<compile_context>
chip_gen: v5e
topology: v5e:2x2
jax: 0.10.0
libtpu: 0.0.40
codegen_flags: <defaults>
</compile_context>

<pallas_src>
import functools

import jax
import jax.numpy as jnp
from jax.experimental import pallas as pl
from jax.experimental.pallas import tpu as pltpu

KSIZES = (3, 5, 7, 9)
LEVELS = 4
GN_GROUPS = 4
GN_EPS = 1e-5
MAXPAD = max(KSIZES) // 2  # 4


def _scsa_kernel(x_ref, w3_ref, w5_ref, w7_ref, w9_ref, cb_ref,
                 gamma_ref, beta_ref, qkw_ref, mask_ref, sel_ref, gmat_ref,
                 out_ref, *, C, H, W, Wp):
    """One batch sample per grid step.

    x_ref    : (C, PADLEN)     flattened zero-padded input (lane-dense)
    w{k}_ref : (C, k*k)        depthwise conv weights (row-major taps)
    cb_ref   : (C, LEVELS)     depthwise conv biases
    gamma_ref/beta_ref : (C, LEVELS)   GroupNorm affine params
    qkw_ref  : (2C, C)         stacked q / k 1x1-conv (channel-mixing) weights
    mask_ref : (1, H*Wp)       1.0 on valid columns, 0.0 on pad junk
    sel_ref  : (H*Wp, H*W)     0/1 selection matrix (padded-width -> dense)
    gmat_ref : (C, C)          group-averaging matrix, entries 1/(cg*H*W)
    out_ref  : (C, H*W)        lane-dense output slab
    """
    SPAN = H * Wp
    maskf = mask_ref[...]                          # (1, SPAN)
    gmat = gmat_ref[...]                           # (C, C)
    wrefs = (w3_ref, w5_ref, w7_ref, w9_ref)

    def conv_group(level_ids):
        """Depthwise conv for a group of levels sharing tap slices."""
        ws = {lvl: wrefs[lvl][...] for lvl in level_ids}          # load weights once
        accs = {lvl: jnp.zeros((C, SPAN), jnp.float32) for lvl in level_ids}
        grp_pad = max(KSIZES[lvl] // 2 for lvl in level_ids)
        for di in range(-grp_pad, grp_pad + 1):
            for dj in range(-grp_pad, grp_pad + 1):
                base = (MAXPAD + di) * Wp + (MAXPAD + dj)         # static offset
                xs = x_ref[:, base:base + SPAN]                   # (C, SPAN) lane slice
                for lvl in level_ids:
                    ks = KSIZES[lvl]
                    pad = ks // 2
                    if abs(di) <= pad and abs(dj) <= pad:
                        t = (di + pad) * ks + (dj + pad)
                        accs[lvl] = accs[lvl] + xs * ws[lvl][:, t:t + 1]
        return accs

    accs = {}
    accs.update(conv_group((3, 2)))    # 9x9 + 7x7 share 81 offset slices
    accs.update(conv_group((1, 0)))    # 5x5 + 3x3 share 25 offset slices

    fused = jnp.zeros((C, SPAN), jnp.float32)
    for lvl in range(LEVELS):
        acc = accs[lvl] + cb_ref[:, lvl:lvl + 1]                  # per-channel bias

        # GroupNorm(4, C): masked statistics (pad-junk columns excluded).
        macc = acc * maskf
        msum = jnp.sum(macc, axis=1, keepdims=True)               # (C, 1)
        msq = jnp.sum(macc * acc, axis=1, keepdims=True)          # (C, 1)
        mean = jnp.dot(gmat, msum, preferred_element_type=jnp.float32)   # (C, 1)
        ex2 = jnp.dot(gmat, msq, preferred_element_type=jnp.float32)     # (C, 1)
        rstd = jax.lax.rsqrt(ex2 - mean * mean + GN_EPS)
        scale = rstd * gamma_ref[:, lvl:lvl + 1]
        shift = beta_ref[:, lvl:lvl + 1] - mean * scale
        fused = fused + jax.nn.sigmoid(acc * scale + shift)

    fused = fused * (1.0 / LEVELS)                                # multiply, not divide

    # Extract the valid (lane-dense) H*W columns with one matmul (no relayout).
    fdense = jnp.dot(fused, sel_ref[...], preferred_element_type=jnp.float32)  # (C, H*W)

    # q / k 1x1 convs fused into one channel-mixing matmul.
    qk = jnp.dot(qkw_ref[...], fdense, preferred_element_type=jnp.float32)     # (2C, H*W)
    q3 = qk[:C].reshape(C, H, W)
    k3 = qk[C:].reshape(C, H, W)

    # Batched per-channel attention: (C,H,W)x(C,H,W) -> (C,H,H)
    y = jnp.einsum('chw,cvw->chv', q3, k3, preferred_element_type=jnp.float32)
    y = y * (float(C) ** -0.5)

    # Batched softmax over the last dim; EUP reciprocal + one Newton step.
    m = jnp.max(y, axis=-1, keepdims=True)
    p = jnp.exp(y - m)
    denom = jnp.sum(p, axis=-1, keepdims=True)
    r = pl.reciprocal(denom, approx=True)
    r = r * (2.0 - denom * r)                    # Newton refinement -> ~f32 accuracy
    attn = p * r
    # TODO(synk): attn_drop (Dropout p=0.2) is identity here (eval-mode semantics).

    # Gating (requires H == W, like the PyTorch broadcast) + ONE lane-dense store.
    out_ref[...] = (fdense * attn.reshape(C, H * H)).astype(out_ref.dtype)


def multilevel_scsa(x, params):
    """x: (B, C, H, W) float32, H == W, C % 4 == 0."""
    B, C, H, W = x.shape
    assert H == W, "final gating requires square spatial dims (H == W)"
    assert C % GN_GROUPS == 0

    Wp = W + 2 * MAXPAD
    Hp = H + 2 * MAXPAD + 1          # one extra zero row keeps all tap slices in-bounds
    SPAN = H * Wp
    PADLEN = Hp * Wp

    xpad = jnp.pad(x, ((0, 0), (0, 0), (MAXPAD, MAXPAD + 1), (MAXPAD, MAXPAD)))
    xflat = xpad.reshape(B, C, PADLEN)

    # Host-side constants (avoid in-kernel iota / reshapes).
    lane = jnp.arange(SPAN, dtype=jnp.int32)
    maskf = ((lane % Wp) < W).astype(jnp.float32)[None, :]                  # (1, SPAN)
    rows = (jnp.arange(H, dtype=jnp.int32)[:, None] * Wp
            + jnp.arange(W, dtype=jnp.int32)[None, :]).reshape(-1)          # (H*W,)
    sel = (lane[:, None] == rows[None, :]).astype(jnp.float32)              # (SPAN, H*W)
    cg = C // GN_GROUPS
    gid = jnp.arange(C, dtype=jnp.int32) // cg
    gmat = (gid[:, None] == gid[None, :]).astype(jnp.float32) / float(cg * H * W)
    qkw = jnp.concatenate([params["qw"], params["kw"]], axis=0)             # (2C, C)

    kernel = functools.partial(_scsa_kernel, C=C, H=H, W=W, Wp=Wp)

    in_specs = [pl.BlockSpec((None, C, PADLEN), lambda b: (b, 0, 0))]
    for ks in KSIZES:
        in_specs.append(pl.BlockSpec((C, ks * ks), lambda b: (0, 0)))
    in_specs += [
        pl.BlockSpec((C, LEVELS), lambda b: (0, 0)),     # conv biases
        pl.BlockSpec((C, LEVELS), lambda b: (0, 0)),     # gn gamma
        pl.BlockSpec((C, LEVELS), lambda b: (0, 0)),     # gn beta
        pl.BlockSpec((2 * C, C), lambda b: (0, 0)),      # stacked q/k weights
        pl.BlockSpec((1, SPAN), lambda b: (0, 0)),       # valid-column mask
        pl.BlockSpec((SPAN, H * W), lambda b: (0, 0)),   # padded -> dense selection
        pl.BlockSpec((C, C), lambda b: (0, 0)),          # group-averaging matrix
    ]

    out_flat = pl.pallas_call(
        kernel,
        out_shape=jax.ShapeDtypeStruct((B, C, H * W), x.dtype),
        grid=(B,),
        in_specs=in_specs,
        out_specs=pl.BlockSpec((None, C, H * W), lambda b: (b, 0, 0)),
        compiler_params=pltpu.CompilerParams(
            dimension_semantics=("parallel",)),
    )(xflat, *params["conv_ws"], params["conv_b"],
      params["gn_gamma"], params["gn_beta"], qkw, maskf, sel, gmat)
    return out_flat.reshape(B, C, H, W)


def init_params(key, C):
    """Deterministic synthetic parameters matching the PyTorch module's shapes."""
    keys = jax.random.split(key, 2 * len(KSIZES) + 2)
    conv_ws = []
    conv_bs = []
    for i, ks in enumerate(KSIZES):
        # nn.Conv2d(dim, dim, ks, groups=dim) weight: (dim, 1, ks, ks) -> (dim, ks*ks)
        w = jax.random.normal(keys[i], (C, ks, ks), jnp.float32) / float(ks)
        conv_ws.append(w.reshape(C, ks * ks))
        conv_bs.append(
            jax.random.normal(keys[len(KSIZES) + i], (C,), jnp.float32) * 0.1)
    conv_b = jnp.stack(conv_bs, axis=1)              # (C, LEVELS)
    gn_gamma = jnp.ones((C, LEVELS), jnp.float32)    # GroupNorm default init
    gn_beta = jnp.zeros((C, LEVELS), jnp.float32)
    qw = jax.random.normal(keys[-2], (C, C), jnp.float32) * (C ** -0.5)
    kw = jax.random.normal(keys[-1], (C, C), jnp.float32) * (C ** -0.5)
    return dict(conv_ws=conv_ws, conv_b=conv_b,
                gn_gamma=gn_gamma, gn_beta=gn_beta, qw=qw, kw=kw)


def _reference(x, params):
    """Pure-JAX (XLA) reference of the PyTorch forward, eval-mode."""
    B, C, H, W = x.shape
    fused = jnp.zeros_like(x)
    for lvl, ks in enumerate(KSIZES):
        w = params["conv_ws"][lvl].reshape(C, ks, ks)[:, None]   # (C,1,ks,ks)
        pad = ks // 2
        out = jax.lax.conv_general_dilated(
            x, w, window_strides=(1, 1), padding=[(pad, pad), (pad, pad)],
            dimension_numbers=('NCHW', 'OIHW', 'NCHW'), feature_group_count=C)
        out = out + params["conv_b"][:, lvl][None, :, None, None]
        og = out.reshape(B, GN_GROUPS, C // GN_GROUPS, H, W)
        mean = og.mean(axis=(2, 3, 4), keepdims=True)
        var = og.var(axis=(2, 3, 4), keepdims=True)
        out = ((og - mean) / jnp.sqrt(var + GN_EPS)).reshape(B, C, H, W)
        out = (out * params["gn_gamma"][:, lvl][None, :, None, None]
               + params["gn_beta"][:, lvl][None, :, None, None])
        fused = fused + jax.nn.sigmoid(out)
    fused = fused / LEVELS
    f2 = fused.reshape(B, C, H * W)
    q = jnp.einsum('oc,bcs->bos', params["qw"], f2).reshape(B, C, H, W)
    k = jnp.einsum('oc,bcs->bos', params["kw"], f2).reshape(B, C, H, W)
    y = jnp.einsum('bchw,bcvw->bchv', q, k) * (float(C) ** -0.5)
    y = jax.nn.softmax(y, axis=-1)
    return fused * y


if __name__ == "__main__":
    B, C, H, W = 2, 8, 16, 16  # dim=8 (divisible by 4 GroupNorm groups), square spatial
    root = jax.random.PRNGKey(0)
    kx, kp = jax.random.split(root)
    x = jax.random.normal(kx, (B, C, H, W), jnp.float32)
    params = init_params(kp, C)

    out = multilevel_scsa(x, params)
    out = jax.block_until_ready(out)
    assert out.shape == (B, C, H, W)
    assert jnp.all(jnp.isfinite(out))

    ref = jax.block_until_ready(_reference(x, params))
    max_err = float(jnp.max(jnp.abs(out - ref)))
    assert max_err < 1e-3, f"max abs err vs reference: {max_err}"
    print("KERNEL_OK")
</pallas_src>

<mosaic_0001>
module attributes {stable_mosaic.version = 11 : i64} {
  func.func @_scsa_kernel(%arg0: i32, %arg1: memref<1x8x600xf32, #tpu.memory_space<vmem>>, %arg2: memref<8x9xf32, #tpu.memory_space<vmem>>, %arg3: memref<8x25xf32, #tpu.memory_space<vmem>>, %arg4: memref<8x49xf32, #tpu.memory_space<vmem>>, %arg5: memref<8x81xf32, #tpu.memory_space<vmem>>, %arg6: memref<8x4xf32, #tpu.memory_space<vmem>>, %arg7: memref<8x4xf32, #tpu.memory_space<vmem>>, %arg8: memref<8x4xf32, #tpu.memory_space<vmem>>, %arg9: memref<16x8xf32, #tpu.memory_space<vmem>>, %arg10: memref<1x384xf32, #tpu.memory_space<vmem>>, %arg11: memref<384x256xf32, #tpu.memory_space<vmem>>, %arg12: memref<8x8xf32, #tpu.memory_space<vmem>>, %arg13: memref<1x8x256xf32, #tpu.memory_space<vmem>>) attributes {dimension_semantics = [#tpu.dimension_semantics<parallel>], iteration_bounds = array<i64: 2>, scalar_prefetch = 0 : i64, scratch_operands = 0 : i64, tpu.core_type = #tpu.core_type<tc>, window_params = [{transform_indices = @transform_0, window_bounds = array<i64: 1, 8, 600>}, {pipeline_mode = #tpu.pipeline_mode<synchronous>, transform_indices = @transform_1, window_bounds = array<i64: 8, 9>}, {pipeline_mode = #tpu.pipeline_mode<synchronous>, transform_indices = @transform_2, window_bounds = array<i64: 8, 25>}, {pipeline_mode = #tpu.pipeline_mode<synchronous>, transform_indices = @transform_3, window_bounds = array<i64: 8, 49>}, {pipeline_mode = #tpu.pipeline_mode<synchronous>, transform_indices = @transform_4, window_bounds = array<i64: 8, 81>}, {pipeline_mode = #tpu.pipeline_mode<synchronous>, transform_indices = @transform_5, window_bounds = array<i64: 8, 4>}, {pipeline_mode = #tpu.pipeline_mode<synchronous>, transform_indices = @transform_6, window_bounds = array<i64: 8, 4>}, {pipeline_mode = #tpu.pipeline_mode<synchronous>, transform_indices = @transform_7, window_bounds = array<i64: 8, 4>}, {pipeline_mode = #tpu.pipeline_mode<synchronous>, transform_indices = @transform_8, window_bounds = array<i64: 16, 8>}, {pipeline_mode = #tpu.pipeline_mode<synchronous>, transform_indices = @transform_9, window_bounds = array<i64: 1, 384>}, {pipeline_mode = #tpu.pipeline_mode<synchronous>, transform_indices = @transform_10, window_bounds = array<i64: 384, 256>}, {pipeline_mode = #tpu.pipeline_mode<synchronous>, transform_indices = @transform_11, window_bounds = array<i64: 8, 8>}, {transform_indices = @transform_12, window_bounds = array<i64: 1, 8, 256>}]} {
    %c0 = arith.constant 0 : index
    %c0_0 = arith.constant 0 : index
    %0 = vector.load %arg10[%c0, %c0_0] : memref<1x384xf32, #tpu.memory_space<vmem>>, vector<1x384xf32>
    %c0_1 = arith.constant 0 : index
    %c0_2 = arith.constant 0 : index
    %1 = vector.load %arg12[%c0_1, %c0_2] : memref<8x8xf32, #tpu.memory_space<vmem>>, vector<8x8xf32>
    %c0_3 = arith.constant 0 : index
    %c0_4 = arith.constant 0 : index
    %2 = vector.load %arg5[%c0_3, %c0_4] : memref<8x81xf32, #tpu.memory_space<vmem>>, vector<8x81xf32>
    %c0_5 = arith.constant 0 : index
    %c0_6 = arith.constant 0 : index
    %3 = vector.load %arg4[%c0_5, %c0_6] : memref<8x49xf32, #tpu.memory_space<vmem>>, vector<8x49xf32>
    %cst = arith.constant 0.000000e+00 : f32
    %4 = vector.broadcast %cst : f32 to vector<8x384xf32>
    %cst_7 = arith.constant 0.000000e+00 : f32
    %5 = vector.broadcast %cst_7 : f32 to vector<8x384xf32>
    %c0_8 = arith.constant 0 : index
    %c0_9 = arith.constant 0 : index
    %c0_10 = arith.constant 0 : index
    %6 = vector.load %arg1[%c0_8, %c0_9, %c0_10] : memref<1x8x600xf32, #tpu.memory_space<vmem>>, vector<1x8x384xf32>
    %7 = vector.shape_cast %6 : vector<1x8x384xf32> to vector<8x384xf32>
    %8 = vector.extract_strided_slice %2 {offsets = [0, 0], sizes = [8, 1], strides = [1, 1]} : vector<8x81xf32> to vector<8x1xf32>
    %9 = vector.broadcast %8 : vector<8x1xf32> to vector<8x384xf32>
    %10 = arith.mulf %7, %9 : vector<8x384xf32>
    %11 = arith.addf %4, %10 : vector<8x384xf32>
    %c0_11 = arith.constant 0 : index
    %c0_12 = arith.constant 0 : index
    %c1 = arith.constant 1 : index
    %12 = vector.load %arg1[%c0_11, %c0_12, %c1] : memref<1x8x600xf32, #tpu.memory_space<vmem>>, vector<1x8x384xf32>
    %13 = vector.shape_cast %12 : vector<1x8x384xf32> to vector<8x384xf32>
    %14 = vector.extract_strided_slice %2 {offsets = [0, 1], sizes = [8, 1], strides = [1, 1]} : vector<8x81xf32> to vector<8x1xf32>
    %15 = vector.broadcast %14 : vector<8x1xf32> to vector<8x384xf32>
    %16 = arith.mulf %13, %15 : vector<8x384xf32>
    %17 = arith.addf %11, %16 : vector<8x384xf32>
    %c0_13 = arith.constant 0 : index
    %c0_14 = arith.constant 0 : index
    %c2 = arith.constant 2 : index
    %18 = vector.load %arg1[%c0_13, %c0_14, %c2] : memref<1x8x600xf32, #tpu.memory_space<vmem>>, vector<1x8x384xf32>
    %19 = vector.shape_cast %18 : vector<1x8x384xf32> to vector<8x384xf32>
    %20 = vector.extract_strided_slice %2 {offsets = [0, 2], sizes = [8, 1], strides = [1, 1]} : vector<8x81xf32> to vector<8x1xf32>
    %21 = vector.broadcast %20 : vector<8x1xf32> to vector<8x384xf32>
    %22 = arith.mulf %19, %21 : vector<8x384xf32>
    %23 = arith.addf %17, %22 : vector<8x384xf32>
    %c0_15 = arith.constant 0 : index
    %c0_16 = arith.constant 0 : index
    %c3 = arith.constant 3 : index
    %24 = vector.load %arg1[%c0_15, %c0_16, %c3] : memref<1x8x600xf32, #tpu.memory_space<vmem>>, vector<1x8x384xf32>
    %25 = vector.shape_cast %24 : vector<1x8x384xf32> to vector<8x384xf32>
    %26 = vector.extract_strided_slice %2 {offsets = [0, 3], sizes = [8, 1], strides = [1, 1]} : vector<8x81xf32> to vector<8x1xf32>
    %27 = vector.broadcast %26 : vector<8x1xf32> to vector<8x384xf32>
    %28 = arith.mulf %25, %27 : vector<8x384xf32>
    %29 = arith.addf %23, %28 : vector<8x384xf32>
    %c0_17 = arith.constant 0 : index
    %c0_18 = arith.constant 0 : index
    %c4 = arith.constant 4 : index
    %30 = vector.load %arg1[%c0_17, %c0_18, %c4] : memref<1x8x600xf32, #tpu.memory_space<vmem>>, vector<1x8x384xf32>
    %31 = vector.shape_cast %30 : vector<1x8x384xf32> to vector<8x384xf32>
    %32 = vector.extract_strided_slice %2 {offsets = [0, 4], sizes = [8, 1], strides = [1, 1]} : vector<8x81xf32> to vector<8x1xf32>
    %33 = vector.broadcast %32 : vector<8x1xf32> to vector<8x384xf32>
    %34 = arith.mulf %31, %33 : vector<8x384xf32>
    %35 = arith.addf %29, %34 : vector<8x384xf32>
    %c0_19 = arith.constant 0 : index
    %c0_20 = arith.constant 0 : index
    %c5 = arith.constant 5 : index
    %36 = vector.load %arg1[%c0_19, %c0_20, %c5] : memref<1x8x600xf32, #tpu.memory_space<vmem>>, vector<1x8x384xf32>
    %37 = vector.shape_cast %36 : vector<1x8x384xf32> to vector<8x384xf32>
    %38 = vector.extract_strided_slice %2 {offsets = [0, 5], sizes = [8, 1], strides = [1, 1]} : vector<8x81xf32> to vector<8x1xf32>
    %39 = vector.broadcast %38 : vector<8x1xf32> to vector<8x384xf32>
    %40 = arith.mulf %37, %39 : vector<8x384xf32>
    %41 = arith.addf %35, %40 : vector<8x384xf32>
    %c0_21 = arith.constant 0 : index
    %c0_22 = arith.constant 0 : index
    %c6 = arith.constant 6 : index
    %42 = vector.load %arg1[%c0_21, %c0_22, %c6] : memref<1x8x600xf32, #tpu.memory_space<vmem>>, vector<1x8x384xf32>
    %43 = vector.shape_cast %42 : vector<1x8x384xf32> to vector<8x384xf32>
    %44 = vector.extract_strided_slice %2 {offsets = [0, 6], sizes = [8, 1], strides = [1, 1]} : vector<8x81xf32> to vector<8x1xf32>
    %45 = vector.broadcast %44 : vector<8x1xf32> to vector<8x384xf32>
    %46 = arith.mulf %43, %45 : vector<8x384xf32>
    %47 = arith.addf %41, %46 : vector<8x384xf32>
    %c0_23 = arith.constant 0 : index
    %c0_24 = arith.constant 0 : index
    %c7 = arith.constant 7 : index
    %48 = vector.load %arg1[%c0_23, %c0_24, %c7] : memref<1x8x600xf32, #tpu.memory_space<vmem>>, vector<1x8x384xf32>
    %49 = vector.shape_cast %48 : vector<1x8x384xf32> to vector<8x384xf32>
    %50 = vector.extract_strided_slice %2 {offsets = [0, 7], sizes = [8, 1], strides = [1, 1]} : vector<8x81xf32> to vector<8x1xf32>
    %51 = vector.broadcast %50 : vector<8x1xf32> to vector<8x384xf32>
    %52 = arith.mulf %49, %51 : vector<8x384xf32>
    %53 = arith.addf %47, %52 : vector<8x384xf32>
    %c0_25 = arith.constant 0 : index
    %c0_26 = arith.constant 0 : index
    %c8 = arith.constant 8 : index
    %54 = vector.load %arg1[%c0_25, %c0_26, %c8] : memref<1x8x600xf32, #tpu.memory_space<vmem>>, vector<1x8x384xf32>
    %55 = vector.shape_cast %54 : vector<1x8x384xf32> to vector<8x384xf32>
    %56 = vector.extract_strided_slice %2 {offsets = [0, 8], sizes = [8, 1], strides = [1, 1]} : vector<8x81xf32> to vector<8x1xf32>
    %57 = vector.broadcast %56 : vector<8x1xf32> to vector<8x384xf32>
    %58 = arith.mulf %55, %57 : vector<8x384xf32>
    %59 = arith.addf %53, %58 : vector<8x384xf32>
    %c0_27 = arith.constant 0 : index
    %c0_28 = arith.constant 0 : index
    %c24 = arith.constant 24 : index
    %60 = vector.load %arg1[%c0_27, %c0_28, %c24] : memref<1x8x600xf32, #tpu.memory_space<vmem>>, vector<1x8x384xf32>
    %61 = vector.shape_cast %60 : vector<1x8x384xf32> to vector<8x384xf32>
    %62 = vector.extract_strided_slice %2 {offsets = [0, 9], sizes = [8, 1], strides = [1, 1]} : vector<8x81xf32> to vector<8x1xf32>
    %63 = vector.broadcast %62 : vector<8x1xf32> to vector<8x384xf32>
    %64 = arith.mulf %61, %63 : vector<8x384xf32>
    %65 = arith.addf %59, %64 : vector<8x384xf32>
    %c0_29 = arith.constant 0 : index
    %c0_30 = arith.constant 0 : index
    %c25 = arith.constant 25 : index
    %66 = vector.load %arg1[%c0_29, %c0_30, %c25] : memref<1x8x600xf32, #tpu.memory_space<vmem>>, vector<1x8x384xf32>
    %67 = vector.shape_cast %66 : vector<1x8x384xf32> to vector<8x384xf32>
    %68 = vector.extract_strided_slice %2 {offsets = [0, 10], sizes = [8, 1], strides = [1, 1]} : vector<8x81xf32> to vector<8x1xf32>
    %69 = vector.broadcast %68 : vector<8x1xf32> to vector<8x384xf32>
    %70 = arith.mulf %67, %69 : vector<8x384xf32>
    %71 = arith.addf %65, %70 : vector<8x384xf32>
    %72 = vector.extract_strided_slice %3 {offsets = [0, 0], sizes = [8, 1], strides = [1, 1]} : vector<8x49xf32> to vector<8x1xf32>
    %73 = vector.broadcast %72 : vector<8x1xf32> to vector<8x384xf32>
    %74 = arith.mulf %67, %73 : vector<8x384xf32>
    %75 = arith.addf %5, %74 : vector<8x384xf32>
    %c0_31 = arith.constant 0 : index
    %c0_32 = arith.constant 0 : index
    %c26 = arith.constant 26 : index
    %76 = vector.load %arg1[%c0_31, %c0_32, %c26] : memref<1x8x600xf32, #tpu.memory_space<vmem>>, vector<1x8x384xf32>
    %77 = vector.shape_cast %76 : vector<1x8x384xf32> to vector<8x384xf32>
    %78 = vector.extract_strided_slice %2 {offsets = [0, 11], sizes = [8, 1], strides = [1, 1]} : vector<8x81xf32> to vector<8x1xf32>
    %79 = vector.broadcast %78 : vector<8x1xf32> to vector<8x384xf32>
    %80 = arith.mulf %77, %79 : vector<8x384xf32>
    %81 = arith.addf %71, %80 : vector<8x384xf32>
    %82 = vector.extract_strided_slice %3 {offsets = [0, 1], sizes = [8, 1], strides = [1, 1]} : vector<8x49xf32> to vector<8x1xf32>
    %83 = vector.broadcast %82 : vector<8x1xf32> to vector<8x384xf32>
    %84 = arith.mulf %77, %83 : vector<8x384xf32>
    %85 = arith.addf %75, %84 : vector<8x384xf32>
    %c0_33 = arith.constant 0 : index
    %c0_34 = arith.constant 0 : index
    %c27 = arith.constant 27 : index
    %86 = vector.load %arg1[%c0_33, %c0_34, %c27] : memref<1x8x600xf32, #tpu.memory_space<vmem>>, vector<1x8x384xf32>
    %87 = vector.shape_cast %86 : vector<1x8x384xf32> to vector<8x384xf32>
    %88 = vector.extract_strided_slice %2 {offsets = [0, 12], sizes = [8, 1], strides = [1, 1]} : vector<8x81xf32> to vector<8x1xf32>
    %89 = vector.broadcast %88 : vector<8x1xf32> to vector<8x384xf32>
    %90 = arith.mulf %87, %89 : vector<8x384xf32>
    %91 = arith.addf %81, %90 : vector<8x384xf32>
    %92 = vector.extract_strided_slice %3 {offsets = [0, 2], sizes = [8, 1], strides = [1, 1]} : vector<8x49xf32> to vector<8x1xf32>
    %93 = vector.broadcast %92 : vector<8x1xf32> to vector<8x384xf32>
    %94 = arith.mulf %87, %93 : vector<8x384xf32>
    %95 = arith.addf %85, %94 : vector<8x384xf32>
    %c0_35 = arith.constant 0 : index
    %c0_36 = arith.constant 0 : index
    %c28 = arith.constant 28 : index
    %96 = vector.load %arg1[%c0_35, %c0_36, %c28] : memref<1x8x600xf32, #tpu.memory_space<vmem>>, vector<1x8x384xf32>
    %97 = vector.shape_cast %96 : vector<1x8x384xf32> to vector<8x384xf32>
    %98 = vector.extract_strided_slice %2 {offsets = [0, 13], sizes = [8, 1], strides = [1, 1]} : vector<8x81xf32> to vector<8x1xf32>
    %99 = vector.broadcast %98 : vector<8x1xf32> to vector<8x384xf32>
    %100 = arith.mulf %97, %99 : vector<8x384xf32>
    %101 = arith.addf %91, %100 : vector<8x384xf32>
    %102 = vector.extract_strided_slice %3 {offsets = [0, 3], sizes = [8, 1], strides = [1, 1]} : vector<8x49xf32> to vector<8x1xf32>
    %103 = vector.broadcast %102 : vector<8x1xf32> to vector<8x384xf32>
    %104 = arith.mulf %97, %103 : vector<8x384xf32>
    %105 = arith.addf %95, %104 : vector<8x384xf32>
    %c0_37 = arith.constant 0 : index
    %c0_38 = arith.constant 0 : index
    %c29 = arith.constant 29 : index
    %106 = vector.load %arg1[%c0_37, %c0_38, %c29] : memref<1x8x600xf32, #tpu.memory_space<vmem>>, vector<1x8x384xf32>
    %107 = vector.shape_cast %106 : vector<1x8x384xf32> to vector<8x384xf32>
    %108 = vector.extract_strided_slice %2 {offsets = [0, 14], sizes = [8, 1], strides = [1, 1]} : vector<8x81xf32> to vector<8x1xf32>
    %109 = vector.broadcast %108 : vector<8x1xf32> to vector<8x384xf32>
    %110 = arith.mulf %107, %109 : vector<8x384xf32>
    %111 = arith.addf %101, %110 : vector<8x384xf32>
    %112 = vector.extract_strided_slice %3 {offsets = [0, 4], sizes = [8, 1], strides = [1, 1]} : vector<8x49xf32> to vector<8x1xf32>
    %113 = vector.broadcast %112 : vector<8x1xf32> to vector<8x384xf32>
    %114 = arith.mulf %107, %113 : vector<8x384xf32>
    %115 = arith.addf %105, %114 : vector<8x384xf32>
    %c0_39 = arith.constant 0 : index
    %c0_40 = arith.constant 0 : index
    %c30 = arith.constant 30 : index
    %116 = vector.load %arg1[%c0_39, %c0_40, %c30] : memref<1x8x600xf32, #tpu.memory_space<vmem>>, vector<1x8x384xf32>
    %117 = vector.shape_cast %116 : vector<1x8x384xf32> to vector<8x384xf32>
    %118 = vector.extract_strided_slice %2 {offsets = [0, 15], sizes = [8, 1], strides = [1, 1]} : vector<8x81xf32> to vector<8x1xf32>
    %119 = vector.broadcast %118 : vector<8x1xf32> to vector<8x384xf32>
    %120 = arith.mulf %117, %119 : vector<8x384xf32>
    %121 = arith.addf %111, %120 : vector<8x384xf32>
    %122 = vector.extract_strided_slice %3 {offsets = [0, 5], sizes = [8, 1], strides = [1, 1]} : vector<8x49xf32> to vector<8x1xf32>
    %123 = vector.broadcast %122 : vector<8x1xf32> to vector<8x384xf32>
    %124 = arith.mulf %117, %123 : vector<8x384xf32>
    %125 = arith.addf %115, %124 : vector<8x384xf32>
    %c0_41 = arith.constant 0 : index
    %c0_42 = arith.constant 0 : index
    %c31 = arith.constant 31 : index
    %126 = vector.load %arg1[%c0_41, %c0_42, %c31] : memref<1x8x600xf32, #tpu.memory_space<vmem>>, vector<1x8x384xf32>
    %127 = vector.shape_cast %126 : vector<1x8x384xf32> to vector<8x384xf32>
    %128 = vector.extract_strided_slice %2 {offsets = [0, 16], sizes = [8, 1], strides = [1, 1]} : vector<8x81xf32> to vector<8x1xf32>
    %129 = vector.broadcast %128 : vector<8x1xf32> to vector<8x384xf32>
    %130 = arith.mulf %127, %129 : vector<8x384xf32>
    %131 = arith.addf %121, %130 : vector<8x384xf32>
    %132 = vector.extract_strided_slice %3 {offsets = [0, 6], sizes = [8, 1], strides = [1, 1]} : vector<8x49xf32> to vector<8x1xf32>
    %133 = vector.broadcast %132 : vector<8x1xf32> to vector<8x384xf32>
    %134 = arith.mulf %127, %133 : vector<8x384xf32>
    %135 = arith.addf %125, %134 : vector<8x384xf32>
    %c0_43 = arith.constant 0 : index
    %c0_44 = arith.constant 0 : index
    %c32 = arith.constant 32 : index
    %136 = vector.load %arg1[%c0_43, %c0_44, %c32] : memref<1x8x600xf32, #tpu.memory_space<vmem>>, vector<1x8x384xf32>
    %137 = vector.shape_cast %136 : vector<1x8x384xf32> to vector<8x384xf32>
    %138 = vector.extract_strided_slice %2 {offsets = [0, 17], sizes = [8, 1], strides = [1, 1]} : vector<8x81xf32> to vector<8x1xf32>
    %139 = vector.broadcast %138 : vector<8x1xf32> to vector<8x384xf32>
    %140 = arith.mulf %137, %139 : vector<8x384xf32>
    %141 = arith.addf %131, %140 : vector<8x384xf32>
    %c0_45 = arith.constant 0 : index
    %c0_46 = arith.constant 0 : index
    %c48 = arith.constant 48 : index
    %142 = vector.load %arg1[%c0_45, %c0_46, %c48] : memref<1x8x600xf32, #tpu.memory_space<vmem>>, vector<1x8x384xf32>
    %143 = vector.shape_cast %142 : vector<1x8x384xf32> to vector<8x384xf32>
    %144 = vector.extract_strided_slice %2 {offsets = [0, 18], sizes = [8, 1], strides = [1, 1]} : vector<8x81xf32> to vector<8x1xf32>
    %145 = vector.broadcast %144 : vector<8x1xf32> to vector<8x384xf32>
    %146 = arith.mulf %143, %145 : vector<8x384xf32>
    %147 = arith.addf %141, %146 : vector<8x384xf32>
    %c0_47 = arith.constant 0 : index
    %c0_48 = arith.constant 0 : index
    %c49 = arith.constant 49 : index
    %148 = vector.load %arg1[%c0_47, %c0_48, %c49] : memref<1x8x600xf32, #tpu.memory_space<vmem>>, vector<1x8x384xf32>
    %149 = vector.shape_cast %148 : vector<1x8x384xf32> to vector<8x384xf32>
    %150 = vector.extract_strided_slice %2 {offsets = [0, 19], sizes = [8, 1], strides = [1, 1]} : vector<8x81xf32> to vector<8x1xf32>
    %151 = vector.broadcast %150 : vector<8x1xf32> to vector<8x384xf32>
    %152 = arith.mulf %149, %151 : vector<8x384xf32>
    %153 = arith.addf %147, %152 : vector<8x384xf32>
    %154 = vector.extract_strided_slice %3 {offsets = [0, 7], sizes = [8, 1], strides = [1, 1]} : vector<8x49xf32> to vector<8x1xf32>
    %155 = vector.broadcast %154 : vector<8x1xf32> to vector<8x384xf32>
    %156 = arith.mulf %149, %155 : vector<8x384xf32>
    %157 = arith.addf %135, %156 : vector<8x384xf32>
    %c0_49 = arith.constant 0 : index
    %c0_50 = arith.constant 0 : index
    %c50 = arith.constant 50 : index
    %158 = vector.load %arg1[%c0_49, %c0_50, %c50] : memref<1x8x600xf32, #tpu.memory_space<vmem>>, vector<1x8x384xf32>
    %159 = vector.shape_cast %158 : vector<1x8x384xf32> to vector<8x384xf32>
    %160 = vector.extract_strided_slice %2 {offsets = [0, 20], sizes = [8, 1], strides = [1, 1]} : vector<8x81xf32> to vector<8x1xf32>
    %161 = vector.broadcast %160 : vector<8x1xf32> to vector<8x384xf32>
    %162 = arith.mulf %159, %161 : vector<8x384xf32>
    %163 = arith.addf %153, %162 : vector<8x384xf32>
    %164 = vector.extract_strided_slice %3 {offsets = [0, 8], sizes = [8, 1], strides = [1, 1]} : vector<8x49xf32> to vector<8x1xf32>
    %165 = vector.broadcast %164 : vector<8x1xf32> to vector<8x384xf32>
    %166 = arith.mulf %159, %165 : vector<8x384xf32>
    %167 = arith.addf %157, %166 : vector<8x384xf32>
    %c0_51 = arith.constant 0 : index
    %c0_52 = arith.constant 0 : index
    %c51 = arith.constant 51 : index
    %168 = vector.load %arg1[%c0_51, %c0_52, %c51] : memref<1x8x600xf32, #tpu.memory_space<vmem>>, vector<1x8x384xf32>
    %169 = vector.shape_cast %168 : vector<1x8x384xf32> to vector<8x384xf32>
    %170 = vector.extract_strided_slice %2 {offsets = [0, 21], sizes = [8, 1], strides = [1, 1]} : vector<8x81xf32> to vector<8x1xf32>
    %171 = vector.broadcast %170 : vector<8x1xf32> to vector<8x384xf32>
    %172 = arith.mulf %169, %171 : vector<8x384xf32>
    %173 = arith.addf %163, %172 : vector<8x384xf32>
    %174 = vector.extract_strided_slice %3 {offsets = [0, 9], sizes = [8, 1], strides = [1, 1]} : vector<8x49xf32> to vector<8x1xf32>
    %175 = vector.broadcast %174 : vector<8x1xf32> to vector<8x384xf32>
    %176 = arith.mulf %169, %175 : vector<8x384xf32>
    %177 = arith.addf %167, %176 : vector<8x384xf32>
    %c0_53 = arith.constant 0 : index
    %c0_54 = arith.constant 0 : index
    %c52 = arith.constant 52 : index
    %178 = vector.load %arg1[%c0_53, %c0_54, %c52] : memref<1x8x600xf32, #tpu.memory_space<vmem>>, vector<1x8x384xf32>
    %179 = vector.shape_cast %178 : vector<1x8x384xf32> to vector<8x384xf32>
    %180 = vector.extract_strided_slice %2 {offsets = [0, 22], sizes = [8, 1], strides = [1, 1]} : vector<8x81xf32> to vector<8x1xf32>
    %181 = vector.broadcast %180 : vector<8x1xf32> to vector<8x384xf32>
    %182 = arith.mulf %179, %181 : vector<8x384xf32>
    %183 = arith.addf %173, %182 : vector<8x384xf32>
    %184 = vector.extract_strided_slice %3 {offsets = [0, 10], sizes = [8, 1], strides = [1, 1]} : vector<8x49xf32> to vector<8x1xf32>
    %185 = vector.broadcast %184 : vector<8x1xf32> to vector<8x384xf32>
    %186 = arith.mulf %179, %185 : vector<8x384xf32>
    %187 = arith.addf %177, %186 : vector<8x384xf32>
    %c0_55 = arith.constant 0 : index
    %c0_56 = arith.constant 0 : index
    %c53 = arith.constant 53 : index
    %188 = vector.load %arg1[%c0_55, %c0_56, %c53] : memref<1x8x600xf32, #tpu.memory_space<vmem>>, vector<1x8x384xf32>
    %189 = vector.shape_cast %188 : vector<1x8x384xf32> to vector<8x384xf32>
    %190 = vector.extract_strided_slice %2 {offsets = [0, 23], sizes = [8, 1], strides = [1, 1]} : vector<8x81xf32> to vector<8x1xf32>
    %191 = vector.broadcast %190 : vector<8x1xf32> to vector<8x384xf32>
    %192 = arith.mulf %189, %191 : vector<8x384xf32>
    %193 = arith.addf %183, %192 : vector<8x384xf32>
    %194 = vector.extract_strided_slice %3 {offsets = [0, 11], sizes = [8, 1], strides = [1, 1]} : vector<8x49xf32> to vector<8x1xf32>
    %195 = vector.broadcast %194 : vector<8x1xf32> to vector<8x384xf32>
    %196 = arith.mulf %189, %195 : vector<8x384xf32>
    %197 = arith.addf %187, %196 : vector<8x384xf32>
    %c0_57 = arith.constant 0 : index
    %c0_58 = arith.constant 0 : index
    %c54 = arith.constant 54 : index
    %198 = vector.load %arg1[%c0_57, %c0_58, %c54] : memref<1x8x600xf32, #tpu.memory_space<vmem>>, vector<1x8x384xf32>
    %199 = vector.shape_cast %198 : vector<1x8x384xf32> to vector<8x384xf32>
    %200 = vector.extract_strided_slice %2 {offsets = [0, 24], sizes = [8, 1], strides = [1, 1]} : vector<8x81xf32> to vector<8x1xf32>
    %201 = vector.broadcast %200 : vector<8x1xf32> to vector<8x384xf32>
    %202 = arith.mulf %199, %201 : vector<8x384xf32>
    %203 = arith.addf %193, %202 : vector<8x384xf32>
    %204 = vector.extract_strided_slice %3 {offsets = [0, 12], sizes = [8, 1], strides = [1, 1]} : vector<8x49xf32> to vector<8x1xf32>
    %205 = vector.broadcast %204 : vector<8x1xf32> to vector<8x384xf32>
    %206 = arith.mulf %199, %205 : vector<8x384xf32>
    %207 = arith.addf %197, %206 : vector<8x384xf32>
    %c0_59 = arith.constant 0 : index
    %c0_60 = arith.constant 0 : index
    %c55 = arith.constant 55 : index
    %208 = vector.load %arg1[%c0_59, %c0_60, %c55] : memref<1x8x600xf32, #tpu.memory_space<vmem>>, vector<1x8x384xf32>
    %209 = vector.shape_cast %208 : vector<1x8x384xf32> to vector<8x384xf32>
    %210 = vector.extract_strided_slice %2 {offsets = [0, 25], sizes = [8, 1], strides = [1, 1]} : vector<8x81xf32> to vector<8x1xf32>
    %211 = vector.broadcast %210 : vector<8x1xf32> to vector<8x384xf32>
    %212 = arith.mulf %209, %211 : vector<8x384xf32>
    %213 = arith.addf %203, %212 : vector<8x384xf32>
    %214 = vector.extract_strided_slice %3 {offsets = [0, 13], sizes = [8, 1], strides = [1, 1]} : vector<8x49xf32> to vector<8x1xf32>
    %215 = vector.broadcast %214 : vector<8x1xf32> to vector<8x384xf32>
    %216 = arith.mulf %209, %215 : vector<8x384xf32>
    %217 = arith.addf %207, %216 : vector<8x384xf32>
    %c0_61 = arith.constant 0 : index
    %c0_62 = arith.constant 0 : index
    %c56 = arith.constant 56 : index
    %218 = vector.load %arg1[%c0_61, %c0_62, %c56] : memref<1x8x600xf32, #tpu.memory_space<vmem>>, vector<1x8x384xf32>
    %219 = vector.shape_cast %218 : vector<1x8x384xf32> to vector<8x384xf32>
    %220 = vector.extract_strided_slice %2 {offsets = [0, 26], sizes = [8, 1], strides = [1, 1]} : vector<8x81xf32> to vector<8x1xf32>
    %221 = vector.broadcast %220 : vector<8x1xf32> to vector<8x384xf32>
    %222 = arith.mulf %219, %221 : vector<8x384xf32>
    %223 = arith.addf %213, %222 : vector<8x384xf32>
    %c0_63 = arith.constant 0 : index
    %c0_64 = arith.constant 0 : index
    %c72 = arith.constant 72 : index
    %224 = vector.load %arg1[%c0_63, %c0_64, %c72] : memref<1x8x600xf32, #tpu.memory_space<vmem>>, vector<1x8x384xf32>
    %225 = vector.shape_cast %224 : vector<1x8x384xf32> to vector<8x384xf32>
    %226 = vector.extract_strided_slice %2 {offsets = [0, 27], sizes = [8, 1], strides = [1, 1]} : vector<8x81xf32> to vector<8x1xf32>
    %227 = vector.broadcast %226 : vector<8x1xf32> to vector<8x384xf32>
    %228 = arith.mulf %225, %227 : vector<8x384xf32>
    %229 = arith.addf %223, %228 : vector<8x384xf32>
    %c0_65 = arith.constant 0 : index
    %c0_66 = arith.constant 0 : index
    %c73 = arith.constant 73 : index
    %230 = vector.load %arg1[%c0_65, %c0_66, %c73] : memref<1x8x600xf32, #tpu.memory_space<vmem>>, vector<1x8x384xf32>
    %231 = vector.shape_cast %230 : vector<1x8x384xf32> to vector<8x384xf32>
    %232 = vector.extract_strided_slice %2 {offsets = [0, 28], sizes = [8, 1], strides = [1, 1]} : vector<8x81xf32> to vector<8x1xf32>
    %233 = vector.broadcast %232 : vector<8x1xf32> to vector<8x384xf32>
    %234 = arith.mulf %231, %233 : vector<8x384xf32>
    %235 = arith.addf %229, %234 : vector<8x384xf32>
    %236 = vector.extract_strided_slice %3 {offsets = [0, 14], sizes = [8, 1], strides = [1, 1]} : vector<8x49xf32> to vector<8x1xf32>
    %237 = vector.broadcast %236 : vector<8x1xf32> to vector<8x384xf32>
    %238 = arith.mulf %231, %237 : vector<8x384xf32>
    %239 = arith.addf %217, %238 : vector<8x384xf32>
    %c0_67 = arith.constant 0 : index
    %c0_68 = arith.constant 0 : index
    %c74 = arith.constant 74 : index
    %240 = vector.load %arg1[%c0_67, %c0_68, %c74] : memref<1x8x600xf32, #tpu.memory_space<vmem>>, vector<1x8x384xf32>
    %241 = vector.shape_cast %240 : vector<1x8x384xf32> to vector<8x384xf32>
    %242 = vector.extract_strided_slice %2 {offsets = [0, 29], sizes = [8, 1], strides = [1, 1]} : vector<8x81xf32> to vector<8x1xf32>
    %243 = vector.broadcast %242 : vector<8x1xf32> to vector<8x384xf32>
    %244 = arith.mulf %241, %243 : vector<8x384xf32>
    %245 = arith.addf %235, %244 : vector<8x384xf32>
    %246 = vector.extract_strided_slice %3 {offsets = [0, 15], sizes = [8, 1], strides = [1, 1]} : vector<8x49xf32> to vector<8x1xf32>
    %247 = vector.broadcast %246 : vector<8x1xf32> to vector<8x384xf32>
    %248 = arith.mulf %241, %247 : vector<8x384xf32>
    %249 = arith.addf %239, %248 : vector<8x384xf32>
    %c0_69 = arith.constant 0 : index
    %c0_70 = arith.constant 0 : index
    %c75 = arith.constant 75 : index
    %250 = vector.load %arg1[%c0_69, %c0_70, %c75] : memref<1x8x600xf32, #tpu.memory_space<vmem>>, vector<1x8x384xf32>
    %251 = vector.shape_cast %250 : vector<1x8x384xf32> to vector<8x384xf32>
    %252 = vector.extract_strided_slice %2 {offsets = [0, 30], sizes = [8, 1], strides = [1, 1]} : vector<8x81xf32> to vector<8x1xf32>
    %253 = vector.broadcast %252 : vector<8x1xf32> to vector<8x384xf32>
    %254 = arith.mulf %251, %253 : vector<8x384xf32>
    %255 = arith.addf %245, %254 : vector<8x384xf32>
    %256 = vector.extract_strided_slice %3 {offsets = [0, 16], sizes = [8, 1], strides = [1, 1]} : vector<8x49xf32> to vector<8x1xf32>
    %257 = vector.broadcast %256 : vector<8x1xf32> to vector<8x384xf32>
    %258 = arith.mulf %251, %257 : vector<8x384xf32>
    %259 = arith.addf %249, %258 : vector<8x384xf32>
    %c0_71 = arith.constant 0 : index
    %c0_72 = arith.constant 0 : index
    %c76 = arith.constant 76 : index
    %260 = vector.load %arg1[%c0_71, %c0_72, %c76] : memref<1x8x600xf32, #tpu.memory_space<vmem>>, vector<1x8x384xf32>
    %261 = vector.shape_cast %260 : vector<1x8x384xf32> to vector<8x384xf32>
    %262 = vector.extract_strided_slice %2 {offsets = [0, 31], sizes = [8, 1], strides = [1, 1]} : vector<8x81xf32> to vector<8x1xf32>
    %263 = vector.broadcast %262 : vector<8x1xf32> to vector<8x384xf32>
    %264 = arith.mulf %261, %263 : vector<8x384xf32>
    %265 = arith.addf %255, %264 : vector<8x384xf32>
    %266 = vector.extract_strided_slice %3 {offsets = [0, 17], sizes = [8, 1], strides = [1, 1]} : vector<8x49xf32> to vector<8x1xf32>
    %267 = vector.broadcast %266 : vector<8x1xf32> to vector<8x384xf32>
    %268 = arith.mulf %261, %267 : vector<8x384xf32>
    %269 = arith.addf %259, %268 : vector<8x384xf32>
    %c0_73 = arith.constant 0 : index
    %c0_74 = arith.constant 0 : index
    %c77 = arith.constant 77 : index
    %270 = vector.load %arg1[%c0_73, %c0_74, %c77] : memref<1x8x600xf32, #tpu.memory_space<vmem>>, vector<1x8x384xf32>
    %271 = vector.shape_cast %270 : vector<1x8x384xf32> to vector<8x384xf32>
    %272 = vector.extract_strided_slice %2 {offsets = [0, 32], sizes = [8, 1], strides = [1, 1]} : vector<8x81xf32> to vector<8x1xf32>
    %273 = vector.broadcast %272 : vector<8x1xf32> to vector<8x384xf32>
    %274 = arith.mulf %271, %273 : vector<8x384xf32>
    %275 = arith.addf %265, %274 : vector<8x384xf32>
    %276 = vector.extract_strided_slice %3 {offsets = [0, 18], sizes = [8, 1], strides = [1, 1]} : vector<8x49xf32> to vector<8x1xf32>
    %277 = vector.broadcast %276 : vector<8x1xf32> to vector<8x384xf32>
    %278 = arith.mulf %271, %277 : vector<8x384xf32>
    %279 = arith.addf %269, %278 : vector<8x384xf32>
    %c0_75 = arith.constant 0 : index
    %c0_76 = arith.constant 0 : index
    %c78 = arith.constant 78 : index
    %280 = vector.load %arg1[%c0_75, %c0_76, %c78] : memref<1x8x600xf32, #tpu.memory_space<vmem>>, vector<1x8x384xf32>
    %281 = vector.shape_cast %280 : vector<1x8x384xf32> to vector<8x384xf32>
    %282 = vector.extract_strided_slice %2 {offsets = [0, 33], sizes = [8, 1], strides = [1, 1]} : vector<8x81xf32> to vector<8x1xf32>
    %283 = vector.broadcast %282 : vector<8x1xf32> to vector<8x384xf32>
    %284 = arith.mulf %281, %283 : vector<8x384xf32>
    %285 = arith.addf %275, %284 : vector<8x384xf32>
    %286 = vector.extract_strided_slice %3 {offsets = [0, 19], sizes = [8, 1], strides = [1, 1]} : vector<8x49xf32> to vector<8x1xf32>
    %287 = vector.broadcast %286 : vector<8x1xf32> to vector<8x384xf32>
    %288 = arith.mulf %281, %287 : vector<8x384xf32>
    %289 = arith.addf %279, %288 : vector<8x384xf32>
    %c0_77 = arith.constant 0 : index
    %c0_78 = arith.constant 0 : index
    %c79 = arith.constant 79 : index
    %290 = vector.load %arg1[%c0_77, %c0_78, %c79] : memref<1x8x600xf32, #tpu.memory_space<vmem>>, vector<1x8x384xf32>
    %291 = vector.shape_cast %290 : vector<1x8x384xf32> to vector<8x384xf32>
    %292 = vector.extract_strided_slice %2 {offsets = [0, 34], sizes = [8, 1], strides = [1, 1]} : vector<8x81xf32> to vector<8x1xf32>
    %293 = vector.broadcast %292 : vector<8x1xf32> to vector<8x384xf32>
    %294 = arith.mulf %291, %293 : vector<8x384xf32>
    %295 = arith.addf %285, %294 : vector<8x384xf32>
    %296 = vector.extract_strided_slice %3 {offsets = [0, 20], sizes = [8, 1], strides = [1, 1]} : vector<8x49xf32> to vector<8x1xf32>
    %297 = vector.broadcast %296 : vector<8x1xf32> to vector<8x384xf32>
    %298 = arith.mulf %291, %297 : vector<8x384xf32>
    %299 = arith.addf %289, %298 : vector<8x384xf32>
    %c0_79 = arith.constant 0 : index
    %c0_80 = arith.constant 0 : index
    %c80 = arith.constant 80 : index
    %300 = vector.load %arg1[%c0_79, %c0_80, %c80] : memref<1x8x600xf32, #tpu.memory_space<vmem>>, vector<1x8x384xf32>
    %301 = vector.shape_cast %300 : vector<1x8x384xf32> to vector<8x384xf32>
    %302 = vector.extract_strided_slice %2 {offsets = [0, 35], sizes = [8, 1], strides = [1, 1]} : vector<8x81xf32> to vector<8x1xf32>
    %303 = vector.broadcast %302 : vector<8x1xf32> to vector<8x384xf32>
    %304 = arith.mulf %301, %303 : vector<8x384xf32>
    %305 = arith.addf %295, %304 : vector<8x384xf32>
    %c0_81 = arith.constant 0 : index
    %c0_82 = arith.constant 0 : index
    %c96 = arith.constant 96 : index
    %306 = vector.load %arg1[%c0_81, %c0_82, %c96] : memref<1x8x600xf32, #tpu.memory_space<vmem>>, vector<1x8x384xf32>
    %307 = vector.shape_cast %306 : vector<1x8x384xf32> to vector<8x384xf32>
    %308 = vector.extract_strided_slice %2 {offsets = [0, 36], sizes = [8, 1], strides = [1, 1]} : vector<8x81xf32> to vector<8x1xf32>
    %309 = vector.broadcast %308 : vector<8x1xf32> to vector<8x384xf32>
    %310 = arith.mulf %307, %309 : vector<8x384xf32>
    %311 = arith.addf %305, %310 : vector<8x384xf32>
    %c0_83 = arith.constant 0 : index
    %c0_84 = arith.constant 0 : index
    %c97 = arith.constant 97 : index
    %312 = vector.load %arg1[%c0_83, %c0_84, %c97] : memref<1x8x600xf32, #tpu.memory_space<vmem>>, vector<1x8x384xf32>
    %313 = vector.shape_cast %312 : vector<1x8x384xf32> to vector<8x384xf32>
    %314 = vector.extract_strided_slice %2 {offsets = [0, 37], sizes = [8, 1], strides = [1, 1]} : vector<8x81xf32> to vector<8x1xf32>
    %315 = vector.broadcast %314 : vector<8x1xf32> to vector<8x384xf32>
    %316 = arith.mulf %313, %315 : vector<8x384xf32>
    %317 = arith.addf %311, %316 : vector<8x384xf32>
    %318 = vector.extract_strided_slice %3 {offsets = [0, 21], sizes = [8, 1], strides = [1, 1]} : vector<8x49xf32> to vector<8x1xf32>
    %319 = vector.broadcast %318 : vector<8x1xf32> to vector<8x384xf32>
    %320 = arith.mulf %313, %319 : vector<8x384xf32>
    %321 = arith.addf %299, %320 : vector<8x384xf32>
    %c0_85 = arith.constant 0 : index
    %c0_86 = arith.constant 0 : index
    %c98 = arith.constant 98 : index
    %322 = vector.load %arg1[%c0_85, %c0_86, %c98] : memref<1x8x600xf32, #tpu.memory_space<vmem>>, vector<1x8x384xf32>
    %323 = vector.shape_cast %322 : vector<1x8x384xf32> to vector<8x384xf32>
    %324 = vector.extract_strided_slice %2 {offsets = [0, 38], sizes = [8, 1], strides = [1, 1]} : vector<8x81xf32> to vector<8x1xf32>
    %325 = vector.broadcast %324 : vector<8x1xf32> to vector<8x384xf32>
    %326 = arith.mulf %323, %325 : vector<8x384xf32>
    %327 = arith.addf %317, %326 : vector<8x384xf32>
    %328 = vector.extract_strided_slice %3 {offsets = [0, 22], sizes = [8, 1], strides = [1, 1]} : vector<8x49xf32> to vector<8x1xf32>
    %329 = vector.broadcast %328 : vector<8x1xf32> to vector<8x384xf32>
    %330 = arith.mulf %323, %329 : vector<8x384xf32>
    %331 = arith.addf %321, %330 : vector<8x384xf32>
    %c0_87 = arith.constant 0 : index
    %c0_88 = arith.constant 0 : index
    %c99 = arith.constant 99 : index
    %332 = vector.load %arg1[%c0_87, %c0_88, %c99] : memref<1x8x600xf32, #tpu.memory_space<vmem>>, vector<1x8x384xf32>
    %333 = vector.shape_cast %332 : vector<1x8x384xf32> to vector<8x384xf32>
    %334 = vector.extract_strided_slice %2 {offsets = [0, 39], sizes = [8, 1], strides = [1, 1]} : vector<8x81xf32> to vector<8x1xf32>
    %335 = vector.broadcast %334 : vector<8x1xf32> to vector<8x384xf32>
    %336 = arith.mulf %333, %335 : vector<8x384xf32>
    %337 = arith.addf %327, %336 : vector<8x384xf32>
    %338 = vector.extract_strided_slice %3 {offsets = [0, 23], sizes = [8, 1], strides = [1, 1]} : vector<8x49xf32> to vector<8x1xf32>
    %339 = vector.broadcast %338 : vector<8x1xf32> to vector<8x384xf32>
    %340 = arith.mulf %333, %339 : vector<8x384xf32>
    %341 = arith.addf %331, %340 : vector<8x384xf32>
    %c0_89 = arith.constant 0 : index
    %c0_90 = arith.constant 0 : index
    %c100 = arith.constant 100 : index
    %342 = vector.load %arg1[%c0_89, %c0_90, %c100] : memref<1x8x600xf32, #tpu.memory_space<vmem>>, vector<1x8x384xf32>
    %343 = vector.shape_cast %342 : vector<1x8x384xf32> to vector<8x384xf32>
    %344 = vector.extract_strided_slice %2 {offsets = [0, 40], sizes = [8, 1], strides = [1, 1]} : vector<8x81xf32> to vector<8x1xf32>
    %345 = vector.broadcast %344 : vector<8x1xf32> to vector<8x384xf32>
    %346 = arith.mulf %343, %345 : vector<8x384xf32>
    %347 = arith.addf %337, %346 : vector<8x384xf32>
    %348 = vector.extract_strided_slice %3 {offsets = [0, 24], sizes = [8, 1], strides = [1, 1]} : vector<8x49xf32> to vector<8x1xf32>
    %349 = vector.broadcast %348 : vector<8x1xf32> to vector<8x384xf32>
    %350 = arith.mulf %343, %349 : vector<8x384xf32>
    %351 = arith.addf %341, %350 : vector<8x384xf32>
    %c0_91 = arith.constant 0 : index
    %c0_92 = arith.constant 0 : index
    %c101 = arith.constant 101 : index
    %352 = vector.load %arg1[%c0_91, %c0_92, %c101] : memref<1x8x600xf32, #tpu.memory_space<vmem>>, vector<1x8x384xf32>
    %353 = vector.shape_cast %352 : vector<1x8x384xf32> to vector<8x384xf32>
    %354 = vector.extract_strided_slice %2 {offsets = [0, 41], sizes = [8, 1], strides = [1, 1]} : vector<8x81xf32> to vector<8x1xf32>
    %355 = vector.broadcast %354 : vector<8x1xf32> to vector<8x384xf32>
    %356 = arith.mulf %353, %355 : vector<8x384xf32>
    %357 = arith.addf %347, %356 : vector<8x384xf32>
    %358 = vector.extract_strided_slice %3 {offsets = [0, 25], sizes = [8, 1], strides = [1, 1]} : vector<8x49xf32> to vector<8x1xf32>
    %359 = vector.broadcast %358 : vector<8x1xf32> to vector<8x384xf32>
    %360 = arith.mulf %353, %359 : vector<8x384xf32>
    %361 = arith.addf %351, %360 : vector<8x384xf32>
    %c0_93 = arith.constant 0 : index
    %c0_94 = arith.constant 0 : index
    %c102 = arith.constant 102 : index
    %362 = vector.load %arg1[%c0_93, %c0_94, %c102] : memref<1x8x600xf32, #tpu.memory_space<vmem>>, vector<1x8x384xf32>
    %363 = vector.shape_cast %362 : vector<1x8x384xf32> to vector<8x384xf32>
    %364 = vector.extract_strided_slice %2 {offsets = [0, 42], sizes = [8, 1], strides = [1, 1]} : vector<8x81xf32> to vector<8x1xf32>
    %365 = vector.broadcast %364 : vector<8x1xf32> to vector<8x384xf32>
    %366 = arith.mulf %363, %365 : vector<8x384xf32>
    %367 = arith.addf %357, %366 : vector<8x384xf32>
    %368 = vector.extract_strided_slice %3 {offsets = [0, 26], sizes = [8, 1], strides = [1, 1]} : vector<8x49xf32> to vector<8x1xf32>
    %369 = vector.broadcast %368 : vector<8x1xf32> to vector<8x384xf32>
    %370 = arith.mulf %363, %369 : vector<8x384xf32>
    %371 = arith.addf %361, %370 : vector<8x384xf32>
    %c0_95 = arith.constant 0 : index
    %c0_96 = arith.constant 0 : index
    %c103 = arith.constant 103 : index
    %372 = vector.load %arg1[%c0_95, %c0_96, %c103] : memref<1x8x600xf32, #tpu.memory_space<vmem>>, vector<1x8x384xf32>
    %373 = vector.shape_cast %372 : vector<1x8x384xf32> to vector<8x384xf32>
    %374 = vector.extract_strided_slice %2 {offsets = [0, 43], sizes = [8, 1], strides = [1, 1]} : vector<8x81xf32> to vector<8x1xf32>
    %375 = vector.broadcast %374 : vector<8x1xf32> to vector<8x384xf32>
    %376 = arith.mulf %373, %375 : vector<8x384xf32>
    %377 = arith.addf %367, %376 : vector<8x384xf32>
    %378 = vector.extract_strided_slice %3 {offsets = [0, 27], sizes = [8, 1], strides = [1, 1]} : vector<8x49xf32> to vector<8x1xf32>
    %379 = vector.broadcast %378 : vector<8x1xf32> to vector<8x384xf32>
    %380 = arith.mulf %373, %379 : vector<8x384xf32>
    %381 = arith.addf %371, %380 : vector<8x384xf32>
    %c0_97 = arith.constant 0 : index
    %c0_98 = arith.constant 0 : index
    %c104 = arith.constant 104 : index
    %382 = vector.load %arg1[%c0_97, %c0_98, %c104] : memref<1x8x600xf32, #tpu.memory_space<vmem>>, vector<1x8x384xf32>
    %383 = vector.shape_cast %382 : vector<1x8x384xf32> to vector<8x384xf32>
    %384 = vector.extract_strided_slice %2 {offsets = [0, 44], sizes = [8, 1], strides = [1, 1]} : vector<8x81xf32> to vector<8x1xf32>
    %385 = vector.broadcast %384 : vector<8x1xf32> to vector<8x384xf32>
    %386 = arith.mulf %383, %385 : vector<8x384xf32>
    %387 = arith.addf %377, %386 : vector<8x384xf32>
    %c0_99 = arith.constant 0 : index
    %c0_100 = arith.constant 0 : index
    %c120 = arith.constant 120 : index
    %388 = vector.load %arg1[%c0_99, %c0_100, %c120] : memref<1x8x600xf32, #tpu.memory_space<vmem>>, vector<1x8x384xf32>
    %389 = vector.shape_cast %388 : vector<1x8x384xf32> to vector<8x384xf32>
    %390 = vector.extract_strided_slice %2 {offsets = [0, 45], sizes = [8, 1], strides = [1, 1]} : vector<8x81xf32> to vector<8x1xf32>
    %391 = vector.broadcast %390 : vector<8x1xf32> to vector<8x384xf32>
    %392 = arith.mulf %389, %391 : vector<8x384xf32>
    %393 = arith.addf %387, %392 : vector<8x384xf32>
    %c0_101 = arith.constant 0 : index
    %c0_102 = arith.constant 0 : index
    %c121 = arith.constant 121 : index
    %394 = vector.load %arg1[%c0_101, %c0_102, %c121] : memref<1x8x600xf32, #tpu.memory_space<vmem>>, vector<1x8x384xf32>
    %395 = vector.shape_cast %394 : vector<1x8x384xf32> to vector<8x384xf32>
    %396 = vector.extract_strided_slice %2 {offsets = [0, 46], sizes = [8, 1], strides = [1, 1]} : vector<8x81xf32> to vector<8x1xf32>
    %397 = vector.broadcast %396 : vector<8x1xf32> to vector<8x384xf32>
    %398 = arith.mulf %395, %397 : vector<8x384xf32>
    %399 = arith.addf %393, %398 : vector<8x384xf32>
    %400 = vector.extract_strided_slice %3 {offsets = [0, 28], sizes = [8, 1], strides = [1, 1]} : vector<8x49xf32> to vector<8x1xf32>
    %401 = vector.broadcast %400 : vector<8x1xf32> to vector<8x384xf32>
    %402 = arith.mulf %395, %401 : vector<8x384xf32>
    %403 = arith.addf %381, %402 : vector<8x384xf32>
    %c0_103 = arith.constant 0 : index
    %c0_104 = arith.constant 0 : index
    %c122 = arith.constant 122 : index
    %404 = vector.load %arg1[%c0_103, %c0_104, %c122] : memref<1x8x600xf32, #tpu.memory_space<vmem>>, vector<1x8x384xf32>
    %405 = vector.shape_cast %404 : vector<1x8x384xf32> to vector<8x384xf32>
    %406 = vector.extract_strided_slice %2 {offsets = [0, 47], sizes = [8, 1], strides = [1, 1]} : vector<8x81xf32> to vector<8x1xf32>
    %407 = vector.broadcast %406 : vector<8x1xf32> to vector<8x384xf32>
    %408 = arith.mulf %405, %407 : vector<8x384xf32>
    %409 = arith.addf %399, %408 : vector<8x384xf32>
    %410 = vector.extract_strided_slice %3 {offsets = [0, 29], sizes = [8, 1], strides = [1, 1]} : vector<8x49xf32> to vector<8x1xf32>
    %411 = vector.broadcast %410 : vector<8x1xf32> to vector<8x384xf32>
    %412 = arith.mulf %405, %411 : vector<8x384xf32>
    %413 = arith.addf %403, %412 : vector<8x384xf32>
    %c0_105 = arith.constant 0 : index
    %c0_106 = arith.constant 0 : index
    %c123 = arith.constant 123 : index
    %414 = vector.load %arg1[%c0_105, %c0_106, %c123] : memref<1x8x600xf32, #tpu.memory_space<vmem>>, vector<1x8x384xf32>
    %415 = vector.shape_cast %414 : vector<1x8x384xf32> to vector<8x384xf32>
    %416 = vector.extract_strided_slice %2 {offsets = [0, 48], sizes = [8, 1], strides = [1, 1]} : vector<8x81xf32> to vector<8x1xf32>
    %417 = vector.broadcast %416 : vector<8x1xf32> to vector<8x384xf32>
    %418 = arith.mulf %415, %417 : vector<8x384xf32>
    %419 = arith.addf %409, %418 : vector<8x384xf32>
    %420 = vector.extract_strided_slice %3 {offsets = [0, 30], sizes = [8, 1], strides = [1, 1]} : vector<8x49xf32> to vector<8x1xf32>
    %421 = vector.broadcast %420 : vector<8x1xf32> to vector<8x384xf32>
    %422 = arith.mulf %415, %421 : vector<8x384xf32>
    %423 = arith.addf %413, %422 : vector<8x384xf32>
    %c0_107 = arith.constant 0 : index
    %c0_108 = arith.constant 0 : index
    %c124 = arith.constant 124 : index
    %424 = vector.load %arg1[%c0_107, %c0_108, %c124] : memref<1x8x600xf32, #tpu.memory_space<vmem>>, vector<1x8x384xf32>
    %425 = vector.shape_cast %424 : vector<1x8x384xf32> to vector<8x384xf32>
    %426 = vector.extract_strided_slice %2 {offsets = [0, 49], sizes = [8, 1], strides = [1, 1]} : vector<8x81xf32> to vector<8x1xf32>
    %427 = vector.broadcast %426 : vector<8x1xf32> to vector<8x384xf32>
    %428 = arith.mulf %425, %427 : vector<8x384xf32>
    %429 = arith.addf %419, %428 : vector<8x384xf32>
    %430 = vector.extract_strided_slice %3 {offsets = [0, 31], sizes = [8, 1], strides = [1, 1]} : vector<8x49xf32> to vector<8x1xf32>
    %431 = vector.broadcast %430 : vector<8x1xf32> to vector<8x384xf32>
    %432 = arith.mulf %425, %431 : vector<8x384xf32>
    %433 = arith.addf %423, %432 : vector<8x384xf32>
    %c0_109 = arith.constant 0 : index
    %c0_110 = arith.constant 0 : index
    %c125 = arith.constant 125 : index
    %434 = vector.load %arg1[%c0_109, %c0_110, %c125] : memref<1x8x600xf32, #tpu.memory_space<vmem>>, vector<1x8x384xf32>
    %435 = vector.shape_cast %434 : vector<1x8x384xf32> to vector<8x384xf32>
    %436 = vector.extract_strided_slice %2 {offsets = [0, 50], sizes = [8, 1], strides = [1, 1]} : vector<8x81xf32> to vector<8x1xf32>
    %437 = vector.broadcast %436 : vector<8x1xf32> to vector<8x384xf32>
    %438 = arith.mulf %435, %437 : vector<8x384xf32>
    %439 = arith.addf %429, %438 : vector<8x384xf32>
    %440 = vector.extract_strided_slice %3 {offsets = [0, 32], sizes = [8, 1], strides = [1, 1]} : vector<8x49xf32> to vector<8x1xf32>
    %441 = vector.broadcast %440 : vector<8x1xf32> to vector<8x384xf32>
    %442 = arith.mulf %435, %441 : vector<8x384xf32>
    %443 = arith.addf %433, %442 : vector<8x384xf32>
    %c0_111 = arith.constant 0 : index
    %c0_112 = arith.constant 0 : index
    %c126 = arith.constant 126 : index
    %444 = vector.load %arg1[%c0_111, %c0_112, %c126] : memref<1x8x600xf32, #tpu.memory_space<vmem>>, vector<1x8x384xf32>
    %445 = vector.shape_cast %444 : vector<1x8x384xf32> to vector<8x384xf32>
    %446 = vector.extract_strided_slice %2 {offsets = [0, 51], sizes = [8, 1], strides = [1, 1]} : vector<8x81xf32> to vector<8x1xf32>
    %447 = vector.broadcast %446 : vector<8x1xf32> to vector<8x384xf32>
    %448 = arith.mulf %445, %447 : vector<8x384xf32>
    %449 = arith.addf %439, %448 : vector<8x384xf32>
    %450 = vector.extract_strided_slice %3 {offsets = [0, 33], sizes = [8, 1], strides = [1, 1]} : vector<8x49xf32> to vector<8x1xf32>
    %451 = vector.broadcast %450 : vector<8x1xf32> to vector<8x384xf32>
    %452 = arith.mulf %445, %451 : vector<8x384xf32>
    %453 = arith.addf %443, %452 : vector<8x384xf32>
    %c0_113 = arith.constant 0 : index
    %c0_114 = arith.constant 0 : index
    %c127 = arith.constant 127 : index
    %454 = vector.load %arg1[%c0_113, %c0_114, %c127] : memref<1x8x600xf32, #tpu.memory_space<vmem>>, vector<1x8x384xf32>
    %455 = vector.shape_cast %454 : vector<1x8x384xf32> to vector<8x384xf32>
    %456 = vector.extract_strided_slice %2 {offsets = [0, 52], sizes = [8, 1], strides = [1, 1]} : vector<8x81xf32> to vector<8x1xf32>
    %457 = vector.broadcast %456 : vector<8x1xf32> to vector<8x384xf32>
    %458 = arith.mulf %455, %457 : vector<8x384xf32>
    %459 = arith.addf %449, %458 : vector<8x384xf32>
    %460 = vector.extract_strided_slice %3 {offsets = [0, 34], sizes = [8, 1], strides = [1, 1]} : vector<8x49xf32> to vector<8x1xf32>
    %461 = vector.broadcast %460 : vector<8x1xf32> to vector<8x384xf32>
    %462 = arith.mulf %455, %461 : vector<8x384xf32>
    %463 = arith.addf %453, %462 : vector<8x384xf32>
    %c0_115 = arith.constant 0 : index
    %c0_116 = arith.constant 0 : index
    %c128 = arith.constant 128 : index
    %464 = vector.load %arg1[%c0_115, %c0_116, %c128] : memref<1x8x600xf32, #tpu.memory_space<vmem>>, vector<1x8x384xf32>
    %465 = vector.shape_cast %464 : vector<1x8x384xf32> to vector<8x384xf32>
    %466 = vector.extract_strided_slice %2 {offsets = [0, 53], sizes = [8, 1], strides = [1, 1]} : vector<8x81xf32> to vector<8x1xf32>
    %467 = vector.broadcast %466 : vector<8x1xf32> to vector<8x384xf32>
    %468 = arith.mulf %465, %467 : vector<8x384xf32>
    %469 = arith.addf %459, %468 : vector<8x384xf32>
    %c0_117 = arith.constant 0 : index
    %c0_118 = arith.constant 0 : index
    %c144 = arith.constant 144 : index
    %470 = vector.load %arg1[%c0_117, %c0_118, %c144] : memref<1x8x600xf32, #tpu.memory_space<vmem>>, vector<1x8x384xf32>
    %471 = vector.shape_cast %470 : vector<1x8x384xf32> to vector<8x384xf32>
    %472 = vector.extract_strided_slice %2 {offsets = [0, 54], sizes = [8, 1], strides = [1, 1]} : vector<8x81xf32> to vector<8x1xf32>
    %473 = vector.broadcast %472 : vector<8x1xf32> to vector<8x384xf32>
    %474 = arith.mulf %471, %473 : vector<8x384xf32>
    %475 = arith.addf %469, %474 : vector<8x384xf32>
    %c0_119 = arith.constant 0 : index
    %c0_120 = arith.constant 0 : index
    %c145 = arith.constant 145 : index
    %476 = vector.load %arg1[%c0_119, %c0_120, %c145] : memref<1x8x600xf32, #tpu.memory_space<vmem>>, vector<1x8x384xf32>
    %477 = vector.shape_cast %476 : vector<1x8x384xf32> to vector<8x384xf32>
    %478 = vector.extract_strided_slice %2 {offsets = [0, 55], sizes = [8, 1], strides = [1, 1]} : vector<8x81xf32> to vector<8x1xf32>
    %479 = vector.broadcast %478 : vector<8x1xf32> to vector<8x384xf32>
    %480 = arith.mulf %477, %479 : vector<8x384xf32>
    %481 = arith.addf %475, %480 : vector<8x384xf32>
    %482 = vector.extract_strided_slice %3 {offsets = [0, 35], sizes = [8, 1], strides = [1, 1]} : vector<8x49xf32> to vector<8x1xf32>
    %483 = vector.broadcast %482 : vector<8x1xf32> to vector<8x384xf32>
    %484 = arith.mulf %477, %483 : vector<8x384xf32>
    %485 = arith.addf %463, %484 : vector<8x384xf32>
    %c0_121 = arith.constant 0 : index
    %c0_122 = arith.constant 0 : index
    %c146 = arith.constant 146 : index
    %486 = vector.load %arg1[%c0_121, %c0_122, %c146] : memref<1x8x600xf32, #tpu.memory_space<vmem>>, vector<1x8x384xf32>
    %487 = vector.shape_cast %486 : vector<1x8x384xf32> to vector<8x384xf32>
    %488 = vector.extract_strided_slice %2 {offsets = [0, 56], sizes = [8, 1], strides = [1, 1]} : vector<8x81xf32> to vector<8x1xf32>
    %489 = vector.broadcast %488 : vector<8x1xf32> to vector<8x384xf32>
    %490 = arith.mulf %487, %489 : vector<8x384xf32>
    %491 = arith.addf %481, %490 : vector<8x384xf32>
    %492 = vector.extract_strided_slice %3 {offsets = [0, 36], sizes = [8, 1], strides = [1, 1]} : vector<8x49xf32> to vector<8x1xf32>
    %493 = vector.broadcast %492 : vector<8x1xf32> to vector<8x384xf32>
    %494 = arith.mulf %487, %493 : vector<8x384xf32>
    %495 = arith.addf %485, %494 : vector<8x384xf32>
    %c0_123 = arith.constant 0 : index
    %c0_124 = arith.constant 0 : index
    %c147 = arith.constant 147 : index
    %496 = vector.load %arg1[%c0_123, %c0_124, %c147] : memref<1x8x600xf32, #tpu.memory_space<vmem>>, vector<1x8x384xf32>
    %497 = vector.shape_cast %496 : vector<1x8x384xf32> to vector<8x384xf32>
    %498 = vector.extract_strided_slice %2 {offsets = [0, 57], sizes = [8, 1], strides = [1, 1]} : vector<8x81xf32> to vector<8x1xf32>
    %499 = vector.broadcast %498 : vector<8x1xf32> to vector<8x384xf32>
    %500 = arith.mulf %497, %499 : vector<8x384xf32>
    %501 = arith.addf %491, %500 : vector<8x384xf32>
    %502 = vector.extract_strided_slice %3 {offsets = [0, 37], sizes = [8, 1], strides = [1, 1]} : vector<8x49xf32> to vector<8x1xf32>
    %503 = vector.broadcast %502 : vector<8x1xf32> to vector<8x384xf32>
    %504 = arith.mulf %497, %503 : vector<8x384xf32>
    %505 = arith.addf %495, %504 : vector<8x384xf32>
    %c0_125 = arith.constant 0 : index
    %c0_126 = arith.constant 0 : index
    %c148 = arith.constant 148 : index
    %506 = vector.load %arg1[%c0_125, %c0_126, %c148] : memref<1x8x600xf32, #tpu.memory_space<vmem>>, vector<1x8x384xf32>
    %507 = vector.shape_cast %506 : vector<1x8x384xf32> to vector<8x384xf32>
    %508 = vector.extract_strided_slice %2 {offsets = [0, 58], sizes = [8, 1], strides = [1, 1]} : vector<8x81xf32> to vector<8x1xf32>
    %509 = vector.broadcast %508 : vector<8x1xf32> to vector<8x384xf32>
    %510 = arith.mulf %507, %509 : vector<8x384xf32>
    %511 = arith.addf %501, %510 : vector<8x384xf32>
    %512 = vector.extract_strided_slice %3 {offsets = [0, 38], sizes = [8, 1], strides = [1, 1]} : vector<8x49xf32> to vector<8x1xf32>
    %513 = vector.broadcast %512 : vector<8x1xf32> to vector<8x384xf32>
    %514 = arith.mulf %507, %513 : vector<8x384xf32>
    %515 = arith.addf %505, %514 : vector<8x384xf32>
    %c0_127 = arith.constant 0 : index
    %c0_128 = arith.constant 0 : index
    %c149 = arith.constant 149 : index
    %516 = vector.load %arg1[%c0_127, %c0_128, %c149] : memref<1x8x600xf32, #tpu.memory_space<vmem>>, vector<1x8x384xf32>
    %517 = vector.shape_cast %516 : vector<1x8x384xf32> to vector<8x384xf32>
    %518 = vector.extract_strided_slice %2 {offsets = [0, 59], sizes = [8, 1], strides = [1, 1]} : vector<8x81xf32> to vector<8x1xf32>
    %519 = vector.broadcast %518 : vector<8x1xf32> to vector<8x384xf32>
    %520 = arith.mulf %517, %519 : vector<8x384xf32>
    %521 = arith.addf %511, %520 : vector<8x384xf32>
    %522 = vector.extract_strided_slice %3 {offsets = [0, 39], sizes = [8, 1], strides = [1, 1]} : vector<8x49xf32> to vector<8x1xf32>
    %523 = vector.broadcast %522 : vector<8x1xf32> to vector<8x384xf32>
    %524 = arith.mulf %517, %523 : vector<8x384xf32>
    %525 = arith.addf %515, %524 : vector<8x384xf32>
    %c0_129 = arith.constant 0 : index
    %c0_130 = arith.constant 0 : index
    %c150 = arith.constant 150 : index
    %526 = vector.load %arg1[%c0_129, %c0_130, %c150] : memref<1x8x600xf32, #tpu.memory_space<vmem>>, vector<1x8x384xf32>
    %527 = vector.shape_cast %526 : vector<1x8x384xf32> to vector<8x384xf32>
    %528 = vector.extract_strided_slice %2 {offsets = [0, 60], sizes = [8, 1], strides = [1, 1]} : vector<8x81xf32> to vector<8x1xf32>
    %529 = vector.broadcast %528 : vector<8x1xf32> to vector<8x384xf32>
    %530 = arith.mulf %527, %529 : vector<8x384xf32>
    %531 = arith.addf %521, %530 : vector<8x384xf32>
    %532 = vector.extract_strided_slice %3 {offsets = [0, 40], sizes = [8, 1], strides = [1, 1]} : vector<8x49xf32> to vector<8x1xf32>
    %533 = vector.broadcast %532 : vector<8x1xf32> to vector<8x384xf32>
    %534 = arith.mulf %527, %533 : vector<8x384xf32>
    %535 = arith.addf %525, %534 : vector<8x384xf32>
    %c0_131 = arith.constant 0 : index
    %c0_132 = arith.constant 0 : index
    %c151 = arith.constant 151 : index
    %536 = vector.load %arg1[%c0_131, %c0_132, %c151] : memref<1x8x600xf32, #tpu.memory_space<vmem>>, vector<1x8x384xf32>
    %537 = vector.shape_cast %536 : vector<1x8x384xf32> to vector<8x384xf32>
    %538 = vector.extract_strided_slice %2 {offsets = [0, 61], sizes = [8, 1], strides = [1, 1]} : vector<8x81xf32> to vector<8x1xf32>
    %539 = vector.broadcast %538 : vector<8x1xf32> to vector<8x384xf32>
    %540 = arith.mulf %537, %539 : vector<8x384xf32>
    %541 = arith.addf %531, %540 : vector<8x384xf32>
    %542 = vector.extract_strided_slice %3 {offsets = [0, 41], sizes = [8, 1], strides = [1, 1]} : vector<8x49xf32> to vector<8x1xf32>
    %543 = vector.broadcast %542 : vector<8x1xf32> to vector<8x384xf32>
    %544 = arith.mulf %537, %543 : vector<8x384xf32>
    %545 = arith.addf %535, %544 : vector<8x384xf32>
    %c0_133 = arith.constant 0 : index
    %c0_134 = arith.constant 0 : index
    %c152 = arith.constant 152 : index
    %546 = vector.load %arg1[%c0_133, %c0_134, %c152] : memref<1x8x600xf32, #tpu.memory_space<vmem>>, vector<1x8x384xf32>
    %547 = vector.shape_cast %546 : vector<1x8x384xf32> to vector<8x384xf32>
    %548 = vector.extract_strided_slice %2 {offsets = [0, 62], sizes = [8, 1], strides = [1, 1]} : vector<8x81xf32> to vector<8x1xf32>
    %549 = vector.broadcast %548 : vector<8x1xf32> to vector<8x384xf32>
    %550 = arith.mulf %547, %549 : vector<8x384xf32>
    %551 = arith.addf %541, %550 : vector<8x384xf32>
    %c0_135 = arith.constant 0 : index
    %c0_136 = arith.constant 0 : index
    %c168 = arith.constant 168 : index
    %552 = vector.load %arg1[%c0_135, %c0_136, %c168] : memref<1x8x600xf32, #tpu.memory_space<vmem>>, vector<1x8x384xf32>
    %553 = vector.shape_cast %552 : vector<1x8x384xf32> to vector<8x384xf32>
    %554 = vector.extract_strided_slice %2 {offsets = [0, 63], sizes = [8, 1], strides = [1, 1]} : vector<8x81xf32> to vector<8x1xf32>
    %555 = vector.broadcast %554 : vector<8x1xf32> to vector<8x384xf32>
    %556 = arith.mulf %553, %555 : vector<8x384xf32>
    %557 = arith.addf %551, %556 : vector<8x384xf32>
    %c0_137 = arith.constant 0 : index
    %c0_138 = arith.constant 0 : index
    %c169 = arith.constant 169 : index
    %558 = vector.load %arg1[%c0_137, %c0_138, %c169] : memref<1x8x600xf32, #tpu.memory_space<vmem>>, vector<1x8x384xf32>
    %559 = vector.shape_cast %558 : vector<1x8x384xf32> to vector<8x384xf32>
    %560 = vector.extract_strided_slice %2 {offsets = [0, 64], sizes = [8, 1], strides = [1, 1]} : vector<8x81xf32> to vector<8x1xf32>
    %561 = vector.broadcast %560 : vector<8x1xf32> to vector<8x384xf32>
    %562 = arith.mulf %559, %561 : vector<8x384xf32>
    %563 = arith.addf %557, %562 : vector<8x384xf32>
    %564 = vector.extract_strided_slice %3 {offsets = [0, 42], sizes = [8, 1], strides = [1, 1]} : vector<8x49xf32> to vector<8x1xf32>
    %565 = vector.broadcast %564 : vector<8x1xf32> to vector<8x384xf32>
    %566 = arith.mulf %559, %565 : vector<8x384xf32>
    %567 = arith.addf %545, %566 : vector<8x384xf32>
    %c0_139 = arith.constant 0 : index
    %c0_140 = arith.constant 0 : index
    %c170 = arith.constant 170 : index
    %568 = vector.load %arg1[%c0_139, %c0_140, %c170] : memref<1x8x600xf32, #tpu.memory_space<vmem>>, vector<1x8x384xf32>
    %569 = vector.shape_cast %568 : vector<1x8x384xf32> to vector<8x384xf32>
    %570 = vector.extract_strided_slice %2 {offsets = [0, 65], sizes = [8, 1], strides = [1, 1]} : vector<8x81xf32> to vector<8x1xf32>
    %571 = vector.broadcast %570 : vector<8x1xf32> to vector<8x384xf32>
    %572 = arith.mulf %569, %571 : vector<8x384xf32>
    %573 = arith.addf %563, %572 : vector<8x384xf32>
    %574 = vector.extract_strided_slice %3 {offsets = [0, 43], sizes = [8, 1], strides = [1, 1]} : vector<8x49xf32> to vector<8x1xf32>
    %575 = vector.broadcast %574 : vector<8x1xf32> to vector<8x384xf32>
    %576 = arith.mulf %569, %575 : vector<8x384xf32>
    %577 = arith.addf %567, %576 : vector<8x384xf32>
    %c0_141 = arith.constant 0 : index
    %c0_142 = arith.constant 0 : index
    %c171 = arith.constant 171 : index
    %578 = vector.load %arg1[%c0_141, %c0_142, %c171] : memref<1x8x600xf32, #tpu.memory_space<vmem>>, vector<1x8x384xf32>
    %579 = vector.shape_cast %578 : vector<1x8x384xf32> to vector<8x384xf32>
    %580 = vector.extract_strided_slice %2 {offsets = [0, 66], sizes = [8, 1], strides = [1, 1]} : vector<8x81xf32> to vector<8x1xf32>
    %581 = vector.broadcast %580 : vector<8x1xf32> to vector<8x384xf32>
    %582 = arith.mulf %579, %581 : vector<8x384xf32>
    %583 = arith.addf %573, %582 : vector<8x384xf32>
    %584 = vector.extract_strided_slice %3 {offsets = [0, 44], sizes = [8, 1], strides = [1, 1]} : vector<8x49xf32> to vector<8x1xf32>
    %585 = vector.broadcast %584 : vector<8x1xf32> to vector<8x384xf32>
    %586 = arith.mulf %579, %585 : vector<8x384xf32>
    %587 = arith.addf %577, %586 : vector<8x384xf32>
    %c0_143 = arith.constant 0 : index
    %c0_144 = arith.constant 0 : index
    %c172 = arith.constant 172 : index
    %588 = vector.load %arg1[%c0_143, %c0_144, %c172] : memref<1x8x600xf32, #tpu.memory_space<vmem>>, vector<1x8x384xf32>
    %589 = vector.shape_cast %588 : vector<1x8x384xf32> to vector<8x384xf32>
    %590 = vector.extract_strided_slice %2 {offsets = [0, 67], sizes = [8, 1], strides = [1, 1]} : vector<8x81xf32> to vector<8x1xf32>
    %591 = vector.broadcast %590 : vector<8x1xf32> to vector<8x384xf32>
    %592 = arith.mulf %589, %591 : vector<8x384xf32>
    %593 = arith.addf %583, %592 : vector<8x384xf32>
    %594 = vector.extract_strided_slice %3 {offsets = [0, 45], sizes = [8, 1], strides = [1, 1]} : vector<8x49xf32> to vector<8x1xf32>
    %595 = vector.broadcast %594 : vector<8x1xf32> to vector<8x384xf32>
    %596 = arith.mulf %589, %595 : vector<8x384xf32>
    %597 = arith.addf %587, %596 : vector<8x384xf32>
    %c0_145 = arith.constant 0 : index
    %c0_146 = arith.constant 0 : index
    %c173 = arith.constant 173 : index
    %598 = vector.load %arg1[%c0_145, %c0_146, %c173] : memref<1x8x600xf32, #tpu.memory_space<vmem>>, vector<1x8x384xf32>
    %599 = vector.shape_cast %598 : vector<1x8x384xf32> to vector<8x384xf32>
    %600 = vector.extract_strided_slice %2 {offsets = [0, 68], sizes = [8, 1], strides = [1, 1]} : vector<8x81xf32> to vector<8x1xf32>
    %601 = vector.broadcast %600 : vector<8x1xf32> to vector<8x384xf32>
    %602 = arith.mulf %599, %601 : vector<8x384xf32>
    %603 = arith.addf %593, %602 : vector<8x384xf32>
    %604 = vector.extract_strided_slice %3 {offsets = [0, 46], sizes = [8, 1], strides = [1, 1]} : vector<8x49xf32> to vector<8x1xf32>
    %605 = vector.broadcast %604 : vector<8x1xf32> to vector<8x384xf32>
    %606 = arith.mulf %599, %605 : vector<8x384xf32>
    %607 = arith.addf %597, %606 : vector<8x384xf32>
    %c0_147 = arith.constant 0 : index
    %c0_148 = arith.constant 0 : index
    %c174 = arith.constant 174 : index
    %608 = vector.load %arg1[%c0_147, %c0_148, %c174] : memref<1x8x600xf32, #tpu.memory_space<vmem>>, vector<1x8x384xf32>
    %609 = vector.shape_cast %608 : vector<1x8x384xf32> to vector<8x384xf32>
    %610 = vector.extract_strided_slice %2 {offsets = [0, 69], sizes = [8, 1], strides = [1, 1]} : vector<8x81xf32> to vector<8x1xf32>
    %611 = vector.broadcast %610 : vector<8x1xf32> to vector<8x384xf32>
    %612 = arith.mulf %609, %611 : vector<8x384xf32>
    %613 = arith.addf %603, %612 : vector<8x384xf32>
    %614 = vector.extract_strided_slice %3 {offsets = [0, 47], sizes = [8, 1], strides = [1, 1]} : vector<8x49xf32> to vector<8x1xf32>
    %615 = vector.broadcast %614 : vector<8x1xf32> to vector<8x384xf32>
    %616 = arith.mulf %609, %615 : vector<8x384xf32>
    %617 = arith.addf %607, %616 : vector<8x384xf32>
    %c0_149 = arith.constant 0 : index
    %c0_150 = arith.constant 0 : index
    %c175 = arith.constant 175 : index
    %618 = vector.load %arg1[%c0_149, %c0_150, %c175] : memref<1x8x600xf32, #tpu.memory_space<vmem>>, vector<1x8x384xf32>
    %619 = vector.shape_cast %618 : vector<1x8x384xf32> to vector<8x384xf32>
    %620 = vector.extract_strided_slice %2 {offsets = [0, 70], sizes = [8, 1], strides = [1, 1]} : vector<8x81xf32> to vector<8x1xf32>
    %621 = vector.broadcast %620 : vector<8x1xf32> to vector<8x384xf32>
    %622 = arith.mulf %619, %621 : vector<8x384xf32>
    %623 = arith.addf %613, %622 : vector<8x384xf32>
    %624 = vector.extract_strided_slice %3 {offsets = [0, 48], sizes = [8, 1], strides = [1, 1]} : vector<8x49xf32> to vector<8x1xf32>
    %625 = vector.broadcast %624 : vector<8x1xf32> to vector<8x384xf32>
    %626 = arith.mulf %619, %625 : vector<8x384xf32>
    %627 = arith.addf %617, %626 : vector<8x384xf32>
    %c0_151 = arith.constant 0 : index
    %c0_152 = arith.constant 0 : index
    %c176 = arith.constant 176 : index
    %628 = vector.load %arg1[%c0_151, %c0_152, %c176] : memref<1x8x600xf32, #tpu.memory_space<vmem>>, vector<1x8x384xf32>
    %629 = vector.shape_cast %628 : vector<1x8x384xf32> to vector<8x384xf32>
    %630 = vector.extract_strided_slice %2 {offsets = [0, 71], sizes = [8, 1], strides = [1, 1]} : vector<8x81xf32> to vector<8x1xf32>
    %631 = vector.broadcast %630 : vector<8x1xf32> to vector<8x384xf32>
    %632 = arith.mulf %629, %631 : vector<8x384xf32>
    %633 = arith.addf %623, %632 : vector<8x384xf32>
    %c0_153 = arith.constant 0 : index
    %c0_154 = arith.constant 0 : index
    %c192 = arith.constant 192 : index
    %634 = vector.load %arg1[%c0_153, %c0_154, %c192] : memref<1x8x600xf32, #tpu.memory_space<vmem>>, vector<1x8x384xf32>
    %635 = vector.shape_cast %634 : vector<1x8x384xf32> to vector<8x384xf32>
    %636 = vector.extract_strided_slice %2 {offsets = [0, 72], sizes = [8, 1], strides = [1, 1]} : vector<8x81xf32> to vector<8x1xf32>
    %637 = vector.broadcast %636 : vector<8x1xf32> to vector<8x384xf32>
    %638 = arith.mulf %635, %637 : vector<8x384xf32>
    %639 = arith.addf %633, %638 : vector<8x384xf32>
    %c0_155 = arith.constant 0 : index
    %c0_156 = arith.constant 0 : index
    %c193 = arith.constant 193 : index
    %640 = vector.load %arg1[%c0_155, %c0_156, %c193] : memref<1x8x600xf32, #tpu.memory_space<vmem>>, vector<1x8x384xf32>
    %641 = vector.shape_cast %640 : vector<1x8x384xf32> to vector<8x384xf32>
    %642 = vector.extract_strided_slice %2 {offsets = [0, 73], sizes = [8, 1], strides = [1, 1]} : vector<8x81xf32> to vector<8x1xf32>
    %643 = vector.broadcast %642 : vector<8x1xf32> to vector<8x384xf32>
    %644 = arith.mulf %641, %643 : vector<8x384xf32>
    %645 = arith.addf %639, %644 : vector<8x384xf32>
    %c0_157 = arith.constant 0 : index
    %c0_158 = arith.constant 0 : index
    %c194 = arith.constant 194 : index
    %646 = vector.load %arg1[%c0_157, %c0_158, %c194] : memref<1x8x600xf32, #tpu.memory_space<vmem>>, vector<1x8x384xf32>
    %647 = vector.shape_cast %646 : vector<1x8x384xf32> to vector<8x384xf32>
    %648 = vector.extract_strided_slice %2 {offsets = [0, 74], sizes = [8, 1], strides = [1, 1]} : vector<8x81xf32> to vector<8x1xf32>
    %649 = vector.broadcast %648 : vector<8x1xf32> to vector<8x384xf32>
    %650 = arith.mulf %647, %649 : vector<8x384xf32>
    %651 = arith.addf %645, %650 : vector<8x384xf32>
    %c0_159 = arith.constant 0 : index
    %c0_160 = arith.constant 0 : index
    %c195 = arith.constant 195 : index
    %652 = vector.load %arg1[%c0_159, %c0_160, %c195] : memref<1x8x600xf32, #tpu.memory_space<vmem>>, vector<1x8x384xf32>
    %653 = vector.shape_cast %652 : vector<1x8x384xf32> to vector<8x384xf32>
    %654 = vector.extract_strided_slice %2 {offsets = [0, 75], sizes = [8, 1], strides = [1, 1]} : vector<8x81xf32> to vector<8x1xf32>
    %655 = vector.broadcast %654 : vector<8x1xf32> to vector<8x384xf32>
    %656 = arith.mulf %653, %655 : vector<8x384xf32>
    %657 = arith.addf %651, %656 : vector<8x384xf32>
    %c0_161 = arith.constant 0 : index
    %c0_162 = arith.constant 0 : index
    %c196 = arith.constant 196 : index
    %658 = vector.load %arg1[%c0_161, %c0_162, %c196] : memref<1x8x600xf32, #tpu.memory_space<vmem>>, vector<1x8x384xf32>
    %659 = vector.shape_cast %658 : vector<1x8x384xf32> to vector<8x384xf32>
    %660 = vector.extract_strided_slice %2 {offsets = [0, 76], sizes = [8, 1], strides = [1, 1]} : vector<8x81xf32> to vector<8x1xf32>
    %661 = vector.broadcast %660 : vector<8x1xf32> to vector<8x384xf32>
    %662 = arith.mulf %659, %661 : vector<8x384xf32>
    %663 = arith.addf %657, %662 : vector<8x384xf32>
    %c0_163 = arith.constant 0 : index
    %c0_164 = arith.constant 0 : index
    %c197 = arith.constant 197 : index
    %664 = vector.load %arg1[%c0_163, %c0_164, %c197] : memref<1x8x600xf32, #tpu.memory_space<vmem>>, vector<1x8x384xf32>
    %665 = vector.shape_cast %664 : vector<1x8x384xf32> to vector<8x384xf32>
    %666 = vector.extract_strided_slice %2 {offsets = [0, 77], sizes = [8, 1], strides = [1, 1]} : vector<8x81xf32> to vector<8x1xf32>
    %667 = vector.broadcast %666 : vector<8x1xf32> to vector<8x384xf32>
    %668 = arith.mulf %665, %667 : vector<8x384xf32>
    %669 = arith.addf %663, %668 : vector<8x384xf32>
    %c0_165 = arith.constant 0 : index
    %c0_166 = arith.constant 0 : index
    %c198 = arith.constant 198 : index
    %670 = vector.load %arg1[%c0_165, %c0_166, %c198] : memref<1x8x600xf32, #tpu.memory_space<vmem>>, vector<1x8x384xf32>
    %671 = vector.shape_cast %670 : vector<1x8x384xf32> to vector<8x384xf32>
    %672 = vector.extract_strided_slice %2 {offsets = [0, 78], sizes = [8, 1], strides = [1, 1]} : vector<8x81xf32> to vector<8x1xf32>
    %673 = vector.broadcast %672 : vector<8x1xf32> to vector<8x384xf32>
    %674 = arith.mulf %671, %673 : vector<8x384xf32>
    %675 = arith.addf %669, %674 : vector<8x384xf32>
    %c0_167 = arith.constant 0 : index
    %c0_168 = arith.constant 0 : index
    %c199 = arith.constant 199 : index
    %676 = vector.load %arg1[%c0_167, %c0_168, %c199] : memref<1x8x600xf32, #tpu.memory_space<vmem>>, vector<1x8x384xf32>
    %677 = vector.shape_cast %676 : vector<1x8x384xf32> to vector<8x384xf32>
    %678 = vector.extract_strided_slice %2 {offsets = [0, 79], sizes = [8, 1], strides = [1, 1]} : vector<8x81xf32> to vector<8x1xf32>
    %679 = vector.broadcast %678 : vector<8x1xf32> to vector<8x384xf32>
    %680 = arith.mulf %677, %679 : vector<8x384xf32>
    %681 = arith.addf %675, %680 : vector<8x384xf32>
    %c0_169 = arith.constant 0 : index
    %c0_170 = arith.constant 0 : index
    %c200 = arith.constant 200 : index
    %682 = vector.load %arg1[%c0_169, %c0_170, %c200] : memref<1x8x600xf32, #tpu.memory_space<vmem>>, vector<1x8x384xf32>
    %683 = vector.shape_cast %682 : vector<1x8x384xf32> to vector<8x384xf32>
    %684 = vector.extract_strided_slice %2 {offsets = [0, 80], sizes = [8, 1], strides = [1, 1]} : vector<8x81xf32> to vector<8x1xf32>
    %685 = vector.broadcast %684 : vector<8x1xf32> to vector<8x384xf32>
    %686 = arith.mulf %683, %685 : vector<8x384xf32>
    %687 = arith.addf %681, %686 : vector<8x384xf32>
    %c0_171 = arith.constant 0 : index
    %c0_172 = arith.constant 0 : index
    %688 = vector.load %arg3[%c0_171, %c0_172] : memref<8x25xf32, #tpu.memory_space<vmem>>, vector<8x25xf32>
    %c0_173 = arith.constant 0 : index
    %c0_174 = arith.constant 0 : index
    %689 = vector.load %arg2[%c0_173, %c0_174] : memref<8x9xf32, #tpu.memory_space<vmem>>, vector<8x9xf32>
    %cst_175 = arith.constant 0.000000e+00 : f32
    %690 = vector.broadcast %cst_175 : f32 to vector<8x384xf32>
    %cst_176 = arith.constant 0.000000e+00 : f32
    %691 = vector.broadcast %cst_176 : f32 to vector<8x384xf32>
    %c0_177 = arith.constant 0 : index
    %c0_178 = arith.constant 0 : index
    %c50_179 = arith.constant 50 : index
    %692 = vector.load %arg1[%c0_177, %c0_178, %c50_179] : memref<1x8x600xf32, #tpu.memory_space<vmem>>, vector<1x8x384xf32>
    %693 = vector.shape_cast %692 : vector<1x8x384xf32> to vector<8x384xf32>
    %694 = vector.extract_strided_slice %688 {offsets = [0, 0], sizes = [8, 1], strides = [1, 1]} : vector<8x25xf32> to vector<8x1xf32>
    %695 = vector.broadcast %694 : vector<8x1xf32> to vector<8x384xf32>
    %696 = arith.mulf %693, %695 : vector<8x384xf32>
    %697 = arith.addf %690, %696 : vector<8x384xf32>
    %c0_180 = arith.constant 0 : index
    %c0_181 = arith.constant 0 : index
    %c51_182 = arith.constant 51 : index
    %698 = vector.load %arg1[%c0_180, %c0_181, %c51_182] : memref<1x8x600xf32, #tpu.memory_space<vmem>>, vector<1x8x384xf32>
    %699 = vector.shape_cast %698 : vector<1x8x384xf32> to vector<8x384xf32>
    %700 = vector.extract_strided_slice %688 {offsets = [0, 1], sizes = [8, 1], strides = [1, 1]} : vector<8x25xf32> to vector<8x1xf32>
    %701 = vector.broadcast %700 : vector<8x1xf32> to vector<8x384xf32>
    %702 = arith.mulf %699, %701 : vector<8x384xf32>
    %703 = arith.addf %697, %702 : vector<8x384xf32>
    %c0_183 = arith.constant 0 : index
    %c0_184 = arith.constant 0 : index
    %c52_185 = arith.constant 52 : index
    %704 = vector.load %arg1[%c0_183, %c0_184, %c52_185] : memref<1x8x600xf32, #tpu.memory_space<vmem>>, vector<1x8x384xf32>
    %705 = vector.shape_cast %704 : vector<1x8x384xf32> to vector<8x384xf32>
    %706 = vector.extract_strided_slice %688 {offsets = [0, 2], sizes = [8, 1], strides = [1, 1]} : vector<8x25xf32> to vector<8x1xf32>
    %707 = vector.broadcast %706 : vector<8x1xf32> to vector<8x384xf32>
    %708 = arith.mulf %705, %707 : vector<8x384xf32>
    %709 = arith.addf %703, %708 : vector<8x384xf32>
    %c0_186 = arith.constant 0 : index
    %c0_187 = arith.constant 0 : index
    %c53_188 = arith.constant 53 : index
    %710 = vector.load %arg1[%c0_186, %c0_187, %c53_188] : memref<1x8x600xf32, #tpu.memory_space<vmem>>, vector<1x8x384xf32>
    %711 = vector.shape_cast %710 : vector<1x8x384xf32> to vector<8x384xf32>
    %712 = vector.extract_strided_slice %688 {offsets = [0, 3], sizes = [8, 1], strides = [1, 1]} : vector<8x25xf32> to vector<8x1xf32>
    %713 = vector.broadcast %712 : vector<8x1xf32> to vector<8x384xf32>
    %714 = arith.mulf %711, %713 : vector<8x384xf32>
    %715 = arith.addf %709, %714 : vector<8x384xf32>
    %c0_189 = arith.constant 0 : index
    %c0_190 = arith.constant 0 : index
    %c54_191 = arith.constant 54 : index
    %716 = vector.load %arg1[%c0_189, %c0_190, %c54_191] : memref<1x8x600xf32, #tpu.memory_space<vmem>>, vector<1x8x384xf32>
    %717 = vector.shape_cast %716 : vector<1x8x384xf32> to vector<8x384xf32>
    %718 = vector.extract_strided_slice %688 {offsets = [0, 4], sizes = [8, 1], strides = [1, 1]} : vector<8x25xf32> to vector<8x1xf32>
    %719 = vector.broadcast %718 : vector<8x1xf32> to vector<8x384xf32>
    %720 = arith.mulf %717, %719 : vector<8x384xf32>
    %721 = arith.addf %715, %720 : vector<8x384xf32>
    %c0_192 = arith.constant 0 : index
    %c0_193 = arith.constant 0 : index
    %c74_194 = arith.constant 74 : index
    %722 = vector.load %arg1[%c0_192, %c0_193, %c74_194] : memref<1x8x600xf32, #tpu.memory_space<vmem>>, vector<1x8x384xf32>
    %723 = vector.shape_cast %722 : vector<1x8x384xf32> to vector<8x384xf32>
    %724 = vector.extract_strided_slice %688 {offsets = [0, 5], sizes = [8, 1], strides = [1, 1]} : vector<8x25xf32> to vector<8x1xf32>
    %725 = vector.broadcast %724 : vector<8x1xf32> to vector<8x384xf32>
    %726 = arith.mulf %723, %725 : vector<8x384xf32>
    %727 = arith.addf %721, %726 : vector<8x384xf32>
    %c0_195 = arith.constant 0 : index
    %c0_196 = arith.constant 0 : index
    %c75_197 = arith.constant 75 : index
    %728 = vector.load %arg1[%c0_195, %c0_196, %c75_197] : memref<1x8x600xf32, #tpu.memory_space<vmem>>, vector<1x8x384xf32>
    %729 = vector.shape_cast %728 : vector<1x8x384xf32> to vector<8x384xf32>
    %730 = vector.extract_strided_slice %688 {offsets = [0, 6], sizes = [8, 1], strides = [1, 1]} : vector<8x25xf32> to vector<8x1xf32>
    %731 = vector.broadcast %730 : vector<8x1xf32> to vector<8x384xf32>
    %732 = arith.mulf %729, %731 : vector<8x384xf32>
    %733 = arith.addf %727, %732 : vector<8x384xf32>
    %734 = vector.extract_strided_slice %689 {offsets = [0, 0], sizes = [8, 1], strides = [1, 1]} : vector<8x9xf32> to vector<8x1xf32>
    %735 = vector.broadcast %734 : vector<8x1xf32> to vector<8x384xf32>
    %736 = arith.mulf %729, %735 : vector<8x384xf32>
    %737 = arith.addf %691, %736 : vector<8x384xf32>
    %c0_198 = arith.constant 0 : index
    %c0_199 = arith.constant 0 : index
    %c76_200 = arith.constant 76 : index
    %738 = vector.load %arg1[%c0_198, %c0_199, %c76_200] : memref<1x8x600xf32, #tpu.memory_space<vmem>>, vector<1x8x384xf32>
    %739 = vector.shape_cast %738 : vector<1x8x384xf32> to vector<8x384xf32>
    %740 = vector.extract_strided_slice %688 {offsets = [0, 7], sizes = [8, 1], strides = [1, 1]} : vector<8x25xf32> to vector<8x1xf32>
    %741 = vector.broadcast %740 : vector<8x1xf32> to vector<8x384xf32>
    %742 = arith.mulf %739, %741 : vector<8x384xf32>
    %743 = arith.addf %733, %742 : vector<8x384xf32>
    %744 = vector.extract_strided_slice %689 {offsets = [0, 1], sizes = [8, 1], strides = [1, 1]} : vector<8x9xf32> to vector<8x1xf32>
    %745 = vector.broadcast %744 : vector<8x1xf32> to vector<8x384xf32>
    %746 = arith.mulf %739, %745 : vector<8x384xf32>
    %747 = arith.addf %737, %746 : vector<8x384xf32>
    %c0_201 = arith.constant 0 : index
    %c0_202 = arith.constant 0 : index
    %c77_203 = arith.constant 77 : index
    %748 = vector.load %arg1[%c0_201, %c0_202, %c77_203] : memref<1x8x600xf32, #tpu.memory_space<vmem>>, vector<1x8x384xf32>
    %749 = vector.shape_cast %748 : vector<1x8x384xf32> to vector<8x384xf32>
    %750 = vector.extract_strided_slice %688 {offsets = [0, 8], sizes = [8, 1], strides = [1, 1]} : vector<8x25xf32> to vector<8x1xf32>
    %751 = vector.broadcast %750 : vector<8x1xf32> to vector<8x384xf32>
    %752 = arith.mulf %749, %751 : vector<8x384xf32>
    %753 = arith.addf %743, %752 : vector<8x384xf32>
    %754 = vector.extract_strided_slice %689 {offsets = [0, 2], sizes = [8, 1], strides = [1, 1]} : vector<8x9xf32> to vector<8x1xf32>
    %755 = vector.broadcast %754 : vector<8x1xf32> to vector<8x384xf32>
    %756 = arith.mulf %749, %755 : vector<8x384xf32>
    %757 = arith.addf %747, %756 : vector<8x384xf32>
    %c0_204 = arith.constant 0 : index
    %c0_205 = arith.constant 0 : index
    %c78_206 = arith.constant 78 : index
    %758 = vector.load %arg1[%c0_204, %c0_205, %c78_206] : memref<1x8x600xf32, #tpu.memory_space<vmem>>, vector<1x8x384xf32>
    %759 = vector.shape_cast %758 : vector<1x8x384xf32> to vector<8x384xf32>
    %760 = vector.extract_strided_slice %688 {offsets = [0, 9], sizes = [8, 1], strides = [1, 1]} : vector<8x25xf32> to vector<8x1xf32>
    %761 = vector.broadcast %760 : vector<8x1xf32> to vector<8x384xf32>
    %762 = arith.mulf %759, %761 : vector<8x384xf32>
    %763 = arith.addf %753, %762 : vector<8x384xf32>
    %c0_207 = arith.constant 0 : index
    %c0_208 = arith.constant 0 : index
    %c98_209 = arith.constant 98 : index
    %764 = vector.load %arg1[%c0_207, %c0_208, %c98_209] : memref<1x8x600xf32, #tpu.memory_space<vmem>>, vector<1x8x384xf32>
    %765 = vector.shape_cast %764 : vector<1x8x384xf32> to vector<8x384xf32>
    %766 = vector.extract_strided_slice %688 {offsets = [0, 10], sizes = [8, 1], strides = [1, 1]} : vector<8x25xf32> to vector<8x1xf32>
    %767 = vector.broadcast %766 : vector<8x1xf32> to vector<8x384xf32>
    %768 = arith.mulf %765, %767 : vector<8x384xf32>
    %769 = arith.addf %763, %768 : vector<8x384xf32>
    %c0_210 = arith.constant 0 : index
    %c0_211 = arith.constant 0 : index
    %c99_212 = arith.constant 99 : index
    %770 = vector.load %arg1[%c0_210, %c0_211, %c99_212] : memref<1x8x600xf32, #tpu.memory_space<vmem>>, vector<1x8x384xf32>
    %771 = vector.shape_cast %770 : vector<1x8x384xf32> to vector<8x384xf32>
    %772 = vector.extract_strided_slice %688 {offsets = [0, 11], sizes = [8, 1], strides = [1, 1]} : vector<8x25xf32> to vector<8x1xf32>
    %773 = vector.broadcast %772 : vector<8x1xf32> to vector<8x384xf32>
    %774 = arith.mulf %771, %773 : vector<8x384xf32>
    %775 = arith.addf %769, %774 : vector<8x384xf32>
    %776 = vector.extract_strided_slice %689 {offsets = [0, 3], sizes = [8, 1], strides = [1, 1]} : vector<8x9xf32> to vector<8x1xf32>
    %777 = vector.broadcast %776 : vector<8x1xf32> to vector<8x384xf32>
    %778 = arith.mulf %771, %777 : vector<8x384xf32>
    %779 = arith.addf %757, %778 : vector<8x384xf32>
    %c0_213 = arith.constant 0 : index
    %c0_214 = arith.constant 0 : index
    %c100_215 = arith.constant 100 : index
    %780 = vector.load %arg1[%c0_213, %c0_214, %c100_215] : memref<1x8x600xf32, #tpu.memory_space<vmem>>, vector<1x8x384xf32>
    %781 = vector.shape_cast %780 : vector<1x8x384xf32> to vector<8x384xf32>
    %782 = vector.extract_strided_slice %688 {offsets = [0, 12], sizes = [8, 1], strides = [1, 1]} : vector<8x25xf32> to vector<8x1xf32>
    %783 = vector.broadcast %782 : vector<8x1xf32> to vector<8x384xf32>
    %784 = arith.mulf %781, %783 : vector<8x384xf32>
    %785 = arith.addf %775, %784 : vector<8x384xf32>
    %786 = vector.extract_strided_slice %689 {offsets = [0, 4], sizes = [8, 1], strides = [1, 1]} : vector<8x9xf32> to vector<8x1xf32>
    %787 = vector.broadcast %786 : vector<8x1xf32> to vector<8x384xf32>
    %788 = arith.mulf %781, %787 : vector<8x384xf32>
    %789 = arith.addf %779, %788 : vector<8x384xf32>
    %c0_216 = arith.constant 0 : index
    %c0_217 = arith.constant 0 : index
    %c101_218 = arith.constant 101 : index
    %790 = vector.load %arg1[%c0_216, %c0_217, %c101_218] : memref<1x8x600xf32, #tpu.memory_space<vmem>>, vector<1x8x384xf32>
    %791 = vector.shape_cast %790 : vector<1x8x384xf32> to vector<8x384xf32>
    %792 = vector.extract_strided_slice %688 {offsets = [0, 13], sizes = [8, 1], strides = [1, 1]} : vector<8x25xf32> to vector<8x1xf32>
    %793 = vector.broadcast %792 : vector<8x1xf32> to vector<8x384xf32>
    %794 = arith.mulf %791, %793 : vector<8x384xf32>
    %795 = arith.addf %785, %794 : vector<8x384xf32>
    %796 = vector.extract_strided_slice %689 {offsets = [0, 5], sizes = [8, 1], strides = [1, 1]} : vector<8x9xf32> to vector<8x1xf32>
    %797 = vector.broadcast %796 : vector<8x1xf32> to vector<8x384xf32>
    %798 = arith.mulf %791, %797 : vector<8x384xf32>
    %799 = arith.addf %789, %798 : vector<8x384xf32>
    %c0_219 = arith.constant 0 : index
    %c0_220 = arith.constant 0 : index
    %c102_221 = arith.constant 102 : index
    %800 = vector.load %arg1[%c0_219, %c0_220, %c102_221] : memref<1x8x600xf32, #tpu.memory_space<vmem>>, vector<1x8x384xf32>
    %801 = vector.shape_cast %800 : vector<1x8x384xf32> to vector<8x384xf32>
    %802 = vector.extract_strided_slice %688 {offsets = [0, 14], sizes = [8, 1], strides = [1, 1]} : vector<8x25xf32> to vector<8x1xf32>
    %803 = vector.broadcast %802 : vector<8x1xf32> to vector<8x384xf32>
    %804 = arith.mulf %801, %803 : vector<8x384xf32>
    %805 = arith.addf %795, %804 : vector<8x384xf32>
    %c0_222 = arith.constant 0 : index
    %c0_223 = arith.constant 0 : index
    %c122_224 = arith.constant 122 : index
    %806 = vector.load %arg1[%c0_222, %c0_223, %c122_224] : memref<1x8x600xf32, #tpu.memory_space<vmem>>, vector<1x8x384xf32>
    %807 = vector.shape_cast %806 : vector<1x8x384xf32> to vector<8x384xf32>
    %808 = vector.extract_strided_slice %688 {offsets = [0, 15], sizes = [8, 1], strides = [1, 1]} : vector<8x25xf32> to vector<8x1xf32>
    %809 = vector.broadcast %808 : vector<8x1xf32> to vector<8x384xf32>
    %810 = arith.mulf %807, %809 : vector<8x384xf32>
    %811 = arith.addf %805, %810 : vector<8x384xf32>
    %c0_225 = arith.constant 0 : index
    %c0_226 = arith.constant 0 : index
    %c123_227 = arith.constant 123 : index
    %812 = vector.load %arg1[%c0_225, %c0_226, %c123_227] : memref<1x8x600xf32, #tpu.memory_space<vmem>>, vector<1x8x384xf32>
    %813 = vector.shape_cast %812 : vector<1x8x384xf32> to vector<8x384xf32>
    %814 = vector.extract_strided_slice %688 {offsets = [0, 16], sizes = [8, 1], strides = [1, 1]} : vector<8x25xf32> to vector<8x1xf32>
    %815 = vector.broadcast %814 : vector<8x1xf32> to vector<8x384xf32>
    %816 = arith.mulf %813, %815 : vector<8x384xf32>
    %817 = arith.addf %811, %816 : vector<8x384xf32>
    %818 = vector.extract_strided_slice %689 {offsets = [0, 6], sizes = [8, 1], strides = [1, 1]} : vector<8x9xf32> to vector<8x1xf32>
    %819 = vector.broadcast %818 : vector<8x1xf32> to vector<8x384xf32>
    %820 = arith.mulf %813, %819 : vector<8x384xf32>
    %821 = arith.addf %799, %820 : vector<8x384xf32>
    %c0_228 = arith.constant 0 : index
    %c0_229 = arith.constant 0 : index
    %c124_230 = arith.constant 124 : index
    %822 = vector.load %arg1[%c0_228, %c0_229, %c124_230] : memref<1x8x600xf32, #tpu.memory_space<vmem>>, vector<1x8x384xf32>
    %823 = vector.shape_cast %822 : vector<1x8x384xf32> to vector<8x384xf32>
    %824 = vector.extract_strided_slice %688 {offsets = [0, 17], sizes = [8, 1], strides = [1, 1]} : vector<8x25xf32> to vector<8x1xf32>
    %825 = vector.broadcast %824 : vector<8x1xf32> to vector<8x384xf32>
    %826 = arith.mulf %823, %825 : vector<8x384xf32>
    %827 = arith.addf %817, %826 : vector<8x384xf32>
    %828 = vector.extract_strided_slice %689 {offsets = [0, 7], sizes = [8, 1], strides = [1, 1]} : vector<8x9xf32> to vector<8x1xf32>
    %829 = vector.broadcast %828 : vector<8x1xf32> to vector<8x384xf32>
    %830 = arith.mulf %823, %829 : vector<8x384xf32>
    %831 = arith.addf %821, %830 : vector<8x384xf32>
    %c0_231 = arith.constant 0 : index
    %c0_232 = arith.constant 0 : index
    %c125_233 = arith.constant 125 : index
    %832 = vector.load %arg1[%c0_231, %c0_232, %c125_233] : memref<1x8x600xf32, #tpu.memory_space<vmem>>, vector<1x8x384xf32>
    %833 = vector.shape_cast %832 : vector<1x8x384xf32> to vector<8x384xf32>
    %834 = vector.extract_strided_slice %688 {offsets = [0, 18], sizes = [8, 1], strides = [1, 1]} : vector<8x25xf32> to vector<8x1xf32>
    %835 = vector.broadcast %834 : vector<8x1xf32> to vector<8x384xf32>
    %836 = arith.mulf %833, %835 : vector<8x384xf32>
    %837 = arith.addf %827, %836 : vector<8x384xf32>
    %838 = vector.extract_strided_slice %689 {offsets = [0, 8], sizes = [8, 1], strides = [1, 1]} : vector<8x9xf32> to vector<8x1xf32>
    %839 = vector.broadcast %838 : vector<8x1xf32> to vector<8x384xf32>
    %840 = arith.mulf %833, %839 : vector<8x384xf32>
    %841 = arith.addf %831, %840 : vector<8x384xf32>
    %c0_234 = arith.constant 0 : index
    %c0_235 = arith.constant 0 : index
    %c126_236 = arith.constant 126 : index
    %842 = vector.load %arg1[%c0_234, %c0_235, %c126_236] : memref<1x8x600xf32, #tpu.memory_space<vmem>>, vector<1x8x384xf32>
    %843 = vector.shape_cast %842 : vector<1x8x384xf32> to vector<8x384xf32>
    %844 = vector.extract_strided_slice %688 {offsets = [0, 19], sizes = [8, 1], strides = [1, 1]} : vector<8x25xf32> to vector<8x1xf32>
    %845 = vector.broadcast %844 : vector<8x1xf32> to vector<8x384xf32>
    %846 = arith.mulf %843, %845 : vector<8x384xf32>
    %847 = arith.addf %837, %846 : vector<8x384xf32>
    %c0_237 = arith.constant 0 : index
    %c0_238 = arith.constant 0 : index
    %c146_239 = arith.constant 146 : index
    %848 = vector.load %arg1[%c0_237, %c0_238, %c146_239] : memref<1x8x600xf32, #tpu.memory_space<vmem>>, vector<1x8x384xf32>
    %849 = vector.shape_cast %848 : vector<1x8x384xf32> to vector<8x384xf32>
    %850 = vector.extract_strided_slice %688 {offsets = [0, 20], sizes = [8, 1], strides = [1, 1]} : vector<8x25xf32> to vector<8x1xf32>
    %851 = vector.broadcast %850 : vector<8x1xf32> to vector<8x384xf32>
    %852 = arith.mulf %849, %851 : vector<8x384xf32>
    %853 = arith.addf %847, %852 : vector<8x384xf32>
    %c0_240 = arith.constant 0 : index
    %c0_241 = arith.constant 0 : index
    %c147_242 = arith.constant 147 : index
    %854 = vector.load %arg1[%c0_240, %c0_241, %c147_242] : memref<1x8x600xf32, #tpu.memory_space<vmem>>, vector<1x8x384xf32>
    %855 = vector.shape_cast %854 : vector<1x8x384xf32> to vector<8x384xf32>
    %856 = vector.extract_strided_slice %688 {offsets = [0, 21], sizes = [8, 1], strides = [1, 1]} : vector<8x25xf32> to vector<8x1xf32>
    %857 = vector.broadcast %856 : vector<8x1xf32> to vector<8x384xf32>
    %858 = arith.mulf %855, %857 : vector<8x384xf32>
    %859 = arith.addf %853, %858 : vector<8x384xf32>
    %c0_243 = arith.constant 0 : index
    %c0_244 = arith.constant 0 : index
    %c148_245 = arith.constant 148 : index
    %860 = vector.load %arg1[%c0_243, %c0_244, %c148_245] : memref<1x8x600xf32, #tpu.memory_space<vmem>>, vector<1x8x384xf32>
    %861 = vector.shape_cast %860 : vector<1x8x384xf32> to vector<8x384xf32>
    %862 = vector.extract_strided_slice %688 {offsets = [0, 22], sizes = [8, 1], strides = [1, 1]} : vector<8x25xf32> to vector<8x1xf32>
    %863 = vector.broadcast %862 : vector<8x1xf32> to vector<8x384xf32>
    %864 = arith.mulf %861, %863 : vector<8x384xf32>
    %865 = arith.addf %859, %864 : vector<8x384xf32>
    %c0_246 = arith.constant 0 : index
    %c0_247 = arith.constant 0 : index
    %c149_248 = arith.constant 149 : index
    %866 = vector.load %arg1[%c0_246, %c0_247, %c149_248] : memref<1x8x600xf32, #tpu.memory_space<vmem>>, vector<1x8x384xf32>
    %867 = vector.shape_cast %866 : vector<1x8x384xf32> to vector<8x384xf32>
    %868 = vector.extract_strided_slice %688 {offsets = [0, 23], sizes = [8, 1], strides = [1, 1]} : vector<8x25xf32> to vector<8x1xf32>
    %869 = vector.broadcast %868 : vector<8x1xf32> to vector<8x384xf32>
    %870 = arith.mulf %867, %869 : vector<8x384xf32>
    %871 = arith.addf %865, %870 : vector<8x384xf32>
    %c0_249 = arith.constant 0 : index
    %c0_250 = arith.constant 0 : index
    %c150_251 = arith.constant 150 : index
    %872 = vector.load %arg1[%c0_249, %c0_250, %c150_251] : memref<1x8x600xf32, #tpu.memory_space<vmem>>, vector<1x8x384xf32>
    %873 = vector.shape_cast %872 : vector<1x8x384xf32> to vector<8x384xf32>
    %874 = vector.extract_strided_slice %688 {offsets = [0, 24], sizes = [8, 1], strides = [1, 1]} : vector<8x25xf32> to vector<8x1xf32>
    %875 = vector.broadcast %874 : vector<8x1xf32> to vector<8x384xf32>
    %876 = arith.mulf %873, %875 : vector<8x384xf32>
    %877 = arith.addf %871, %876 : vector<8x384xf32>
    %cst_252 = arith.constant 0.000000e+00 : f32
    %878 = vector.broadcast %cst_252 : f32 to vector<8x384xf32>
    %c0_253 = arith.constant 0 : index
    %c0_254 = arith.constant 0 : index
    %879 = vector.load %arg6[%c0_253, %c0_254] : memref<8x4xf32, #tpu.memory_space<vmem>>, vector<8x1xf32>
    %880 = vector.broadcast %879 : vector<8x1xf32> to vector<8x384xf32>
    %881 = arith.addf %841, %880 : vector<8x384xf32>
    %882 = vector.broadcast %0 : vector<1x384xf32> to vector<8x384xf32>
    %883 = arith.mulf %881, %882 : vector<8x384xf32>
    %cst_255 = arith.constant dense<0.000000e+00> : vector<8xf32>
    %884 = vector.multi_reduction <add>, %883, %cst_255 [1] : vector<8x384xf32> to vector<8xf32>
    %885 = vector.shape_cast %884 : vector<8xf32> to vector<8x1xf32>
    %886 = arith.mulf %883, %881 : vector<8x384xf32>
    %cst_256 = arith.constant dense<0.000000e+00> : vector<8xf32>
    %887 = vector.multi_reduction <add>, %886, %cst_256 [1] : vector<8x384xf32> to vector<8xf32>
    %888 = vector.shape_cast %887 : vector<8xf32> to vector<8x1xf32>
    %cst_257 = arith.constant dense<0.000000e+00> : vector<8x1xf32>
    %889 = tpu.matmul %1, %885, %cst_257 {dimension_numbers = #tpu.dot_dimension_numbers<[1], [0], [0], [1], [0, 0, 1, 1], [], []>} : vector<8x8xf32>, vector<8x1xf32>, vector<8x1xf32> -> vector<8x1xf32>
    %cst_258 = arith.constant dense<0.000000e+00> : vector<8x1xf32>
    %890 = tpu.matmul %1, %888, %cst_258 {dimension_numbers = #tpu.dot_dimension_numbers<[1], [0], [0], [1], [0, 0, 1, 1], [], []>} : vector<8x8xf32>, vector<8x1xf32>, vector<8x1xf32> -> vector<8x1xf32>
    %891 = arith.mulf %889, %889 : vector<8x1xf32>
    %892 = arith.subf %890, %891 : vector<8x1xf32>
    %cst_259 = arith.constant 9.99999974E-6 : f32
    %893 = vector.broadcast %cst_259 : f32 to vector<8x1xf32>
    %894 = arith.addf %892, %893 : vector<8x1xf32>
    %895 = math.rsqrt %894 : vector<8x1xf32>
    %c0_260 = arith.constant 0 : index
    %c0_261 = arith.constant 0 : index
    %896 = vector.load %arg7[%c0_260, %c0_261] : memref<8x4xf32, #tpu.memory_space<vmem>>, vector<8x1xf32>
    %897 = arith.mulf %895, %896 : vector<8x1xf32>
    %c0_262 = arith.constant 0 : index
    %c0_263 = arith.constant 0 : index
    %898 = vector.load %arg8[%c0_262, %c0_263] : memref<8x4xf32, #tpu.memory_space<vmem>>, vector<8x1xf32>
    %899 = arith.mulf %889, %897 : vector<8x1xf32>
    %900 = arith.subf %898, %899 : vector<8x1xf32>
    %901 = vector.broadcast %897 : vector<8x1xf32> to vector<8x384xf32>
    %902 = arith.mulf %881, %901 : vector<8x384xf32>
    %903 = vector.broadcast %900 : vector<8x1xf32> to vector<8x384xf32>
    %904 = arith.addf %902, %903 : vector<8x384xf32>
    %905 = arith.negf %904 : vector<8x384xf32>
    %906 = math.exp %905 : vector<8x384xf32>
    %cst_264 = arith.constant 1.000000e+00 : f32
    %907 = vector.broadcast %cst_264 : f32 to vector<8x384xf32>
    %908 = arith.addf %907, %906 : vector<8x384xf32>
    %909 = arith.divf %907, %908 : vector<8x384xf32>
    %910 = arith.addf %878, %909 : vector<8x384xf32>
    %c0_265 = arith.constant 0 : index
    %c1_266 = arith.constant 1 : index
    %911 = vector.load %arg6[%c0_265, %c1_266] : memref<8x4xf32, #tpu.memory_space<vmem>>, vector<8x1xf32>
    %912 = vector.broadcast %911 : vector<8x1xf32> to vector<8x384xf32>
    %913 = arith.addf %877, %912 : vector<8x384xf32>
    %914 = vector.broadcast %0 : vector<1x384xf32> to vector<8x384xf32>
    %915 = arith.mulf %913, %914 : vector<8x384xf32>
    %cst_267 = arith.constant dense<0.000000e+00> : vector<8xf32>
    %916 = vector.multi_reduction <add>, %915, %cst_267 [1] : vector<8x384xf32> to vector<8xf32>
    %917 = vector.shape_cast %916 : vector<8xf32> to vector<8x1xf32>
    %918 = arith.mulf %915, %913 : vector<8x384xf32>
    %cst_268 = arith.constant dense<0.000000e+00> : vector<8xf32>
    %919 = vector.multi_reduction <add>, %918, %cst_268 [1] : vector<8x384xf32> to vector<8xf32>
    %920 = vector.shape_cast %919 : vector<8xf32> to vector<8x1xf32>
    %cst_269 = arith.constant dense<0.000000e+00> : vector<8x1xf32>
    %921 = tpu.matmul %1, %917, %cst_269 {dimension_numbers = #tpu.dot_dimension_numbers<[1], [0], [0], [1], [0, 0, 1, 1], [], []>} : vector<8x8xf32>, vector<8x1xf32>, vector<8x1xf32> -> vector<8x1xf32>
    %cst_270 = arith.constant dense<0.000000e+00> : vector<8x1xf32>
    %922 = tpu.matmul %1, %920, %cst_270 {dimension_numbers = #tpu.dot_dimension_numbers<[1], [0], [0], [1], [0, 0, 1, 1], [], []>} : vector<8x8xf32>, vector<8x1xf32>, vector<8x1xf32> -> vector<8x1xf32>
    %923 = arith.mulf %921, %921 : vector<8x1xf32>
    %924 = arith.subf %922, %923 : vector<8x1xf32>
    %cst_271 = arith.constant 9.99999974E-6 : f32
    %925 = vector.broadcast %cst_271 : f32 to vector<8x1xf32>
    %926 = arith.addf %924, %925 : vector<8x1xf32>
    %927 = math.rsqrt %926 : vector<8x1xf32>
    %c0_272 = arith.constant 0 : index
    %c1_273 = arith.constant 1 : index
    %928 = vector.load %arg7[%c0_272, %c1_273] : memref<8x4xf32, #tpu.memory_space<vmem>>, vector<8x1xf32>
    %929 = arith.mulf %927, %928 : vector<8x1xf32>
    %c0_274 = arith.constant 0 : index
    %c1_275 = arith.constant 1 : index
    %930 = vector.load %arg8[%c0_274, %c1_275] : memref<8x4xf32, #tpu.memory_space<vmem>>, vector<8x1xf32>
    %931 = arith.mulf %921, %929 : vector<8x1xf32>
    %932 = arith.subf %930, %931 : vector<8x1xf32>
    %933 = vector.broadcast %929 : vector<8x1xf32> to vector<8x384xf32>
    %934 = arith.mulf %913, %933 : vector<8x384xf32>
    %935 = vector.broadcast %932 : vector<8x1xf32> to vector<8x384xf32>
    %936 = arith.addf %934, %935 : vector<8x384xf32>
    %937 = arith.negf %936 : vector<8x384xf32>
    %938 = math.exp %937 : vector<8x384xf32>
    %cst_276 = arith.constant 1.000000e+00 : f32
    %939 = vector.broadcast %cst_276 : f32 to vector<8x384xf32>
    %940 = arith.addf %939, %938 : vector<8x384xf32>
    %941 = arith.divf %939, %940 : vector<8x384xf32>
    %942 = arith.addf %910, %941 : vector<8x384xf32>
    %c0_277 = arith.constant 0 : index
    %c2_278 = arith.constant 2 : index
    %943 = vector.load %arg6[%c0_277, %c2_278] : memref<8x4xf32, #tpu.memory_space<vmem>>, vector<8x1xf32>
    %944 = vector.broadcast %943 : vector<8x1xf32> to vector<8x384xf32>
    %945 = arith.addf %627, %944 : vector<8x384xf32>
    %946 = vector.broadcast %0 : vector<1x384xf32> to vector<8x384xf32>
    %947 = arith.mulf %945, %946 : vector<8x384xf32>
    %cst_279 = arith.constant dense<0.000000e+00> : vector<8xf32>
    %948 = vector.multi_reduction <add>, %947, %cst_279 [1] : vector<8x384xf32> to vector<8xf32>
    %949 = vector.shape_cast %948 : vector<8xf32> to vector<8x1xf32>
    %950 = arith.mulf %947, %945 : vector<8x384xf32>
    %cst_280 = arith.constant dense<0.000000e+00> : vector<8xf32>
    %951 = vector.multi_reduction <add>, %950, %cst_280 [1] : vector<8x384xf32> to vector<8xf32>
    %952 = vector.shape_cast %951 : vector<8xf32> to vector<8x1xf32>
    %cst_281 = arith.constant dense<0.000000e+00> : vector<8x1xf32>
    %953 = tpu.matmul %1, %949, %cst_281 {dimension_numbers = #tpu.dot_dimension_numbers<[1], [0], [0], [1], [0, 0, 1, 1], [], []>} : vector<8x8xf32>, vector<8x1xf32>, vector<8x1xf32> -> vector<8x1xf32>
    %cst_282 = arith.constant dense<0.000000e+00> : vector<8x1xf32>
    %954 = tpu.matmul %1, %952, %cst_282 {dimension_numbers = #tpu.dot_dimension_numbers<[1], [0], [0], [1], [0, 0, 1, 1], [], []>} : vector<8x8xf32>, vector<8x1xf32>, vector<8x1xf32> -> vector<8x1xf32>
    %955 = arith.mulf %953, %953 : vector<8x1xf32>
    %956 = arith.subf %954, %955 : vector<8x1xf32>
    %cst_283 = arith.constant 9.99999974E-6 : f32
    %957 = vector.broadcast %cst_283 : f32 to vector<8x1xf32>
    %958 = arith.addf %956, %957 : vector<8x1xf32>
    %959 = math.rsqrt %958 : vector<8x1xf32>
    %c0_284 = arith.constant 0 : index
    %c2_285 = arith.constant 2 : index
    %960 = vector.load %arg7[%c0_284, %c2_285] : memref<8x4xf32, #tpu.memory_space<vmem>>, vector<8x1xf32>
    %961 = arith.mulf %959, %960 : vector<8x1xf32>
    %c0_286 = arith.constant 0 : index
    %c2_287 = arith.constant 2 : index
    %962 = vector.load %arg8[%c0_286, %c2_287] : memref<8x4xf32, #tpu.memory_space<vmem>>, vector<8x1xf32>
    %963 = arith.mulf %953, %961 : vector<8x1xf32>
    %964 = arith.subf %962, %963 : vector<8x1xf32>
    %965 = vector.broadcast %961 : vector<8x1xf32> to vector<8x384xf32>
    %966 = arith.mulf %945, %965 : vector<8x384xf32>
    %967 = vector.broadcast %964 : vector<8x1xf32> to vector<8x384xf32>
    %968 = arith.addf %966, %967 : vector<8x384xf32>
    %969 = arith.negf %968 : vector<8x384xf32>
    %970 = math.exp %969 : vector<8x384xf32>
    %cst_288 = arith.constant 1.000000e+00 : f32
    %971 = vector.broadcast %cst_288 : f32 to vector<8x384xf32>
    %972 = arith.addf %971, %970 : vector<8x384xf32>
    %973 = arith.divf %971, %972 : vector<8x384xf32>
    %974 = arith.addf %942, %973 : vector<8x384xf32>
    %c0_289 = arith.constant 0 : index
    %c3_290 = arith.constant 3 : index
    %975 = vector.load %arg6[%c0_289, %c3_290] : memref<8x4xf32, #tpu.memory_space<vmem>>, vector<8x1xf32>
    %976 = vector.broadcast %975 : vector<8x1xf32> to vector<8x384xf32>
    %977 = arith.addf %687, %976 : vector<8x384xf32>
    %978 = vector.broadcast %0 : vector<1x384xf32> to vector<8x384xf32>
    %979 = arith.mulf %977, %978 : vector<8x384xf32>
    %cst_291 = arith.constant dense<0.000000e+00> : vector<8xf32>
    %980 = vector.multi_reduction <add>, %979, %cst_291 [1] : vector<8x384xf32> to vector<8xf32>
    %981 = vector.shape_cast %980 : vector<8xf32> to vector<8x1xf32>
    %982 = arith.mulf %979, %977 : vector<8x384xf32>
    %cst_292 = arith.constant dense<0.000000e+00> : vector<8xf32>
    %983 = vector.multi_reduction <add>, %982, %cst_292 [1] : vector<8x384xf32> to vector<8xf32>
    %984 = vector.shape_cast %983 : vector<8xf32> to vector<8x1xf32>
    %cst_293 = arith.constant dense<0.000000e+00> : vector<8x1xf32>
    %985 = tpu.matmul %1, %981, %cst_293 {dimension_numbers = #tpu.dot_dimension_numbers<[1], [0], [0], [1], [0, 0, 1, 1], [], []>} : vector<8x8xf32>, vector<8x1xf32>, vector<8x1xf32> -> vector<8x1xf32>
    %cst_294 = arith.constant dense<0.000000e+00> : vector<8x1xf32>
    %986 = tpu.matmul %1, %984, %cst_294 {dimension_numbers = #tpu.dot_dimension_numbers<[1], [0], [0], [1], [0, 0, 1, 1], [], []>} : vector<8x8xf32>, vector<8x1xf32>, vector<8x1xf32> -> vector<8x1xf32>
    %987 = arith.mulf %985, %985 : vector<8x1xf32>
    %988 = arith.subf %986, %987 : vector<8x1xf32>
    %cst_295 = arith.constant 9.99999974E-6 : f32
    %989 = vector.broadcast %cst_295 : f32 to vector<8x1xf32>
    %990 = arith.addf %988, %989 : vector<8x1xf32>
    %991 = math.rsqrt %990 : vector<8x1xf32>
    %c0_296 = arith.constant 0 : index
    %c3_297 = arith.constant 3 : index
    %992 = vector.load %arg7[%c0_296, %c3_297] : memref<8x4xf32, #tpu.memory_space<vmem>>, vector<8x1xf32>
    %993 = arith.mulf %991, %992 : vector<8x1xf32>
    %c0_298 = arith.constant 0 : index
    %c3_299 = arith.constant 3 : index
    %994 = vector.load %arg8[%c0_298, %c3_299] : memref<8x4xf32, #tpu.memory_space<vmem>>, vector<8x1xf32>
    %995 = arith.mulf %985, %993 : vector<8x1xf32>
    %996 = arith.subf %994, %995 : vector<8x1xf32>
    %997 = vector.broadcast %993 : vector<8x1xf32> to vector<8x384xf32>
    %998 = arith.mulf %977, %997 : vector<8x384xf32>
    %999 = vector.broadcast %996 : vector<8x1xf32> to vector<8x384xf32>
    %1000 = arith.addf %998, %999 : vector<8x384xf32>
    %1001 = arith.negf %1000 : vector<8x384xf32>
    %1002 = math.exp %1001 : vector<8x384xf32>
    %cst_300 = arith.constant 1.000000e+00 : f32
    %1003 = vector.broadcast %cst_300 : f32 to vector<8x384xf32>
    %1004 = arith.addf %1003, %1002 : vector<8x384xf32>
    %1005 = arith.divf %1003, %1004 : vector<8x384xf32>
    %1006 = arith.addf %974, %1005 : vector<8x384xf32>
    %cst_301 = arith.constant 2.500000e-01 : f32
    %1007 = vector.broadcast %cst_301 : f32 to vector<8x384xf32>
    %1008 = arith.mulf %1006, %1007 : vector<8x384xf32>
    %c0_302 = arith.constant 0 : index
    %c0_303 = arith.constant 0 : index
    %1009 = vector.load %arg11[%c0_302, %c0_303] : memref<384x256xf32, #tpu.memory_space<vmem>>, vector<384x256xf32>
    %cst_304 = arith.constant dense<0.000000e+00> : vector<8x256xf32>
    %1010 = tpu.matmul %1008, %1009, %cst_304 {dimension_numbers = #tpu.dot_dimension_numbers<[1], [0], [0], [1], [0, 0, 1, 1], [], []>} : vector<8x384xf32>, vector<384x256xf32>, vector<8x256xf32> -> vector<8x256xf32>
    %c0_305 = arith.constant 0 : index
    %c0_306 = arith.constant 0 : index
    %1011 = vector.load %arg9[%c0_305, %c0_306] : memref<16x8xf32, #tpu.memory_space<vmem>>, vector<16x8xf32>
    %cst_307 = arith.constant dense<0.000000e+00> : vector<16x256xf32>
    %1012 = tpu.matmul %1011, %1010, %cst_307 {dimension_numbers = #tpu.dot_dimension_numbers<[1], [0], [0], [1], [0, 0, 1, 1], [], []>} : vector<16x8xf32>, vector<8x256xf32>, vector<16x256xf32> -> vector<16x256xf32>
    %1013 = vector.extract_strided_slice %1012 {offsets = [0, 0], sizes = [8, 256], strides = [1, 1]} : vector<16x256xf32> to vector<8x256xf32>
    %1014 = vector.shape_cast %1013 : vector<8x256xf32> to vector<8x16x16xf32>
    %1015 = vector.extract_strided_slice %1012 {offsets = [8, 0], sizes = [8, 256], strides = [1, 1]} : vector<16x256xf32> to vector<8x256xf32>
    %1016 = vector.shape_cast %1015 : vector<8x256xf32> to vector<8x16x16xf32>
    "tpu.trace_start"() <{level = 10 : i32, message = "chw,cvw->chv"}> : () -> ()
    %cst_308 = arith.constant dense<0.000000e+00> : vector<8x16x16xf32>
    %1017 = tpu.matmul %1014, %1016, %cst_308 {dimension_numbers = #tpu.dot_dimension_numbers<[2], [2], [1], [1], [0, 0, 0, 1, 1, 1], [0], [0]>} : vector<8x16x16xf32>, vector<8x16x16xf32>, vector<8x16x16xf32> -> vector<8x16x16xf32>
    "tpu.trace_stop"() : () -> ()
    %cst_309 = arith.constant 0.353553385 : f32
    %1018 = vector.broadcast %cst_309 : f32 to vector<8x16x16xf32>
    %1019 = arith.mulf %1017, %1018 : vector<8x16x16xf32>
    %cst_310 = arith.constant dense<0xFF800000> : vector<8x16xf32>
    %1020 = vector.multi_reduction <maximumf>, %1019, %cst_310 [2] : vector<8x16x16xf32> to vector<8x16xf32>
    %1021 = vector.shape_cast %1020 : vector<8x16xf32> to vector<8x16x1xf32>
    %1022 = vector.broadcast %1021 : vector<8x16x1xf32> to vector<8x16x16xf32>
    %1023 = arith.subf %1019, %1022 : vector<8x16x16xf32>
    %1024 = math.exp %1023 : vector<8x16x16xf32>
    %cst_311 = arith.constant dense<0.000000e+00> : vector<8x16xf32>
    %1025 = vector.multi_reduction <add>, %1024, %cst_311 [2] : vector<8x16x16xf32> to vector<8x16xf32>
    %1026 = vector.shape_cast %1025 : vector<8x16xf32> to vector<8x16x1xf32>
    %1027 = tpu.reciprocal %1026 {approx = true} : vector<8x16x1xf32> -> vector<8x16x1xf32>
    %1028 = arith.mulf %1026, %1027 : vector<8x16x1xf32>
    %cst_312 = arith.constant 2.000000e+00 : f32
    %1029 = vector.broadcast %cst_312 : f32 to vector<8x16x1xf32>
    %1030 = arith.subf %1029, %1028 : vector<8x16x1xf32>
    %1031 = arith.mulf %1027, %1030 : vector<8x16x1xf32>
    %1032 = vector.broadcast %1031 : vector<8x16x1xf32> to vector<8x16x16xf32>
    %1033 = arith.mulf %1024, %1032 : vector<8x16x16xf32>
    %1034 = vector.shape_cast %1033 : vector<8x16x16xf32> to vector<8x256xf32>
    %1035 = arith.mulf %1010, %1034 : vector<8x256xf32>
    %c0_313 = arith.constant 0 : index
    %c0_314 = arith.constant 0 : index
    %c0_315 = arith.constant 0 : index
    %1036 = vector.load %arg13[%c0_313, %c0_314, %c0_315] : memref<1x8x256xf32, #tpu.memory_space<vmem>>, vector<1x8x256xf32>
    %1037 = vector.shape_cast %1036 : vector<1x8x256xf32> to vector<8x256xf32>
    %1038 = vector.shape_cast %1035 : vector<8x256xf32> to vector<1x8x256xf32>
    tpu.vector_store %arg13[%c0_313, %c0_314, %c0_315], %1038 {strides = array<i32>} : memref<1x8x256xf32, #tpu.memory_space<vmem>>, vector<1x8x256xf32>,
    return
  }
  func.func @transform_0(%arg0: i32) -> (i32, i32, i32) {
    %c0_i32 = arith.constant 0 : i32
    %c0_i32_0 = arith.constant 0 : i32
    %c0_i32_1 = arith.constant 0 : i32
    return %arg0, %c0_i32, %c0_i32_0 : i32, i32, i32
  }
  func.func @transform_1(%arg0: i32) -> (i32, i32) {
    %c0_i32 = arith.constant 0 : i32
    %c0_i32_0 = arith.constant 0 : i32
    %c0_i32_1 = arith.constant 0 : i32
    return %c0_i32, %c0_i32_0 : i32, i32
  }
  func.func @transform_2(%arg0: i32) -> (i32, i32) {
    %c0_i32 = arith.constant 0 : i32
    %c0_i32_0 = arith.constant 0 : i32
    %c0_i32_1 = arith.constant 0 : i32
    return %c0_i32, %c0_i32_0 : i32, i32
  }
  func.func @transform_3(%arg0: i32) -> (i32, i32) {
    %c0_i32 = arith.constant 0 : i32
    %c0_i32_0 = arith.constant 0 : i32
    %c0_i32_1 = arith.constant 0 : i32
    return %c0_i32, %c0_i32_0 : i32, i32
  }
  func.func @transform_4(%arg0: i32) -> (i32, i32) {
    %c0_i32 = arith.constant 0 : i32
    %c0_i32_0 = arith.constant 0 : i32
    %c0_i32_1 = arith.constant 0 : i32
    return %c0_i32, %c0_i32_0 : i32, i32
  }
  func.func @transform_5(%arg0: i32) -> (i32, i32) {
    %c0_i32 = arith.constant 0 : i32
    %c0_i32_0 = arith.constant 0 : i32
    %c0_i32_1 = arith.constant 0 : i32
    return %c0_i32, %c0_i32_0 : i32, i32
  }
  func.func @transform_6(%arg0: i32) -> (i32, i32) {
    %c0_i32 = arith.constant 0 : i32
    %c0_i32_0 = arith.constant 0 : i32
    %c0_i32_1 = arith.constant 0 : i32
    return %c0_i32, %c0_i32_0 : i32, i32
  }
  func.func @transform_7(%arg0: i32) -> (i32, i32) {
    %c0_i32 = arith.constant 0 : i32
    %c0_i32_0 = arith.constant 0 : i32
    %c0_i32_1 = arith.constant 0 : i32
    return %c0_i32, %c0_i32_0 : i32, i32
  }
  func.func @transform_8(%arg0: i32) -> (i32, i32) {
    %c0_i32 = arith.constant 0 : i32
    %c0_i32_0 = arith.constant 0 : i32
    %c0_i32_1 = arith.constant 0 : i32
    return %c0_i32, %c0_i32_0 : i32, i32
  }
  func.func @transform_9(%arg0: i32) -> (i32, i32) {
    %c0_i32 = arith.constant 0 : i32
    %c0_i32_0 = arith.constant 0 : i32
    %c0_i32_1 = arith.constant 0 : i32
    return %c0_i32, %c0_i32_0 : i32, i32
  }
  func.func @transform_10(%arg0: i32) -> (i32, i32) {
    %c0_i32 = arith.constant 0 : i32
    %c0_i32_0 = arith.constant 0 : i32
    %c0_i32_1 = arith.constant 0 : i32
    return %c0_i32, %c0_i32_0 : i32, i32
  }
  func.func @transform_11(%arg0: i32) -> (i32, i32) {
    %c0_i32 = arith.constant 0 : i32
    %c0_i32_0 = arith.constant 0 : i32
    %c0_i32_1 = arith.constant 0 : i32
    return %c0_i32, %c0_i32_0 : i32, i32
  }
  func.func @transform_12(%arg0: i32) -> (i32, i32, i32) {
    %c0_i32 = arith.constant 0 : i32
    %c0_i32_0 = arith.constant 0 : i32
    %c0_i32_1 = arith.constant 0 : i32
    return %arg0, %c0_i32, %c0_i32_0 : i32, i32, i32
  }
}

</mosaic_0001>

<llo_original>
// kernel: tpu_custom_call.1
$region0: #{tpu_custom_call.1}
  #allocation0 [shape = 'u32[]', space=smem, size = 0x4, offset = 0x4, fixed_abs, tag = 'smem constant byte address 0x4 - core index']
  #allocation1 [shape = 'u32[72,128]{1,0:T(1,128)}', space=vmem, size = 0x9000, scoped, tag = 'internal scratch']
  %s0 = inlined_call_operand.hbm [shape: f32[2,8,600], index: 0, kind: input, shape index: {}]
  %s1 = inlined_call_operand.vmem [shape: f32[8,9], index: 1, kind: input, shape index: {}]
  %s2 = inlined_call_operand.vmem [shape: f32[8,25], index: 2, kind: input, shape index: {}]
  %s3 = inlined_call_operand.vmem [shape: f32[8,49], index: 3, kind: input, shape index: {}]
  %s4 = inlined_call_operand.vmem [shape: f32[8,81], index: 4, kind: input, shape index: {}]
  %s5 = inlined_call_operand.vmem [shape: f32[8,4], index: 5, kind: input, shape index: {}]
  %s6 = inlined_call_operand.vmem [shape: f32[8,4], index: 6, kind: input, shape index: {}]
  %s7 = inlined_call_operand.vmem [shape: f32[8,4], index: 7, kind: input, shape index: {}]
  %s8 = inlined_call_operand.vmem [shape: f32[16,8], index: 8, kind: input, shape index: {}]
  %s9 = inlined_call_operand.vmem [shape: f32[1,384], index: 9, kind: input, shape index: {}]
  %s10 = inlined_call_operand.hbm [shape: f32[384,256], index: 10, kind: input, shape index: {}]
  %s11 = inlined_call_operand.vmem [shape: f32[8,8], index: 11, kind: input, shape index: {}]
  %s12 = inlined_call_operand.hbm [shape: f32[2,8,256], index: 12, kind: output, shape index: {}]
  %s13 = sld [smem:[#allocation0]]
  $region89: #{tpu_custom_call.1} parent=0
    _
  %s15 = ssub.s32 1, %s13
  %s16 = scalar_select 0, %s15, %s13
  $region1: #{tpu_custom_call.1} parent=0
    #allocation2 [shape = 'u8[40960]{0}', space=vmem, size = 0xa000, scoped, tag = 'input window, operand 0']
    #allocation3 [shape = 's32[2]{0}', space=sflag, size = 0x8, scoped, tag = 'scoped memory for tpu_custom_call.1']
    #allocation4 [shape = 's32[2]{0}', space=sflag, size = 0x8, scoped, tag = 'scoped memory for tpu_custom_call.1']
    #allocation5 [shape = 'u8[393216]{0}', space=vmem, size = 0x60000, scoped, tag = 'input window, operand 10, single buffered']
    #allocation6 [shape = 's32[1]{0}', space=sflag, size = 0x4, scoped, tag = 'scoped memory for tpu_custom_call.1']
    #allocation7 [shape = 'u8[16384]{0}', space=vmem, size = 0x4000, scoped, tag = 'output window, operand 0']
    %17 = vsyncpa [#allocation3], 0
    %s18 = scalar_lea.sflag [#allocation3], 1
    %19 = vsyncpa %s18, 0
    %20 = vsyncpa [#allocation6], 0
    %21 = vsyncpa [#allocation4], 0
    %s22 = scalar_lea.sflag [#allocation4], 1
    %23 = vsyncpa %s22, 0
    loop: start=0, step=1, limit=4
    $region2: #{tpu_custom_call.1} parent=1 // loop_pre_header
      _
    $region3: #{tpu_custom_call.1} parent=1 // loop_header
      %s25 = sphi 0, %s29
      %p26 = scmp.ge.s32.totalorder %s25, 4
      %s35 = sphi 0, %s37
      %s38 = sphi 0, %s35
      %s39 = sphi 0, %s38
      %s55 = sphi 0, %s39
      %s59 = sphi 0, %s59
      %s61 = sphi 0, %s59
      %s62 = sphi 0, %s61
      %s76 = sphi 0, %s62
      %s80 = sphi 0, %s80
      %s82 = sphi 0, %s80
      %s83 = sphi 0, %s82
      %s97 = sphi 0, %s83
      %s101 = sphi 0, %s101
      %s103 = sphi 0, %s101
      %s104 = sphi 0, %s103
      %s118 = sphi 0, %s104
      %s122 = sphi 0, %s122
      %s124 = sphi 0, %s122
      %s125 = sphi 0, %s124
      %s139 = sphi 0, %s125
      %s143 = sphi 0, %s143
      %s145 = sphi 0, %s143
      %s146 = sphi 0, %s145
      %s160 = sphi 0, %s146
      %s164 = sphi 0, %s164
      %s166 = sphi 0, %s164
      %s167 = sphi 0, %s166
      %s181 = sphi 0, %s167
      %s185 = sphi 0, %s185
      %s187 = sphi 0, %s185
      %s188 = sphi 0, %s187
      %s202 = sphi 0, %s188
      %s206 = sphi 0, %s206
      %s208 = sphi 0, %s206
      %s209 = sphi 0, %s208
      %s223 = sphi 0, %s209
      %s227 = sphi 0, %s227
      %s229 = sphi 0, %s227
      %s230 = sphi 0, %s229
      %s244 = sphi 0, %s230
      %s248 = sphi 0, %s248
      %s250 = sphi 0, %s248
      %s251 = sphi 0, %s250
      %s265 = sphi 0, %s251
      %s269 = sphi 0, %s269
      %s271 = sphi 0, %s269
      %s272 = sphi 0, %s271
      %s286 = sphi 0, %s272
      %s292 = sphi 0, %s294
      %s295 = sphi 0, %s292
      %s296 = sphi 0, %s295
      %s312 = sphi 0, %s296
    $region4: #{tpu_custom_call.1} parent=1 // loop_header_branch
      %28 = sbr.rel (%p26) target = $region8
    $region5: #{tpu_custom_call.1} parent=1 // loop_body
      %s30 = ssub.s32 %s25, 1
      %s31 = ssub.s32 %s25, 2
      %s32 = sadd.s32 %s25, 1
      %s33 = ssub.s32 %s25, %s32
      %p34 = scmp.eq.s32.totalorder %s33, 0
      %s36 = sadd.s32 %s35, 1
      %s37 = scalar_select %p34, %s35, %s36
      %p40 = pneg %p34
      %p41 = scmp.eq.s32.totalorder %s25, 1
      %p42 = por %p40, %p41
      %p43 = scmp.ne.s32.totalorder %s35, %s38
      %p44 = scmp.eq.s32.totalorder %s25, 0
      %p45 = por %p43, %p44
      %p46 = scmp.ne.s32.totalorder %s35, %s38
      %p47 = scmp.eq.s32.totalorder %s30, 1
      %p48 = por %p46, %p47
      %p49 = scmp.ne.s32.totalorder %s38, %s39
      %p50 = scmp.eq.s32.totalorder %s30, 0
      %p51 = por %p49, %p50
      %p52 = scmp.ne.s32.totalorder %s38, %s39
      %p53 = scmp.eq.s32.totalorder %s31, 1
      %p54 = por %p52, %p53
      %p56 = scmp.ne.s32.totalorder %s39, %s55
      %p57 = scmp.eq.s32.totalorder %s31, 0
      %p58 = por %p56, %p57
      %s60 = sadd.s32 %s59, 1
      %p63 = scmp.eq.s32.totalorder %s25, 1
      %p64 = scmp.ne.s32.totalorder %s59, %s61
      %p65 = scmp.eq.s32.totalorder %s25, 0
      %p66 = por %p64, %p65
      %p67 = scmp.ne.s32.totalorder %s59, %s61
      %p68 = scmp.eq.s32.totalorder %s30, 1
      %p69 = por %p67, %p68
      %p70 = scmp.ne.s32.totalorder %s61, %s62
      %p71 = scmp.eq.s32.totalorder %s30, 0
      %p72 = por %p70, %p71
      %p73 = scmp.ne.s32.totalorder %s61, %s62
      %p74 = scmp.eq.s32.totalorder %s31, 1
      %p75 = por %p73, %p74
      %p77 = scmp.ne.s32.totalorder %s62, %s76
      %p78 = scmp.eq.s32.totalorder %s31, 0
      %p79 = por %p77, %p78
      %s81 = sadd.s32 %s80, 1
      %p84 = scmp.eq.s32.totalorder %s25, 1
      %p85 = scmp.ne.s32.totalorder %s80, %s82
      %p86 = scmp.eq.s32.totalorder %s25, 0
      %p87 = por %p85, %p86
      %p88 = scmp.ne.s32.totalorder %s80, %s82
      %p89 = scmp.eq.s32.totalorder %s30, 1
      %p90 = por %p88, %p89
      %p91 = scmp.ne.s32.totalorder %s82, %s83
      %p92 = scmp.eq.s32.totalorder %s30, 0
      %p93 = por %p91, %p92
      %p94 = scmp.ne.s32.totalorder %s82, %s83
      %p95 = scmp.eq.s32.totalorder %s31, 1
      %p96 = por %p94, %p95
      %p98 = scmp.ne.s32.totalorder %s83, %s97
      %p99 = scmp.eq.s32.totalorder %s31, 0
      %p100 = por %p98, %p99
      %s102 = sadd.s32 %s101, 1
      %p105 = scmp.eq.s32.totalorder %s25, 1
      %p106 = scmp.ne.s32.totalorder %s101, %s103
      %p107 = scmp.eq.s32.totalorder %s25, 0
      %p108 = por %p106, %p107
      %p109 = scmp.ne.s32.totalorder %s101, %s103
      %p110 = scmp.eq.s32.totalorder %s30, 1
      %p111 = por %p109, %p110
      %p112 = scmp.ne.s32.totalorder %s103, %s104
      %p113 = scmp.eq.s32.totalorder %s30, 0
      %p114 = por %p112, %p113
      %p115 = scmp.ne.s32.totalorder %s103, %s104
      %p116 = scmp.eq.s32.totalorder %s31, 1
      %p117 = por %p115, %p116
      %p119 = scmp.ne.s32.totalorder %s104, %s118
      %p120 = scmp.eq.s32.totalorder %s31, 0
      %p121 = por %p119, %p120
      %s123 = sadd.s32 %s122, 1
      %p126 = scmp.eq.s32.totalorder %s25, 1
      %p127 = scmp.ne.s32.totalorder %s122, %s124
      %p128 = scmp.eq.s32.totalorder %s25, 0
      %p129 = por %p127, %p128
      %p130 = scmp.ne.s32.totalorder %s122, %s124
      %p131 = scmp.eq.s32.totalorder %s30, 1
      %p132 = por %p130, %p131
      %p133 = scmp.ne.s32.totalorder %s124, %s125
      %p134 = scmp.eq.s32.totalorder %s30, 0
      %p135 = por %p133, %p134
      %p136 = scmp.ne.s32.totalorder %s124, %s125
      %p137 = scmp.eq.s32.totalorder %s31, 1
      %p138 = por %p136, %p137
      %p140 = scmp.ne.s32.totalorder %s125, %s139
      %p141 = scmp.eq.s32.totalorder %s31, 0
      %p142 = por %p140, %p141
      %s144 = sadd.s32 %s143, 1
      %p147 = scmp.eq.s32.totalorder %s25, 1
      %p148 = scmp.ne.s32.totalorder %s143, %s145
      %p149 = scmp.eq.s32.totalorder %s25, 0
      %p150 = por %p148, %p149
      %p151 = scmp.ne.s32.totalorder %s143, %s145
      %p152 = scmp.eq.s32.totalorder %s30, 1
      %p153 = por %p151, %p152
      %p154 = scmp.ne.s32.totalorder %s145, %s146
      %p155 = scmp.eq.s32.totalorder %s30, 0
      %p156 = por %p154, %p155
      %p157 = scmp.ne.s32.totalorder %s145, %s146
      %p158 = scmp.eq.s32.totalorder %s31, 1
      %p159 = por %p157, %p158
      %p161 = scmp.ne.s32.totalorder %s146, %s160
      %p162 = scmp.eq.s32.totalorder %s31, 0
      %p163 = por %p161, %p162
      %s165 = sadd.s32 %s164, 1
      %p168 = scmp.eq.s32.totalorder %s25, 1
      %p169 = scmp.ne.s32.totalorder %s164, %s166
      %p170 = scmp.eq.s32.totalorder %s25, 0
      %p171 = por %p169, %p170
      %p172 = scmp.ne.s32.totalorder %s164, %s166
      %p173 = scmp.eq.s32.totalorder %s30, 1
      %p174 = por %p172, %p173
      %p175 = scmp.ne.s32.totalorder %s166, %s167
      %p176 = scmp.eq.s32.totalorder %s30, 0
      %p177 = por %p175, %p176
      %p178 = scmp.ne.s32.totalorder %s166, %s167
      %p179 = scmp.eq.s32.totalorder %s31, 1
      %p180 = por %p178, %p179
      %p182 = scmp.ne.s32.totalorder %s167, %s181
      %p183 = scmp.eq.s32.totalorder %s31, 0
      %p184 = por %p182, %p183
      %s186 = sadd.s32 %s185, 1
      %p189 = scmp.eq.s32.totalorder %s25, 1
      %p190 = scmp.ne.s32.totalorder %s185, %s187
      %p191 = scmp.eq.s32.totalorder %s25, 0
      %p192 = por %p190, %p191
      %p193 = scmp.ne.s32.totalorder %s185, %s187
      %p194 = scmp.eq.s32.totalorder %s30, 1
      %p195 = por %p193, %p194
      %p196 = scmp.ne.s32.totalorder %s187, %s188
      %p197 = scmp.eq.s32.totalorder %s30, 0
      %p198 = por %p196, %p197
      %p199 = scmp.ne.s32.totalorder %s187, %s188
      %p200 = scmp.eq.s32.totalorder %s31, 1
      %p201 = por %p199, %p200
      %p203 = scmp.ne.s32.totalorder %s188, %s202
      %p204 = scmp.eq.s32.totalorder %s31, 0
      %p205 = por %p203, %p204
      %s207 = sadd.s32 %s206, 1
      %p210 = scmp.eq.s32.totalorder %s25, 1
      %p211 = scmp.ne.s32.totalorder %s206, %s208
      %p212 = scmp.eq.s32.totalorder %s25, 0
      %p213 = por %p211, %p212
      %p214 = scmp.ne.s32.totalorder %s206, %s208
      %p215 = scmp.eq.s32.totalorder %s30, 1
      %p216 = por %p214, %p215
      %p217 = scmp.ne.s32.totalorder %s208, %s209
      %p218 = scmp.eq.s32.totalorder %s30, 0
      %p219 = por %p217, %p218
      %p220 = scmp.ne.s32.totalorder %s208, %s209
      %p221 = scmp.eq.s32.totalorder %s31, 1
      %p222 = por %p220, %p221
      %p224 = scmp.ne.s32.totalorder %s209, %s223
      %p225 = scmp.eq.s32.totalorder %s31, 0
      %p226 = por %p224, %p225
      %s228 = sadd.s32 %s227, 1
      %p231 = scmp.eq.s32.totalorder %s25, 1
      %p232 = scmp.ne.s32.totalorder %s227, %s229
      %p233 = scmp.eq.s32.totalorder %s25, 0
      %p234 = por %p232, %p233
      %p235 = scmp.ne.s32.totalorder %s227, %s229
      %p236 = scmp.eq.s32.totalorder %s30, 1
      %p237 = por %p235, %p236
      %p238 = scmp.ne.s32.totalorder %s229, %s230
      %p239 = scmp.eq.s32.totalorder %s30, 0
      %p240 = por %p238, %p239
      %p241 = scmp.ne.s32.totalorder %s229, %s230
      %p242 = scmp.eq.s32.totalorder %s31, 1
      %p243 = por %p241, %p242
      %p245 = scmp.ne.s32.totalorder %s230, %s244
      %p246 = scmp.eq.s32.totalorder %s31, 0
      %p247 = por %p245, %p246
      %s249 = sadd.s32 %s248, 1
      %p252 = scmp.eq.s32.totalorder %s25, 1
      %p253 = scmp.ne.s32.totalorder %s248, %s250
      %p254 = scmp.eq.s32.totalorder %s25, 0
      %p255 = por %p253, %p254
      %p256 = scmp.ne.s32.totalorder %s248, %s250
      %p257 = scmp.eq.s32.totalorder %s30, 1
      %p258 = por %p256, %p257
      %p259 = scmp.ne.s32.totalorder %s250, %s251
      %p260 = scmp.eq.s32.totalorder %s30, 0
      %p261 = por %p259, %p260
      %p262 = scmp.ne.s32.totalorder %s250, %s251
      %p263 = scmp.eq.s32.totalorder %s31, 1
      %p264 = por %p262, %p263
      %p266 = scmp.ne.s32.totalorder %s251, %s265
      %p267 = scmp.eq.s32.totalorder %s31, 0
      %p268 = por %p266, %p267
      %s270 = sadd.s32 %s269, 1
      %p273 = scmp.eq.s32.totalorder %s25, 1
      %p274 = scmp.ne.s32.totalorder %s269, %s271
      %p275 = scmp.eq.s32.totalorder %s25, 0
      %p276 = por %p274, %p275
      %p277 = scmp.ne.s32.totalorder %s269, %s271
      %p278 = scmp.eq.s32.totalorder %s30, 1
      %p279 = por %p277, %p278
      %p280 = scmp.ne.s32.totalorder %s271, %s272
      %p281 = scmp.eq.s32.totalorder %s30, 0
      %p282 = por %p280, %p281
      %p283 = scmp.ne.s32.totalorder %s271, %s272
      %p284 = scmp.eq.s32.totalorder %s31, 1
      %p285 = por %p283, %p284
      %p287 = scmp.ne.s32.totalorder %s272, %s286
      %p288 = scmp.eq.s32.totalorder %s31, 0
      %p289 = por %p287, %p288
      %s290 = ssub.s32 %s25, %s32
      %p291 = scmp.eq.s32.totalorder %s290, 0
      %s293 = sadd.s32 %s292, 1
      %s294 = scalar_select %p291, %s292, %s293
      %p297 = pneg %p291
      %p298 = scmp.eq.s32.totalorder %s25, 1
      %p299 = por %p297, %p298
      %p300 = scmp.ne.s32.totalorder %s292, %s295
      %p301 = scmp.eq.s32.totalorder %s25, 0
      %p302 = por %p300, %p301
      %p303 = scmp.ne.s32.totalorder %s292, %s295
      %p304 = scmp.eq.s32.totalorder %s30, 1
      %p305 = por %p303, %p304
      %p306 = scmp.ne.s32.totalorder %s295, %s296
      %p307 = scmp.eq.s32.totalorder %s30, 0
      %p308 = por %p306, %p307
      %p309 = scmp.ne.s32.totalorder %s295, %s296
      %p310 = scmp.eq.s32.totalorder %s31, 1
      %p311 = por %p309, %p310
      %p313 = scmp.ne.s32.totalorder %s296, %s312
      %p314 = scmp.eq.s32.totalorder %s31, 0
      %p315 = por %p313, %p314
      %p316 = scmp.le.s32.totalorder 1, %s25
      %p317 = scmp.lt.s32.totalorder %s25, 3
      %p318 = pnand %p316, %p317
      %p319 = pneg %p318
      // Predicated region
      $region9: #{tpu_custom_call.1} parent=5 // pred_check
        _
      $region10: #{tpu_custom_call.1} parent=5 // pred_check_branch
        %321 = sbr.rel (%p318) target = $region12
      $region11: #{tpu_custom_call.1} parent=5 // pred_region
        %s322 = ssub.s32 %s25, 1
        // Predicated region
        $region13: #{tpu_custom_call.1} parent=11 // pred_check
          %p323 = pneg %p72
        $region14: #{tpu_custom_call.1} parent=11 // pred_check_branch
          %325 = sbr.rel (%p323) target = $region16
        $region15: #{tpu_custom_call.1} parent=11 // pred_region
          _
        $region16: #{tpu_custom_call.1} parent=11 // pred_fallthru
          _
        // Predicated region
        $region17: #{tpu_custom_call.1} parent=11 // pred_check
          %p326 = pneg %p93
        $region18: #{tpu_custom_call.1} parent=11 // pred_check_branch
          %328 = sbr.rel (%p326) target = $region20
        $region19: #{tpu_custom_call.1} parent=11 // pred_region
          _
        $region20: #{tpu_custom_call.1} parent=11 // pred_fallthru
          _
        // Predicated region
        $region21: #{tpu_custom_call.1} parent=11 // pred_check
          %p329 = pneg %p114
        $region22: #{tpu_custom_call.1} parent=11 // pred_check_branch
          %331 = sbr.rel (%p329) target = $region24
        $region23: #{tpu_custom_call.1} parent=11 // pred_region
          _
        $region24: #{tpu_custom_call.1} parent=11 // pred_fallthru
          _
        // Predicated region
        $region25: #{tpu_custom_call.1} parent=11 // pred_check
          %p332 = pneg %p135
        $region26: #{tpu_custom_call.1} parent=11 // pred_check_branch
          %334 = sbr.rel (%p332) target = $region28
        $region27: #{tpu_custom_call.1} parent=11 // pred_region
          _
        $region28: #{tpu_custom_call.1} parent=11 // pred_fallthru
          _
        // Predicated region
        $region29: #{tpu_custom_call.1} parent=11 // pred_check
          %p335 = pneg %p156
        $region30: #{tpu_custom_call.1} parent=11 // pred_check_branch
          %337 = sbr.rel (%p335) target = $region32
        $region31: #{tpu_custom_call.1} parent=11 // pred_region
          _
        $region32: #{tpu_custom_call.1} parent=11 // pred_fallthru
          _
        // Predicated region
        $region33: #{tpu_custom_call.1} parent=11 // pred_check
          %p338 = pneg %p177
        $region34: #{tpu_custom_call.1} parent=11 // pred_check_branch
          %340 = sbr.rel (%p338) target = $region36
        $region35: #{tpu_custom_call.1} parent=11 // pred_region
          _
        $region36: #{tpu_custom_call.1} parent=11 // pred_fallthru
          _
        // Predicated region
        $region37: #{tpu_custom_call.1} parent=11 // pred_check
          %p341 = pneg %p198
        $region38: #{tpu_custom_call.1} parent=11 // pred_check_branch
          %343 = sbr.rel (%p341) target = $region40
        $region39: #{tpu_custom_call.1} parent=11 // pred_region
          _
        $region40: #{tpu_custom_call.1} parent=11 // pred_fallthru
          _
        // Predicated region
        $region41: #{tpu_custom_call.1} parent=11 // pred_check
          %p344 = pneg %p219
        $region42: #{tpu_custom_call.1} parent=11 // pred_check_branch
          %346 = sbr.rel (%p344) target = $region44
        $region43: #{tpu_custom_call.1} parent=11 // pred_region
          _
        $region44: #{tpu_custom_call.1} parent=11 // pred_fallthru
          _
        // Predicated region
        $region45: #{tpu_custom_call.1} parent=11 // pred_check
          %p347 = pneg %p240
        $region46: #{tpu_custom_call.1} parent=11 // pred_check_branch
          %349 = sbr.rel (%p347) target = $region48
        $region47: #{tpu_custom_call.1} parent=11 // pred_region
          _
        $region48: #{tpu_custom_call.1} parent=11 // pred_fallthru
          _
        // Predicated region
        $region49: #{tpu_custom_call.1} parent=11 // pred_check
          %p350 = pneg %p261
        $region50: #{tpu_custom_call.1} parent=11 // pred_check_branch
          %352 = sbr.rel (%p350) target = $region52
        $region51: #{tpu_custom_call.1} parent=11 // pred_region
          %354 = vsyncadd [#allocation6], 0
          %s355 = sshll.u32 %s10, 4
          %s356 = int_to_ptr.hbm [resolvable:$true] %s355
          %s357 = sshll.u32 [#allocation5], 4
          %s358 = int_to_ptr.vmem [resolvable:$true] %s357
          %363 = dma.hbm_to_vmem [thread:$0]  %s356, 12288, %s358, [#allocation6], 256, 256, 16
        $region52: #{tpu_custom_call.1} parent=11 // pred_fallthru
          _
        // Predicated region
        $region53: #{tpu_custom_call.1} parent=11 // pred_check
          %p364 = pneg %p282
        $region54: #{tpu_custom_call.1} parent=11 // pred_check_branch
          %366 = sbr.rel (%p364) target = $region56
        $region55: #{tpu_custom_call.1} parent=11 // pred_region
          _
        $region56: #{tpu_custom_call.1} parent=11 // pred_fallthru
          _
      $region12: #{tpu_custom_call.1} parent=5 // pred_fallthru
        _
      %p367 = scmp.lt.s32.totalorder %s25, 2
      // Predicated region
      $region57: #{tpu_custom_call.1} parent=5 // pred_check
        %p368 = pneg %p367
      $region58: #{tpu_custom_call.1} parent=5 // pred_check_branch
        %370 = sbr.rel (%p368) target = $region60
      $region59: #{tpu_custom_call.1} parent=5 // pred_region
        // Predicated region
        $region61: #{tpu_custom_call.1} parent=59 // pred_check
          %p371 = pneg %p45
        $region62: #{tpu_custom_call.1} parent=59 // pred_check_branch
          %373 = sbr.rel (%p371) target = $region64
        $region63: #{tpu_custom_call.1} parent=59 // pred_region
          %s374 = sand.u32 %s35, 1
          %s375 = scalar_lea.sflag [#allocation3], %s374
          %s376 = sand.u32 %s35, 1
          %s377 = smul.addr %s376, 40
          %s378 = scalar_lea.vmem [#allocation2], %s377
          %380 = vsyncadd %s375, 0
          %s381 = smul.addr %s25, 5
          %s382 = smul.addr %s381, 8
          %s383 = scalar_lea.hbm %s0, %s382
          %s385 = sshll.u32 %s383, 4
          %s386 = int_to_ptr.hbm [resolvable:$true] %s385
          %s387 = sshll.u32 %s378, 4
          %s388 = int_to_ptr.vmem [resolvable:$true] %s387
          %390 = dma.hbm_to_vmem [thread:$0]  %s386, 640, %s388, %s375
        $region64: #{tpu_custom_call.1} parent=59 // pred_fallthru
          _
      $region60: #{tpu_custom_call.1} parent=5 // pred_fallthru
        _
      %p391 = scmp.le.s32.totalorder 1, %s25
      %p392 = scmp.lt.s32.totalorder %s25, 3
      %p393 = pnand %p391, %p392
      %p394 = pneg %p393
      // Predicated region
      $region65: #{tpu_custom_call.1} parent=5 // pred_check
        _
      $region66: #{tpu_custom_call.1} parent=5 // pred_check_branch
        %396 = sbr.rel (%p393) target = $region68
      $region67: #{tpu_custom_call.1} parent=5 // pred_region
        %s397 = ssub.s32 %s25, 1
        %s398 = sand.u32 %s38, 1
        %s399 = scalar_lea.sflag [#allocation3], %s398
        %s400 = sand.u32 %s38, 1
        %s401 = smul.addr %s400, 40
        %s402 = scalar_lea.vmem [#allocation2], %s401
        // Predicated region
        $region69: #{tpu_custom_call.1} parent=67 // pred_check
          %p403 = pneg %p51
        $region70: #{tpu_custom_call.1} parent=67 // pred_check_branch
          %405 = sbr.rel (%p403) target = $region72
        $region71: #{tpu_custom_call.1} parent=67 // pred_region
          %407 = dma.done %s399, 640
        $region72: #{tpu_custom_call.1} parent=67 // pred_fallthru
          _
        // Predicated region
        $region73: #{tpu_custom_call.1} parent=67 // pred_check
          %p408 = pneg %p261
        $region74: #{tpu_custom_call.1} parent=67 // pred_check_branch
          %410 = sbr.rel (%p408) target = $region76
        $region75: #{tpu_custom_call.1} parent=67 // pred_region
          %412 = dma.done [#allocation6], 12288
        $region76: #{tpu_custom_call.1} parent=67 // pred_fallthru
          _
        %s413 = sand.u32 %s38, 1
        %s414 = scalar_lea.sflag [#allocation3], %s413
        %s415 = sand.u32 %s38, 1
        %s416 = smul.addr %s415, 40
        %s417 = scalar_lea.vmem [#allocation2], %s416
        %p418 = pneg %p51
        %p419 = pneg %p48
        %p420 = pneg %p72
        %p421 = pneg %p69
        %p422 = pneg %p93
        %p423 = pneg %p90
        %p424 = pneg %p114
        %p425 = pneg %p111
        %p426 = pneg %p135
        %p427 = pneg %p132
        %p428 = pneg %p156
        %p429 = pneg %p153
        %p430 = pneg %p177
        %p431 = pneg %p174
        %p432 = pneg %p198
        %p433 = pneg %p195
        %p434 = pneg %p219
        %p435 = pneg %p216
        %p436 = pneg %p240
        %p437 = pneg %p237
        %p438 = pneg %p261
        %p439 = pneg %p258
        %p440 = pneg %p282
        %p441 = pneg %p279
        %p442 = pneg %p308
        %p443 = pneg %p305
        %s444 = sand.u32 %s295, 1
        %s445 = scalar_lea.sflag [#allocation4], %s444
        %s446 = sand.u32 %s295, 1
        %s447 = smul.addr %s446, 16
        %s448 = scalar_lea.vmem [#allocation7], %s447
        %v449 = vld [vmem:[%s9] sm:$0x7]
        %v450 = vld [vmem:[%s11] sm:$0xff]
        %v451 = vld [vmem:[%s4] sm:$0xff]
        %v452 = vld [vmem:[%s3] sm:$0xff]
        %v453 = vld [vmem:[%s402] sm:$0xff]
        %v454 = vld [vmem:[%s402 + $0x8] sm:$0xff]
        %v455 = vld [vmem:[%s402 + $0x10] sm:$0xff]
        %457 = vset.pattern.permute.xlu0 0
        %458 = vperm.xlu0 %457, %v451
        %v459 = vpop.permute.xlu0 %458
        %v461 = vmul.f32 %v453, %v459
        %v462 = vmul.f32 %v454, %v459
        %v463 = vmul.f32 %v455, %v459
        %v464 = vadd.f32 %v461, 0.0
        %v465 = vadd.f32 %v462, 0.0
        %v466 = vadd.f32 %v463, 0.0
        %v467 = vld [vmem:[%s402] sm:$0xff]
        %v468 = vld [vmem:[%s402 + $0x8] sm:$0xff]
        %v469 = vld [vmem:[%s402 + $0x10] sm:$0xff]
        %v470 = vld [vmem:[%s402 + $0x18] sm:$0xff]
        %471 = vset.pattern.permute.xlu0 1
        %472 = vperm.xlu0 %471, %v451
        %v473 = vpop.permute.xlu0 %472
        %v475 = vmul.f32 %v467, %v473
        %v476 = vmul.f32 %v468, %v473
        %v477 = vmul.f32 %v469, %v473
        %v478 = vmul.f32 %v470, %v473
        %483 = vrot.lane.b32.xlu0 %v475, 127
        %v484 = vpop.permute.xlu0 %483
        %485 = vrot.lane.b32.xlu0 %v476, 127
        %v486 = vpop.permute.xlu0 %485
        %487 = vrot.lane.b32.xlu0 %v477, 127
        %v488 = vpop.permute.xlu0 %487
        %489 = vrot.lane.b32.xlu0 %v478, 127
        %v490 = vpop.permute.xlu0 %489
        %vm491 = vcmask 1039360
        %v492 = vsel %vm491, %v484, %v486
        %v493 = vsel %vm491, %v486, %v488
        %v494 = vsel %vm491, %v488, %v490
        %v498 = vadd.f32 %v464, %v492
        %v499 = vadd.f32 %v465, %v493
        %v500 = vadd.f32 %v466, %v494
        %501 = vset.pattern.permute.xlu0 2
        %502 = vperm.xlu0 %501, %v451
        %v503 = vpop.permute.xlu0 %502
        %v505 = vmul.f32 %v467, %v503
        %v506 = vmul.f32 %v468, %v503
        %v507 = vmul.f32 %v469, %v503
        %v508 = vmul.f32 %v470, %v503
        %513 = vrot.lane.b32.xlu0 %v505, 126
        %v514 = vpop.permute.xlu0 %513
        %515 = vrot.lane.b32.xlu0 %v506, 126
        %v516 = vpop.permute.xlu0 %515
        %517 = vrot.lane.b32.xlu0 %v507, 126
        %v518 = vpop.permute.xlu0 %517
        %519 = vrot.lane.b32.xlu0 %v508, 126
        %v520 = vpop.permute.xlu0 %519
        %vm521 = vcmask 1031168
        %v522 = vsel %vm521, %v514, %v516
        %v523 = vsel %vm521, %v516, %v518
        %v524 = vsel %vm521, %v518, %v520
        %v528 = vadd.f32 %v498, %v522
        %v529 = vadd.f32 %v499, %v523
        %v530 = vadd.f32 %v500, %v524
        %531 = vset.pattern.permute.xlu0 3
        %532 = vperm.xlu0 %531, %v451
        %v533 = vpop.permute.xlu0 %532
        %v535 = vmul.f32 %v467, %v533
        %v536 = vmul.f32 %v468, %v533
        %v537 = vmul.f32 %v469, %v533
        %v538 = vmul.f32 %v470, %v533
        %543 = vrot.lane.b32.xlu0 %v535, 125
        %v544 = vpop.permute.xlu0 %543
        %545 = vrot.lane.b32.xlu0 %v536, 125
        %v546 = vpop.permute.xlu0 %545
        %547 = vrot.lane.b32.xlu0 %v537, 125
        %v548 = vpop.permute.xlu0 %547
        %549 = vrot.lane.b32.xlu0 %v538, 125
        %v550 = vpop.permute.xlu0 %549
        %vm551 = vcmask 1022976
        %v552 = vsel %vm551, %v544, %v546
        %v553 = vsel %vm551, %v546, %v548
        %v554 = vsel %vm551, %v548, %v550
        %v558 = vadd.f32 %v528, %v552
        %v559 = vadd.f32 %v529, %v553
        %v560 = vadd.f32 %v530, %v554
        %561 = vset.pattern.permute.xlu0 4
        %562 = vperm.xlu0 %561, %v451
        %v563 = vpop.permute.xlu0 %562
        %v565 = vmul.f32 %v467, %v563
        %v566 = vmul.f32 %v468, %v563
        %v567 = vmul.f32 %v469, %v563
        %v568 = vmul.f32 %v470, %v563
        %573 = vrot.lane.b32.xlu0 %v565, 124
        %v574 = vpop.permute.xlu0 %573
        %575 = vrot.lane.b32.xlu0 %v566, 124
        %v576 = vpop.permute.xlu0 %575
        %577 = vrot.lane.b32.xlu0 %v567, 124
        %v578 = vpop.permute.xlu0 %577
        %579 = vrot.lane.b32.xlu0 %v568, 124
        %v580 = vpop.permute.xlu0 %579
        %vm581 = vcmask 1014784
        %v582 = vsel %vm581, %v574, %v576
        %v583 = vsel %vm581, %v576, %v578
        %v584 = vsel %vm581, %v578, %v580
        %v588 = vadd.f32 %v558, %v582
        %v589 = vadd.f32 %v559, %v583
        %v590 = vadd.f32 %v560, %v584
        %591 = vset.pattern.permute.xlu0 5
        %592 = vperm.xlu0 %591, %v451
        %v593 = vpop.permute.xlu0 %592
        %v595 = vmul.f32 %v467, %v593
        %v596 = vmul.f32 %v468, %v593
        %v597 = vmul.f32 %v469, %v593
        %v598 = vmul.f32 %v470, %v593
        %603 = vrot.lane.b32.xlu0 %v595, 123
        %v604 = vpop.permute.xlu0 %603
        %605 = vrot.lane.b32.xlu0 %v596, 123
        %v606 = vpop.permute.xlu0 %605
        %607 = vrot.lane.b32.xlu0 %v597, 123
        %v608 = vpop.permute.xlu0 %607
        %609 = vrot.lane.b32.xlu0 %v598, 123
        %v610 = vpop.permute.xlu0 %609
        %vm611 = vcmask 1006592
        %v612 = vsel %vm611, %v604, %v606
        %v613 = vsel %vm611, %v606, %v608
        %v614 = vsel %vm611, %v608, %v610
        %v618 = vadd.f32 %v588, %v612
        %v619 = vadd.f32 %v589, %v613
        %v620 = vadd.f32 %v590, %v614
        %621 = vset.pattern.permute.xlu0 6
        %622 = vperm.xlu0 %621, %v451
        %v623 = vpop.permute.xlu0 %622
        %v625 = vmul.f32 %v467, %v623
        %v626 = vmul.f32 %v468, %v623
        %v627 = vmul.f32 %v469, %v623
        %v628 = vmul.f32 %v470, %v623
        %633 = vrot.lane.b32.xlu0 %v625, 122
        %v634 = vpop.permute.xlu0 %633
        %635 = vrot.lane.b32.xlu0 %v626, 122
        %v636 = vpop.permute.xlu0 %635
        %637 = vrot.lane.b32.xlu0 %v627, 122
        %v638 = vpop.permute.xlu0 %637
        %639 = vrot.lane.b32.xlu0 %v628, 122
        %v640 = vpop.permute.xlu0 %639
        %vm641 = vcmask 998400
        %v642 = vsel %vm641, %v634, %v636
        %v643 = vsel %vm641, %v636, %v638
        %v644 = vsel %vm641, %v638, %v640
        %v648 = vadd.f32 %v618, %v642
        %v649 = vadd.f32 %v619, %v643
        %v650 = vadd.f32 %v620, %v644
        %651 = vset.pattern.permute.xlu0 7
        %652 = vperm.xlu0 %651, %v451
        %v653 = vpop.permute.xlu0 %652
        %v655 = vmul.f32 %v467, %v653
        %v656 = vmul.f32 %v468, %v653
        %v657 = vmul.f32 %v469, %v653
        %v658 = vmul.f32 %v470, %v653
        %663 = vrot.lane.b32.xlu0 %v655, 121
        %v664 = vpop.permute.xlu0 %663
        %665 = vrot.lane.b32.xlu0 %v656, 121
        %v666 = vpop.permute.xlu0 %665
        %667 = vrot.lane.b32.xlu0 %v657, 121
        %v668 = vpop.permute.xlu0 %667
        %669 = vrot.lane.b32.xlu0 %v658, 121
        %v670 = vpop.permute.xlu0 %669
        %vm671 = vcmask 990208
        %v672 = vsel %vm671, %v664, %v666
        %v673 = vsel %vm671, %v666, %v668
        %v674 = vsel %vm671, %v668, %v670
        %v678 = vadd.f32 %v648, %v672
        %v679 = vadd.f32 %v649, %v673
        %v680 = vadd.f32 %v650, %v674
        %681 = vset.pattern.permute.xlu0 8
        %682 = vperm.xlu0 %681, %v451
        %v683 = vpop.permute.xlu0 %682
        %v685 = vmul.f32 %v467, %v683
        %v686 = vmul.f32 %v468, %v683
        %v687 = vmul.f32 %v469, %v683
        %v688 = vmul.f32 %v470, %v683
        %693 = vrot.lane.b32.xlu0 %v685, 120
        %v694 = vpop.permute.xlu0 %693
        %695 = vrot.lane.b32.xlu0 %v686, 120
        %v696 = vpop.permute.xlu0 %695
        %697 = vrot.lane.b32.xlu0 %v687, 120
        %v698 = vpop.permute.xlu0 %697
        %699 = vrot.lane.b32.xlu0 %v688, 120
        %v700 = vpop.permute.xlu0 %699
        %vm701 = vcmask 982016
        %v702 = vsel %vm701, %v694, %v696
        %v703 = vsel %vm701, %v696, %v698
        %v704 = vsel %vm701, %v698, %v700
        %v708 = vadd.f32 %v678, %v702
        %v709 = vadd.f32 %v679, %v703
        %v710 = vadd.f32 %v680, %v704
        %711 = vset.pattern.permute.xlu0 9
        %712 = vperm.xlu0 %711, %v451
        %v713 = vpop.permute.xlu0 %712
        %v715 = vmul.f32 %v467, %v713
        %v716 = vmul.f32 %v468, %v713
        %v717 = vmul.f32 %v469, %v713
        %v718 = vmul.f32 %v470, %v713
        %723 = vrot.lane.b32.xlu0 %v715, 104
        %v724 = vpop.permute.xlu0 %723
        %725 = vrot.lane.b32.xlu0 %v716, 104
        %v726 = vpop.permute.xlu0 %725
        %727 = vrot.lane.b32.xlu0 %v717, 104
        %v728 = vpop.permute.xlu0 %727
        %729 = vrot.lane.b32.xlu0 %v718, 104
        %v730 = vpop.permute.xlu0 %729
        %vm731 = vcmask 850944
        %v732 = vsel %vm731, %v724, %v726
        %v733 = vsel %vm731, %v726, %v728
        %v734 = vsel %vm731, %v728, %v730
        %v738 = vadd.f32 %v708, %v732
        %v739 = vadd.f32 %v709, %v733
        %v740 = vadd.f32 %v710, %v734
        %741 = vset.pattern.permute.xlu0 10
        %742 = vperm.xlu0 %741, %v451
        %v743 = vpop.permute.xlu0 %742
        %v745 = vmul.f32 %v467, %v743
        %v746 = vmul.f32 %v468, %v743
        %v747 = vmul.f32 %v469, %v743
        %v748 = vmul.f32 %v470, %v743
        %753 = vrot.lane.b32.xlu0 %v745, 103
        %v754 = vpop.permute.xlu0 %753
        %755 = vrot.lane.b32.xlu0 %v746, 103
        %v756 = vpop.permute.xlu0 %755
        %757 = vrot.lane.b32.xlu0 %v747, 103
        %v758 = vpop.permute.xlu0 %757
        %759 = vrot.lane.b32.xlu0 %v748, 103
        %v760 = vpop.permute.xlu0 %759
        %vm761 = vcmask 842752
        %v762 = vsel %vm761, %v754, %v756
        %v763 = vsel %vm761, %v756, %v758
        %v764 = vsel %vm761, %v758, %v760
        %v768 = vadd.f32 %v738, %v762
        %v769 = vadd.f32 %v739, %v763
        %v770 = vadd.f32 %v740, %v764
        %772 = vset.pattern.permute.xlu0 0
        %773 = vperm.xlu0 %772, %v452
        %v774 = vpop.permute.xlu0 %773
        %v776 = vmul.f32 %v467, %v774
        %v777 = vmul.f32 %v468, %v774
        %v778 = vmul.f32 %v469, %v774
        %v779 = vmul.f32 %v470, %v774
        %v780 = vadd.f32 %v776, 0.0
        %v781 = vadd.f32 %v777, 0.0
        %v782 = vadd.f32 %v778, 0.0
        %v783 = vadd.f32 %v779, 0.0
        %784 = vset.pattern.permute.xlu0 11
        %785 = vperm.xlu0 %784, %v451
        %v786 = vpop.permute.xlu0 %785
        %v788 = vmul.f32 %v467, %v786
        %v789 = vmul.f32 %v468, %v786
        %v790 = vmul.f32 %v469, %v786
        %v791 = vmul.f32 %v470, %v786
        %796 = vrot.lane.b32.xlu0 %v788, 102
        %v797 = vpop.permute.xlu0 %796
        %798 = vrot.lane.b32.xlu0 %v789, 102
        %v799 = vpop.permute.xlu0 %798
        %800 = vrot.lane.b32.xlu0 %v790, 102
        %v801 = vpop.permute.xlu0 %800
        %802 = vrot.lane.b32.xlu0 %v791, 102
        %v803 = vpop.permute.xlu0 %802
        %vm804 = vcmask 834560
        %v805 = vsel %vm804, %v797, %v799
        %v806 = vsel %vm804, %v799, %v801
        %v807 = vsel %vm804, %v801, %v803
        %v811 = vadd.f32 %v768, %v805
        %v812 = vadd.f32 %v769, %v806
        %v813 = vadd.f32 %v770, %v807
        %814 = vset.pattern.permute.xlu0 1
        %815 = vperm.xlu0 %814, %v452
        %v816 = vpop.permute.xlu0 %815
        %v818 = vmul.f32 %v467, %v816
        %v819 = vmul.f32 %v468, %v816
        %v820 = vmul.f32 %v469, %v816
        %v821 = vmul.f32 %v470, %v816
        %826 = vrot.lane.b32.xlu0 %v818, 127
        %v827 = vpop.permute.xlu0 %826
        %828 = vrot.lane.b32.xlu0 %v819, 127
        %v829 = vpop.permute.xlu0 %828
        %830 = vrot.lane.b32.xlu0 %v820, 127
        %v831 = vpop.permute.xlu0 %830
        %832 = vrot.lane.b32.xlu0 %v821, 127
        %v833 = vpop.permute.xlu0 %832
        %v834 = vsel %vm491, %v827, %v829
        %v835 = vsel %vm491, %v829, %v831
        %v836 = vsel %vm491, %v831, %v833
        %v841 = vadd.f32 %v780, %v834
        %v842 = vadd.f32 %v781, %v835
        %v843 = vadd.f32 %v782, %v836
        %v844 = vadd.f32 %v783, %v833
        %845 = vset.pattern.permute.xlu0 12
        %846 = vperm.xlu0 %845, %v451
        %v847 = vpop.permute.xlu0 %846
        %v849 = vmul.f32 %v467, %v847
        %v850 = vmul.f32 %v468, %v847
        %v851 = vmul.f32 %v469, %v847
        %v852 = vmul.f32 %v470, %v847
        %857 = vrot.lane.b32.xlu0 %v849, 101
        %v858 = vpop.permute.xlu0 %857
        %859 = vrot.lane.b32.xlu0 %v850, 101
        %v860 = vpop.permute.xlu0 %859
        %861 = vrot.lane.b32.xlu0 %v851, 101
        %v862 = vpop.permute.xlu0 %861
        %863 = vrot.lane.b32.xlu0 %v852, 101
        %v864 = vpop.permute.xlu0 %863
        %vm865 = vcmask 826368
        %v866 = vsel %vm865, %v858, %v860
        %v867 = vsel %vm865, %v860, %v862
        %v868 = vsel %vm865, %v862, %v864
        %v872 = vadd.f32 %v811, %v866
        %v873 = vadd.f32 %v812, %v867
        %v874 = vadd.f32 %v813, %v868
        %875 = vset.pattern.permute.xlu0 2
        %876 = vperm.xlu0 %875, %v452
        %v877 = vpop.permute.xlu0 %876
        %v879 = vmul.f32 %v467, %v877
        %v880 = vmul.f32 %v468, %v877
        %v881 = vmul.f32 %v469, %v877
        %v882 = vmul.f32 %v470, %v877
        %887 = vrot.lane.b32.xlu0 %v879, 126
        %v888 = vpop.permute.xlu0 %887
        %889 = vrot.lane.b32.xlu0 %v880, 126
        %v890 = vpop.permute.xlu0 %889
        %891 = vrot.lane.b32.xlu0 %v881, 126
        %v892 = vpop.permute.xlu0 %891
        %893 = vrot.lane.b32.xlu0 %v882, 126
        %v894 = vpop.permute.xlu0 %893
        %v895 = vsel %vm521, %v888, %v890
        %v896 = vsel %vm521, %v890, %v892
        %v897 = vsel %vm521, %v892, %v894
        %v902 = vadd.f32 %v841, %v895
        %v903 = vadd.f32 %v842, %v896
        %v904 = vadd.f32 %v843, %v897
        %v905 = vadd.f32 %v844, %v894
        %906 = vset.pattern.permute.xlu0 13
        %907 = vperm.xlu0 %906, %v451
        %v908 = vpop.permute.xlu0 %907
        %v910 = vmul.f32 %v467, %v908
        %v911 = vmul.f32 %v468, %v908
        %v912 = vmul.f32 %v469, %v908
        %v913 = vmul.f32 %v470, %v908
        %918 = vrot.lane.b32.xlu0 %v910, 100
        %v919 = vpop.permute.xlu0 %918
        %920 = vrot.lane.b32.xlu0 %v911, 100
        %v921 = vpop.permute.xlu0 %920
        %922 = vrot.lane.b32.xlu0 %v912, 100
        %v923 = vpop.permute.xlu0 %922
        %924 = vrot.lane.b32.xlu0 %v913, 100
        %v925 = vpop.permute.xlu0 %924
        %vm926 = vcmask 818176
        %v927 = vsel %vm926, %v919, %v921
        %v928 = vsel %vm926, %v921, %v923
        %v929 = vsel %vm926, %v923, %v925
        %v933 = vadd.f32 %v872, %v927
        %v934 = vadd.f32 %v873, %v928
        %v935 = vadd.f32 %v874, %v929
        %936 = vset.pattern.permute.xlu0 3
        %937 = vperm.xlu0 %936, %v452
        %v938 = vpop.permute.xlu0 %937
        %v940 = vmul.f32 %v467, %v938
        %v941 = vmul.f32 %v468, %v938
        %v942 = vmul.f32 %v469, %v938
        %v943 = vmul.f32 %v470, %v938
        %948 = vrot.lane.b32.xlu0 %v940, 125
        %v949 = vpop.permute.xlu0 %948
        %950 = vrot.lane.b32.xlu0 %v941, 125
        %v951 = vpop.permute.xlu0 %950
        %952 = vrot.lane.b32.xlu0 %v942, 125
        %v953 = vpop.permute.xlu0 %952
        %954 = vrot.lane.b32.xlu0 %v943, 125
        %v955 = vpop.permute.xlu0 %954
        %v956 = vsel %vm551, %v949, %v951
        %v957 = vsel %vm551, %v951, %v953
        %v958 = vsel %vm551, %v953, %v955
        %v963 = vadd.f32 %v902, %v956
        %v964 = vadd.f32 %v903, %v957
        %v965 = vadd.f32 %v904, %v958
        %v966 = vadd.f32 %v905, %v955
        %967 = vset.pattern.permute.xlu0 14
        %968 = vperm.xlu0 %967, %v451
        %v969 = vpop.permute.xlu0 %968
        %v971 = vmul.f32 %v467, %v969
        %v972 = vmul.f32 %v468, %v969
        %v973 = vmul.f32 %v469, %v969
        %v974 = vmul.f32 %v470, %v969
        %979 = vrot.lane.b32.xlu0 %v971, 99
        %v980 = vpop.permute.xlu0 %979
        %981 = vrot.lane.b32.xlu0 %v972, 99
        %v982 = vpop.permute.xlu0 %981
        %983 = vrot.lane.b32.xlu0 %v973, 99
        %v984 = vpop.permute.xlu0 %983
        %985 = vrot.lane.b32.xlu0 %v974, 99
        %v986 = vpop.permute.xlu0 %985
        %vm987 = vcmask 809984
        %v988 = vsel %vm987, %v980, %v982
        %v989 = vsel %vm987, %v982, %v984
        %v990 = vsel %vm987, %v984, %v986
        %v994 = vadd.f32 %v933, %v988
        %v995 = vadd.f32 %v934, %v989
        %v996 = vadd.f32 %v935, %v990
        %997 = vset.pattern.permute.xlu0 4
        %998 = vperm.xlu0 %997, %v452
        %v999 = vpop.permute.xlu0 %998
        %v1001 = vmul.f32 %v467, %v999
        %v1002 = vmul.f32 %v468, %v999
        %v1003 = vmul.f32 %v469, %v999
        %v1004 = vmul.f32 %v470, %v999
        %1009 = vrot.lane.b32.xlu0 %v1001, 124
        %v1010 = vpop.permute.xlu0 %1009
        %1011 = vrot.lane.b32.xlu0 %v1002, 124
        %v1012 = vpop.permute.xlu0 %1011
        %1013 = vrot.lane.b32.xlu0 %v1003, 124
        %v1014 = vpop.permute.xlu0 %1013
        %1015 = vrot.lane.b32.xlu0 %v1004, 124
        %v1016 = vpop.permute.xlu0 %1015
        %v1017 = vsel %vm581, %v1010, %v1012
        %v1018 = vsel %vm581, %v1012, %v1014
        %v1019 = vsel %vm581, %v1014, %v1016
        %v1024 = vadd.f32 %v963, %v1017
        %v1025 = vadd.f32 %v964, %v1018
        %v1026 = vadd.f32 %v965, %v1019
        %v1027 = vadd.f32 %v966, %v1016
        %1028 = vset.pattern.permute.xlu0 15
        %1029 = vperm.xlu0 %1028, %v451
        %v1030 = vpop.permute.xlu0 %1029
        %v1032 = vmul.f32 %v467, %v1030
        %v1033 = vmul.f32 %v468, %v1030
        %v1034 = vmul.f32 %v469, %v1030
        %v1035 = vmul.f32 %v470, %v1030
        %1040 = vrot.lane.b32.xlu0 %v1032, 98
        %v1041 = vpop.permute.xlu0 %1040
        %1042 = vrot.lane.b32.xlu0 %v1033, 98
        %v1043 = vpop.permute.xlu0 %1042
        %1044 = vrot.lane.b32.xlu0 %v1034, 98
        %v1045 = vpop.permute.xlu0 %1044
        %1046 = vrot.lane.b32.xlu0 %v1035, 98
        %v1047 = vpop.permute.xlu0 %1046
        %vm1048 = vcmask 801792
        %v1049 = vsel %vm1048, %v1041, %v1043
        %v1050 = vsel %vm1048, %v1043, %v1045
        %v1051 = vsel %vm1048, %v1045, %v1047
        %v1055 = vadd.f32 %v994, %v1049
        %v1056 = vadd.f32 %v995, %v1050
        %v1057 = vadd.f32 %v996, %v1051
        %1058 = vset.pattern.permute.xlu0 5
        %1059 = vperm.xlu0 %1058, %v452
        %v1060 = vpop.permute.xlu0 %1059
        %v1062 = vmul.f32 %v467, %v1060
        %v1063 = vmul.f32 %v468, %v1060
        %v1064 = vmul.f32 %v469, %v1060
        %v1065 = vmul.f32 %v470, %v1060
        %1070 = vrot.lane.b32.xlu0 %v1062, 123
        %v1071 = vpop.permute.xlu0 %1070
        %1072 = vrot.lane.b32.xlu0 %v1063, 123
        %v1073 = vpop.permute.xlu0 %1072
        %1074 = vrot.lane.b32.xlu0 %v1064, 123
        %v1075 = vpop.permute.xlu0 %1074
        %1076 = vrot.lane.b32.xlu0 %v1065, 123
        %v1077 = vpop.permute.xlu0 %1076
        %v1078 = vsel %vm611, %v1071, %v1073
        %v1079 = vsel %vm611, %v1073, %v1075
        %v1080 = vsel %vm611, %v1075, %v1077
        %v1085 = vadd.f32 %v1024, %v1078
        %v1086 = vadd.f32 %v1025, %v1079
        %v1087 = vadd.f32 %v1026, %v1080
        %v1088 = vadd.f32 %v1027, %v1077
        %1089 = vset.pattern.permute.xlu0 16
        %1090 = vperm.xlu0 %1089, %v451
        %v1091 = vpop.permute.xlu0 %1090
        %v1093 = vmul.f32 %v467, %v1091
        %v1094 = vmul.f32 %v468, %v1091
        %v1095 = vmul.f32 %v469, %v1091
        %v1096 = vmul.f32 %v470, %v1091
        %1101 = vrot.lane.b32.xlu0 %v1093, 97
        %v1102 = vpop.permute.xlu0 %1101
        %1103 = vrot.lane.b32.xlu0 %v1094, 97
        %v1104 = vpop.permute.xlu0 %1103
        %1105 = vrot.lane.b32.xlu0 %v1095, 97
        %v1106 = vpop.permute.xlu0 %1105
        %1107 = vrot.lane.b32.xlu0 %v1096, 97
        %v1108 = vpop.permute.xlu0 %1107
        %vm1109 = vcmask 793600
        %v1110 = vsel %vm1109, %v1102, %v1104
        %v1111 = vsel %vm1109, %v1104, %v1106
        %v1112 = vsel %vm1109, %v1106, %v1108
        %v1116 = vadd.f32 %v1055, %v1110
        %v1117 = vadd.f32 %v1056, %v1111
        %v1118 = vadd.f32 %v1057, %v1112
        %1119 = vset.pattern.permute.xlu0 6
        %1120 = vperm.xlu0 %1119, %v452
        %v1121 = vpop.permute.xlu0 %1120
        %v1123 = vmul.f32 %v467, %v1121
        %v1124 = vmul.f32 %v468, %v1121
        %v1125 = vmul.f32 %v469, %v1121
        %v1126 = vmul.f32 %v470, %v1121
        %1131 = vrot.lane.b32.xlu0 %v1123, 122
        %v1132 = vpop.permute.xlu0 %1131
        %1133 = vrot.lane.b32.xlu0 %v1124, 122
        %v1134 = vpop.permute.xlu0 %1133
        %1135 = vrot.lane.b32.xlu0 %v1125, 122
        %v1136 = vpop.permute.xlu0 %1135
        %1137 = vrot.lane.b32.xlu0 %v1126, 122
        %v1138 = vpop.permute.xlu0 %1137
        %v1139 = vsel %vm641, %v1132, %v1134
        %v1140 = vsel %vm641, %v1134, %v1136
        %v1141 = vsel %vm641, %v1136, %v1138
        %v1146 = vadd.f32 %v1085, %v1139
        %v1147 = vadd.f32 %v1086, %v1140
        %v1148 = vadd.f32 %v1087, %v1141
        %v1149 = vadd.f32 %v1088, %v1138
        %1150 = vset.pattern.permute.xlu0 17
        %1151 = vperm.xlu0 %1150, %v451
        %v1152 = vpop.permute.xlu0 %1151
        %v1154 = vmul.f32 %v467, %v1152
        %v1155 = vmul.f32 %v468, %v1152
        %v1156 = vmul.f32 %v469, %v1152
        %v1157 = vmul.f32 %v470, %v1152
        %1162 = vrot.lane.b32.xlu0 %v1154, 96
        %v1163 = vpop.permute.xlu0 %1162
        %1164 = vrot.lane.b32.xlu0 %v1155, 96
        %v1165 = vpop.permute.xlu0 %1164
        %1166 = vrot.lane.b32.xlu0 %v1156, 96
        %v1167 = vpop.permute.xlu0 %1166
        %1168 = vrot.lane.b32.xlu0 %v1157, 96
        %v1169 = vpop.permute.xlu0 %1168
        %vm1170 = vcmask 785408
        %v1171 = vsel %vm1170, %v1163, %v1165
        %v1172 = vsel %vm1170, %v1165, %v1167
        %v1173 = vsel %vm1170, %v1167, %v1169
        %v1177 = vadd.f32 %v1116, %v1171
        %v1178 = vadd.f32 %v1117, %v1172
        %v1179 = vadd.f32 %v1118, %v1173
        %1180 = vset.pattern.permute.xlu0 18
        %1181 = vperm.xlu0 %1180, %v451
        %v1182 = vpop.permute.xlu0 %1181
        %v1184 = vmul.f32 %v467, %v1182
        %v1185 = vmul.f32 %v468, %v1182
        %v1186 = vmul.f32 %v469, %v1182
        %v1187 = vmul.f32 %v470, %v1182
        %1192 = vrot.lane.b32.xlu0 %v1184, 80
        %v1193 = vpop.permute.xlu0 %1192
        %1194 = vrot.lane.b32.xlu0 %v1185, 80
        %v1195 = vpop.permute.xlu0 %1194
        %1196 = vrot.lane.b32.xlu0 %v1186, 80
        %v1197 = vpop.permute.xlu0 %1196
        %1198 = vrot.lane.b32.xlu0 %v1187, 80
        %v1199 = vpop.permute.xlu0 %1198
        %vm1200 = vcmask 654336
        %v1201 = vsel %vm1200, %v1193, %v1195
        %v1202 = vsel %vm1200, %v1195, %v1197
        %v1203 = vsel %vm1200, %v1197, %v1199
        %v1207 = vadd.f32 %v1177, %v1201
        %v1208 = vadd.f32 %v1178, %v1202
        %v1209 = vadd.f32 %v1179, %v1203
        %1210 = vset.pattern.permute.xlu0 19
        %1211 = vperm.xlu0 %1210, %v451
        %v1212 = vpop.permute.xlu0 %1211
        %v1214 = vmul.f32 %v467, %v1212
        %v1215 = vmul.f32 %v468, %v1212
        %v1216 = vmul.f32 %v469, %v1212
        %v1217 = vmul.f32 %v470, %v1212
        %1222 = vrot.lane.b32.xlu0 %v1214, 79
        %v1223 = vpop.permute.xlu0 %1222
        %1224 = vrot.lane.b32.xlu0 %v1215, 79
        %v1225 = vpop.permute.xlu0 %1224
        %1226 = vrot.lane.b32.xlu0 %v1216, 79
        %v1227 = vpop.permute.xlu0 %1226
        %1228 = vrot.lane.b32.xlu0 %v1217, 79
        %v1229 = vpop.permute.xlu0 %1228
        %vm1230 = vcmask 646144
        %v1231 = vsel %vm1230, %v1223, %v1225
        %v1232 = vsel %vm1230, %v1225, %v1227
        %v1233 = vsel %vm1230, %v1227, %v1229
        %v1237 = vadd.f32 %v1207, %v1231
        %v1238 = vadd.f32 %v1208, %v1232
        %v1239 = vadd.f32 %v1209, %v1233
        %1240 = vset.pattern.permute.xlu0 7
        %1241 = vperm.xlu0 %1240, %v452
        %v1242 = vpop.permute.xlu0 %1241
        %v1244 = vmul.f32 %v467, %v1242
        %v1245 = vmul.f32 %v468, %v1242
        %v1246 = vmul.f32 %v469, %v1242
        %v1247 = vmul.f32 %v470, %v1242
        %1252 = vrot.lane.b32.xlu0 %v1244, 104
        %v1253 = vpop.permute.xlu0 %1252
        %1254 = vrot.lane.b32.xlu0 %v1245, 104
        %v1255 = vpop.permute.xlu0 %1254
        %1256 = vrot.lane.b32.xlu0 %v1246, 104
        %v1257 = vpop.permute.xlu0 %1256
        %1258 = vrot.lane.b32.xlu0 %v1247, 104
        %v1259 = vpop.permute.xlu0 %1258
        %v1260 = vsel %vm731, %v1253, %v1255
        %v1261 = vsel %vm731, %v1255, %v1257
        %v1262 = vsel %vm731, %v1257, %v1259
        %v1267 = vadd.f32 %v1146, %v1260
        %v1268 = vadd.f32 %v1147, %v1261
        %v1269 = vadd.f32 %v1148, %v1262
        %v1270 = vadd.f32 %v1149, %v1259
        %1271 = vset.pattern.permute.xlu0 20
        %1272 = vperm.xlu0 %1271, %v451
        %v1273 = vpop.permute.xlu0 %1272
        %v1275 = vmul.f32 %v467, %v1273
        %v1276 = vmul.f32 %v468, %v1273
        %v1277 = vmul.f32 %v469, %v1273
        %v1278 = vmul.f32 %v470, %v1273
        %1283 = vrot.lane.b32.xlu0 %v1275, 78
        %v1284 = vpop.permute.xlu0 %1283
        %1285 = vrot.lane.b32.xlu0 %v1276, 78
        %v1286 = vpop.permute.xlu0 %1285
        %1287 = vrot.lane.b32.xlu0 %v1277, 78
        %v1288 = vpop.permute.xlu0 %1287
        %1289 = vrot.lane.b32.xlu0 %v1278, 78
        %v1290 = vpop.permute.xlu0 %1289
        %vm1291 = vcmask 637952
        %v1292 = vsel %vm1291, %v1284, %v1286
        %v1293 = vsel %vm1291, %v1286, %v1288
        %v1294 = vsel %vm1291, %v1288, %v1290
        %v1298 = vadd.f32 %v1237, %v1292
        %v1299 = vadd.f32 %v1238, %v1293
        %v1300 = vadd.f32 %v1239, %v1294
        %1301 = vset.pattern.permute.xlu0 8
        %1302 = vperm.xlu0 %1301, %v452
        %v1303 = vpop.permute.xlu0 %1302
        %v1305 = vmul.f32 %v467, %v1303
        %v1306 = vmul.f32 %v468, %v1303
        %v1307 = vmul.f32 %v469, %v1303
        %v1308 = vmul.f32 %v470, %v1303
        %1313 = vrot.lane.b32.xlu0 %v1305, 103
        %v1314 = vpop.permute.xlu0 %1313
        %1315 = vrot.lane.b32.xlu0 %v1306, 103
        %v1316 = vpop.permute.xlu0 %1315
        %1317 = vrot.lane.b32.xlu0 %v1307, 103
        %v1318 = vpop.permute.xlu0 %1317
        %1319 = vrot.lane.b32.xlu0 %v1308, 103
        %v1320 = vpop.permute.xlu0 %1319
        %v1321 = vsel %vm761, %v1314, %v1316
        %v1322 = vsel %vm761, %v1316, %v1318
        %v1323 = vsel %vm761, %v1318, %v1320
        %v1328 = vadd.f32 %v1267, %v1321
        %v1329 = vadd.f32 %v1268, %v1322
        %v1330 = vadd.f32 %v1269, %v1323
        %v1331 = vadd.f32 %v1270, %v1320
        %1332 = vset.pattern.permute.xlu0 21
        %1333 = vperm.xlu0 %1332, %v451
        %v1334 = vpop.permute.xlu0 %1333
        %v1336 = vmul.f32 %v467, %v1334
        %v1337 = vmul.f32 %v468, %v1334
        %v1338 = vmul.f32 %v469, %v1334
        %v1339 = vmul.f32 %v470, %v1334
        %1344 = vrot.lane.b32.xlu0 %v1336, 77
        %v1345 = vpop.permute.xlu0 %1344
        %1346 = vrot.lane.b32.xlu0 %v1337, 77
        %v1347 = vpop.permute.xlu0 %1346
        %1348 = vrot.lane.b32.xlu0 %v1338, 77
        %v1349 = vpop.permute.xlu0 %1348
        %1350 = vrot.lane.b32.xlu0 %v1339, 77
        %v1351 = vpop.permute.xlu0 %1350
        %vm1352 = vcmask 629760
        %v1353 = vsel %vm1352, %v1345, %v1347
        %v1354 = vsel %vm1352, %v1347, %v1349
        %v1355 = vsel %vm1352, %v1349, %v1351
        %v1359 = vadd.f32 %v1298, %v1353
        %v1360 = vadd.f32 %v1299, %v1354
        %v1361 = vadd.f32 %v1300, %v1355
        %1362 = vset.pattern.permute.xlu0 9
        %1363 = vperm.xlu0 %1362, %v452
        %v1364 = vpop.permute.xlu0 %1363
        %v1366 = vmul.f32 %v467, %v1364
        %v1367 = vmul.f32 %v468, %v1364
        %v1368 = vmul.f32 %v469, %v1364
        %v1369 = vmul.f32 %v470, %v1364
        %1374 = vrot.lane.b32.xlu0 %v1366, 102
        %v1375 = vpop.permute.xlu0 %1374
        %1376 = vrot.lane.b32.xlu0 %v1367, 102
        %v1377 = vpop.permute.xlu0 %1376
        %1378 = vrot.lane.b32.xlu0 %v1368, 102
        %v1379 = vpop.permute.xlu0 %1378
        %1380 = vrot.lane.b32.xlu0 %v1369, 102
        %v1381 = vpop.permute.xlu0 %1380
        %v1382 = vsel %vm804, %v1375, %v1377
        %v1383 = vsel %vm804, %v1377, %v1379
        %v1384 = vsel %vm804, %v1379, %v1381
        %v1389 = vadd.f32 %v1328, %v1382
        %v1390 = vadd.f32 %v1329, %v1383
        %v1391 = vadd.f32 %v1330, %v1384
        %v1392 = vadd.f32 %v1331, %v1381
        %1393 = vset.pattern.permute.xlu0 22
        %1394 = vperm.xlu0 %1393, %v451
        %v1395 = vpop.permute.xlu0 %1394
        %v1397 = vmul.f32 %v467, %v1395
        %v1398 = vmul.f32 %v468, %v1395
        %v1399 = vmul.f32 %v469, %v1395
        %v1400 = vmul.f32 %v470, %v1395
        %1405 = vrot.lane.b32.xlu0 %v1397, 76
        %v1406 = vpop.permute.xlu0 %1405
        %1407 = vrot.lane.b32.xlu0 %v1398, 76
        %v1408 = vpop.permute.xlu0 %1407
        %1409 = vrot.lane.b32.xlu0 %v1399, 76
        %v1410 = vpop.permute.xlu0 %1409
        %1411 = vrot.lane.b32.xlu0 %v1400, 76
        %v1412 = vpop.permute.xlu0 %1411
        %vm1413 = vcmask 621568
        %v1414 = vsel %vm1413, %v1406, %v1408
        %v1415 = vsel %vm1413, %v1408, %v1410
        %v1416 = vsel %vm1413, %v1410, %v1412
        %v1420 = vadd.f32 %v1359, %v1414
        %v1421 = vadd.f32 %v1360, %v1415
        %v1422 = vadd.f32 %v1361, %v1416
        %1423 = vset.pattern.permute.xlu0 10
        %1424 = vperm.xlu0 %1423, %v452
        %v1425 = vpop.permute.xlu0 %1424
        %v1427 = vmul.f32 %v467, %v1425
        %v1428 = vmul.f32 %v468, %v1425
        %v1429 = vmul.f32 %v469, %v1425
        %v1430 = vmul.f32 %v470, %v1425
        %1435 = vrot.lane.b32.xlu0 %v1427, 101
        %v1436 = vpop.permute.xlu0 %1435
        %1437 = vrot.lane.b32.xlu0 %v1428, 101
        %v1438 = vpop.permute.xlu0 %1437
        %1439 = vrot.lane.b32.xlu0 %v1429, 101
        %v1440 = vpop.permute.xlu0 %1439
        %1441 = vrot.lane.b32.xlu0 %v1430, 101
        %v1442 = vpop.permute.xlu0 %1441
        %v1443 = vsel %vm865, %v1436, %v1438
        %v1444 = vsel %vm865, %v1438, %v1440
        %v1445 = vsel %vm865, %v1440, %v1442
        %v1450 = vadd.f32 %v1389, %v1443
        %v1451 = vadd.f32 %v1390, %v1444
        %v1452 = vadd.f32 %v1391, %v1445
        %v1453 = vadd.f32 %v1392, %v1442
        %1454 = vset.pattern.permute.xlu0 23
        %1455 = vperm.xlu0 %1454, %v451
        %v1456 = vpop.permute.xlu0 %1455
        %v1458 = vmul.f32 %v467, %v1456
        %v1459 = vmul.f32 %v468, %v1456
        %v1460 = vmul.f32 %v469, %v1456
        %v1461 = vmul.f32 %v470, %v1456
        %1466 = vrot.lane.b32.xlu0 %v1458, 75
        %v1467 = vpop.permute.xlu0 %1466
        %1468 = vrot.lane.b32.xlu0 %v1459, 75
        %v1469 = vpop.permute.xlu0 %1468
        %1470 = vrot.lane.b32.xlu0 %v1460, 75
        %v1471 = vpop.permute.xlu0 %1470
        %1472 = vrot.lane.b32.xlu0 %v1461, 75
        %v1473 = vpop.permute.xlu0 %1472
        %vm1474 = vcmask 613376
        %v1475 = vsel %vm1474, %v1467, %v1469
        %v1476 = vsel %vm1474, %v1469, %v1471
        %v1477 = vsel %vm1474, %v1471, %v1473
        %v1481 = vadd.f32 %v1420, %v1475
        %v1482 = vadd.f32 %v1421, %v1476
        %v1483 = vadd.f32 %v1422, %v1477
        %1484 = vset.pattern.permute.xlu0 11
        %1485 = vperm.xlu0 %1484, %v452
        %v1486 = vpop.permute.xlu0 %1485
        %v1488 = vmul.f32 %v467, %v1486
        %v1489 = vmul.f32 %v468, %v1486
        %v1490 = vmul.f32 %v469, %v1486
        %v1491 = vmul.f32 %v470, %v1486
        %1496 = vrot.lane.b32.xlu0 %v1488, 100
        %v1497 = vpop.permute.xlu0 %1496
        %1498 = vrot.lane.b32.xlu0 %v1489, 100
        %v1499 = vpop.permute.xlu0 %1498
        %1500 = vrot.lane.b32.xlu0 %v1490, 100
        %v1501 = vpop.permute.xlu0 %1500
        %1502 = vrot.lane.b32.xlu0 %v1491, 100
        %v1503 = vpop.permute.xlu0 %1502
        %v1504 = vsel %vm926, %v1497, %v1499
        %v1505 = vsel %vm926, %v1499, %v1501
        %v1506 = vsel %vm926, %v1501, %v1503
        %v1511 = vadd.f32 %v1450, %v1504
        %v1512 = vadd.f32 %v1451, %v1505
        %v1513 = vadd.f32 %v1452, %v1506
        %v1514 = vadd.f32 %v1453, %v1503
        %1515 = vset.pattern.permute.xlu0 24
        %1516 = vperm.xlu0 %1515, %v451
        %v1517 = vpop.permute.xlu0 %1516
        %v1519 = vmul.f32 %v467, %v1517
        %v1520 = vmul.f32 %v468, %v1517
        %v1521 = vmul.f32 %v469, %v1517
        %v1522 = vmul.f32 %v470, %v1517
        %1527 = vrot.lane.b32.xlu0 %v1519, 74
        %v1528 = vpop.permute.xlu0 %1527
        %1529 = vrot.lane.b32.xlu0 %v1520, 74
        %v1530 = vpop.permute.xlu0 %1529
        %1531 = vrot.lane.b32.xlu0 %v1521, 74
        %v1532 = vpop.permute.xlu0 %1531
        %1533 = vrot.lane.b32.xlu0 %v1522, 74
        %v1534 = vpop.permute.xlu0 %1533
        %vm1535 = vcmask 605184
        %v1536 = vsel %vm1535, %v1528, %v1530
        %v1537 = vsel %vm1535, %v1530, %v1532
        %v1538 = vsel %vm1535, %v1532, %v1534
        %v1542 = vadd.f32 %v1481, %v1536
        %v1543 = vadd.f32 %v1482, %v1537
        %v1544 = vadd.f32 %v1483, %v1538
        %1545 = vset.pattern.permute.xlu0 12
        %1546 = vperm.xlu0 %1545, %v452
        %v1547 = vpop.permute.xlu0 %1546
        %v1549 = vmul.f32 %v467, %v1547
        %v1550 = vmul.f32 %v468, %v1547
        %v1551 = vmul.f32 %v469, %v1547
        %v1552 = vmul.f32 %v470, %v1547
        %1557 = vrot.lane.b32.xlu0 %v1549, 99
        %v1558 = vpop.permute.xlu0 %1557
        %1559 = vrot.lane.b32.xlu0 %v1550, 99
        %v1560 = vpop.permute.xlu0 %1559
        %1561 = vrot.lane.b32.xlu0 %v1551, 99
        %v1562 = vpop.permute.xlu0 %1561
        %1563 = vrot.lane.b32.xlu0 %v1552, 99
        %v1564 = vpop.permute.xlu0 %1563
        %v1565 = vsel %vm987, %v1558, %v1560
        %v1566 = vsel %vm987, %v1560, %v1562
        %v1567 = vsel %vm987, %v1562, %v1564
        %v1572 = vadd.f32 %v1511, %v1565
        %v1573 = vadd.f32 %v1512, %v1566
        %v1574 = vadd.f32 %v1513, %v1567
        %v1575 = vadd.f32 %v1514, %v1564
        %1576 = vset.pattern.permute.xlu0 25
        %1577 = vperm.xlu0 %1576, %v451
        %v1578 = vpop.permute.xlu0 %1577
        %v1580 = vmul.f32 %v467, %v1578
        %v1581 = vmul.f32 %v468, %v1578
        %v1582 = vmul.f32 %v469, %v1578
        %v1583 = vmul.f32 %v470, %v1578
        %1588 = vrot.lane.b32.xlu0 %v1580, 73
        %v1589 = vpop.permute.xlu0 %1588
        %1590 = vrot.lane.b32.xlu0 %v1581, 73
        %v1591 = vpop.permute.xlu0 %1590
        %1592 = vrot.lane.b32.xlu0 %v1582, 73
        %v1593 = vpop.permute.xlu0 %1592
        %1594 = vrot.lane.b32.xlu0 %v1583, 73
        %v1595 = vpop.permute.xlu0 %1594
        %vm1596 = vcmask 596992
        %v1597 = vsel %vm1596, %v1589, %v1591
        %v1598 = vsel %vm1596, %v1591, %v1593
        %v1599 = vsel %vm1596, %v1593, %v1595
        %v1603 = vadd.f32 %v1542, %v1597
        %v1604 = vadd.f32 %v1543, %v1598
        %v1605 = vadd.f32 %v1544, %v1599
        %1606 = vset.pattern.permute.xlu0 13
        %1607 = vperm.xlu0 %1606, %v452
        %v1608 = vpop.permute.xlu0 %1607
        %v1610 = vmul.f32 %v467, %v1608
        %v1611 = vmul.f32 %v468, %v1608
        %v1612 = vmul.f32 %v469, %v1608
        %v1613 = vmul.f32 %v470, %v1608
        %1618 = vrot.lane.b32.xlu0 %v1610, 98
        %v1619 = vpop.permute.xlu0 %1618
        %1620 = vrot.lane.b32.xlu0 %v1611, 98
        %v1621 = vpop.permute.xlu0 %1620
        %1622 = vrot.lane.b32.xlu0 %v1612, 98
        %v1623 = vpop.permute.xlu0 %1622
        %1624 = vrot.lane.b32.xlu0 %v1613, 98
        %v1625 = vpop.permute.xlu0 %1624
        %v1626 = vsel %vm1048, %v1619, %v1621
        %v1627 = vsel %vm1048, %v1621, %v1623
        %v1628 = vsel %vm1048, %v1623, %v1625
        %v1633 = vadd.f32 %v1572, %v1626
        %v1634 = vadd.f32 %v1573, %v1627
        %v1635 = vadd.f32 %v1574, %v1628
        %v1636 = vadd.f32 %v1575, %v1625
        %1637 = vset.pattern.permute.xlu0 26
        %1638 = vperm.xlu0 %1637, %v451
        %v1639 = vpop.permute.xlu0 %1638
        %v1641 = vmul.f32 %v467, %v1639
        %v1642 = vmul.f32 %v468, %v1639
        %v1643 = vmul.f32 %v469, %v1639
        %v1644 = vmul.f32 %v470, %v1639
        %1649 = vrot.lane.b32.xlu0 %v1641, 72
        %v1650 = vpop.permute.xlu0 %1649
        %1651 = vrot.lane.b32.xlu0 %v1642, 72
        %v1652 = vpop.permute.xlu0 %1651
        %1653 = vrot.lane.b32.xlu0 %v1643, 72
        %v1654 = vpop.permute.xlu0 %1653
        %1655 = vrot.lane.b32.xlu0 %v1644, 72
        %v1656 = vpop.permute.xlu0 %1655
        %vm1657 = vcmask 588800
        %v1658 = vsel %vm1657, %v1650, %v1652
        %v1659 = vsel %vm1657, %v1652, %v1654
        %v1660 = vsel %vm1657, %v1654, %v1656
        %v1664 = vadd.f32 %v1603, %v1658
        %v1665 = vadd.f32 %v1604, %v1659
        %v1666 = vadd.f32 %v1605, %v1660
        %1667 = vset.pattern.permute.xlu0 27
        %1668 = vperm.xlu0 %1667, %v451
        %v1669 = vpop.permute.xlu0 %1668
        %v1671 = vmul.f32 %v467, %v1669
        %v1672 = vmul.f32 %v468, %v1669
        %v1673 = vmul.f32 %v469, %v1669
        %v1674 = vmul.f32 %v470, %v1669
        %1679 = vrot.lane.b32.xlu0 %v1671, 56
        %v1680 = vpop.permute.xlu0 %1679
        %1681 = vrot.lane.b32.xlu0 %v1672, 56
        %v1682 = vpop.permute.xlu0 %1681
        %1683 = vrot.lane.b32.xlu0 %v1673, 56
        %v1684 = vpop.permute.xlu0 %1683
        %1685 = vrot.lane.b32.xlu0 %v1674, 56
        %v1686 = vpop.permute.xlu0 %1685
        %vm1687 = vcmask 457728
        %v1688 = vsel %vm1687, %v1680, %v1682
        %v1689 = vsel %vm1687, %v1682, %v1684
        %v1690 = vsel %vm1687, %v1684, %v1686
        %v1694 = vadd.f32 %v1664, %v1688
        %v1695 = vadd.f32 %v1665, %v1689
        %v1696 = vadd.f32 %v1666, %v1690
        %1697 = vset.pattern.permute.xlu0 28
        %1698 = vperm.xlu0 %1697, %v451
        %v1699 = vpop.permute.xlu0 %1698
        %v1701 = vmul.f32 %v467, %v1699
        %v1702 = vmul.f32 %v468, %v1699
        %v1703 = vmul.f32 %v469, %v1699
        %v1704 = vmul.f32 %v470, %v1699
        %1709 = vrot.lane.b32.xlu0 %v1701, 55
        %v1710 = vpop.permute.xlu0 %1709
        %1711 = vrot.lane.b32.xlu0 %v1702, 55
        %v1712 = vpop.permute.xlu0 %1711
        %1713 = vrot.lane.b32.xlu0 %v1703, 55
        %v1714 = vpop.permute.xlu0 %1713
        %1715 = vrot.lane.b32.xlu0 %v1704, 55
        %v1716 = vpop.permute.xlu0 %1715
        %vm1717 = vcmask 449536
        %v1718 = vsel %vm1717, %v1710, %v1712
        %v1719 = vsel %vm1717, %v1712, %v1714
        %v1720 = vsel %vm1717, %v1714, %v1716
        %v1724 = vadd.f32 %v1694, %v1718
        %v1725 = vadd.f32 %v1695, %v1719
        %v1726 = vadd.f32 %v1696, %v1720
        %1727 = vset.pattern.permute.xlu0 14
        %1728 = vperm.xlu0 %1727, %v452
        %v1729 = vpop.permute.xlu0 %1728
        %v1731 = vmul.f32 %v467, %v1729
        %v1732 = vmul.f32 %v468, %v1729
        %v1733 = vmul.f32 %v469, %v1729
        %v1734 = vmul.f32 %v470, %v1729
        %1739 = vrot.lane.b32.xlu0 %v1731, 80
        %v1740 = vpop.permute.xlu0 %1739
        %1741 = vrot.lane.b32.xlu0 %v1732, 80
        %v1742 = vpop.permute.xlu0 %1741
        %1743 = vrot.lane.b32.xlu0 %v1733, 80
        %v1744 = vpop.permute.xlu0 %1743
        %1745 = vrot.lane.b32.xlu0 %v1734, 80
        %v1746 = vpop.permute.xlu0 %1745
        %v1747 = vsel %vm1200, %v1740, %v1742
        %v1748 = vsel %vm1200, %v1742, %v1744
        %v1749 = vsel %vm1200, %v1744, %v1746
        %v1754 = vadd.f32 %v1633, %v1747
        %v1755 = vadd.f32 %v1634, %v1748
        %v1756 = vadd.f32 %v1635, %v1749
        %v1757 = vadd.f32 %v1636, %v1746
        %1758 = vset.pattern.permute.xlu0 29
        %1759 = vperm.xlu0 %1758, %v451
        %v1760 = vpop.permute.xlu0 %1759
        %v1762 = vmul.f32 %v467, %v1760
        %v1763 = vmul.f32 %v468, %v1760
        %v1764 = vmul.f32 %v469, %v1760
        %v1765 = vmul.f32 %v470, %v1760
        %1770 = vrot.lane.b32.xlu0 %v1762, 54
        %v1771 = vpop.permute.xlu0 %1770
        %1772 = vrot.lane.b32.xlu0 %v1763, 54
        %v1773 = vpop.permute.xlu0 %1772
        %1774 = vrot.lane.b32.xlu0 %v1764, 54
        %v1775 = vpop.permute.xlu0 %1774
        %1776 = vrot.lane.b32.xlu0 %v1765, 54
        %v1777 = vpop.permute.xlu0 %1776
        %vm1778 = vcmask 441344
        %v1779 = vsel %vm1778, %v1771, %v1773
        %v1780 = vsel %vm1778, %v1773, %v1775
        %v1781 = vsel %vm1778, %v1775, %v1777
        %v1785 = vadd.f32 %v1724, %v1779
        %v1786 = vadd.f32 %v1725, %v1780
        %v1787 = vadd.f32 %v1726, %v1781
        %1788 = vset.pattern.permute.xlu0 15
        %1789 = vperm.xlu0 %1788, %v452
        %v1790 = vpop.permute.xlu0 %1789
        %v1792 = vmul.f32 %v467, %v1790
        %v1793 = vmul.f32 %v468, %v1790
        %v1794 = vmul.f32 %v469, %v1790
        %v1795 = vmul.f32 %v470, %v1790
        %1800 = vrot.lane.b32.xlu0 %v1792, 79
        %v1801 = vpop.permute.xlu0 %1800
        %1802 = vrot.lane.b32.xlu0 %v1793, 79
        %v1803 = vpop.permute.xlu0 %1802
        %1804 = vrot.lane.b32.xlu0 %v1794, 79
        %v1805 = vpop.permute.xlu0 %1804
        %1806 = vrot.lane.b32.xlu0 %v1795, 79
        %v1807 = vpop.permute.xlu0 %1806
        %v1808 = vsel %vm1230, %v1801, %v1803
        %v1809 = vsel %vm1230, %v1803, %v1805
        %v1810 = vsel %vm1230, %v1805, %v1807
        %v1815 = vadd.f32 %v1754, %v1808
        %v1816 = vadd.f32 %v1755, %v1809
        %v1817 = vadd.f32 %v1756, %v1810
        %v1818 = vadd.f32 %v1757, %v1807
        %1819 = vset.pattern.permute.xlu0 30
        %1820 = vperm.xlu0 %1819, %v451
        %v1821 = vpop.permute.xlu0 %1820
        %v1823 = vmul.f32 %v467, %v1821
        %v1824 = vmul.f32 %v468, %v1821
        %v1825 = vmul.f32 %v469, %v1821
        %v1826 = vmul.f32 %v470, %v1821
        %1831 = vrot.lane.b32.xlu0 %v1823, 53
        %v1832 = vpop.permute.xlu0 %1831
        %1833 = vrot.lane.b32.xlu0 %v1824, 53
        %v1834 = vpop.permute.xlu0 %1833
        %1835 = vrot.lane.b32.xlu0 %v1825, 53
        %v1836 = vpop.permute.xlu0 %1835
        %1837 = vrot.lane.b32.xlu0 %v1826, 53
        %v1838 = vpop.permute.xlu0 %1837
        %vm1839 = vcmask 433152
        %v1840 = vsel %vm1839, %v1832, %v1834
        %v1841 = vsel %vm1839, %v1834, %v1836
        %v1842 = vsel %vm1839, %v1836, %v1838
        %v1846 = vadd.f32 %v1785, %v1840
        %v1847 = vadd.f32 %v1786, %v1841
        %v1848 = vadd.f32 %v1787, %v1842
        %1849 = vset.pattern.permute.xlu0 16
        %1850 = vperm.xlu0 %1849, %v452
        %v1851 = vpop.permute.xlu0 %1850
        %v1853 = vmul.f32 %v467, %v1851
        %v1854 = vmul.f32 %v468, %v1851
        %v1855 = vmul.f32 %v469, %v1851
        %v1856 = vmul.f32 %v470, %v1851
        %1861 = vrot.lane.b32.xlu0 %v1853, 78
        %v1862 = vpop.permute.xlu0 %1861
        %1863 = vrot.lane.b32.xlu0 %v1854, 78
        %v1864 = vpop.permute.xlu0 %1863
        %1865 = vrot.lane.b32.xlu0 %v1855, 78
        %v1866 = vpop.permute.xlu0 %1865
        %1867 = vrot.lane.b32.xlu0 %v1856, 78
        %v1868 = vpop.permute.xlu0 %1867
        %v1869 = vsel %vm1291, %v1862, %v1864
        %v1870 = vsel %vm1291, %v1864, %v1866
        %v1871 = vsel %vm1291, %v1866, %v1868
        %v1876 = vadd.f32 %v1815, %v1869
        %v1877 = vadd.f32 %v1816, %v1870
        %v1878 = vadd.f32 %v1817, %v1871
        %v1879 = vadd.f32 %v1818, %v1868
        %1880 = vset.pattern.permute.xlu0 31
        %1881 = vperm.xlu0 %1880, %v451
        %v1882 = vpop.permute.xlu0 %1881
        %v1884 = vmul.f32 %v467, %v1882
        %v1885 = vmul.f32 %v468, %v1882
        %v1886 = vmul.f32 %v469, %v1882
        %v1887 = vmul.f32 %v470, %v1882
        %1892 = vrot.lane.b32.xlu0 %v1884, 52
        %v1893 = vpop.permute.xlu0 %1892
        %1894 = vrot.lane.b32.xlu0 %v1885, 52
        %v1895 = vpop.permute.xlu0 %1894
        %1896 = vrot.lane.b32.xlu0 %v1886, 52
        %v1897 = vpop.permute.xlu0 %1896
        %1898 = vrot.lane.b32.xlu0 %v1887, 52
        %v1899 = vpop.permute.xlu0 %1898
        %vm1900 = vcmask 424960
        %v1901 = vsel %vm1900, %v1893, %v1895
        %v1902 = vsel %vm1900, %v1895, %v1897
        %v1903 = vsel %vm1900, %v1897, %v1899
        %v1907 = vadd.f32 %v1846, %v1901
        %v1908 = vadd.f32 %v1847, %v1902
        %v1909 = vadd.f32 %v1848, %v1903
        %1910 = vset.pattern.permute.xlu0 17
        %1911 = vperm.xlu0 %1910, %v452
        %v1912 = vpop.permute.xlu0 %1911
        %v1914 = vmul.f32 %v467, %v1912
        %v1915 = vmul.f32 %v468, %v1912
        %v1916 = vmul.f32 %v469, %v1912
        %v1917 = vmul.f32 %v470, %v1912
        %1922 = vrot.lane.b32.xlu0 %v1914, 77
        %v1923 = vpop.permute.xlu0 %1922
        %1924 = vrot.lane.b32.xlu0 %v1915, 77
        %v1925 = vpop.permute.xlu0 %1924
        %1926 = vrot.lane.b32.xlu0 %v1916, 77
        %v1927 = vpop.permute.xlu0 %1926
        %1928 = vrot.lane.b32.xlu0 %v1917, 77
        %v1929 = vpop.permute.xlu0 %1928
        %v1930 = vsel %vm1352, %v1923, %v1925
        %v1931 = vsel %vm1352, %v1925, %v1927
        %v1932 = vsel %vm1352, %v1927, %v1929
        %v1937 = vadd.f32 %v1876, %v1930
        %v1938 = vadd.f32 %v1877, %v1931
        %v1939 = vadd.f32 %v1878, %v1932
        %v1940 = vadd.f32 %v1879, %v1929
        %1941 = vset.pattern.permute.xlu0 32
        %1942 = vperm.xlu0 %1941, %v451
        %v1943 = vpop.permute.xlu0 %1942
        %v1945 = vmul.f32 %v467, %v1943
        %v1946 = vmul.f32 %v468, %v1943
        %v1947 = vmul.f32 %v469, %v1943
        %v1948 = vmul.f32 %v470, %v1943
        %1953 = vrot.lane.b32.xlu0 %v1945, 51
        %v1954 = vpop.permute.xlu0 %1953
        %1955 = vrot.lane.b32.xlu0 %v1946, 51
        %v1956 = vpop.permute.xlu0 %1955
        %1957 = vrot.lane.b32.xlu0 %v1947, 51
        %v1958 = vpop.permute.xlu0 %1957
        %1959 = vrot.lane.b32.xlu0 %v1948, 51
        %v1960 = vpop.permute.xlu0 %1959
        %vm1961 = vcmask 416768
        %v1962 = vsel %vm1961, %v1954, %v1956
        %v1963 = vsel %vm1961, %v1956, %v1958
        %v1964 = vsel %vm1961, %v1958, %v1960
        %v1968 = vadd.f32 %v1907, %v1962
        %v1969 = vadd.f32 %v1908, %v1963
        %v1970 = vadd.f32 %v1909, %v1964
        %1971 = vset.pattern.permute.xlu0 18
        %1972 = vperm.xlu0 %1971, %v452
        %v1973 = vpop.permute.xlu0 %1972
        %v1975 = vmul.f32 %v467, %v1973
        %v1976 = vmul.f32 %v468, %v1973
        %v1977 = vmul.f32 %v469, %v1973
        %v1978 = vmul.f32 %v470, %v1973
        %1983 = vrot.lane.b32.xlu0 %v1975, 76
        %v1984 = vpop.permute.xlu0 %1983
        %1985 = vrot.lane.b32.xlu0 %v1976, 76
        %v1986 = vpop.permute.xlu0 %1985
        %1987 = vrot.lane.b32.xlu0 %v1977, 76
        %v1988 = vpop.permute.xlu0 %1987
        %1989 = vrot.lane.b32.xlu0 %v1978, 76
        %v1990 = vpop.permute.xlu0 %1989
        %v1991 = vsel %vm1413, %v1984, %v1986
        %v1992 = vsel %vm1413, %v1986, %v1988
        %v1993 = vsel %vm1413, %v1988, %v1990
        %v1998 = vadd.f32 %v1937, %v1991
        %v1999 = vadd.f32 %v1938, %v1992
        %v2000 = vadd.f32 %v1939, %v1993
        %v2001 = vadd.f32 %v1940, %v1990
        %2002 = vset.pattern.permute.xlu0 33
        %2003 = vperm.xlu0 %2002, %v451
        %v2004 = vpop.permute.xlu0 %2003
        %v2006 = vmul.f32 %v467, %v2004
        %v2007 = vmul.f32 %v468, %v2004
        %v2008 = vmul.f32 %v469, %v2004
        %v2009 = vmul.f32 %v470, %v2004
        %2014 = vrot.lane.b32.xlu0 %v2006, 50
        %v2015 = vpop.permute.xlu0 %2014
        %2016 = vrot.lane.b32.xlu0 %v2007, 50
        %v2017 = vpop.permute.xlu0 %2016
        %2018 = vrot.lane.b32.xlu0 %v2008, 50
        %v2019 = vpop.permute.xlu0 %2018
        %2020 = vrot.lane.b32.xlu0 %v2009, 50
        %v2021 = vpop.permute.xlu0 %2020
        %vm2022 = vcmask 408576
        %v2023 = vsel %vm2022, %v2015, %v2017
        %v2024 = vsel %vm2022, %v2017, %v2019
        %v2025 = vsel %vm2022, %v2019, %v2021
        %v2029 = vadd.f32 %v1968, %v2023
        %v2030 = vadd.f32 %v1969, %v2024
        %v2031 = vadd.f32 %v1970, %v2025
        %2032 = vset.pattern.permute.xlu0 19
        %2033 = vperm.xlu0 %2032, %v452
        %v2034 = vpop.permute.xlu0 %2033
        %v2036 = vmul.f32 %v467, %v2034
        %v2037 = vmul.f32 %v468, %v2034
        %v2038 = vmul.f32 %v469, %v2034
        %v2039 = vmul.f32 %v470, %v2034
        %2044 = vrot.lane.b32.xlu0 %v2036, 75
        %v2045 = vpop.permute.xlu0 %2044
        %2046 = vrot.lane.b32.xlu0 %v2037, 75
        %v2047 = vpop.permute.xlu0 %2046
        %2048 = vrot.lane.b32.xlu0 %v2038, 75
        %v2049 = vpop.permute.xlu0 %2048
        %2050 = vrot.lane.b32.xlu0 %v2039, 75
        %v2051 = vpop.permute.xlu0 %2050
        %v2052 = vsel %vm1474, %v2045, %v2047
        %v2053 = vsel %vm1474, %v2047, %v2049
        %v2054 = vsel %vm1474, %v2049, %v2051
        %v2059 = vadd.f32 %v1998, %v2052
        %v2060 = vadd.f32 %v1999, %v2053
        %v2061 = vadd.f32 %v2000, %v2054
        %v2062 = vadd.f32 %v2001, %v2051
        %2063 = vset.pattern.permute.xlu0 34
        %2064 = vperm.xlu0 %2063, %v451
        %v2065 = vpop.permute.xlu0 %2064
        %v2067 = vmul.f32 %v467, %v2065
        %v2068 = vmul.f32 %v468, %v2065
        %v2069 = vmul.f32 %v469, %v2065
        %v2070 = vmul.f32 %v470, %v2065
        %2075 = vrot.lane.b32.xlu0 %v2067, 49
        %v2076 = vpop.permute.xlu0 %2075
        %2077 = vrot.lane.b32.xlu0 %v2068, 49
        %v2078 = vpop.permute.xlu0 %2077
        %2079 = vrot.lane.b32.xlu0 %v2069, 49
        %v2080 = vpop.permute.xlu0 %2079
        %2081 = vrot.lane.b32.xlu0 %v2070, 49
        %v2082 = vpop.permute.xlu0 %2081
        %vm2083 = vcmask 400384
        %v2084 = vsel %vm2083, %v2076, %v2078
        %v2085 = vsel %vm2083, %v2078, %v2080
        %v2086 = vsel %vm2083, %v2080, %v2082
        %v2090 = vadd.f32 %v2029, %v2084
        %v2091 = vadd.f32 %v2030, %v2085
        %v2092 = vadd.f32 %v2031, %v2086
        %2093 = vset.pattern.permute.xlu0 20
        %2094 = vperm.xlu0 %2093, %v452
        %v2095 = vpop.permute.xlu0 %2094
        %v2097 = vmul.f32 %v467, %v2095
        %v2098 = vmul.f32 %v468, %v2095
        %v2099 = vmul.f32 %v469, %v2095
        %v2100 = vmul.f32 %v470, %v2095
        %2105 = vrot.lane.b32.xlu0 %v2097, 74
        %v2106 = vpop.permute.xlu0 %2105
        %2107 = vrot.lane.b32.xlu0 %v2098, 74
        %v2108 = vpop.permute.xlu0 %2107
        %2109 = vrot.lane.b32.xlu0 %v2099, 74
        %v2110 = vpop.permute.xlu0 %2109
        %2111 = vrot.lane.b32.xlu0 %v2100, 74
        %v2112 = vpop.permute.xlu0 %2111
        %v2113 = vsel %vm1535, %v2106, %v2108
        %v2114 = vsel %vm1535, %v2108, %v2110
        %v2115 = vsel %vm1535, %v2110, %v2112
        %v2120 = vadd.f32 %v2059, %v2113
        %v2121 = vadd.f32 %v2060, %v2114
        %v2122 = vadd.f32 %v2061, %v2115
        %v2123 = vadd.f32 %v2062, %v2112
        %2124 = vset.pattern.permute.xlu0 35
        %2125 = vperm.xlu0 %2124, %v451
        %v2126 = vpop.permute.xlu0 %2125
        %v2128 = vmul.f32 %v467, %v2126
        %v2129 = vmul.f32 %v468, %v2126
        %v2130 = vmul.f32 %v469, %v2126
        %v2131 = vmul.f32 %v470, %v2126
        %2136 = vrot.lane.b32.xlu0 %v2128, 48
        %v2137 = vpop.permute.xlu0 %2136
        %2138 = vrot.lane.b32.xlu0 %v2129, 48
        %v2139 = vpop.permute.xlu0 %2138
        %2140 = vrot.lane.b32.xlu0 %v2130, 48
        %v2141 = vpop.permute.xlu0 %2140
        %2142 = vrot.lane.b32.xlu0 %v2131, 48
        %v2143 = vpop.permute.xlu0 %2142
        %vm2144 = vcmask 392192
        %v2145 = vsel %vm2144, %v2137, %v2139
        %v2146 = vsel %vm2144, %v2139, %v2141
        %v2147 = vsel %vm2144, %v2141, %v2143
        %v2151 = vadd.f32 %v2090, %v2145
        %v2152 = vadd.f32 %v2091, %v2146
        %v2153 = vadd.f32 %v2092, %v2147
        %2154 = vset.pattern.permute.xlu0 36
        %2155 = vperm.xlu0 %2154, %v451
        %v2156 = vpop.permute.xlu0 %2155
        %v2158 = vmul.f32 %v467, %v2156
        %v2159 = vmul.f32 %v468, %v2156
        %v2160 = vmul.f32 %v469, %v2156
        %v2161 = vmul.f32 %v470, %v2156
        %2166 = vrot.lane.b32.xlu0 %v2158, 32
        %v2167 = vpop.permute.xlu0 %2166
        %2168 = vrot.lane.b32.xlu0 %v2159, 32
        %v2169 = vpop.permute.xlu0 %2168
        %2170 = vrot.lane.b32.xlu0 %v2160, 32
        %v2171 = vpop.permute.xlu0 %2170
        %2172 = vrot.lane.b32.xlu0 %v2161, 32
        %v2173 = vpop.permute.xlu0 %2172
        %vm2174 = vcmask 261120
        %v2175 = vsel %vm2174, %v2167, %v2169
        %v2176 = vsel %vm2174, %v2169, %v2171
        %v2177 = vsel %vm2174, %v2171, %v2173
        %v2181 = vadd.f32 %v2151, %v2175
        %v2182 = vadd.f32 %v2152, %v2176
        %v2183 = vadd.f32 %v2153, %v2177
        %2184 = vset.pattern.permute.xlu0 37
        %2185 = vperm.xlu0 %2184, %v451
        %v2186 = vpop.permute.xlu0 %2185
        %v2188 = vmul.f32 %v467, %v2186
        %v2189 = vmul.f32 %v468, %v2186
        %v2190 = vmul.f32 %v469, %v2186
        %v2191 = vmul.f32 %v470, %v2186
        %2196 = vrot.lane.b32.xlu0 %v2188, 31
        %v2197 = vpop.permute.xlu0 %2196
        %2198 = vrot.lane.b32.xlu0 %v2189, 31
        %v2199 = vpop.permute.xlu0 %2198
        %2200 = vrot.lane.b32.xlu0 %v2190, 31
        %v2201 = vpop.permute.xlu0 %2200
        %2202 = vrot.lane.b32.xlu0 %v2191, 31
        %v2203 = vpop.permute.xlu0 %2202
        %vm2204 = vcmask 252928
        %v2205 = vsel %vm2204, %v2197, %v2199
        %v2206 = vsel %vm2204, %v2199, %v2201
        %v2207 = vsel %vm2204, %v2201, %v2203
        %v2211 = vadd.f32 %v2181, %v2205
        %v2212 = vadd.f32 %v2182, %v2206
        %v2213 = vadd.f32 %v2183, %v2207
        %2214 = vset.pattern.permute.xlu0 21
        %2215 = vperm.xlu0 %2214, %v452
        %v2216 = vpop.permute.xlu0 %2215
        %v2218 = vmul.f32 %v467, %v2216
        %v2219 = vmul.f32 %v468, %v2216
        %v2220 = vmul.f32 %v469, %v2216
        %v2221 = vmul.f32 %v470, %v2216
        %2226 = vrot.lane.b32.xlu0 %v2218, 56
        %v2227 = vpop.permute.xlu0 %2226
        %2228 = vrot.lane.b32.xlu0 %v2219, 56
        %v2229 = vpop.permute.xlu0 %2228
        %2230 = vrot.lane.b32.xlu0 %v2220, 56
        %v2231 = vpop.permute.xlu0 %2230
        %2232 = vrot.lane.b32.xlu0 %v2221, 56
        %v2233 = vpop.permute.xlu0 %2232
        %v2234 = vsel %vm1687, %v2227, %v2229
        %v2235 = vsel %vm1687, %v2229, %v2231
        %v2236 = vsel %vm1687, %v2231, %v2233
        %v2241 = vadd.f32 %v2120, %v2234
        %v2242 = vadd.f32 %v2121, %v2235
        %v2243 = vadd.f32 %v2122, %v2236
        %v2244 = vadd.f32 %v2123, %v2233
        %2245 = vset.pattern.permute.xlu0 38
        %2246 = vperm.xlu0 %2245, %v451
        %v2247 = vpop.permute.xlu0 %2246
        %v2249 = vmul.f32 %v467, %v2247
        %v2250 = vmul.f32 %v468, %v2247
        %v2251 = vmul.f32 %v469, %v2247
        %v2252 = vmul.f32 %v470, %v2247
        %2257 = vrot.lane.b32.xlu0 %v2249, 30
        %v2258 = vpop.permute.xlu0 %2257
        %2259 = vrot.lane.b32.xlu0 %v2250, 30
        %v2260 = vpop.permute.xlu0 %2259
        %2261 = vrot.lane.b32.xlu0 %v2251, 30
        %v2262 = vpop.permute.xlu0 %2261
        %2263 = vrot.lane.b32.xlu0 %v2252, 30
        %v2264 = vpop.permute.xlu0 %2263
        %vm2265 = vcmask 244736
        %v2266 = vsel %vm2265, %v2258, %v2260
        %v2267 = vsel %vm2265, %v2260, %v2262
        %v2268 = vsel %vm2265, %v2262, %v2264
        %v2272 = vadd.f32 %v2211, %v2266
        %v2273 = vadd.f32 %v2212, %v2267
        %v2274 = vadd.f32 %v2213, %v2268
        %2275 = vset.pattern.permute.xlu0 22
        %2276 = vperm.xlu0 %2275, %v452
        %v2277 = vpop.permute.xlu0 %2276
        %v2279 = vmul.f32 %v467, %v2277
        %v2280 = vmul.f32 %v468, %v2277
        %v2281 = vmul.f32 %v469, %v2277
        %v2282 = vmul.f32 %v470, %v2277
        %2287 = vrot.lane.b32.xlu0 %v2279, 55
        %v2288 = vpop.permute.xlu0 %2287
        %2289 = vrot.lane.b32.xlu0 %v2280, 55
        %v2290 = vpop.permute.xlu0 %2289
        %2291 = vrot.lane.b32.xlu0 %v2281, 55
        %v2292 = vpop.permute.xlu0 %2291
        %2293 = vrot.lane.b32.xlu0 %v2282, 55
        %v2294 = vpop.permute.xlu0 %2293
        %v2295 = vsel %vm1717, %v2288, %v2290
        %v2296 = vsel %vm1717, %v2290, %v2292
        %v2297 = vsel %vm1717, %v2292, %v2294
        %v2302 = vadd.f32 %v2241, %v2295
        %v2303 = vadd.f32 %v2242, %v2296
        %v2304 = vadd.f32 %v2243, %v2297
        %v2305 = vadd.f32 %v2244, %v2294
        %2306 = vset.pattern.permute.xlu0 39
        %2307 = vperm.xlu0 %2306, %v451
        %v2308 = vpop.permute.xlu0 %2307
        %v2310 = vmul.f32 %v467, %v2308
        %v2311 = vmul.f32 %v468, %v2308
        %v2312 = vmul.f32 %v469, %v2308
        %v2313 = vmul.f32 %v470, %v2308
        %2318 = vrot.lane.b32.xlu0 %v2310, 29
        %v2319 = vpop.permute.xlu0 %2318
        %2320 = vrot.lane.b32.xlu0 %v2311, 29
        %v2321 = vpop.permute.xlu0 %2320
        %2322 = vrot.lane.b32.xlu0 %v2312, 29
        %v2323 = vpop.permute.xlu0 %2322
        %2324 = vrot.lane.b32.xlu0 %v2313, 29
        %v2325 = vpop.permute.xlu0 %2324
        %vm2326 = vcmask 236544
        %v2327 = vsel %vm2326, %v2319, %v2321
        %v2328 = vsel %vm2326, %v2321, %v2323
        %v2329 = vsel %vm2326, %v2323, %v2325
        %v2333 = vadd.f32 %v2272, %v2327
        %v2334 = vadd.f32 %v2273, %v2328
        %v2335 = vadd.f32 %v2274, %v2329
        %2336 = vset.pattern.permute.xlu0 23
        %2337 = vperm.xlu0 %2336, %v452
        %v2338 = vpop.permute.xlu0 %2337
        %v2340 = vmul.f32 %v467, %v2338
        %v2341 = vmul.f32 %v468, %v2338
        %v2342 = vmul.f32 %v469, %v2338
        %v2343 = vmul.f32 %v470, %v2338
        %2348 = vrot.lane.b32.xlu0 %v2340, 54
        %v2349 = vpop.permute.xlu0 %2348
        %2350 = vrot.lane.b32.xlu0 %v2341, 54
        %v2351 = vpop.permute.xlu0 %2350
        %2352 = vrot.lane.b32.xlu0 %v2342, 54
        %v2353 = vpop.permute.xlu0 %2352
        %2354 = vrot.lane.b32.xlu0 %v2343, 54
        %v2355 = vpop.permute.xlu0 %2354
        %v2356 = vsel %vm1778, %v2349, %v2351
        %v2357 = vsel %vm1778, %v2351, %v2353
        %v2358 = vsel %vm1778, %v2353, %v2355
        %v2363 = vadd.f32 %v2302, %v2356
        %v2364 = vadd.f32 %v2303, %v2357
        %v2365 = vadd.f32 %v2304, %v2358
        %v2366 = vadd.f32 %v2305, %v2355
        %2367 = vset.pattern.permute.xlu0 40
        %2368 = vperm.xlu0 %2367, %v451
        %v2369 = vpop.permute.xlu0 %2368
        %v2371 = vmul.f32 %v467, %v2369
        %v2372 = vmul.f32 %v468, %v2369
        %v2373 = vmul.f32 %v469, %v2369
        %v2374 = vmul.f32 %v470, %v2369
        %2379 = vrot.lane.b32.xlu0 %v2371, 28
        %v2380 = vpop.permute.xlu0 %2379
        %2381 = vrot.lane.b32.xlu0 %v2372, 28
        %v2382 = vpop.permute.xlu0 %2381
        %2383 = vrot.lane.b32.xlu0 %v2373, 28
        %v2384 = vpop.permute.xlu0 %2383
        %2385 = vrot.lane.b32.xlu0 %v2374, 28
        %v2386 = vpop.permute.xlu0 %2385
        %vm2387 = vcmask 228352
        %v2388 = vsel %vm2387, %v2380, %v2382
        %v2389 = vsel %vm2387, %v2382, %v2384
        %v2390 = vsel %vm2387, %v2384, %v2386
        %v2394 = vadd.f32 %v2333, %v2388
        %v2395 = vadd.f32 %v2334, %v2389
        %v2396 = vadd.f32 %v2335, %v2390
        %2397 = vset.pattern.permute.xlu0 24
        %2398 = vperm.xlu0 %2397, %v452
        %v2399 = vpop.permute.xlu0 %2398
        %v2401 = vmul.f32 %v467, %v2399
        %v2402 = vmul.f32 %v468, %v2399
        %v2403 = vmul.f32 %v469, %v2399
        %v2404 = vmul.f32 %v470, %v2399
        %2409 = vrot.lane.b32.xlu0 %v2401, 53
        %v2410 = vpop.permute.xlu0 %2409
        %2411 = vrot.lane.b32.xlu0 %v2402, 53
        %v2412 = vpop.permute.xlu0 %2411
        %2413 = vrot.lane.b32.xlu0 %v2403, 53
        %v2414 = vpop.permute.xlu0 %2413
        %2415 = vrot.lane.b32.xlu0 %v2404, 53
        %v2416 = vpop.permute.xlu0 %2415
        %v2417 = vsel %vm1839, %v2410, %v2412
        %v2418 = vsel %vm1839, %v2412, %v2414
        %v2419 = vsel %vm1839, %v2414, %v2416
        %v2424 = vadd.f32 %v2363, %v2417
        %v2425 = vadd.f32 %v2364, %v2418
        %v2426 = vadd.f32 %v2365, %v2419
        %v2427 = vadd.f32 %v2366, %v2416
        %2428 = vset.pattern.permute.xlu0 41
        %2429 = vperm.xlu0 %2428, %v451
        %v2430 = vpop.permute.xlu0 %2429
        %v2432 = vmul.f32 %v467, %v2430
        %v2433 = vmul.f32 %v468, %v2430
        %v2434 = vmul.f32 %v469, %v2430
        %v2435 = vmul.f32 %v470, %v2430
        %2440 = vrot.lane.b32.xlu0 %v2432, 27
        %v2441 = vpop.permute.xlu0 %2440
        %2442 = vrot.lane.b32.xlu0 %v2433, 27
        %v2443 = vpop.permute.xlu0 %2442
        %2444 = vrot.lane.b32.xlu0 %v2434, 27
        %v2445 = vpop.permute.xlu0 %2444
        %2446 = vrot.lane.b32.xlu0 %v2435, 27
        %v2447 = vpop.permute.xlu0 %2446
        %vm2448 = vcmask 220160
        %v2449 = vsel %vm2448, %v2441, %v2443
        %v2450 = vsel %vm2448, %v2443, %v2445
        %v2451 = vsel %vm2448, %v2445, %v2447
        %v2455 = vadd.f32 %v2394, %v2449
        %v2456 = vadd.f32 %v2395, %v2450
        %v2457 = vadd.f32 %v2396, %v2451
        %2458 = vset.pattern.permute.xlu0 25
        %2459 = vperm.xlu0 %2458, %v452
        %v2460 = vpop.permute.xlu0 %2459
        %v2462 = vmul.f32 %v467, %v2460
        %v2463 = vmul.f32 %v468, %v2460
        %v2464 = vmul.f32 %v469, %v2460
        %v2465 = vmul.f32 %v470, %v2460
        %2470 = vrot.lane.b32.xlu0 %v2462, 52
        %v2471 = vpop.permute.xlu0 %2470
        %2472 = vrot.lane.b32.xlu0 %v2463, 52
        %v2473 = vpop.permute.xlu0 %2472
        %2474 = vrot.lane.b32.xlu0 %v2464, 52
        %v2475 = vpop.permute.xlu0 %2474
        %2476 = vrot.lane.b32.xlu0 %v2465, 52
        %v2477 = vpop.permute.xlu0 %2476
        %v2478 = vsel %vm1900, %v2471, %v2473
        %v2479 = vsel %vm1900, %v2473, %v2475
        %v2480 = vsel %vm1900, %v2475, %v2477
        %v2485 = vadd.f32 %v2424, %v2478
        %v2486 = vadd.f32 %v2425, %v2479
        %v2487 = vadd.f32 %v2426, %v2480
        %v2488 = vadd.f32 %v2427, %v2477
        %2489 = vset.pattern.permute.xlu0 42
        %2490 = vperm.xlu0 %2489, %v451
        %v2491 = vpop.permute.xlu0 %2490
        %v2493 = vmul.f32 %v467, %v2491
        %v2494 = vmul.f32 %v468, %v2491
        %v2495 = vmul.f32 %v469, %v2491
        %v2496 = vmul.f32 %v470, %v2491
        %2501 = vrot.lane.b32.xlu0 %v2493, 26
        %v2502 = vpop.permute.xlu0 %2501
        %2503 = vrot.lane.b32.xlu0 %v2494, 26
        %v2504 = vpop.permute.xlu0 %2503
        %2505 = vrot.lane.b32.xlu0 %v2495, 26
        %v2506 = vpop.permute.xlu0 %2505
        %2507 = vrot.lane.b32.xlu0 %v2496, 26
        %v2508 = vpop.permute.xlu0 %2507
        %vm2509 = vcmask 211968
        %v2510 = vsel %vm2509, %v2502, %v2504
        %v2511 = vsel %vm2509, %v2504, %v2506
        %v2512 = vsel %vm2509, %v2506, %v2508
        %v2516 = vadd.f32 %v2455, %v2510
        %v2517 = vadd.f32 %v2456, %v2511
        %v2518 = vadd.f32 %v2457, %v2512
        %2519 = vset.pattern.permute.xlu0 26
        %2520 = vperm.xlu0 %2519, %v452
        %v2521 = vpop.permute.xlu0 %2520
        %v2523 = vmul.f32 %v467, %v2521
        %v2524 = vmul.f32 %v468, %v2521
        %v2525 = vmul.f32 %v469, %v2521
        %v2526 = vmul.f32 %v470, %v2521
        %2531 = vrot.lane.b32.xlu0 %v2523, 51
        %v2532 = vpop.permute.xlu0 %2531
        %2533 = vrot.lane.b32.xlu0 %v2524, 51
        %v2534 = vpop.permute.xlu0 %2533
        %2535 = vrot.lane.b32.xlu0 %v2525, 51
        %v2536 = vpop.permute.xlu0 %2535
        %2537 = vrot.lane.b32.xlu0 %v2526, 51
        %v2538 = vpop.permute.xlu0 %2537
        %v2539 = vsel %vm1961, %v2532, %v2534
        %v2540 = vsel %vm1961, %v2534, %v2536
        %v2541 = vsel %vm1961, %v2536, %v2538
        %v2546 = vadd.f32 %v2485, %v2539
        %v2547 = vadd.f32 %v2486, %v2540
        %v2548 = vadd.f32 %v2487, %v2541
        %v2549 = vadd.f32 %v2488, %v2538
        %2550 = vset.pattern.permute.xlu0 43
        %2551 = vperm.xlu0 %2550, %v451
        %v2552 = vpop.permute.xlu0 %2551
        %v2554 = vmul.f32 %v467, %v2552
        %v2555 = vmul.f32 %v468, %v2552
        %v2556 = vmul.f32 %v469, %v2552
        %v2557 = vmul.f32 %v470, %v2552
        %2562 = vrot.lane.b32.xlu0 %v2554, 25
        %v2563 = vpop.permute.xlu0 %2562
        %2564 = vrot.lane.b32.xlu0 %v2555, 25
        %v2565 = vpop.permute.xlu0 %2564
        %2566 = vrot.lane.b32.xlu0 %v2556, 25
        %v2567 = vpop.permute.xlu0 %2566
        %2568 = vrot.lane.b32.xlu0 %v2557, 25
        %v2569 = vpop.permute.xlu0 %2568
        %vm2570 = vcmask 203776
        %v2571 = vsel %vm2570, %v2563, %v2565
        %v2572 = vsel %vm2570, %v2565, %v2567
        %v2573 = vsel %vm2570, %v2567, %v2569
        %v2577 = vadd.f32 %v2516, %v2571
        %v2578 = vadd.f32 %v2517, %v2572
        %v2579 = vadd.f32 %v2518, %v2573
        %2580 = vset.pattern.permute.xlu0 27
        %2581 = vperm.xlu0 %2580, %v452
        %v2582 = vpop.permute.xlu0 %2581
        %v2584 = vmul.f32 %v467, %v2582
        %v2585 = vmul.f32 %v468, %v2582
        %v2586 = vmul.f32 %v469, %v2582
        %v2587 = vmul.f32 %v470, %v2582
        %2592 = vrot.lane.b32.xlu0 %v2584, 50
        %v2593 = vpop.permute.xlu0 %2592
        %2594 = vrot.lane.b32.xlu0 %v2585, 50
        %v2595 = vpop.permute.xlu0 %2594
        %2596 = vrot.lane.b32.xlu0 %v2586, 50
        %v2597 = vpop.permute.xlu0 %2596
        %2598 = vrot.lane.b32.xlu0 %v2587, 50
        %v2599 = vpop.permute.xlu0 %2598
        %v2600 = vsel %vm2022, %v2593, %v2595
        %v2601 = vsel %vm2022, %v2595, %v2597
        %v2602 = vsel %vm2022, %v2597, %v2599
        %v2607 = vadd.f32 %v2546, %v2600
        %v2608 = vadd.f32 %v2547, %v2601
        %v2609 = vadd.f32 %v2548, %v2602
        %v2610 = vadd.f32 %v2549, %v2599
        %2611 = vset.pattern.permute.xlu0 44
        %2612 = vperm.xlu0 %2611, %v451
        %v2613 = vpop.permute.xlu0 %2612
        %v2615 = vmul.f32 %v467, %v2613
        %v2616 = vmul.f32 %v468, %v2613
        %v2617 = vmul.f32 %v469, %v2613
        %v2618 = vmul.f32 %v470, %v2613
        %2623 = vrot.lane.b32.xlu0 %v2615, 24
        %v2624 = vpop.permute.xlu0 %2623
        %2625 = vrot.lane.b32.xlu0 %v2616, 24
        %v2626 = vpop.permute.xlu0 %2625
        %2627 = vrot.lane.b32.xlu0 %v2617, 24
        %v2628 = vpop.permute.xlu0 %2627
        %2629 = vrot.lane.b32.xlu0 %v2618, 24
        %v2630 = vpop.permute.xlu0 %2629
        %vm2631 = vcmask 195584
        %v2632 = vsel %vm2631, %v2624, %v2626
        %v2633 = vsel %vm2631, %v2626, %v2628
        %v2634 = vsel %vm2631, %v2628, %v2630
        %v2638 = vadd.f32 %v2577, %v2632
        %v2639 = vadd.f32 %v2578, %v2633
        %v2640 = vadd.f32 %v2579, %v2634
        %2641 = vset.pattern.permute.xlu0 45
        %2642 = vperm.xlu0 %2641, %v451
        %v2643 = vpop.permute.xlu0 %2642
        %v2645 = vmul.f32 %v467, %v2643
        %v2646 = vmul.f32 %v468, %v2643
        %v2647 = vmul.f32 %v469, %v2643
        %v2648 = vmul.f32 %v470, %v2643
        %2653 = vrot.lane.b32.xlu0 %v2645, 8
        %v2654 = vpop.permute.xlu0 %2653
        %2655 = vrot.lane.b32.xlu0 %v2646, 8
        %v2656 = vpop.permute.xlu0 %2655
        %2657 = vrot.lane.b32.xlu0 %v2647, 8
        %v2658 = vpop.permute.xlu0 %2657
        %2659 = vrot.lane.b32.xlu0 %v2648, 8
        %v2660 = vpop.permute.xlu0 %2659
        %vm2661 = vcmask 64512
        %v2662 = vsel %vm2661, %v2654, %v2656
        %v2663 = vsel %vm2661, %v2656, %v2658
        %v2664 = vsel %vm2661, %v2658, %v2660
        %v2668 = vadd.f32 %v2638, %v2662
        %v2669 = vadd.f32 %v2639, %v2663
        %v2670 = vadd.f32 %v2640, %v2664
        %2671 = vset.pattern.permute.xlu0 46
        %2672 = vperm.xlu0 %2671, %v451
        %v2673 = vpop.permute.xlu0 %2672
        %v2675 = vmul.f32 %v467, %v2673
        %v2676 = vmul.f32 %v468, %v2673
        %v2677 = vmul.f32 %v469, %v2673
        %v2678 = vmul.f32 %v470, %v2673
        %2683 = vrot.lane.b32.xlu0 %v2675, 7
        %v2684 = vpop.permute.xlu0 %2683
        %2685 = vrot.lane.b32.xlu0 %v2676, 7
        %v2686 = vpop.permute.xlu0 %2685
        %2687 = vrot.lane.b32.xlu0 %v2677, 7
        %v2688 = vpop.permute.xlu0 %2687
        %2689 = vrot.lane.b32.xlu0 %v2678, 7
        %v2690 = vpop.permute.xlu0 %2689
        %vm2691 = vcmask 56320
        %v2692 = vsel %vm2691, %v2684, %v2686
        %v2693 = vsel %vm2691, %v2686, %v2688
        %v2694 = vsel %vm2691, %v2688, %v2690
        %v2698 = vadd.f32 %v2668, %v2692
        %v2699 = vadd.f32 %v2669, %v2693
        %v2700 = vadd.f32 %v2670, %v2694
        %2701 = vset.pattern.permute.xlu0 28
        %2702 = vperm.xlu0 %2701, %v452
        %v2703 = vpop.permute.xlu0 %2702
        %v2705 = vmul.f32 %v467, %v2703
        %v2706 = vmul.f32 %v468, %v2703
        %v2707 = vmul.f32 %v469, %v2703
        %v2708 = vmul.f32 %v470, %v2703
        %2713 = vrot.lane.b32.xlu0 %v2705, 32
        %v2714 = vpop.permute.xlu0 %2713
        %2715 = vrot.lane.b32.xlu0 %v2706, 32
        %v2716 = vpop.permute.xlu0 %2715
        %2717 = vrot.lane.b32.xlu0 %v2707, 32
        %v2718 = vpop.permute.xlu0 %2717
        %2719 = vrot.lane.b32.xlu0 %v2708, 32
        %v2720 = vpop.permute.xlu0 %2719
        %v2721 = vsel %vm2174, %v2714, %v2716
        %v2722 = vsel %vm2174, %v2716, %v2718
        %v2723 = vsel %vm2174, %v2718, %v2720
        %v2728 = vadd.f32 %v2607, %v2721
        %v2729 = vadd.f32 %v2608, %v2722
        %v2730 = vadd.f32 %v2609, %v2723
        %v2731 = vadd.f32 %v2610, %v2720
        %2732 = vset.pattern.permute.xlu0 47
        %2733 = vperm.xlu0 %2732, %v451
        %v2734 = vpop.permute.xlu0 %2733
        %v2736 = vmul.f32 %v467, %v2734
        %v2737 = vmul.f32 %v468, %v2734
        %v2738 = vmul.f32 %v469, %v2734
        %v2739 = vmul.f32 %v470, %v2734
        %2744 = vrot.lane.b32.xlu0 %v2736, 6
        %v2745 = vpop.permute.xlu0 %2744
        %2746 = vrot.lane.b32.xlu0 %v2737, 6
        %v2747 = vpop.permute.xlu0 %2746
        %2748 = vrot.lane.b32.xlu0 %v2738, 6
        %v2749 = vpop.permute.xlu0 %2748
        %2750 = vrot.lane.b32.xlu0 %v2739, 6
        %v2751 = vpop.permute.xlu0 %2750
        %vm2752 = vcmask 48128
        %v2753 = vsel %vm2752, %v2745, %v2747
        %v2754 = vsel %vm2752, %v2747, %v2749
        %v2755 = vsel %vm2752, %v2749, %v2751
        %v2759 = vadd.f32 %v2698, %v2753
        %v2760 = vadd.f32 %v2699, %v2754
        %v2761 = vadd.f32 %v2700, %v2755
        %2762 = vset.pattern.permute.xlu0 29
        %2763 = vperm.xlu0 %2762, %v452
        %v2764 = vpop.permute.xlu0 %2763
        %v2766 = vmul.f32 %v467, %v2764
        %v2767 = vmul.f32 %v468, %v2764
        %v2768 = vmul.f32 %v469, %v2764
        %v2769 = vmul.f32 %v470, %v2764
        %2774 = vrot.lane.b32.xlu0 %v2766, 31
        %v2775 = vpop.permute.xlu0 %2774
        %2776 = vrot.lane.b32.xlu0 %v2767, 31
        %v2777 = vpop.permute.xlu0 %2776
        %2778 = vrot.lane.b32.xlu0 %v2768, 31
        %v2779 = vpop.permute.xlu0 %2778
        %2780 = vrot.lane.b32.xlu0 %v2769, 31
        %v2781 = vpop.permute.xlu0 %2780
        %v2782 = vsel %vm2204, %v2775, %v2777
        %v2783 = vsel %vm2204, %v2777, %v2779
        %v2784 = vsel %vm2204, %v2779, %v2781
        %v2789 = vadd.f32 %v2728, %v2782
        %v2790 = vadd.f32 %v2729, %v2783
        %v2791 = vadd.f32 %v2730, %v2784
        %v2792 = vadd.f32 %v2731, %v2781
        %2793 = vset.pattern.permute.xlu0 48
        %2794 = vperm.xlu0 %2793, %v451
        %v2795 = vpop.permute.xlu0 %2794
        %v2797 = vmul.f32 %v467, %v2795
        %v2798 = vmul.f32 %v468, %v2795
        %v2799 = vmul.f32 %v469, %v2795
        %v2800 = vmul.f32 %v470, %v2795
        %2805 = vrot.lane.b32.xlu0 %v2797, 5
        %v2806 = vpop.permute.xlu0 %2805
        %2807 = vrot.lane.b32.xlu0 %v2798, 5
        %v2808 = vpop.permute.xlu0 %2807
        %2809 = vrot.lane.b32.xlu0 %v2799, 5
        %v2810 = vpop.permute.xlu0 %2809
        %2811 = vrot.lane.b32.xlu0 %v2800, 5
        %v2812 = vpop.permute.xlu0 %2811
        %vm2813 = vcmask 39936
        %v2814 = vsel %vm2813, %v2806, %v2808
        %v2815 = vsel %vm2813, %v2808, %v2810
        %v2816 = vsel %vm2813, %v2810, %v2812
        %v2820 = vadd.f32 %v2759, %v2814
        %v2821 = vadd.f32 %v2760, %v2815
        %v2822 = vadd.f32 %v2761, %v2816
        %2823 = vset.pattern.permute.xlu0 30
        %2824 = vperm.xlu0 %2823, %v452
        %v2825 = vpop.permute.xlu0 %2824
        %v2827 = vmul.f32 %v467, %v2825
        %v2828 = vmul.f32 %v468, %v2825
        %v2829 = vmul.f32 %v469, %v2825
        %v2830 = vmul.f32 %v470, %v2825
        %2835 = vrot.lane.b32.xlu0 %v2827, 30
        %v2836 = vpop.permute.xlu0 %2835
        %2837 = vrot.lane.b32.xlu0 %v2828, 30
        %v2838 = vpop.permute.xlu0 %2837
        %2839 = vrot.lane.b32.xlu0 %v2829, 30
        %v2840 = vpop.permute.xlu0 %2839
        %2841 = vrot.lane.b32.xlu0 %v2830, 30
        %v2842 = vpop.permute.xlu0 %2841
        %v2843 = vsel %vm2265, %v2836, %v2838
        %v2844 = vsel %vm2265, %v2838, %v2840
        %v2845 = vsel %vm2265, %v2840, %v2842
        %v2850 = vadd.f32 %v2789, %v2843
        %v2851 = vadd.f32 %v2790, %v2844
        %v2852 = vadd.f32 %v2791, %v2845
        %v2853 = vadd.f32 %v2792, %v2842
        %2854 = vset.pattern.permute.xlu0 49
        %2855 = vperm.xlu0 %2854, %v451
        %v2856 = vpop.permute.xlu0 %2855
        %v2858 = vmul.f32 %v467, %v2856
        %v2859 = vmul.f32 %v468, %v2856
        %v2860 = vmul.f32 %v469, %v2856
        %v2861 = vmul.f32 %v470, %v2856
        %2866 = vrot.lane.b32.xlu0 %v2858, 4
        %v2867 = vpop.permute.xlu0 %2866
        %2868 = vrot.lane.b32.xlu0 %v2859, 4
        %v2869 = vpop.permute.xlu0 %2868
        %2870 = vrot.lane.b32.xlu0 %v2860, 4
        %v2871 = vpop.permute.xlu0 %2870
        %2872 = vrot.lane.b32.xlu0 %v2861, 4
        %v2873 = vpop.permute.xlu0 %2872
        %vm2874 = vcmask 31744
        %v2875 = vsel %vm2874, %v2867, %v2869
        %v2876 = vsel %vm2874, %v2869, %v2871
        %v2877 = vsel %vm2874, %v2871, %v2873
        %v2881 = vadd.f32 %v2820, %v2875
        %v2882 = vadd.f32 %v2821, %v2876
        %v2883 = vadd.f32 %v2822, %v2877
        %2884 = vset.pattern.permute.xlu0 31
        %2885 = vperm.xlu0 %2884, %v452
        %v2886 = vpop.permute.xlu0 %2885
        %v2888 = vmul.f32 %v467, %v2886
        %v2889 = vmul.f32 %v468, %v2886
        %v2890 = vmul.f32 %v469, %v2886
        %v2891 = vmul.f32 %v470, %v2886
        %2896 = vrot.lane.b32.xlu0 %v2888, 29
        %v2897 = vpop.permute.xlu0 %2896
        %2898 = vrot.lane.b32.xlu0 %v2889, 29
        %v2899 = vpop.permute.xlu0 %2898
        %2900 = vrot.lane.b32.xlu0 %v2890, 29
        %v2901 = vpop.permute.xlu0 %2900
        %2902 = vrot.lane.b32.xlu0 %v2891, 29
        %v2903 = vpop.permute.xlu0 %2902
        %v2904 = vsel %vm2326, %v2897, %v2899
        %v2905 = vsel %vm2326, %v2899, %v2901
        %v2906 = vsel %vm2326, %v2901, %v2903
        %v2911 = vadd.f32 %v2850, %v2904
        %v2912 = vadd.f32 %v2851, %v2905
        %v2913 = vadd.f32 %v2852, %v2906
        %v2914 = vadd.f32 %v2853, %v2903
        %2915 = vset.pattern.permute.xlu0 50
        %2916 = vperm.xlu0 %2915, %v451
        %v2917 = vpop.permute.xlu0 %2916
        %v2919 = vmul.f32 %v467, %v2917
        %v2920 = vmul.f32 %v468, %v2917
        %v2921 = vmul.f32 %v469, %v2917
        %v2922 = vmul.f32 %v470, %v2917
        %2927 = vrot.lane.b32.xlu0 %v2919, 3
        %v2928 = vpop.permute.xlu0 %2927
        %2929 = vrot.lane.b32.xlu0 %v2920, 3
        %v2930 = vpop.permute.xlu0 %2929
        %2931 = vrot.lane.b32.xlu0 %v2921, 3
        %v2932 = vpop.permute.xlu0 %2931
        %2933 = vrot.lane.b32.xlu0 %v2922, 3
        %v2934 = vpop.permute.xlu0 %2933
        %vm2935 = vcmask 23552
        %v2936 = vsel %vm2935, %v2928, %v2930
        %v2937 = vsel %vm2935, %v2930, %v2932
        %v2938 = vsel %vm2935, %v2932, %v2934
        %v2942 = vadd.f32 %v2881, %v2936
        %v2943 = vadd.f32 %v2882, %v2937
        %v2944 = vadd.f32 %v2883, %v2938
        %2945 = vset.pattern.permute.xlu0 32
        %2946 = vperm.xlu0 %2945, %v452
        %v2947 = vpop.permute.xlu0 %2946
        %v2949 = vmul.f32 %v467, %v2947
        %v2950 = vmul.f32 %v468, %v2947
        %v2951 = vmul.f32 %v469, %v2947
        %v2952 = vmul.f32 %v470, %v2947
        %2957 = vrot.lane.b32.xlu0 %v2949, 28
        %v2958 = vpop.permute.xlu0 %2957
        %2959 = vrot.lane.b32.xlu0 %v2950, 28
        %v2960 = vpop.permute.xlu0 %2959
        %2961 = vrot.lane.b32.xlu0 %v2951, 28
        %v2962 = vpop.permute.xlu0 %2961
        %2963 = vrot.lane.b32.xlu0 %v2952, 28
        %v2964 = vpop.permute.xlu0 %2963
        %v2965 = vsel %vm2387, %v2958, %v2960
        %v2966 = vsel %vm2387, %v2960, %v2962
        %v2967 = vsel %vm2387, %v2962, %v2964
        %v2972 = vadd.f32 %v2911, %v2965
        %v2973 = vadd.f32 %v2912, %v2966
        %v2974 = vadd.f32 %v2913, %v2967
        %v2975 = vadd.f32 %v2914, %v2964
        %2976 = vset.pattern.permute.xlu0 51
        %2977 = vperm.xlu0 %2976, %v451
        %v2978 = vpop.permute.xlu0 %2977
        %v2980 = vmul.f32 %v467, %v2978
        %v2981 = vmul.f32 %v468, %v2978
        %v2982 = vmul.f32 %v469, %v2978
        %v2983 = vmul.f32 %v470, %v2978
        %2988 = vrot.lane.b32.xlu0 %v2980, 2
        %v2989 = vpop.permute.xlu0 %2988
        %2990 = vrot.lane.b32.xlu0 %v2981, 2
        %v2991 = vpop.permute.xlu0 %2990
        %2992 = vrot.lane.b32.xlu0 %v2982, 2
        %v2993 = vpop.permute.xlu0 %2992
        %2994 = vrot.lane.b32.xlu0 %v2983, 2
        %v2995 = vpop.permute.xlu0 %2994
        %vm2996 = vcmask 15360
        %v2997 = vsel %vm2996, %v2989, %v2991
        %v2998 = vsel %vm2996, %v2991, %v2993
        %v2999 = vsel %vm2996, %v2993, %v2995
        %v3003 = vadd.f32 %v2942, %v2997
        %v3004 = vadd.f32 %v2943, %v2998
        %v3005 = vadd.f32 %v2944, %v2999
        %3006 = vset.pattern.permute.xlu0 33
        %3007 = vperm.xlu0 %3006, %v452
        %v3008 = vpop.permute.xlu0 %3007
        %v3010 = vmul.f32 %v467, %v3008
        %v3011 = vmul.f32 %v468, %v3008
        %v3012 = vmul.f32 %v469, %v3008
        %v3013 = vmul.f32 %v470, %v3008
        %3018 = vrot.lane.b32.xlu0 %v3010, 27
        %v3019 = vpop.permute.xlu0 %3018
        %3020 = vrot.lane.b32.xlu0 %v3011, 27
        %v3021 = vpop.permute.xlu0 %3020
        %3022 = vrot.lane.b32.xlu0 %v3012, 27
        %v3023 = vpop.permute.xlu0 %3022
        %3024 = vrot.lane.b32.xlu0 %v3013, 27
        %v3025 = vpop.permute.xlu0 %3024
        %v3026 = vsel %vm2448, %v3019, %v3021
        %v3027 = vsel %vm2448, %v3021, %v3023
        %v3028 = vsel %vm2448, %v3023, %v3025
        %v3033 = vadd.f32 %v2972, %v3026
        %v3034 = vadd.f32 %v2973, %v3027
        %v3035 = vadd.f32 %v2974, %v3028
        %v3036 = vadd.f32 %v2975, %v3025
        %3037 = vset.pattern.permute.xlu0 52
        %3038 = vperm.xlu0 %3037, %v451
        %v3039 = vpop.permute.xlu0 %3038
        %v3041 = vmul.f32 %v467, %v3039
        %v3042 = vmul.f32 %v468, %v3039
        %v3043 = vmul.f32 %v469, %v3039
        %v3044 = vmul.f32 %v470, %v3039
        %3049 = vrot.lane.b32.xlu0 %v3041, 1
        %v3050 = vpop.permute.xlu0 %3049
        %3051 = vrot.lane.b32.xlu0 %v3042, 1
        %v3052 = vpop.permute.xlu0 %3051
        %3053 = vrot.lane.b32.xlu0 %v3043, 1
        %v3054 = vpop.permute.xlu0 %3053
        %3055 = vrot.lane.b32.xlu0 %v3044, 1
        %v3056 = vpop.permute.xlu0 %3055
        %vm3057 = vcmask 7168
        %v3058 = vsel %vm3057, %v3050, %v3052
        %v3059 = vsel %vm3057, %v3052, %v3054
        %v3060 = vsel %vm3057, %v3054, %v3056
        %v3064 = vadd.f32 %v3003, %v3058
        %v3065 = vadd.f32 %v3004, %v3059
        %v3066 = vadd.f32 %v3005, %v3060
        %3067 = vset.pattern.permute.xlu0 34
        %3068 = vperm.xlu0 %3067, %v452
        %v3069 = vpop.permute.xlu0 %3068
        %v3071 = vmul.f32 %v467, %v3069
        %v3072 = vmul.f32 %v468, %v3069
        %v3073 = vmul.f32 %v469, %v3069
        %v3074 = vmul.f32 %v470, %v3069
        %3079 = vrot.lane.b32.xlu0 %v3071, 26
        %v3080 = vpop.permute.xlu0 %3079
        %3081 = vrot.lane.b32.xlu0 %v3072, 26
        %v3082 = vpop.permute.xlu0 %3081
        %3083 = vrot.lane.b32.xlu0 %v3073, 26
        %v3084 = vpop.permute.xlu0 %3083
        %3085 = vrot.lane.b32.xlu0 %v3074, 26
        %v3086 = vpop.permute.xlu0 %3085
        %v3087 = vsel %vm2509, %v3080, %v3082
        %v3088 = vsel %vm2509, %v3082, %v3084
        %v3089 = vsel %vm2509, %v3084, %v3086
        %v3094 = vadd.f32 %v3033, %v3087
        %v3095 = vadd.f32 %v3034, %v3088
        %v3096 = vadd.f32 %v3035, %v3089
        %v3097 = vadd.f32 %v3036, %v3086
        %3098 = vset.pattern.permute.xlu0 53
        %3099 = vperm.xlu0 %3098, %v451
        %v3100 = vpop.permute.xlu0 %3099
        %v3102 = vmul.f32 %v468, %v3100
        %v3103 = vmul.f32 %v469, %v3100
        %v3104 = vmul.f32 %v470, %v3100
        %v3105 = vadd.f32 %v3064, %v3102
        %v3106 = vadd.f32 %v3065, %v3103
        %v3107 = vadd.f32 %v3066, %v3104
        %v3108 = vld [vmem:[%s402 + $0x8] sm:$0xff]
        %v3109 = vld [vmem:[%s402 + $0x10] sm:$0xff]
        %v3110 = vld [vmem:[%s402 + $0x18] sm:$0xff]
        %v3111 = vld [vmem:[%s402 + $0x20] sm:$0xff]
        %3112 = vset.pattern.permute.xlu0 54
        %3113 = vperm.xlu0 %3112, %v451
        %v3114 = vpop.permute.xlu0 %3113
        %v3116 = vmul.f32 %v3108, %v3114
        %v3117 = vmul.f32 %v3109, %v3114
        %v3118 = vmul.f32 %v3110, %v3114
        %v3119 = vmul.f32 %v3111, %v3114
        %3124 = vrot.lane.b32.xlu0 %v3116, 112
        %v3125 = vpop.permute.xlu0 %3124
        %3126 = vrot.lane.b32.xlu0 %v3117, 112
        %v3127 = vpop.permute.xlu0 %3126
        %3128 = vrot.lane.b32.xlu0 %v3118, 112
        %v3129 = vpop.permute.xlu0 %3128
        %3130 = vrot.lane.b32.xlu0 %v3119, 112
        %v3131 = vpop.permute.xlu0 %3130
        %vm3132 = vcmask 916480
        %v3133 = vsel %vm3132, %v3125, %v3127
        %v3134 = vsel %vm3132, %v3127, %v3129
        %v3135 = vsel %vm3132, %v3129, %v3131
        %v3139 = vadd.f32 %v3105, %v3133
        %v3140 = vadd.f32 %v3106, %v3134
        %v3141 = vadd.f32 %v3107, %v3135
        %3142 = vset.pattern.permute.xlu0 55
        %3143 = vperm.xlu0 %3142, %v451
        %v3144 = vpop.permute.xlu0 %3143
        %v3146 = vmul.f32 %v3108, %v3144
        %v3147 = vmul.f32 %v3109, %v3144
        %v3148 = vmul.f32 %v3110, %v3144
        %v3149 = vmul.f32 %v3111, %v3144
        %3154 = vrot.lane.b32.xlu0 %v3146, 111
        %v3155 = vpop.permute.xlu0 %3154
        %3156 = vrot.lane.b32.xlu0 %v3147, 111
        %v3157 = vpop.permute.xlu0 %3156
        %3158 = vrot.lane.b32.xlu0 %v3148, 111
        %v3159 = vpop.permute.xlu0 %3158
        %3160 = vrot.lane.b32.xlu0 %v3149, 111
        %v3161 = vpop.permute.xlu0 %3160
        %vm3162 = vcmask 908288
        %v3163 = vsel %vm3162, %v3155, %v3157
        %v3164 = vsel %vm3162, %v3157, %v3159
        %v3165 = vsel %vm3162, %v3159, %v3161
        %v3169 = vadd.f32 %v3139, %v3163
        %v3170 = vadd.f32 %v3140, %v3164
        %v3171 = vadd.f32 %v3141, %v3165
        %3172 = vset.pattern.permute.xlu0 35
        %3173 = vperm.xlu0 %3172, %v452
        %v3174 = vpop.permute.xlu0 %3173
        %v3176 = vmul.f32 %v3108, %v3174
        %v3177 = vmul.f32 %v3109, %v3174
        %v3178 = vmul.f32 %v3110, %v3174
        %v3179 = vmul.f32 %v3111, %v3174
        %3184 = vrot.lane.b32.xlu0 %v3176, 8
        %v3185 = vpop.permute.xlu0 %3184
        %3186 = vrot.lane.b32.xlu0 %v3177, 8
        %v3187 = vpop.permute.xlu0 %3186
        %3188 = vrot.lane.b32.xlu0 %v3178, 8
        %v3189 = vpop.permute.xlu0 %3188
        %3190 = vrot.lane.b32.xlu0 %v3179, 8
        %v3191 = vpop.permute.xlu0 %3190
        %v3192 = vsel %vm2661, %v3185, %v3187
        %v3193 = vsel %vm2661, %v3187, %v3189
        %v3194 = vsel %vm2661, %v3189, %v3191
        %v3199 = vadd.f32 %v3094, %v3185
        %v3200 = vadd.f32 %v3095, %v3192
        %v3201 = vadd.f32 %v3096, %v3193
        %v3202 = vadd.f32 %v3097, %v3194
        %3203 = vset.pattern.permute.xlu0 56
        %3204 = vperm.xlu0 %3203, %v451
        %v3205 = vpop.permute.xlu0 %3204
        %v3207 = vmul.f32 %v3108, %v3205
        %v3208 = vmul.f32 %v3109, %v3205
        %v3209 = vmul.f32 %v3110, %v3205
        %v3210 = vmul.f32 %v3111, %v3205
        %3215 = vrot.lane.b32.xlu0 %v3207, 110
        %v3216 = vpop.permute.xlu0 %3215
        %3217 = vrot.lane.b32.xlu0 %v3208, 110
        %v3218 = vpop.permute.xlu0 %3217
        %3219 = vrot.lane.b32.xlu0 %v3209, 110
        %v3220 = vpop.permute.xlu0 %3219
        %3221 = vrot.lane.b32.xlu0 %v3210, 110
        %v3222 = vpop.permute.xlu0 %3221
        %vm3223 = vcmask 900096
        %v3224 = vsel %vm3223, %v3216, %v3218
        %v3225 = vsel %vm3223, %v3218, %v3220
        %v3226 = vsel %vm3223, %v3220, %v3222
        %v3230 = vadd.f32 %v3169, %v3224
        %v3231 = vadd.f32 %v3170, %v3225
        %v3232 = vadd.f32 %v3171, %v3226
        %3233 = vset.pattern.permute.xlu0 36
        %3234 = vperm.xlu0 %3233, %v452
        %v3235 = vpop.permute.xlu0 %3234
        %v3237 = vmul.f32 %v3108, %v3235
        %v3238 = vmul.f32 %v3109, %v3235
        %v3239 = vmul.f32 %v3110, %v3235
        %v3240 = vmul.f32 %v3111, %v3235
        %3245 = vrot.lane.b32.xlu0 %v3237, 7
        %v3246 = vpop.permute.xlu0 %3245
        %3247 = vrot.lane.b32.xlu0 %v3238, 7
        %v3248 = vpop.permute.xlu0 %3247
        %3249 = vrot.lane.b32.xlu0 %v3239, 7
        %v3250 = vpop.permute.xlu0 %3249
        %3251 = vrot.lane.b32.xlu0 %v3240, 7
        %v3252 = vpop.permute.xlu0 %3251
        %v3253 = vsel %vm2691, %v3246, %v3248
        %v3254 = vsel %vm2691, %v3248, %v3250
        %v3255 = vsel %vm2691, %v3250, %v3252
        %v3260 = vadd.f32 %v3199, %v3246
        %v3261 = vadd.f32 %v3200, %v3253
        %v3262 = vadd.f32 %v3201, %v3254
        %v3263 = vadd.f32 %v3202, %v3255
        %3264 = vset.pattern.permute.xlu0 57
        %3265 = vperm.xlu0 %3264, %v451
        %v3266 = vpop.permute.xlu0 %3265
        %v3268 = vmul.f32 %v3108, %v3266
        %v3269 = vmul.f32 %v3109, %v3266
        %v3270 = vmul.f32 %v3110, %v3266
        %v3271 = vmul.f32 %v3111, %v3266
        %3276 = vrot.lane.b32.xlu0 %v3268, 109
        %v3277 = vpop.permute.xlu0 %3276
        %3278 = vrot.lane.b32.xlu0 %v3269, 109
        %v3279 = vpop.permute.xlu0 %3278
        %3280 = vrot.lane.b32.xlu0 %v3270, 109
        %v3281 = vpop.permute.xlu0 %3280
        %3282 = vrot.lane.b32.xlu0 %v3271, 109
        %v3283 = vpop.permute.xlu0 %3282
        %vm3284 = vcmask 891904
        %v3285 = vsel %vm3284, %v3277, %v3279
        %v3286 = vsel %vm3284, %v3279, %v3281
        %v3287 = vsel %vm3284, %v3281, %v3283
        %v3291 = vadd.f32 %v3230, %v3285
        %v3292 = vadd.f32 %v3231, %v3286
        %v3293 = vadd.f32 %v3232, %v3287
        %3294 = vset.pattern.permute.xlu0 37
        %3295 = vperm.xlu0 %3294, %v452
        %v3296 = vpop.permute.xlu0 %3295
        %v3298 = vmul.f32 %v3108, %v3296
        %v3299 = vmul.f32 %v3109, %v3296
        %v3300 = vmul.f32 %v3110, %v3296
        %v3301 = vmul.f32 %v3111, %v3296
        %3306 = vrot.lane.b32.xlu0 %v3298, 6
        %v3307 = vpop.permute.xlu0 %3306
        %3308 = vrot.lane.b32.xlu0 %v3299, 6
        %v3309 = vpop.permute.xlu0 %3308
        %3310 = vrot.lane.b32.xlu0 %v3300, 6
        %v3311 = vpop.permute.xlu0 %3310
        %3312 = vrot.lane.b32.xlu0 %v3301, 6
        %v3313 = vpop.permute.xlu0 %3312
        %v3314 = vsel %vm2752, %v3307, %v3309
        %v3315 = vsel %vm2752, %v3309, %v3311
        %v3316 = vsel %vm2752, %v3311, %v3313
        %v3321 = vadd.f32 %v3260, %v3307
        %v3322 = vadd.f32 %v3261, %v3314
        %v3323 = vadd.f32 %v3262, %v3315
        %v3324 = vadd.f32 %v3263, %v3316
        %3325 = vset.pattern.permute.xlu0 58
        %3326 = vperm.xlu0 %3325, %v451
        %v3327 = vpop.permute.xlu0 %3326
        %v3329 = vmul.f32 %v3108, %v3327
        %v3330 = vmul.f32 %v3109, %v3327
        %v3331 = vmul.f32 %v3110, %v3327
        %v3332 = vmul.f32 %v3111, %v3327
        %3337 = vrot.lane.b32.xlu0 %v3329, 108
        %v3338 = vpop.permute.xlu0 %3337
        %3339 = vrot.lane.b32.xlu0 %v3330, 108
        %v3340 = vpop.permute.xlu0 %3339
        %3341 = vrot.lane.b32.xlu0 %v3331, 108
        %v3342 = vpop.permute.xlu0 %3341
        %3343 = vrot.lane.b32.xlu0 %v3332, 108
        %v3344 = vpop.permute.xlu0 %3343
        %vm3345 = vcmask 883712
        %v3346 = vsel %vm3345, %v3338, %v3340
        %v3347 = vsel %vm3345, %v3340, %v3342
        %v3348 = vsel %vm3345, %v3342, %v3344
        %v3352 = vadd.f32 %v3291, %v3346
        %v3353 = vadd.f32 %v3292, %v3347
        %v3354 = vadd.f32 %v3293, %v3348
        %3355 = vset.pattern.permute.xlu0 38
        %3356 = vperm.xlu0 %3355, %v452
        %v3357 = vpop.permute.xlu0 %3356
        %v3359 = vmul.f32 %v3108, %v3357
        %v3360 = vmul.f32 %v3109, %v3357
        %v3361 = vmul.f32 %v3110, %v3357
        %v3362 = vmul.f32 %v3111, %v3357
        %3367 = vrot.lane.b32.xlu0 %v3359, 5
        %v3368 = vpop.permute.xlu0 %3367
        %3369 = vrot.lane.b32.xlu0 %v3360, 5
        %v3370 = vpop.permute.xlu0 %3369
        %3371 = vrot.lane.b32.xlu0 %v3361, 5
        %v3372 = vpop.permute.xlu0 %3371
        %3373 = vrot.lane.b32.xlu0 %v3362, 5
        %v3374 = vpop.permute.xlu0 %3373
        %v3375 = vsel %vm2813, %v3368, %v3370
        %v3376 = vsel %vm2813, %v3370, %v3372
        %v3377 = vsel %vm2813, %v3372, %v3374
        %v3382 = vadd.f32 %v3321, %v3368
        %v3383 = vadd.f32 %v3322, %v3375
        %v3384 = vadd.f32 %v3323, %v3376
        %v3385 = vadd.f32 %v3324, %v3377
        %3386 = vset.pattern.permute.xlu0 59
        %3387 = vperm.xlu0 %3386, %v451
        %v3388 = vpop.permute.xlu0 %3387
        %v3390 = vmul.f32 %v3108, %v3388
        %v3391 = vmul.f32 %v3109, %v3388
        %v3392 = vmul.f32 %v3110, %v3388
        %v3393 = vmul.f32 %v3111, %v3388
        %3398 = vrot.lane.b32.xlu0 %v3390, 107
        %v3399 = vpop.permute.xlu0 %3398
        %3400 = vrot.lane.b32.xlu0 %v3391, 107
        %v3401 = vpop.permute.xlu0 %3400
        %3402 = vrot.lane.b32.xlu0 %v3392, 107
        %v3403 = vpop.permute.xlu0 %3402
        %3404 = vrot.lane.b32.xlu0 %v3393, 107
        %v3405 = vpop.permute.xlu0 %3404
        %vm3406 = vcmask 875520
        %v3407 = vsel %vm3406, %v3399, %v3401
        %v3408 = vsel %vm3406, %v3401, %v3403
        %v3409 = vsel %vm3406, %v3403, %v3405
        %v3413 = vadd.f32 %v3352, %v3407
        %v3414 = vadd.f32 %v3353, %v3408
        %v3415 = vadd.f32 %v3354, %v3409
        %3416 = vset.pattern.permute.xlu0 39
        %3417 = vperm.xlu0 %3416, %v452
        %v3418 = vpop.permute.xlu0 %3417
        %v3420 = vmul.f32 %v3108, %v3418
        %v3421 = vmul.f32 %v3109, %v3418
        %v3422 = vmul.f32 %v3110, %v3418
        %v3423 = vmul.f32 %v3111, %v3418
        %3428 = vrot.lane.b32.xlu0 %v3420, 4
        %v3429 = vpop.permute.xlu0 %3428
        %3430 = vrot.lane.b32.xlu0 %v3421, 4
        %v3431 = vpop.permute.xlu0 %3430
        %3432 = vrot.lane.b32.xlu0 %v3422, 4
        %v3433 = vpop.permute.xlu0 %3432
        %3434 = vrot.lane.b32.xlu0 %v3423, 4
        %v3435 = vpop.permute.xlu0 %3434
        %v3436 = vsel %vm2874, %v3429, %v3431
        %v3437 = vsel %vm2874, %v3431, %v3433
        %v3438 = vsel %vm2874, %v3433, %v3435
        %v3443 = vadd.f32 %v3382, %v3429
        %v3444 = vadd.f32 %v3383, %v3436
        %v3445 = vadd.f32 %v3384, %v3437
        %v3446 = vadd.f32 %v3385, %v3438
        %3447 = vset.pattern.permute.xlu0 60
        %3448 = vperm.xlu0 %3447, %v451
        %v3449 = vpop.permute.xlu0 %3448
        %v3451 = vmul.f32 %v3108, %v3449
        %v3452 = vmul.f32 %v3109, %v3449
        %v3453 = vmul.f32 %v3110, %v3449
        %v3454 = vmul.f32 %v3111, %v3449
        %3459 = vrot.lane.b32.xlu0 %v3451, 106
        %v3460 = vpop.permute.xlu0 %3459
        %3461 = vrot.lane.b32.xlu0 %v3452, 106
        %v3462 = vpop.permute.xlu0 %3461
        %3463 = vrot.lane.b32.xlu0 %v3453, 106
        %v3464 = vpop.permute.xlu0 %3463
        %3465 = vrot.lane.b32.xlu0 %v3454, 106
        %v3466 = vpop.permute.xlu0 %3465
        %vm3467 = vcmask 867328
        %v3468 = vsel %vm3467, %v3460, %v3462
        %v3469 = vsel %vm3467, %v3462, %v3464
        %v3470 = vsel %vm3467, %v3464, %v3466
        %v3474 = vadd.f32 %v3413, %v3468
        %v3475 = vadd.f32 %v3414, %v3469
        %v3476 = vadd.f32 %v3415, %v3470
        %3477 = vset.pattern.permute.xlu0 40
        %3478 = vperm.xlu0 %3477, %v452
        %v3479 = vpop.permute.xlu0 %3478
        %v3481 = vmul.f32 %v3108, %v3479
        %v3482 = vmul.f32 %v3109, %v3479
        %v3483 = vmul.f32 %v3110, %v3479
        %v3484 = vmul.f32 %v3111, %v3479
        %3489 = vrot.lane.b32.xlu0 %v3481, 3
        %v3490 = vpop.permute.xlu0 %3489
        %3491 = vrot.lane.b32.xlu0 %v3482, 3
        %v3492 = vpop.permute.xlu0 %3491
        %3493 = vrot.lane.b32.xlu0 %v3483, 3
        %v3494 = vpop.permute.xlu0 %3493
        %3495 = vrot.lane.b32.xlu0 %v3484, 3
        %v3496 = vpop.permute.xlu0 %3495
        %v3497 = vsel %vm2935, %v3490, %v3492
        %v3498 = vsel %vm2935, %v3492, %v3494
        %v3499 = vsel %vm2935, %v3494, %v3496
        %v3504 = vadd.f32 %v3443, %v3490
        %v3505 = vadd.f32 %v3444, %v3497
        %v3506 = vadd.f32 %v3445, %v3498
        %v3507 = vadd.f32 %v3446, %v3499
        %3508 = vset.pattern.permute.xlu0 61
        %3509 = vperm.xlu0 %3508, %v451
        %v3510 = vpop.permute.xlu0 %3509
        %v3512 = vmul.f32 %v3108, %v3510
        %v3513 = vmul.f32 %v3109, %v3510
        %v3514 = vmul.f32 %v3110, %v3510
        %v3515 = vmul.f32 %v3111, %v3510
        %3520 = vrot.lane.b32.xlu0 %v3512, 105
        %v3521 = vpop.permute.xlu0 %3520
        %3522 = vrot.lane.b32.xlu0 %v3513, 105
        %v3523 = vpop.permute.xlu0 %3522
        %3524 = vrot.lane.b32.xlu0 %v3514, 105
        %v3525 = vpop.permute.xlu0 %3524
        %3526 = vrot.lane.b32.xlu0 %v3515, 105
        %v3527 = vpop.permute.xlu0 %3526
        %vm3528 = vcmask 859136
        %v3529 = vsel %vm3528, %v3521, %v3523
        %v3530 = vsel %vm3528, %v3523, %v3525
        %v3531 = vsel %vm3528, %v3525, %v3527
        %v3535 = vadd.f32 %v3474, %v3529
        %v3536 = vadd.f32 %v3475, %v3530
        %v3537 = vadd.f32 %v3476, %v3531
        %3538 = vset.pattern.permute.xlu0 41
        %3539 = vperm.xlu0 %3538, %v452
        %v3540 = vpop.permute.xlu0 %3539
        %v3542 = vmul.f32 %v3108, %v3540
        %v3543 = vmul.f32 %v3109, %v3540
        %v3544 = vmul.f32 %v3110, %v3540
        %v3545 = vmul.f32 %v3111, %v3540
        %3550 = vrot.lane.b32.xlu0 %v3542, 2
        %v3551 = vpop.permute.xlu0 %3550
        %3552 = vrot.lane.b32.xlu0 %v3543, 2
        %v3553 = vpop.permute.xlu0 %3552
        %3554 = vrot.lane.b32.xlu0 %v3544, 2
        %v3555 = vpop.permute.xlu0 %3554
        %3556 = vrot.lane.b32.xlu0 %v3545, 2
        %v3557 = vpop.permute.xlu0 %3556
        %v3558 = vsel %vm2996, %v3551, %v3553
        %v3559 = vsel %vm2996, %v3553, %v3555
        %v3560 = vsel %vm2996, %v3555, %v3557
        %v3565 = vadd.f32 %v3504, %v3551
        %v3566 = vadd.f32 %v3505, %v3558
        %v3567 = vadd.f32 %v3506, %v3559
        %v3568 = vadd.f32 %v3507, %v3560
        %3569 = vset.pattern.permute.xlu0 62
        %3570 = vperm.xlu0 %3569, %v451
        %v3571 = vpop.permute.xlu0 %3570
        %v3573 = vmul.f32 %v3108, %v3571
        %v3574 = vmul.f32 %v3109, %v3571
        %v3575 = vmul.f32 %v3110, %v3571
        %v3576 = vmul.f32 %v3111, %v3571
        %3581 = vrot.lane.b32.xlu0 %v3573, 104
        %v3582 = vpop.permute.xlu0 %3581
        %3583 = vrot.lane.b32.xlu0 %v3574, 104
        %v3584 = vpop.permute.xlu0 %3583
        %3585 = vrot.lane.b32.xlu0 %v3575, 104
        %v3586 = vpop.permute.xlu0 %3585
        %3587 = vrot.lane.b32.xlu0 %v3576, 104
        %v3588 = vpop.permute.xlu0 %3587
        %v3589 = vsel %vm731, %v3582, %v3584
        %v3590 = vsel %vm731, %v3584, %v3586
        %v3591 = vsel %vm731, %v3586, %v3588
        %v3595 = vadd.f32 %v3535, %v3589
        %v3596 = vadd.f32 %v3536, %v3590
        %v3597 = vadd.f32 %v3537, %v3591
        %3598 = vset.pattern.permute.xlu0 63
        %3599 = vperm.xlu0 %3598, %v451
        %v3600 = vpop.permute.xlu0 %3599
        %v3602 = vmul.f32 %v3108, %v3600
        %v3603 = vmul.f32 %v3109, %v3600
        %v3604 = vmul.f32 %v3110, %v3600
        %v3605 = vmul.f32 %v3111, %v3600
        %3610 = vrot.lane.b32.xlu0 %v3602, 88
        %v3611 = vpop.permute.xlu0 %3610
        %3612 = vrot.lane.b32.xlu0 %v3603, 88
        %v3613 = vpop.permute.xlu0 %3612
        %3614 = vrot.lane.b32.xlu0 %v3604, 88
        %v3615 = vpop.permute.xlu0 %3614
        %3616 = vrot.lane.b32.xlu0 %v3605, 88
        %v3617 = vpop.permute.xlu0 %3616
        %vm3618 = vcmask 719872
        %v3619 = vsel %vm3618, %v3611, %v3613
        %v3620 = vsel %vm3618, %v3613, %v3615
        %v3621 = vsel %vm3618, %v3615, %v3617
        %v3625 = vadd.f32 %v3595, %v3619
        %v3626 = vadd.f32 %v3596, %v3620
        %v3627 = vadd.f32 %v3597, %v3621
        %3628 = vset.pattern.permute.xlu0 64
        %3629 = vperm.xlu0 %3628, %v451
        %v3630 = vpop.permute.xlu0 %3629
        %v3632 = vmul.f32 %v3108, %v3630
        %v3633 = vmul.f32 %v3109, %v3630
        %v3634 = vmul.f32 %v3110, %v3630
        %v3635 = vmul.f32 %v3111, %v3630
        %3640 = vrot.lane.b32.xlu0 %v3632, 87
        %v3641 = vpop.permute.xlu0 %3640
        %3642 = vrot.lane.b32.xlu0 %v3633, 87
        %v3643 = vpop.permute.xlu0 %3642
        %3644 = vrot.lane.b32.xlu0 %v3634, 87
        %v3645 = vpop.permute.xlu0 %3644
        %3646 = vrot.lane.b32.xlu0 %v3635, 87
        %v3647 = vpop.permute.xlu0 %3646
        %vm3648 = vcmask 711680
        %v3649 = vsel %vm3648, %v3641, %v3643
        %v3650 = vsel %vm3648, %v3643, %v3645
        %v3651 = vsel %vm3648, %v3645, %v3647
        %v3655 = vadd.f32 %v3625, %v3649
        %v3656 = vadd.f32 %v3626, %v3650
        %v3657 = vadd.f32 %v3627, %v3651
        %3658 = vset.pattern.permute.xlu0 42
        %3659 = vperm.xlu0 %3658, %v452
        %v3660 = vpop.permute.xlu0 %3659
        %v3662 = vmul.f32 %v3108, %v3660
        %v3663 = vmul.f32 %v3109, %v3660
        %v3664 = vmul.f32 %v3110, %v3660
        %v3665 = vmul.f32 %v3111, %v3660
        %3670 = vrot.lane.b32.xlu0 %v3662, 112
        %v3671 = vpop.permute.xlu0 %3670
        %3672 = vrot.lane.b32.xlu0 %v3663, 112
        %v3673 = vpop.permute.xlu0 %3672
        %3674 = vrot.lane.b32.xlu0 %v3664, 112
        %v3675 = vpop.permute.xlu0 %3674
        %3676 = vrot.lane.b32.xlu0 %v3665, 112
        %v3677 = vpop.permute.xlu0 %3676
        %v3678 = vsel %vm3132, %v3671, %v3673
        %v3679 = vsel %vm3132, %v3673, %v3675
        %v3680 = vsel %vm3132, %v3675, %v3677
        %v3685 = vadd.f32 %v3565, %v3678
        %v3686 = vadd.f32 %v3566, %v3679
        %v3687 = vadd.f32 %v3567, %v3680
        %v3688 = vadd.f32 %v3568, %v3677
        %3689 = vset.pattern.permute.xlu0 65
        %3690 = vperm.xlu0 %3689, %v451
        %v3691 = vpop.permute.xlu0 %3690
        %v3693 = vmul.f32 %v3108, %v3691
        %v3694 = vmul.f32 %v3109, %v3691
        %v3695 = vmul.f32 %v3110, %v3691
        %v3696 = vmul.f32 %v3111, %v3691
        %3701 = vrot.lane.b32.xlu0 %v3693, 86
        %v3702 = vpop.permute.xlu0 %3701
        %3703 = vrot.lane.b32.xlu0 %v3694, 86
        %v3704 = vpop.permute.xlu0 %3703
        %3705 = vrot.lane.b32.xlu0 %v3695, 86
        %v3706 = vpop.permute.xlu0 %3705
        %3707 = vrot.lane.b32.xlu0 %v3696, 86
        %v3708 = vpop.permute.xlu0 %3707
        %vm3709 = vcmask 703488
        %v3710 = vsel %vm3709, %v3702, %v3704
        %v3711 = vsel %vm3709, %v3704, %v3706
        %v3712 = vsel %vm3709, %v3706, %v3708
        %v3716 = vadd.f32 %v3655, %v3710
        %v3717 = vadd.f32 %v3656, %v3711
        %v3718 = vadd.f32 %v3657, %v3712
        %3719 = vset.pattern.permute.xlu0 43
        %3720 = vperm.xlu0 %3719, %v452
        %v3721 = vpop.permute.xlu0 %3720
        %v3723 = vmul.f32 %v3108, %v3721
        %v3724 = vmul.f32 %v3109, %v3721
        %v3725 = vmul.f32 %v3110, %v3721
        %v3726 = vmul.f32 %v3111, %v3721
        %3731 = vrot.lane.b32.xlu0 %v3723, 111
        %v3732 = vpop.permute.xlu0 %3731
        %3733 = vrot.lane.b32.xlu0 %v3724, 111
        %v3734 = vpop.permute.xlu0 %3733
        %3735 = vrot.lane.b32.xlu0 %v3725, 111
        %v3736 = vpop.permute.xlu0 %3735
        %3737 = vrot.lane.b32.xlu0 %v3726, 111
        %v3738 = vpop.permute.xlu0 %3737
        %v3739 = vsel %vm3162, %v3732, %v3734
        %v3740 = vsel %vm3162, %v3734, %v3736
        %v3741 = vsel %vm3162, %v3736, %v3738
        %v3746 = vadd.f32 %v3685, %v3739
        %v3747 = vadd.f32 %v3686, %v3740
        %v3748 = vadd.f32 %v3687, %v3741
        %v3749 = vadd.f32 %v3688, %v3738
        %3750 = vset.pattern.permute.xlu0 66
        %3751 = vperm.xlu0 %3750, %v451
        %v3752 = vpop.permute.xlu0 %3751
        %v3754 = vmul.f32 %v3108, %v3752
        %v3755 = vmul.f32 %v3109, %v3752
        %v3756 = vmul.f32 %v3110, %v3752
        %v3757 = vmul.f32 %v3111, %v3752
        %3762 = vrot.lane.b32.xlu0 %v3754, 85
        %v3763 = vpop.permute.xlu0 %3762
        %3764 = vrot.lane.b32.xlu0 %v3755, 85
        %v3765 = vpop.permute.xlu0 %3764
        %3766 = vrot.lane.b32.xlu0 %v3756, 85
        %v3767 = vpop.permute.xlu0 %3766
        %3768 = vrot.lane.b32.xlu0 %v3757, 85
        %v3769 = vpop.permute.xlu0 %3768
        %vm3770 = vcmask 695296
        %v3771 = vsel %vm3770, %v3763, %v3765
        %v3772 = vsel %vm3770, %v3765, %v3767
        %v3773 = vsel %vm3770, %v3767, %v3769
        %v3777 = vadd.f32 %v3716, %v3771
        %v3778 = vadd.f32 %v3717, %v3772
        %v3779 = vadd.f32 %v3718, %v3773
        %3780 = vset.pattern.permute.xlu0 44
        %3781 = vperm.xlu0 %3780, %v452
        %v3782 = vpop.permute.xlu0 %3781
        %v3784 = vmul.f32 %v3108, %v3782
        %v3785 = vmul.f32 %v3109, %v3782
        %v3786 = vmul.f32 %v3110, %v3782
        %v3787 = vmul.f32 %v3111, %v3782
        %3792 = vrot.lane.b32.xlu0 %v3784, 110
        %v3793 = vpop.permute.xlu0 %3792
        %3794 = vrot.lane.b32.xlu0 %v3785, 110
        %v3795 = vpop.permute.xlu0 %3794
        %3796 = vrot.lane.b32.xlu0 %v3786, 110
        %v3797 = vpop.permute.xlu0 %3796
        %3798 = vrot.lane.b32.xlu0 %v3787, 110
        %v3799 = vpop.permute.xlu0 %3798
        %v3800 = vsel %vm3223, %v3793, %v3795
        %v3801 = vsel %vm3223, %v3795, %v3797
        %v3802 = vsel %vm3223, %v3797, %v3799
        %v3807 = vadd.f32 %v3746, %v3800
        %v3808 = vadd.f32 %v3747, %v3801
        %v3809 = vadd.f32 %v3748, %v3802
        %v3810 = vadd.f32 %v3749, %v3799
        %3811 = vset.pattern.permute.xlu0 67
        %3812 = vperm.xlu0 %3811, %v451
        %v3813 = vpop.permute.xlu0 %3812
        %v3815 = vmul.f32 %v3108, %v3813
        %v3816 = vmul.f32 %v3109, %v3813
        %v3817 = vmul.f32 %v3110, %v3813
        %v3818 = vmul.f32 %v3111, %v3813
        %3823 = vrot.lane.b32.xlu0 %v3815, 84
        %v3824 = vpop.permute.xlu0 %3823
        %3825 = vrot.lane.b32.xlu0 %v3816, 84
        %v3826 = vpop.permute.xlu0 %3825
        %3827 = vrot.lane.b32.xlu0 %v3817, 84
        %v3828 = vpop.permute.xlu0 %3827
        %3829 = vrot.lane.b32.xlu0 %v3818, 84
        %v3830 = vpop.permute.xlu0 %3829
        %vm3831 = vcmask 687104
        %v3832 = vsel %vm3831, %v3824, %v3826
        %v3833 = vsel %vm3831, %v3826, %v3828
        %v3834 = vsel %vm3831, %v3828, %v3830
        %v3838 = vadd.f32 %v3777, %v3832
        %v3839 = vadd.f32 %v3778, %v3833
        %v3840 = vadd.f32 %v3779, %v3834
        %3841 = vset.pattern.permute.xlu0 45
        %3842 = vperm.xlu0 %3841, %v452
        %v3843 = vpop.permute.xlu0 %3842
        %v3845 = vmul.f32 %v3108, %v3843
        %v3846 = vmul.f32 %v3109, %v3843
        %v3847 = vmul.f32 %v3110, %v3843
        %v3848 = vmul.f32 %v3111, %v3843
        %3853 = vrot.lane.b32.xlu0 %v3845, 109
        %v3854 = vpop.permute.xlu0 %3853
        %3855 = vrot.lane.b32.xlu0 %v3846, 109
        %v3856 = vpop.permute.xlu0 %3855
        %3857 = vrot.lane.b32.xlu0 %v3847, 109
        %v3858 = vpop.permute.xlu0 %3857
        %3859 = vrot.lane.b32.xlu0 %v3848, 109
        %v3860 = vpop.permute.xlu0 %3859
        %v3861 = vsel %vm3284, %v3854, %v3856
        %v3862 = vsel %vm3284, %v3856, %v3858
        %v3863 = vsel %vm3284, %v3858, %v3860
        %v3868 = vadd.f32 %v3807, %v3861
        %v3869 = vadd.f32 %v3808, %v3862
        %v3870 = vadd.f32 %v3809, %v3863
        %v3871 = vadd.f32 %v3810, %v3860
        %3872 = vset.pattern.permute.xlu0 68
        %3873 = vperm.xlu0 %3872, %v451
        %v3874 = vpop.permute.xlu0 %3873
        %v3876 = vmul.f32 %v3108, %v3874
        %v3877 = vmul.f32 %v3109, %v3874
        %v3878 = vmul.f32 %v3110, %v3874
        %v3879 = vmul.f32 %v3111, %v3874
        %3884 = vrot.lane.b32.xlu0 %v3876, 83
        %v3885 = vpop.permute.xlu0 %3884
        %3886 = vrot.lane.b32.xlu0 %v3877, 83
        %v3887 = vpop.permute.xlu0 %3886
        %3888 = vrot.lane.b32.xlu0 %v3878, 83
        %v3889 = vpop.permute.xlu0 %3888
        %3890 = vrot.lane.b32.xlu0 %v3879, 83
        %v3891 = vpop.permute.xlu0 %3890
        %vm3892 = vcmask 678912
        %v3893 = vsel %vm3892, %v3885, %v3887
        %v3894 = vsel %vm3892, %v3887, %v3889
        %v3895 = vsel %vm3892, %v3889, %v3891
        %v3899 = vadd.f32 %v3838, %v3893
        %v3900 = vadd.f32 %v3839, %v3894
        %v3901 = vadd.f32 %v3840, %v3895
        %3902 = vset.pattern.permute.xlu0 46
        %3903 = vperm.xlu0 %3902, %v452
        %v3904 = vpop.permute.xlu0 %3903
        %v3906 = vmul.f32 %v3108, %v3904
        %v3907 = vmul.f32 %v3109, %v3904
        %v3908 = vmul.f32 %v3110, %v3904
        %v3909 = vmul.f32 %v3111, %v3904
        %3914 = vrot.lane.b32.xlu0 %v3906, 108
        %v3915 = vpop.permute.xlu0 %3914
        %3916 = vrot.lane.b32.xlu0 %v3907, 108
        %v3917 = vpop.permute.xlu0 %3916
        %3918 = vrot.lane.b32.xlu0 %v3908, 108
        %v3919 = vpop.permute.xlu0 %3918
        %3920 = vrot.lane.b32.xlu0 %v3909, 108
        %v3921 = vpop.permute.xlu0 %3920
        %v3922 = vsel %vm3345, %v3915, %v3917
        %v3923 = vsel %vm3345, %v3917, %v3919
        %v3924 = vsel %vm3345, %v3919, %v3921
        %v3929 = vadd.f32 %v3868, %v3922
        %v3930 = vadd.f32 %v3869, %v3923
        %v3931 = vadd.f32 %v3870, %v3924
        %v3932 = vadd.f32 %v3871, %v3921
        %3933 = vset.pattern.permute.xlu0 69
        %3934 = vperm.xlu0 %3933, %v451
        %v3935 = vpop.permute.xlu0 %3934
        %v3937 = vmul.f32 %v3108, %v3935
        %v3938 = vmul.f32 %v3109, %v3935
        %v3939 = vmul.f32 %v3110, %v3935
        %v3940 = vmul.f32 %v3111, %v3935
        %3945 = vrot.lane.b32.xlu0 %v3937, 82
        %v3946 = vpop.permute.xlu0 %3945
        %3947 = vrot.lane.b32.xlu0 %v3938, 82
        %v3948 = vpop.permute.xlu0 %3947
        %3949 = vrot.lane.b32.xlu0 %v3939, 82
        %v3950 = vpop.permute.xlu0 %3949
        %3951 = vrot.lane.b32.xlu0 %v3940, 82
        %v3952 = vpop.permute.xlu0 %3951
        %vm3953 = vcmask 670720
        %v3954 = vsel %vm3953, %v3946, %v3948
        %v3955 = vsel %vm3953, %v3948, %v3950
        %v3956 = vsel %vm3953, %v3950, %v3952
        %v3960 = vadd.f32 %v3899, %v3954
        %v3961 = vadd.f32 %v3900, %v3955
        %v3962 = vadd.f32 %v3901, %v3956
        %3963 = vset.pattern.permute.xlu0 47
        %3964 = vperm.xlu0 %3963, %v452
        %v3965 = vpop.permute.xlu0 %3964
        %v3967 = vmul.f32 %v3108, %v3965
        %v3968 = vmul.f32 %v3109, %v3965
        %v3969 = vmul.f32 %v3110, %v3965
        %v3970 = vmul.f32 %v3111, %v3965
        %3975 = vrot.lane.b32.xlu0 %v3967, 107
        %v3976 = vpop.permute.xlu0 %3975
        %3977 = vrot.lane.b32.xlu0 %v3968, 107
        %v3978 = vpop.permute.xlu0 %3977
        %3979 = vrot.lane.b32.xlu0 %v3969, 107
        %v3980 = vpop.permute.xlu0 %3979
        %3981 = vrot.lane.b32.xlu0 %v3970, 107
        %v3982 = vpop.permute.xlu0 %3981
        %v3983 = vsel %vm3406, %v3976, %v3978
        %v3984 = vsel %vm3406, %v3978, %v3980
        %v3985 = vsel %vm3406, %v3980, %v3982
        %v3990 = vadd.f32 %v3929, %v3983
        %v3991 = vadd.f32 %v3930, %v3984
        %v3992 = vadd.f32 %v3931, %v3985
        %v3993 = vadd.f32 %v3932, %v3982
        %3994 = vset.pattern.permute.xlu0 70
        %3995 = vperm.xlu0 %3994, %v451
        %v3996 = vpop.permute.xlu0 %3995
        %v3998 = vmul.f32 %v3108, %v3996
        %v3999 = vmul.f32 %v3109, %v3996
        %v4000 = vmul.f32 %v3110, %v3996
        %v4001 = vmul.f32 %v3111, %v3996
        %4006 = vrot.lane.b32.xlu0 %v3998, 81
        %v4007 = vpop.permute.xlu0 %4006
        %4008 = vrot.lane.b32.xlu0 %v3999, 81
        %v4009 = vpop.permute.xlu0 %4008
        %4010 = vrot.lane.b32.xlu0 %v4000, 81
        %v4011 = vpop.permute.xlu0 %4010
        %4012 = vrot.lane.b32.xlu0 %v4001, 81
        %v4013 = vpop.permute.xlu0 %4012
        %vm4014 = vcmask 662528
        %v4015 = vsel %vm4014, %v4007, %v4009
        %v4016 = vsel %vm4014, %v4009, %v4011
        %v4017 = vsel %vm4014, %v4011, %v4013
        %v4021 = vadd.f32 %v3960, %v4015
        %v4022 = vadd.f32 %v3961, %v4016
        %v4023 = vadd.f32 %v3962, %v4017
        %4024 = vset.pattern.permute.xlu0 48
        %4025 = vperm.xlu0 %4024, %v452
        %v4026 = vpop.permute.xlu0 %4025
        %v4028 = vmul.f32 %v3108, %v4026
        %v4029 = vmul.f32 %v3109, %v4026
        %v4030 = vmul.f32 %v3110, %v4026
        %v4031 = vmul.f32 %v3111, %v4026
        %4036 = vrot.lane.b32.xlu0 %v4028, 106
        %v4037 = vpop.permute.xlu0 %4036
        %4038 = vrot.lane.b32.xlu0 %v4029, 106
        %v4039 = vpop.permute.xlu0 %4038
        %4040 = vrot.lane.b32.xlu0 %v4030, 106
        %v4041 = vpop.permute.xlu0 %4040
        %4042 = vrot.lane.b32.xlu0 %v4031, 106
        %v4043 = vpop.permute.xlu0 %4042
        %v4044 = vsel %vm3467, %v4037, %v4039
        %v4045 = vsel %vm3467, %v4039, %v4041
        %v4046 = vsel %vm3467, %v4041, %v4043
        %v4051 = vadd.f32 %v3990, %v4044
        %v4052 = vadd.f32 %v3991, %v4045
        %v4053 = vadd.f32 %v3992, %v4046
        %v4054 = vadd.f32 %v3993, %v4043
        %4055 = vset.pattern.permute.xlu0 71
        %4056 = vperm.xlu0 %4055, %v451
        %v4057 = vpop.permute.xlu0 %4056
        %v4059 = vmul.f32 %v3108, %v4057
        %v4060 = vmul.f32 %v3109, %v4057
        %v4061 = vmul.f32 %v3110, %v4057
        %v4062 = vmul.f32 %v3111, %v4057
        %4067 = vrot.lane.b32.xlu0 %v4059, 80
        %v4068 = vpop.permute.xlu0 %4067
        %4069 = vrot.lane.b32.xlu0 %v4060, 80
        %v4070 = vpop.permute.xlu0 %4069
        %4071 = vrot.lane.b32.xlu0 %v4061, 80
        %v4072 = vpop.permute.xlu0 %4071
        %4073 = vrot.lane.b32.xlu0 %v4062, 80
        %v4074 = vpop.permute.xlu0 %4073
        %v4075 = vsel %vm1200, %v4068, %v4070
        %v4076 = vsel %vm1200, %v4070, %v4072
        %v4077 = vsel %vm1200, %v4072, %v4074
        %v4081 = vadd.f32 %v4021, %v4075
        %v4082 = vadd.f32 %v4022, %v4076
        %v4083 = vadd.f32 %v4023, %v4077
        %4084 = vset.pattern.permute.xlu0 72
        %4085 = vperm.xlu0 %4084, %v451
        %v4086 = vpop.permute.xlu0 %4085
        %v4088 = vmul.f32 %v3108, %v4086
        %v4089 = vmul.f32 %v3109, %v4086
        %v4090 = vmul.f32 %v3110, %v4086
        %v4091 = vmul.f32 %v3111, %v4086
        %4096 = vrot.lane.b32.xlu0 %v4088, 64
        %v4097 = vpop.permute.xlu0 %4096
        %4098 = vrot.lane.b32.xlu0 %v4089, 64
        %v4099 = vpop.permute.xlu0 %4098
        %4100 = vrot.lane.b32.xlu0 %v4090, 64
        %v4101 = vpop.permute.xlu0 %4100
        %4102 = vrot.lane.b32.xlu0 %v4091, 64
        %v4103 = vpop.permute.xlu0 %4102
        %vm4104 = vcmask 523264
        %v4105 = vsel %vm4104, %v4097, %v4099
        %v4106 = vsel %vm4104, %v4099, %v4101
        %v4107 = vsel %vm4104, %v4101, %v4103
        %v4111 = vadd.f32 %v4081, %v4105
        %v4112 = vadd.f32 %v4082, %v4106
        %v4113 = vadd.f32 %v4083, %v4107
        %4114 = vset.pattern.permute.xlu0 73
        %4115 = vperm.xlu0 %4114, %v451
        %v4116 = vpop.permute.xlu0 %4115
        %v4118 = vmul.f32 %v3108, %v4116
        %v4119 = vmul.f32 %v3109, %v4116
        %v4120 = vmul.f32 %v3110, %v4116
        %v4121 = vmul.f32 %v3111, %v4116
        %4126 = vrot.lane.b32.xlu0 %v4118, 63
        %v4127 = vpop.permute.xlu0 %4126
        %4128 = vrot.lane.b32.xlu0 %v4119, 63
        %v4129 = vpop.permute.xlu0 %4128
        %4130 = vrot.lane.b32.xlu0 %v4120, 63
        %v4131 = vpop.permute.xlu0 %4130
        %4132 = vrot.lane.b32.xlu0 %v4121, 63
        %v4133 = vpop.permute.xlu0 %4132
        %vm4134 = vcmask 515072
        %v4135 = vsel %vm4134, %v4127, %v4129
        %v4136 = vsel %vm4134, %v4129, %v4131
        %v4137 = vsel %vm4134, %v4131, %v4133
        %v4141 = vadd.f32 %v4111, %v4135
        %v4142 = vadd.f32 %v4112, %v4136
        %v4143 = vadd.f32 %v4113, %v4137
        %4144 = vset.pattern.permute.xlu0 74
        %4145 = vperm.xlu0 %4144, %v451
        %v4146 = vpop.permute.xlu0 %4145
        %v4148 = vmul.f32 %v3108, %v4146
        %v4149 = vmul.f32 %v3109, %v4146
        %v4150 = vmul.f32 %v3110, %v4146
        %v4151 = vmul.f32 %v3111, %v4146
        %4156 = vrot.lane.b32.xlu0 %v4148, 62
        %v4157 = vpop.permute.xlu0 %4156
        %4158 = vrot.lane.b32.xlu0 %v4149, 62
        %v4159 = vpop.permute.xlu0 %4158
        %4160 = vrot.lane.b32.xlu0 %v4150, 62
        %v4161 = vpop.permute.xlu0 %4160
        %4162 = vrot.lane.b32.xlu0 %v4151, 62
        %v4163 = vpop.permute.xlu0 %4162
        %vm4164 = vcmask 506880
        %v4165 = vsel %vm4164, %v4157, %v4159
        %v4166 = vsel %vm4164, %v4159, %v4161
        %v4167 = vsel %vm4164, %v4161, %v4163
        %v4171 = vadd.f32 %v4141, %v4165
        %v4172 = vadd.f32 %v4142, %v4166
        %v4173 = vadd.f32 %v4143, %v4167
        %4174 = vset.pattern.permute.xlu0 75
        %4175 = vperm.xlu0 %4174, %v451
        %v4176 = vpop.permute.xlu0 %4175
        %v4178 = vmul.f32 %v3108, %v4176
        %v4179 = vmul.f32 %v3109, %v4176
        %v4180 = vmul.f32 %v3110, %v4176
        %v4181 = vmul.f32 %v3111, %v4176
        %4186 = vrot.lane.b32.xlu0 %v4178, 61
        %v4187 = vpop.permute.xlu0 %4186
        %4188 = vrot.lane.b32.xlu0 %v4179, 61
        %v4189 = vpop.permute.xlu0 %4188
        %4190 = vrot.lane.b32.xlu0 %v4180, 61
        %v4191 = vpop.permute.xlu0 %4190
        %4192 = vrot.lane.b32.xlu0 %v4181, 61
        %v4193 = vpop.permute.xlu0 %4192
        %vm4194 = vcmask 498688
        %v4195 = vsel %vm4194, %v4187, %v4189
        %v4196 = vsel %vm4194, %v4189, %v4191
        %v4197 = vsel %vm4194, %v4191, %v4193
        %v4201 = vadd.f32 %v4171, %v4195
        %v4202 = vadd.f32 %v4172, %v4196
        %v4203 = vadd.f32 %v4173, %v4197
        %4204 = vset.pattern.permute.xlu0 76
        %4205 = vperm.xlu0 %4204, %v451
        %v4206 = vpop.permute.xlu0 %4205
        %v4208 = vmul.f32 %v3108, %v4206
        %v4209 = vmul.f32 %v3109, %v4206
        %v4210 = vmul.f32 %v3110, %v4206
        %v4211 = vmul.f32 %v3111, %v4206
        %4216 = vrot.lane.b32.xlu0 %v4208, 60
        %v4217 = vpop.permute.xlu0 %4216
        %4218 = vrot.lane.b32.xlu0 %v4209, 60
        %v4219 = vpop.permute.xlu0 %4218
        %4220 = vrot.lane.b32.xlu0 %v4210, 60
        %v4221 = vpop.permute.xlu0 %4220
        %4222 = vrot.lane.b32.xlu0 %v4211, 60
        %v4223 = vpop.permute.xlu0 %4222
        %vm4224 = vcmask 490496
        %v4225 = vsel %vm4224, %v4217, %v4219
        %v4226 = vsel %vm4224, %v4219, %v4221
        %v4227 = vsel %vm4224, %v4221, %v4223
        %v4231 = vadd.f32 %v4201, %v4225
        %v4232 = vadd.f32 %v4202, %v4226
        %v4233 = vadd.f32 %v4203, %v4227
        %4234 = vset.pattern.permute.xlu0 77
        %4235 = vperm.xlu0 %4234, %v451
        %v4236 = vpop.permute.xlu0 %4235
        %v4238 = vmul.f32 %v3108, %v4236
        %v4239 = vmul.f32 %v3109, %v4236
        %v4240 = vmul.f32 %v3110, %v4236
        %v4241 = vmul.f32 %v3111, %v4236
        %4246 = vrot.lane.b32.xlu0 %v4238, 59
        %v4247 = vpop.permute.xlu0 %4246
        %4248 = vrot.lane.b32.xlu0 %v4239, 59
        %v4249 = vpop.permute.xlu0 %4248
        %4250 = vrot.lane.b32.xlu0 %v4240, 59
        %v4251 = vpop.permute.xlu0 %4250
        %4252 = vrot.lane.b32.xlu0 %v4241, 59
        %v4253 = vpop.permute.xlu0 %4252
        %vm4254 = vcmask 482304
        %v4255 = vsel %vm4254, %v4247, %v4249
        %v4256 = vsel %vm4254, %v4249, %v4251
        %v4257 = vsel %vm4254, %v4251, %v4253
        %v4261 = vadd.f32 %v4231, %v4255
        %v4262 = vadd.f32 %v4232, %v4256
        %v4263 = vadd.f32 %v4233, %v4257
        %4264 = vset.pattern.permute.xlu0 78
        %4265 = vperm.xlu0 %4264, %v451
        %v4266 = vpop.permute.xlu0 %4265
        %v4268 = vmul.f32 %v3108, %v4266
        %v4269 = vmul.f32 %v3109, %v4266
        %v4270 = vmul.f32 %v3110, %v4266
        %v4271 = vmul.f32 %v3111, %v4266
        %4276 = vrot.lane.b32.xlu0 %v4268, 58
        %v4277 = vpop.permute.xlu0 %4276
        %4278 = vrot.lane.b32.xlu0 %v4269, 58
        %v4279 = vpop.permute.xlu0 %4278
        %4280 = vrot.lane.b32.xlu0 %v4270, 58
        %v4281 = vpop.permute.xlu0 %4280
        %4282 = vrot.lane.b32.xlu0 %v4271, 58
        %v4283 = vpop.permute.xlu0 %4282
        %vm4284 = vcmask 474112
        %v4285 = vsel %vm4284, %v4277, %v4279
        %v4286 = vsel %vm4284, %v4279, %v4281
        %v4287 = vsel %vm4284, %v4281, %v4283
        %v4291 = vadd.f32 %v4261, %v4285
        %v4292 = vadd.f32 %v4262, %v4286
        %v4293 = vadd.f32 %v4263, %v4287
        %4294 = vset.pattern.permute.xlu0 79
        %4295 = vperm.xlu0 %4294, %v451
        %v4296 = vpop.permute.xlu0 %4295
        %v4298 = vmul.f32 %v3108, %v4296
        %v4299 = vmul.f32 %v3109, %v4296
        %v4300 = vmul.f32 %v3110, %v4296
        %v4301 = vmul.f32 %v3111, %v4296
        %4306 = vrot.lane.b32.xlu0 %v4298, 57
        %v4307 = vpop.permute.xlu0 %4306
        %4308 = vrot.lane.b32.xlu0 %v4299, 57
        %v4309 = vpop.permute.xlu0 %4308
        %4310 = vrot.lane.b32.xlu0 %v4300, 57
        %v4311 = vpop.permute.xlu0 %4310
        %4312 = vrot.lane.b32.xlu0 %v4301, 57
        %v4313 = vpop.permute.xlu0 %4312
        %vm4314 = vcmask 465920
        %v4315 = vsel %vm4314, %v4307, %v4309
        %v4316 = vsel %vm4314, %v4309, %v4311
        %v4317 = vsel %vm4314, %v4311, %v4313
        %v4321 = vadd.f32 %v4291, %v4315
        %v4322 = vadd.f32 %v4292, %v4316
        %v4323 = vadd.f32 %v4293, %v4317
        %4324 = vset.pattern.permute.xlu0 80
        %4325 = vperm.xlu0 %4324, %v451
        %v4326 = vpop.permute.xlu0 %4325
        %v4328 = vmul.f32 %v3108, %v4326
        %v4329 = vmul.f32 %v3109, %v4326
        %v4330 = vmul.f32 %v3110, %v4326
        %v4331 = vmul.f32 %v3111, %v4326
        %4336 = vrot.lane.b32.xlu0 %v4328, 56
        %v4337 = vpop.permute.xlu0 %4336
        %4338 = vrot.lane.b32.xlu0 %v4329, 56
        %v4339 = vpop.permute.xlu0 %4338
        %4340 = vrot.lane.b32.xlu0 %v4330, 56
        %v4341 = vpop.permute.xlu0 %4340
        %4342 = vrot.lane.b32.xlu0 %v4331, 56
        %v4343 = vpop.permute.xlu0 %4342
        %v4344 = vsel %vm1687, %v4337, %v4339
        %v4345 = vsel %vm1687, %v4339, %v4341
        %v4346 = vsel %vm1687, %v4341, %v4343
        %v4350 = vadd.f32 %v4321, %v4344
        %v4351 = vadd.f32 %v4322, %v4345
        %v4352 = vadd.f32 %v4323, %v4346
        %v4353 = vld [vmem:[%s2] sm:$0xff]
        %v4354 = vld [vmem:[%s1] sm:$0xff]
        %4356 = vset.pattern.permute.xlu0 0
        %4357 = vperm.xlu0 %4356, %v4353
        %v4358 = vpop.permute.xlu0 %4357
        %v4360 = vmul.f32 %v467, %v4358
        %v4361 = vmul.f32 %v468, %v4358
        %v4362 = vmul.f32 %v469, %v4358
        %v4363 = vmul.f32 %v470, %v4358
        %v4364 = vadd.f32 %v4360, 0.0
        %v4365 = vadd.f32 %v4361, 0.0
        %v4366 = vadd.f32 %v4362, 0.0
        %v4367 = vadd.f32 %v4363, 0.0
        %4368 = vset.pattern.permute.xlu0 1
        %4369 = vperm.xlu0 %4368, %v4353
        %v4370 = vpop.permute.xlu0 %4369
        %v4372 = vmul.f32 %v467, %v4370
        %v4373 = vmul.f32 %v468, %v4370
        %v4374 = vmul.f32 %v469, %v4370
        %v4375 = vmul.f32 %v470, %v4370
        %4380 = vrot.lane.b32.xlu0 %v4372, 127
        %v4381 = vpop.permute.xlu0 %4380
        %4382 = vrot.lane.b32.xlu0 %v4373, 127
        %v4383 = vpop.permute.xlu0 %4382
        %4384 = vrot.lane.b32.xlu0 %v4374, 127
        %v4385 = vpop.permute.xlu0 %4384
        %4386 = vrot.lane.b32.xlu0 %v4375, 127
        %v4387 = vpop.permute.xlu0 %4386
        %v4388 = vsel %vm491, %v4381, %v4383
        %v4389 = vsel %vm491, %v4383, %v4385
        %v4390 = vsel %vm491, %v4385, %v4387
        %v4395 = vadd.f32 %v4364, %v4388
        %v4396 = vadd.f32 %v4365, %v4389
        %v4397 = vadd.f32 %v4366, %v4390
        %v4398 = vadd.f32 %v4367, %v4387
        %4399 = vset.pattern.permute.xlu0 2
        %4400 = vperm.xlu0 %4399, %v4353
        %v4401 = vpop.permute.xlu0 %4400
        %v4403 = vmul.f32 %v467, %v4401
        %v4404 = vmul.f32 %v468, %v4401
        %v4405 = vmul.f32 %v469, %v4401
        %v4406 = vmul.f32 %v470, %v4401
        %4411 = vrot.lane.b32.xlu0 %v4403, 126
        %v4412 = vpop.permute.xlu0 %4411
        %4413 = vrot.lane.b32.xlu0 %v4404, 126
        %v4414 = vpop.permute.xlu0 %4413
        %4415 = vrot.lane.b32.xlu0 %v4405, 126
        %v4416 = vpop.permute.xlu0 %4415
        %4417 = vrot.lane.b32.xlu0 %v4406, 126
        %v4418 = vpop.permute.xlu0 %4417
        %v4419 = vsel %vm521, %v4412, %v4414
        %v4420 = vsel %vm521, %v4414, %v4416
        %v4421 = vsel %vm521, %v4416, %v4418
        %v4426 = vadd.f32 %v4395, %v4419
        %v4427 = vadd.f32 %v4396, %v4420
        %v4428 = vadd.f32 %v4397, %v4421
        %v4429 = vadd.f32 %v4398, %v4418
        %4430 = vset.pattern.permute.xlu0 3
        %4431 = vperm.xlu0 %4430, %v4353
        %v4432 = vpop.permute.xlu0 %4431
        %v4434 = vmul.f32 %v467, %v4432
        %v4435 = vmul.f32 %v468, %v4432
        %v4436 = vmul.f32 %v469, %v4432
        %v4437 = vmul.f32 %v470, %v4432
        %4442 = vrot.lane.b32.xlu0 %v4434, 125
        %v4443 = vpop.permute.xlu0 %4442
        %4444 = vrot.lane.b32.xlu0 %v4435, 125
        %v4445 = vpop.permute.xlu0 %4444
        %4446 = vrot.lane.b32.xlu0 %v4436, 125
        %v4447 = vpop.permute.xlu0 %4446
        %4448 = vrot.lane.b32.xlu0 %v4437, 125
        %v4449 = vpop.permute.xlu0 %4448
        %v4450 = vsel %vm551, %v4443, %v4445
        %v4451 = vsel %vm551, %v4445, %v4447
        %v4452 = vsel %vm551, %v4447, %v4449
        %v4457 = vadd.f32 %v4426, %v4450
        %v4458 = vadd.f32 %v4427, %v4451
        %v4459 = vadd.f32 %v4428, %v4452
        %v4460 = vadd.f32 %v4429, %v4449
        %4461 = vset.pattern.permute.xlu0 4
        %4462 = vperm.xlu0 %4461, %v4353
        %v4463 = vpop.permute.xlu0 %4462
        %v4465 = vmul.f32 %v467, %v4463
        %v4466 = vmul.f32 %v468, %v4463
        %v4467 = vmul.f32 %v469, %v4463
        %v4468 = vmul.f32 %v470, %v4463
        %4473 = vrot.lane.b32.xlu0 %v4465, 124
        %v4474 = vpop.permute.xlu0 %4473
        %4475 = vrot.lane.b32.xlu0 %v4466, 124
        %v4476 = vpop.permute.xlu0 %4475
        %4477 = vrot.lane.b32.xlu0 %v4467, 124
        %v4478 = vpop.permute.xlu0 %4477
        %4479 = vrot.lane.b32.xlu0 %v4468, 124
        %v4480 = vpop.permute.xlu0 %4479
        %v4481 = vsel %vm581, %v4474, %v4476
        %v4482 = vsel %vm581, %v4476, %v4478
        %v4483 = vsel %vm581, %v4478, %v4480
        %v4488 = vadd.f32 %v4457, %v4481
        %v4489 = vadd.f32 %v4458, %v4482
        %v4490 = vadd.f32 %v4459, %v4483
        %v4491 = vadd.f32 %v4460, %v4480
        %4492 = vset.pattern.permute.xlu0 5
        %4493 = vperm.xlu0 %4492, %v4353
        %v4494 = vpop.permute.xlu0 %4493
        %v4496 = vmul.f32 %v467, %v4494
        %v4497 = vmul.f32 %v468, %v4494
        %v4498 = vmul.f32 %v469, %v4494
        %v4499 = vmul.f32 %v470, %v4494
        %4504 = vrot.lane.b32.xlu0 %v4496, 104
        %v4505 = vpop.permute.xlu0 %4504
        %4506 = vrot.lane.b32.xlu0 %v4497, 104
        %v4507 = vpop.permute.xlu0 %4506
        %4508 = vrot.lane.b32.xlu0 %v4498, 104
        %v4509 = vpop.permute.xlu0 %4508
        %4510 = vrot.lane.b32.xlu0 %v4499, 104
        %v4511 = vpop.permute.xlu0 %4510
        %v4512 = vsel %vm731, %v4505, %v4507
        %v4513 = vsel %vm731, %v4507, %v4509
        %v4514 = vsel %vm731, %v4509, %v4511
        %v4519 = vadd.f32 %v4488, %v4512
        %v4520 = vadd.f32 %v4489, %v4513
        %v4521 = vadd.f32 %v4490, %v4514
        %v4522 = vadd.f32 %v4491, %v4511
        %4523 = vset.pattern.permute.xlu0 6
        %4524 = vperm.xlu0 %4523, %v4353
        %v4525 = vpop.permute.xlu0 %4524
        %v4527 = vmul.f32 %v467, %v4525
        %v4528 = vmul.f32 %v468, %v4525
        %v4529 = vmul.f32 %v469, %v4525
        %v4530 = vmul.f32 %v470, %v4525
        %4535 = vrot.lane.b32.xlu0 %v4527, 103
        %v4536 = vpop.permute.xlu0 %4535
        %4537 = vrot.lane.b32.xlu0 %v4528, 103
        %v4538 = vpop.permute.xlu0 %4537
        %4539 = vrot.lane.b32.xlu0 %v4529, 103
        %v4540 = vpop.permute.xlu0 %4539
        %4541 = vrot.lane.b32.xlu0 %v4530, 103
        %v4542 = vpop.permute.xlu0 %4541
        %v4543 = vsel %vm761, %v4536, %v4538
        %v4544 = vsel %vm761, %v4538, %v4540
        %v4545 = vsel %vm761, %v4540, %v4542
        %v4550 = vadd.f32 %v4519, %v4543
        %v4551 = vadd.f32 %v4520, %v4544
        %v4552 = vadd.f32 %v4521, %v4545
        %v4553 = vadd.f32 %v4522, %v4542
        %4555 = vset.pattern.permute.xlu0 0
        %4556 = vperm.xlu0 %4555, %v4354
        %v4557 = vpop.permute.xlu0 %4556
        %v4559 = vmul.f32 %v467, %v4557
        %v4560 = vmul.f32 %v468, %v4557
        %v4561 = vmul.f32 %v469, %v4557
        %v4562 = vmul.f32 %v470, %v4557
        %v4563 = vadd.f32 %v4559, 0.0
        %v4564 = vadd.f32 %v4560, 0.0
        %v4565 = vadd.f32 %v4561, 0.0
        %v4566 = vadd.f32 %v4562, 0.0
        %4567 = vset.pattern.permute.xlu0 7
        %4568 = vperm.xlu0 %4567, %v4353
        %v4569 = vpop.permute.xlu0 %4568
        %v4571 = vmul.f32 %v467, %v4569
        %v4572 = vmul.f32 %v468, %v4569
        %v4573 = vmul.f32 %v469, %v4569
        %v4574 = vmul.f32 %v470, %v4569
        %4579 = vrot.lane.b32.xlu0 %v4571, 102
        %v4580 = vpop.permute.xlu0 %4579
        %4581 = vrot.lane.b32.xlu0 %v4572, 102
        %v4582 = vpop.permute.xlu0 %4581
        %4583 = vrot.lane.b32.xlu0 %v4573, 102
        %v4584 = vpop.permute.xlu0 %4583
        %4585 = vrot.lane.b32.xlu0 %v4574, 102
        %v4586 = vpop.permute.xlu0 %4585
        %v4587 = vsel %vm804, %v4580, %v4582
        %v4588 = vsel %vm804, %v4582, %v4584
        %v4589 = vsel %vm804, %v4584, %v4586
        %v4594 = vadd.f32 %v4550, %v4587
        %v4595 = vadd.f32 %v4551, %v4588
        %v4596 = vadd.f32 %v4552, %v4589
        %v4597 = vadd.f32 %v4553, %v4586
        %4598 = vset.pattern.permute.xlu0 1
        %4599 = vperm.xlu0 %4598, %v4354
        %v4600 = vpop.permute.xlu0 %4599
        %v4602 = vmul.f32 %v467, %v4600
        %v4603 = vmul.f32 %v468, %v4600
        %v4604 = vmul.f32 %v469, %v4600
        %v4605 = vmul.f32 %v470, %v4600
        %4610 = vrot.lane.b32.xlu0 %v4602, 127
        %v4611 = vpop.permute.xlu0 %4610
        %4612 = vrot.lane.b32.xlu0 %v4603, 127
        %v4613 = vpop.permute.xlu0 %4612
        %4614 = vrot.lane.b32.xlu0 %v4604, 127
        %v4615 = vpop.permute.xlu0 %4614
        %4616 = vrot.lane.b32.xlu0 %v4605, 127
        %v4617 = vpop.permute.xlu0 %4616
        %v4618 = vsel %vm491, %v4611, %v4613
        %v4619 = vsel %vm491, %v4613, %v4615
        %v4620 = vsel %vm491, %v4615, %v4617
        %v4625 = vadd.f32 %v4563, %v4618
        %v4626 = vadd.f32 %v4564, %v4619
        %v4627 = vadd.f32 %v4565, %v4620
        %v4628 = vadd.f32 %v4566, %v4617
        %4629 = vset.pattern.permute.xlu0 8
        %4630 = vperm.xlu0 %4629, %v4353
        %v4631 = vpop.permute.xlu0 %4630
        %v4633 = vmul.f32 %v467, %v4631
        %v4634 = vmul.f32 %v468, %v4631
        %v4635 = vmul.f32 %v469, %v4631
        %v4636 = vmul.f32 %v470, %v4631
        %4641 = vrot.lane.b32.xlu0 %v4633, 101
        %v4642 = vpop.permute.xlu0 %4641
        %4643 = vrot.lane.b32.xlu0 %v4634, 101
        %v4644 = vpop.permute.xlu0 %4643
        %4645 = vrot.lane.b32.xlu0 %v4635, 101
        %v4646 = vpop.permute.xlu0 %4645
        %4647 = vrot.lane.b32.xlu0 %v4636, 101
        %v4648 = vpop.permute.xlu0 %4647
        %v4649 = vsel %vm865, %v4642, %v4644
        %v4650 = vsel %vm865, %v4644, %v4646
        %v4651 = vsel %vm865, %v4646, %v4648
        %v4656 = vadd.f32 %v4594, %v4649
        %v4657 = vadd.f32 %v4595, %v4650
        %v4658 = vadd.f32 %v4596, %v4651
        %v4659 = vadd.f32 %v4597, %v4648
        %4660 = vset.pattern.permute.xlu0 2
        %4661 = vperm.xlu0 %4660, %v4354
        %v4662 = vpop.permute.xlu0 %4661
        %v4664 = vmul.f32 %v467, %v4662
        %v4665 = vmul.f32 %v468, %v4662
        %v4666 = vmul.f32 %v469, %v4662
        %v4667 = vmul.f32 %v470, %v4662
        %4672 = vrot.lane.b32.xlu0 %v4664, 126
        %v4673 = vpop.permute.xlu0 %4672
        %4674 = vrot.lane.b32.xlu0 %v4665, 126
        %v4675 = vpop.permute.xlu0 %4674
        %4676 = vrot.lane.b32.xlu0 %v4666, 126
        %v4677 = vpop.permute.xlu0 %4676
        %4678 = vrot.lane.b32.xlu0 %v4667, 126
        %v4679 = vpop.permute.xlu0 %4678
        %v4680 = vsel %vm521, %v4673, %v4675
        %v4681 = vsel %vm521, %v4675, %v4677
        %v4682 = vsel %vm521, %v4677, %v4679
        %v4687 = vadd.f32 %v4625, %v4680
        %v4688 = vadd.f32 %v4626, %v4681
        %v4689 = vadd.f32 %v4627, %v4682
        %v4690 = vadd.f32 %v4628, %v4679
        %4691 = vset.pattern.permute.xlu0 9
        %4692 = vperm.xlu0 %4691, %v4353
        %v4693 = vpop.permute.xlu0 %4692
        %v4695 = vmul.f32 %v467, %v4693
        %v4696 = vmul.f32 %v468, %v4693
        %v4697 = vmul.f32 %v469, %v4693
        %v4698 = vmul.f32 %v470, %v4693
        %4703 = vrot.lane.b32.xlu0 %v4695, 100
        %v4704 = vpop.permute.xlu0 %4703
        %4705 = vrot.lane.b32.xlu0 %v4696, 100
        %v4706 = vpop.permute.xlu0 %4705
        %4707 = vrot.lane.b32.xlu0 %v4697, 100
        %v4708 = vpop.permute.xlu0 %4707
        %4709 = vrot.lane.b32.xlu0 %v4698, 100
        %v4710 = vpop.permute.xlu0 %4709
        %v4711 = vsel %vm926, %v4704, %v4706
        %v4712 = vsel %vm926, %v4706, %v4708
        %v4713 = vsel %vm926, %v4708, %v4710
        %v4718 = vadd.f32 %v4656, %v4711
        %v4719 = vadd.f32 %v4657, %v4712
        %v4720 = vadd.f32 %v4658, %v4713
        %v4721 = vadd.f32 %v4659, %v4710
        %4722 = vset.pattern.permute.xlu0 10
        %4723 = vperm.xlu0 %4722, %v4353
        %v4724 = vpop.permute.xlu0 %4723
        %v4726 = vmul.f32 %v467, %v4724
        %v4727 = vmul.f32 %v468, %v4724
        %v4728 = vmul.f32 %v469, %v4724
        %v4729 = vmul.f32 %v470, %v4724
        %4734 = vrot.lane.b32.xlu0 %v4726, 80
        %v4735 = vpop.permute.xlu0 %4734
        %4736 = vrot.lane.b32.xlu0 %v4727, 80
        %v4737 = vpop.permute.xlu0 %4736
        %4738 = vrot.lane.b32.xlu0 %v4728, 80
        %v4739 = vpop.permute.xlu0 %4738
        %4740 = vrot.lane.b32.xlu0 %v4729, 80
        %v4741 = vpop.permute.xlu0 %4740
        %v4742 = vsel %vm1200, %v4735, %v4737
        %v4743 = vsel %vm1200, %v4737, %v4739
        %v4744 = vsel %vm1200, %v4739, %v4741
        %v4749 = vadd.f32 %v4718, %v4742
        %v4750 = vadd.f32 %v4719, %v4743
        %v4751 = vadd.f32 %v4720, %v4744
        %v4752 = vadd.f32 %v4721, %v4741
        %4753 = vset.pattern.permute.xlu0 11
        %4754 = vperm.xlu0 %4753, %v4353
        %v4755 = vpop.permute.xlu0 %4754
        %v4757 = vmul.f32 %v467, %v4755
        %v4758 = vmul.f32 %v468, %v4755
        %v4759 = vmul.f32 %v469, %v4755
        %v4760 = vmul.f32 %v470, %v4755
        %4765 = vrot.lane.b32.xlu0 %v4757, 79
        %v4766 = vpop.permute.xlu0 %4765
        %4767 = vrot.lane.b32.xlu0 %v4758, 79
        %v4768 = vpop.permute.xlu0 %4767
        %4769 = vrot.lane.b32.xlu0 %v4759, 79
        %v4770 = vpop.permute.xlu0 %4769
        %4771 = vrot.lane.b32.xlu0 %v4760, 79
        %v4772 = vpop.permute.xlu0 %4771
        %v4773 = vsel %vm1230, %v4766, %v4768
        %v4774 = vsel %vm1230, %v4768, %v4770
        %v4775 = vsel %vm1230, %v4770, %v4772
        %v4780 = vadd.f32 %v4749, %v4773
        %v4781 = vadd.f32 %v4750, %v4774
        %v4782 = vadd.f32 %v4751, %v4775
        %v4783 = vadd.f32 %v4752, %v4772
        %4784 = vset.pattern.permute.xlu0 3
        %4785 = vperm.xlu0 %4784, %v4354
        %v4786 = vpop.permute.xlu0 %4785
        %v4788 = vmul.f32 %v467, %v4786
        %v4789 = vmul.f32 %v468, %v4786
        %v4790 = vmul.f32 %v469, %v4786
        %v4791 = vmul.f32 %v470, %v4786
        %4796 = vrot.lane.b32.xlu0 %v4788, 104
        %v4797 = vpop.permute.xlu0 %4796
        %4798 = vrot.lane.b32.xlu0 %v4789, 104
        %v4799 = vpop.permute.xlu0 %4798
        %4800 = vrot.lane.b32.xlu0 %v4790, 104
        %v4801 = vpop.permute.xlu0 %4800
        %4802 = vrot.lane.b32.xlu0 %v4791, 104
        %v4803 = vpop.permute.xlu0 %4802
        %v4804 = vsel %vm731, %v4797, %v4799
        %v4805 = vsel %vm731, %v4799, %v4801
        %v4806 = vsel %vm731, %v4801, %v4803
        %v4811 = vadd.f32 %v4687, %v4804
        %v4812 = vadd.f32 %v4688, %v4805
        %v4813 = vadd.f32 %v4689, %v4806
        %v4814 = vadd.f32 %v4690, %v4803
        %4815 = vset.pattern.permute.xlu0 12
        %4816 = vperm.xlu0 %4815, %v4353
        %v4817 = vpop.permute.xlu0 %4816
        %v4819 = vmul.f32 %v467, %v4817
        %v4820 = vmul.f32 %v468, %v4817
        %v4821 = vmul.f32 %v469, %v4817
        %v4822 = vmul.f32 %v470, %v4817
        %4827 = vrot.lane.b32.xlu0 %v4819, 78
        %v4828 = vpop.permute.xlu0 %4827
        %4829 = vrot.lane.b32.xlu0 %v4820, 78
        %v4830 = vpop.permute.xlu0 %4829
        %4831 = vrot.lane.b32.xlu0 %v4821, 78
        %v4832 = vpop.permute.xlu0 %4831
        %4833 = vrot.lane.b32.xlu0 %v4822, 78
        %v4834 = vpop.permute.xlu0 %4833
        %v4835 = vsel %vm1291, %v4828, %v4830
        %v4836 = vsel %vm1291, %v4830, %v4832
        %v4837 = vsel %vm1291, %v4832, %v4834
        %v4842 = vadd.f32 %v4780, %v4835
        %v4843 = vadd.f32 %v4781, %v4836
        %v4844 = vadd.f32 %v4782, %v4837
        %v4845 = vadd.f32 %v4783, %v4834
        %4846 = vset.pattern.permute.xlu0 4
        %4847 = vperm.xlu0 %4846, %v4354
        %v4848 = vpop.permute.xlu0 %4847
        %v4850 = vmul.f32 %v467, %v4848
        %v4851 = vmul.f32 %v468, %v4848
        %v4852 = vmul.f32 %v469, %v4848
        %v4853 = vmul.f32 %v470, %v4848
        %4858 = vrot.lane.b32.xlu0 %v4850, 103
        %v4859 = vpop.permute.xlu0 %4858
        %4860 = vrot.lane.b32.xlu0 %v4851, 103
        %v4861 = vpop.permute.xlu0 %4860
        %4862 = vrot.lane.b32.xlu0 %v4852, 103
        %v4863 = vpop.permute.xlu0 %4862
        %4864 = vrot.lane.b32.xlu0 %v4853, 103
        %v4865 = vpop.permute.xlu0 %4864
        %v4866 = vsel %vm761, %v4859, %v4861
        %v4867 = vsel %vm761, %v4861, %v4863
        %v4868 = vsel %vm761, %v4863, %v4865
        %v4873 = vadd.f32 %v4811, %v4866
        %v4874 = vadd.f32 %v4812, %v4867
        %v4875 = vadd.f32 %v4813, %v4868
        %v4876 = vadd.f32 %v4814, %v4865
        %4877 = vset.pattern.permute.xlu0 13
        %4878 = vperm.xlu0 %4877, %v4353
        %v4879 = vpop.permute.xlu0 %4878
        %v4881 = vmul.f32 %v467, %v4879
        %v4882 = vmul.f32 %v468, %v4879
        %v4883 = vmul.f32 %v469, %v4879
        %v4884 = vmul.f32 %v470, %v4879
        %4889 = vrot.lane.b32.xlu0 %v4881, 77
        %v4890 = vpop.permute.xlu0 %4889
        %4891 = vrot.lane.b32.xlu0 %v4882, 77
        %v4892 = vpop.permute.xlu0 %4891
        %4893 = vrot.lane.b32.xlu0 %v4883, 77
        %v4894 = vpop.permute.xlu0 %4893
        %4895 = vrot.lane.b32.xlu0 %v4884, 77
        %v4896 = vpop.permute.xlu0 %4895
        %v4897 = vsel %vm1352, %v4890, %v4892
        %v4898 = vsel %vm1352, %v4892, %v4894
        %v4899 = vsel %vm1352, %v4894, %v4896
        %v4904 = vadd.f32 %v4842, %v4897
        %v4905 = vadd.f32 %v4843, %v4898
        %v4906 = vadd.f32 %v4844, %v4899
        %v4907 = vadd.f32 %v4845, %v4896
        %4908 = vset.pattern.permute.xlu0 5
        %4909 = vperm.xlu0 %4908, %v4354
        %v4910 = vpop.permute.xlu0 %4909
        %v4912 = vmul.f32 %v467, %v4910
        %v4913 = vmul.f32 %v468, %v4910
        %v4914 = vmul.f32 %v469, %v4910
        %v4915 = vmul.f32 %v470, %v4910
        %4920 = vrot.lane.b32.xlu0 %v4912, 102
        %v4921 = vpop.permute.xlu0 %4920
        %4922 = vrot.lane.b32.xlu0 %v4913, 102
        %v4923 = vpop.permute.xlu0 %4922
        %4924 = vrot.lane.b32.xlu0 %v4914, 102
        %v4925 = vpop.permute.xlu0 %4924
        %4926 = vrot.lane.b32.xlu0 %v4915, 102
        %v4927 = vpop.permute.xlu0 %4926
        %v4928 = vsel %vm804, %v4921, %v4923
        %v4929 = vsel %vm804, %v4923, %v4925
        %v4930 = vsel %vm804, %v4925, %v4927
        %v4935 = vadd.f32 %v4873, %v4928
        %v4936 = vadd.f32 %v4874, %v4929
        %v4937 = vadd.f32 %v4875, %v4930
        %v4938 = vadd.f32 %v4876, %v4927
        %4939 = vset.pattern.permute.xlu0 14
        %4940 = vperm.xlu0 %4939, %v4353
        %v4941 = vpop.permute.xlu0 %4940
        %v4943 = vmul.f32 %v467, %v4941
        %v4944 = vmul.f32 %v468, %v4941
        %v4945 = vmul.f32 %v469, %v4941
        %v4946 = vmul.f32 %v470, %v4941
        %4951 = vrot.lane.b32.xlu0 %v4943, 76
        %v4952 = vpop.permute.xlu0 %4951
        %4953 = vrot.lane.b32.xlu0 %v4944, 76
        %v4954 = vpop.permute.xlu0 %4953
        %4955 = vrot.lane.b32.xlu0 %v4945, 76
        %v4956 = vpop.permute.xlu0 %4955
        %4957 = vrot.lane.b32.xlu0 %v4946, 76
        %v4958 = vpop.permute.xlu0 %4957
        %v4959 = vsel %vm1413, %v4952, %v4954
        %v4960 = vsel %vm1413, %v4954, %v4956
        %v4961 = vsel %vm1413, %v4956, %v4958
        %v4966 = vadd.f32 %v4904, %v4959
        %v4967 = vadd.f32 %v4905, %v4960
        %v4968 = vadd.f32 %v4906, %v4961
        %v4969 = vadd.f32 %v4907, %v4958
        %4970 = vset.pattern.permute.xlu0 15
        %4971 = vperm.xlu0 %4970, %v4353
        %v4972 = vpop.permute.xlu0 %4971
        %v4974 = vmul.f32 %v467, %v4972
        %v4975 = vmul.f32 %v468, %v4972
        %v4976 = vmul.f32 %v469, %v4972
        %v4977 = vmul.f32 %v470, %v4972
        %4982 = vrot.lane.b32.xlu0 %v4974, 56
        %v4983 = vpop.permute.xlu0 %4982
        %4984 = vrot.lane.b32.xlu0 %v4975, 56
        %v4985 = vpop.permute.xlu0 %4984
        %4986 = vrot.lane.b32.xlu0 %v4976, 56
        %v4987 = vpop.permute.xlu0 %4986
        %4988 = vrot.lane.b32.xlu0 %v4977, 56
        %v4989 = vpop.permute.xlu0 %4988
        %v4990 = vsel %vm1687, %v4983, %v4985
        %v4991 = vsel %vm1687, %v4985, %v4987
        %v4992 = vsel %vm1687, %v4987, %v4989
        %v4997 = vadd.f32 %v4966, %v4990
        %v4998 = vadd.f32 %v4967, %v4991
        %v4999 = vadd.f32 %v4968, %v4992
        %v5000 = vadd.f32 %v4969, %v4989
        %5001 = vset.pattern.permute.xlu0 16
        %5002 = vperm.xlu0 %5001, %v4353
        %v5003 = vpop.permute.xlu0 %5002
        %v5005 = vmul.f32 %v467, %v5003
        %v5006 = vmul.f32 %v468, %v5003
        %v5007 = vmul.f32 %v469, %v5003
        %v5008 = vmul.f32 %v470, %v5003
        %5013 = vrot.lane.b32.xlu0 %v5005, 55
        %v5014 = vpop.permute.xlu0 %5013
        %5015 = vrot.lane.b32.xlu0 %v5006, 55
        %v5016 = vpop.permute.xlu0 %5015
        %5017 = vrot.lane.b32.xlu0 %v5007, 55
        %v5018 = vpop.permute.xlu0 %5017
        %5019 = vrot.lane.b32.xlu0 %v5008, 55
        %v5020 = vpop.permute.xlu0 %5019
        %v5021 = vsel %vm1717, %v5014, %v5016
        %v5022 = vsel %vm1717, %v5016, %v5018
        %v5023 = vsel %vm1717, %v5018, %v5020
        %v5028 = vadd.f32 %v4997, %v5021
        %v5029 = vadd.f32 %v4998, %v5022
        %v5030 = vadd.f32 %v4999, %v5023
        %v5031 = vadd.f32 %v5000, %v5020
        %5032 = vset.pattern.permute.xlu0 6
        %5033 = vperm.xlu0 %5032, %v4354
        %v5034 = vpop.permute.xlu0 %5033
        %v5036 = vmul.f32 %v467, %v5034
        %v5037 = vmul.f32 %v468, %v5034
        %v5038 = vmul.f32 %v469, %v5034
        %v5039 = vmul.f32 %v470, %v5034
        %5044 = vrot.lane.b32.xlu0 %v5036, 80
        %v5045 = vpop.permute.xlu0 %5044
        %5046 = vrot.lane.b32.xlu0 %v5037, 80
        %v5047 = vpop.permute.xlu0 %5046
        %5048 = vrot.lane.b32.xlu0 %v5038, 80
        %v5049 = vpop.permute.xlu0 %5048
        %5050 = vrot.lane.b32.xlu0 %v5039, 80
        %v5051 = vpop.permute.xlu0 %5050
        %v5052 = vsel %vm1200, %v5045, %v5047
        %v5053 = vsel %vm1200, %v5047, %v5049
        %v5054 = vsel %vm1200, %v5049, %v5051
        %v5059 = vadd.f32 %v4935, %v5052
        %v5060 = vadd.f32 %v4936, %v5053
        %v5061 = vadd.f32 %v4937, %v5054
        %v5062 = vadd.f32 %v4938, %v5051
        %5063 = vset.pattern.permute.xlu0 17
        %5064 = vperm.xlu0 %5063, %v4353
        %v5065 = vpop.permute.xlu0 %5064
        %v5067 = vmul.f32 %v467, %v5065
        %v5068 = vmul.f32 %v468, %v5065
        %v5069 = vmul.f32 %v469, %v5065
        %v5070 = vmul.f32 %v470, %v5065
        %5075 = vrot.lane.b32.xlu0 %v5067, 54
        %v5076 = vpop.permute.xlu0 %5075
        %5077 = vrot.lane.b32.xlu0 %v5068, 54
        %v5078 = vpop.permute.xlu0 %5077
        %5079 = vrot.lane.b32.xlu0 %v5069, 54
        %v5080 = vpop.permute.xlu0 %5079
        %5081 = vrot.lane.b32.xlu0 %v5070, 54
        %v5082 = vpop.permute.xlu0 %5081
        %v5083 = vsel %vm1778, %v5076, %v5078
        %v5084 = vsel %vm1778, %v5078, %v5080
        %v5085 = vsel %vm1778, %v5080, %v5082
        %v5090 = vadd.f32 %v5028, %v5083
        %v5091 = vadd.f32 %v5029, %v5084
        %v5092 = vadd.f32 %v5030, %v5085
        %v5093 = vadd.f32 %v5031, %v5082
        %5094 = vset.pattern.permute.xlu0 7
        %5095 = vperm.xlu0 %5094, %v4354
        %v5096 = vpop.permute.xlu0 %5095
        %v5098 = vmul.f32 %v467, %v5096
        %v5099 = vmul.f32 %v468, %v5096
        %v5100 = vmul.f32 %v469, %v5096
        %v5101 = vmul.f32 %v470, %v5096
        %5106 = vrot.lane.b32.xlu0 %v5098, 79
        %v5107 = vpop.permute.xlu0 %5106
        %5108 = vrot.lane.b32.xlu0 %v5099, 79
        %v5109 = vpop.permute.xlu0 %5108
        %5110 = vrot.lane.b32.xlu0 %v5100, 79
        %v5111 = vpop.permute.xlu0 %5110
        %5112 = vrot.lane.b32.xlu0 %v5101, 79
        %v5113 = vpop.permute.xlu0 %5112
        %v5114 = vsel %vm1230, %v5107, %v5109
        %v5115 = vsel %vm1230, %v5109, %v5111
        %v5116 = vsel %vm1230, %v5111, %v5113
        %v5121 = vadd.f32 %v5059, %v5114
        %v5122 = vadd.f32 %v5060, %v5115
        %v5123 = vadd.f32 %v5061, %v5116
        %v5124 = vadd.f32 %v5062, %v5113
        %5125 = vset.pattern.permute.xlu0 18
        %5126 = vperm.xlu0 %5125, %v4353
        %v5127 = vpop.permute.xlu0 %5126
        %v5129 = vmul.f32 %v467, %v5127
        %v5130 = vmul.f32 %v468, %v5127
        %v5131 = vmul.f32 %v469, %v5127
        %v5132 = vmul.f32 %v470, %v5127
        %5137 = vrot.lane.b32.xlu0 %v5129, 53
        %v5138 = vpop.permute.xlu0 %5137
        %5139 = vrot.lane.b32.xlu0 %v5130, 53
        %v5140 = vpop.permute.xlu0 %5139
        %5141 = vrot.lane.b32.xlu0 %v5131, 53
        %v5142 = vpop.permute.xlu0 %5141
        %5143 = vrot.lane.b32.xlu0 %v5132, 53
        %v5144 = vpop.permute.xlu0 %5143
        %v5145 = vsel %vm1839, %v5138, %v5140
        %v5146 = vsel %vm1839, %v5140, %v5142
        %v5147 = vsel %vm1839, %v5142, %v5144
        %v5152 = vadd.f32 %v5090, %v5145
        %v5153 = vadd.f32 %v5091, %v5146
        %v5154 = vadd.f32 %v5092, %v5147
        %v5155 = vadd.f32 %v5093, %v5144
        %5156 = vset.pattern.permute.xlu0 8
        %5157 = vperm.xlu0 %5156, %v4354
        %v5158 = vpop.permute.xlu0 %5157
        %v5160 = vmul.f32 %v467, %v5158
        %v5161 = vmul.f32 %v468, %v5158
        %v5162 = vmul.f32 %v469, %v5158
        %v5163 = vmul.f32 %v470, %v5158
        %5168 = vrot.lane.b32.xlu0 %v5160, 78
        %v5169 = vpop.permute.xlu0 %5168
        %5170 = vrot.lane.b32.xlu0 %v5161, 78
        %v5171 = vpop.permute.xlu0 %5170
        %5172 = vrot.lane.b32.xlu0 %v5162, 78
        %v5173 = vpop.permute.xlu0 %5172
        %5174 = vrot.lane.b32.xlu0 %v5163, 78
        %v5175 = vpop.permute.xlu0 %5174
        %v5176 = vsel %vm1291, %v5169, %v5171
        %v5177 = vsel %vm1291, %v5171, %v5173
        %v5178 = vsel %vm1291, %v5173, %v5175
        %v5183 = vadd.f32 %v5121, %v5176
        %v5184 = vadd.f32 %v5122, %v5177
        %v5185 = vadd.f32 %v5123, %v5178
        %v5186 = vadd.f32 %v5124, %v5175
        %5187 = vset.pattern.permute.xlu0 19
        %5188 = vperm.xlu0 %5187, %v4353
        %v5189 = vpop.permute.xlu0 %5188
        %v5191 = vmul.f32 %v467, %v5189
        %v5192 = vmul.f32 %v468, %v5189
        %v5193 = vmul.f32 %v469, %v5189
        %v5194 = vmul.f32 %v470, %v5189
        %5199 = vrot.lane.b32.xlu0 %v5191, 52
        %v5200 = vpop.permute.xlu0 %5199
        %5201 = vrot.lane.b32.xlu0 %v5192, 52
        %v5202 = vpop.permute.xlu0 %5201
        %5203 = vrot.lane.b32.xlu0 %v5193, 52
        %v5204 = vpop.permute.xlu0 %5203
        %5205 = vrot.lane.b32.xlu0 %v5194, 52
        %v5206 = vpop.permute.xlu0 %5205
        %v5207 = vsel %vm1900, %v5200, %v5202
        %v5208 = vsel %vm1900, %v5202, %v5204
        %v5209 = vsel %vm1900, %v5204, %v5206
        %v5214 = vadd.f32 %v5152, %v5207
        %v5215 = vadd.f32 %v5153, %v5208
        %v5216 = vadd.f32 %v5154, %v5209
        %v5217 = vadd.f32 %v5155, %v5206
        %5218 = vset.pattern.permute.xlu0 20
        %5219 = vperm.xlu0 %5218, %v4353
        %v5220 = vpop.permute.xlu0 %5219
        %v5222 = vmul.f32 %v3108, %v5220
        %v5223 = vmul.f32 %v3109, %v5220
        %v5224 = vmul.f32 %v3110, %v5220
        %v5225 = vmul.f32 %v3111, %v5220
        %5230 = vrot.lane.b32.xlu0 %v5222, 32
        %v5231 = vpop.permute.xlu0 %5230
        %5232 = vrot.lane.b32.xlu0 %v5223, 32
        %v5233 = vpop.permute.xlu0 %5232
        %5234 = vrot.lane.b32.xlu0 %v5224, 32
        %v5235 = vpop.permute.xlu0 %5234
        %5236 = vrot.lane.b32.xlu0 %v5225, 32
        %v5237 = vpop.permute.xlu0 %5236
        %v5238 = vsel %vm2174, %v5231, %v5233
        %v5239 = vsel %vm2174, %v5233, %v5235
        %v5240 = vsel %vm2174, %v5235, %v5237
        %v5245 = vadd.f32 %v5214, %v5231
        %v5246 = vadd.f32 %v5215, %v5238
        %v5247 = vadd.f32 %v5216, %v5239
        %v5248 = vadd.f32 %v5217, %v5240
        %5249 = vset.pattern.permute.xlu0 21
        %5250 = vperm.xlu0 %5249, %v4353
        %v5251 = vpop.permute.xlu0 %5250
        %v5253 = vmul.f32 %v3108, %v5251
        %v5254 = vmul.f32 %v3109, %v5251
        %v5255 = vmul.f32 %v3110, %v5251
        %v5256 = vmul.f32 %v3111, %v5251
        %5261 = vrot.lane.b32.xlu0 %v5253, 31
        %v5262 = vpop.permute.xlu0 %5261
        %5263 = vrot.lane.b32.xlu0 %v5254, 31
        %v5264 = vpop.permute.xlu0 %5263
        %5265 = vrot.lane.b32.xlu0 %v5255, 31
        %v5266 = vpop.permute.xlu0 %5265
        %5267 = vrot.lane.b32.xlu0 %v5256, 31
        %v5268 = vpop.permute.xlu0 %5267
        %v5269 = vsel %vm2204, %v5262, %v5264
        %v5270 = vsel %vm2204, %v5264, %v5266
        %v5271 = vsel %vm2204, %v5266, %v5268
        %v5276 = vadd.f32 %v5245, %v5262
        %v5277 = vadd.f32 %v5246, %v5269
        %v5278 = vadd.f32 %v5247, %v5270
        %v5279 = vadd.f32 %v5248, %v5271
        %5280 = vset.pattern.permute.xlu0 22
        %5281 = vperm.xlu0 %5280, %v4353
        %v5282 = vpop.permute.xlu0 %5281
        %v5284 = vmul.f32 %v3108, %v5282
        %v5285 = vmul.f32 %v3109, %v5282
        %v5286 = vmul.f32 %v3110, %v5282
        %v5287 = vmul.f32 %v3111, %v5282
        %5292 = vrot.lane.b32.xlu0 %v5284, 30
        %v5293 = vpop.permute.xlu0 %5292
        %5294 = vrot.lane.b32.xlu0 %v5285, 30
        %v5295 = vpop.permute.xlu0 %5294
        %5296 = vrot.lane.b32.xlu0 %v5286, 30
        %v5297 = vpop.permute.xlu0 %5296
        %5298 = vrot.lane.b32.xlu0 %v5287, 30
        %v5299 = vpop.permute.xlu0 %5298
        %v5300 = vsel %vm2265, %v5293, %v5295
        %v5301 = vsel %vm2265, %v5295, %v5297
        %v5302 = vsel %vm2265, %v5297, %v5299
        %v5307 = vadd.f32 %v5276, %v5293
        %v5308 = vadd.f32 %v5277, %v5300
        %v5309 = vadd.f32 %v5278, %v5301
        %v5310 = vadd.f32 %v5279, %v5302
        %5311 = vset.pattern.permute.xlu0 23
        %5312 = vperm.xlu0 %5311, %v4353
        %v5313 = vpop.permute.xlu0 %5312
        %v5315 = vmul.f32 %v3108, %v5313
        %v5316 = vmul.f32 %v3109, %v5313
        %v5317 = vmul.f32 %v3110, %v5313
        %v5318 = vmul.f32 %v3111, %v5313
        %5323 = vrot.lane.b32.xlu0 %v5315, 29
        %v5324 = vpop.permute.xlu0 %5323
        %5325 = vrot.lane.b32.xlu0 %v5316, 29
        %v5326 = vpop.permute.xlu0 %5325
        %5327 = vrot.lane.b32.xlu0 %v5317, 29
        %v5328 = vpop.permute.xlu0 %5327
        %5329 = vrot.lane.b32.xlu0 %v5318, 29
        %v5330 = vpop.permute.xlu0 %5329
        %v5331 = vsel %vm2326, %v5324, %v5326
        %v5332 = vsel %vm2326, %v5326, %v5328
        %v5333 = vsel %vm2326, %v5328, %v5330
        %v5338 = vadd.f32 %v5307, %v5324
        %v5339 = vadd.f32 %v5308, %v5331
        %v5340 = vadd.f32 %v5309, %v5332
        %v5341 = vadd.f32 %v5310, %v5333
        %5342 = vset.pattern.permute.xlu0 24
        %5343 = vperm.xlu0 %5342, %v4353
        %v5344 = vpop.permute.xlu0 %5343
        %v5346 = vmul.f32 %v3108, %v5344
        %v5347 = vmul.f32 %v3109, %v5344
        %v5348 = vmul.f32 %v3110, %v5344
        %v5349 = vmul.f32 %v3111, %v5344
        %5354 = vrot.lane.b32.xlu0 %v5346, 28
        %v5355 = vpop.permute.xlu0 %5354
        %5356 = vrot.lane.b32.xlu0 %v5347, 28
        %v5357 = vpop.permute.xlu0 %5356
        %5358 = vrot.lane.b32.xlu0 %v5348, 28
        %v5359 = vpop.permute.xlu0 %5358
        %5360 = vrot.lane.b32.xlu0 %v5349, 28
        %v5361 = vpop.permute.xlu0 %5360
        %v5362 = vsel %vm2387, %v5355, %v5357
        %v5363 = vsel %vm2387, %v5357, %v5359
        %v5364 = vsel %vm2387, %v5359, %v5361
        %v5369 = vadd.f32 %v5338, %v5355
        %v5370 = vadd.f32 %v5339, %v5362
        %v5371 = vadd.f32 %v5340, %v5363
        %v5372 = vadd.f32 %v5341, %v5364
        %v5373 = vld [vmem:[%s5] sm:$0xff]
        %5375 = vset.pattern.permute.xlu0 0
        %5376 = vperm.xlu0 %5375, %v5373
        %v5377 = vpop.permute.xlu0 %5376
        %v5379 = vadd.f32 %v5183, %v5377
        %v5380 = vadd.f32 %v5184, %v5377
        %v5381 = vadd.f32 %v5185, %v5377
        %v5382 = vadd.f32 %v5186, %v5377
        %v5384 = vperm.slane %v449, 0
        %v5385 = vperm.slane %v449, 1
        %v5386 = vperm.slane %v449, 2
        %5390 = vrot.lane.b32.xlu0 %v5384, 75
        %v5391 = vpop.permute.xlu0 %5390
        %5392 = vrot.lane.b32.xlu0 %v5385, 75
        %v5393 = vpop.permute.xlu0 %5392
        %5394 = vrot.lane.b32.xlu0 %v5386, 75
        %v5395 = vpop.permute.xlu0 %5394
        %v5396 = vsel %vm1474, %v5391, %v5393
        %v5397 = vsel %vm1474, %v5393, %v5395
        %v5402 = vmul.f32 %v5379, %v5391
        %v5403 = vmul.f32 %v5380, %v5396
        %v5404 = vmul.f32 %v5381, %v5397
        %v5405 = vmul.f32 %v5382, %v5395
        %5410 = vrot.lane.b32.xlu0 %v5402, 53
        %v5411 = vpop.permute.xlu0 %5410
        %5412 = vrot.lane.b32.xlu0 %v5403, 53
        %v5413 = vpop.permute.xlu0 %5412
        %5414 = vrot.lane.b32.xlu0 %v5404, 53
        %v5415 = vpop.permute.xlu0 %5414
        %5416 = vrot.lane.b32.xlu0 %v5405, 53
        %v5417 = vpop.permute.xlu0 %5416
        %v5418 = vsel %vm1839, %v5411, %v5413
        %v5419 = vsel %vm1839, %v5413, %v5415
        %v5420 = vsel %vm1839, %v5415, %v5417
        %v5424 = vadd.f32 %v5418, %v5419
        %v5425 = vadd.f32 %v5424, %v5420
        %5426 = vadd.xlane.f32.xlu0 %v5425
        %v5427 = vpop.xlane.xlu0 %5426
        %v5428 = vmul.f32 %v5402, %v5379
        %v5429 = vmul.f32 %v5403, %v5380
        %v5430 = vmul.f32 %v5404, %v5381
        %v5431 = vmul.f32 %v5405, %v5382
        %5436 = vrot.lane.b32.xlu0 %v5428, 53
        %v5437 = vpop.permute.xlu0 %5436
        %5438 = vrot.lane.b32.xlu0 %v5429, 53
        %v5439 = vpop.permute.xlu0 %5438
        %5440 = vrot.lane.b32.xlu0 %v5430, 53
        %v5441 = vpop.permute.xlu0 %5440
        %5442 = vrot.lane.b32.xlu0 %v5431, 53
        %v5443 = vpop.permute.xlu0 %5442
        %v5444 = vsel %vm1839, %v5437, %v5439
        %v5445 = vsel %vm1839, %v5439, %v5441
        %v5446 = vsel %vm1839, %v5441, %v5443
        %v5450 = vadd.f32 %v5444, %v5445
        %v5451 = vadd.f32 %v5450, %v5446
        %5452 = vadd.xlane.f32.xlu0 %v5451
        %v5453 = vpop.xlane.xlu0 %5452
        %v5455 = vsel %vm2661, %v450, 0
        %5457 = vmatpush.msra.mxu0 0.0
        %5458 = vmatpush.msra.mxu0 0.0
        %5459 = vmatpush.msra.mxu0 0.0
        %5460 = vmatpush.msra.mxu0 0.0
        %5461 = vmatpush.msra.mxu0 0.0
        %5462 = vmatpush.msra.mxu0 0.0
        %5463 = vmatpush.msra.mxu0 0.0
        %5464 = vmatpush.msra.mxu0 0.0
        %5465 = vmatpush.msra.mxu0 0.0
        %5466 = vmatpush.msra.mxu0 0.0
        %5467 = vmatpush.msra.mxu0 0.0
        %5468 = vmatpush.msra.mxu0 0.0
        %5469 = vmatpush.msra.mxu0 0.0
        %5470 = vmatpush.msra.mxu0 0.0
        %5471 = vmatpush.msra.mxu0 0.0
        %5472 = vmatpush.msra.mxu0 %v5427
        %5473 = vmatmul.f32.gmra.mxu0 %v5455
        %v5474 = vpop.f32.mrf.mxu0
        %v5475 = vadd.f32 0.0, %v5474
        %5476 = vdwg.mxu0
        %5477 = vmatpush.msra.mxu0 0.0
        %5478 = vmatpush.msra.mxu0 0.0
        %5479 = vmatpush.msra.mxu0 0.0
        %5480 = vmatpush.msra.mxu0 0.0
        %5481 = vmatpush.msra.mxu0 0.0
        %5482 = vmatpush.msra.mxu0 0.0
        %5483 = vmatpush.msra.mxu0 0.0
        %5484 = vmatpush.msra.mxu0 0.0
        %5485 = vmatpush.msra.mxu0 0.0
        %5486 = vmatpush.msra.mxu0 0.0
        %5487 = vmatpush.msra.mxu0 0.0
        %5488 = vmatpush.msra.mxu0 0.0
        %5489 = vmatpush.msra.mxu0 0.0
        %5490 = vmatpush.msra.mxu0 0.0
        %5491 = vmatpush.msra.mxu0 0.0
        %5492 = vmatpush.msra.mxu0 %v5453
        %5493 = vmatmul.f32.gmra.mxu0 %v5455
        %v5494 = vpop.f32.mrf.mxu0
        %v5495 = vadd.f32 0.0, %v5494
        %5496 = vdwg.mxu0
        %v5497 = vmul.f32 %v5475, %v5475
        %v5498 = vsub.f32 %v5495, %v5497
        %v5499 = vadd.f32 %v5498, 1e-05
        %v5500 = vrsqrt.pop %v5499
        %v5501 = vmul.f32 %v5500, %v5499
        %v5502 = vmul.f32 %v5501, %v5500
        %v5503 = vmul.f32 0.5, %v5502
        %v5504 = vsub.f32 1.5, %v5503
        %v5505 = vmul.f32 %v5500, %v5504
        %vm5506 = vweird.f32 %v5499
        %vm5507 = vweird.f32 %v5500
        %vm5508 = vmor %vm5506, %vm5507
        %v5509 = vsel %vm5508, %v5500, %v5505
        %v5510 = vld [vmem:[%s6] sm:$0xff]
        %v5511 = vmul.f32 %v5509, %v5510
        %v5512 = vld [vmem:[%s7] sm:$0xff]
        %v5513 = vmul.f32 %v5475, %v5511
        %v5514 = vsub.f32 %v5512, %v5513
        %5516 = vset.pattern.permute.xlu0 0
        %5517 = vperm.xlu0 %5516, %v5511
        %v5518 = vpop.permute.xlu0 %5517
        %v5520 = vmul.f32 %v5379, %v5518
        %v5521 = vmul.f32 %v5380, %v5518
        %v5522 = vmul.f32 %v5381, %v5518
        %v5523 = vmul.f32 %v5382, %v5518
        %5525 = vset.pattern.permute.xlu0 0
        %5526 = vperm.xlu0 %5525, %v5514
        %v5527 = vpop.permute.xlu0 %5526
        %v5529 = vadd.f32 %v5520, %v5527
        %v5530 = vadd.f32 %v5521, %v5527
        %v5531 = vadd.f32 %v5522, %v5527
        %v5532 = vadd.f32 %v5523, %v5527
        %v5533 = vxor.u32 %v5529, 2147483648
        %v5534 = vxor.u32 %v5530, 2147483648
        %v5535 = vxor.u32 %v5531, 2147483648
        %v5536 = vxor.u32 %v5532, 2147483648
        %v5537 = vmul.f32 %v5533, 1.442695
        %v5538 = vpow.pop %v5537
        %v5539 = vmul.f32 %v5534, 1.442695
        %v5540 = vpow.pop %v5539
        %v5541 = vmul.f32 %v5535, 1.442695
        %v5542 = vpow.pop %v5541
        %v5543 = vmul.f32 %v5536, 1.442695
        %v5544 = vpow.pop %v5543
        %v5545 = vadd.f32 %v5538, 1.0
        %v5546 = vadd.f32 %v5540, 1.0
        %v5547 = vadd.f32 %v5542, 1.0
        %v5548 = vadd.f32 %v5544, 1.0
        %v5549 = vrcp.pop %v5545
        %v5550 = vmul.f32 %v5545, %v5549
        %v5551 = vsub.f32 1.0, %v5550
        %v5552 = vmul.f32 %v5549, %v5551
        %v5553 = vadd.f32 %v5549, %v5552
        %vm5554 = vweird.f32 %v5545
        %vm5555 = vweird.f32 %v5549
        %vm5556 = vmor %vm5554, %vm5555
        %v5557 = vsel %vm5556, %v5549, %v5553
        %v5558 = vand.u32 2147483647, %v5545
        %vm5559 = vcmp.eq.f32.partialorder %v5558, 8.507059e+37
        %v5560 = vand.u32 %v5545, 2147483648
        %v5561 = vor.u32 1.1754944e-38, %v5560
        %v5562 = vsel %vm5559, %v5561, %v5557
        %v5563 = vmul.f32 1.0, %v5562
        %v5564 = vrcp.pop %v5546
        %v5565 = vmul.f32 %v5546, %v5564
        %v5566 = vsub.f32 1.0, %v5565
        %v5567 = vmul.f32 %v5564, %v5566
        %v5568 = vadd.f32 %v5564, %v5567
        %vm5569 = vweird.f32 %v5546
        %vm5570 = vweird.f32 %v5564
        %vm5571 = vmor %vm5569, %vm5570
        %v5572 = vsel %vm5571, %v5564, %v5568
        %v5573 = vand.u32 2147483647, %v5546
        %vm5574 = vcmp.eq.f32.partialorder %v5573, 8.507059e+37
        %v5575 = vand.u32 %v5546, 2147483648
        %v5576 = vor.u32 1.1754944e-38, %v5575
        %v5577 = vsel %vm5574, %v5576, %v5572
        %v5578 = vmul.f32 1.0, %v5577
        %v5579 = vrcp.pop %v5547
        %v5580 = vmul.f32 %v5547, %v5579
        %v5581 = vsub.f32 1.0, %v5580
        %v5582 = vmul.f32 %v5579, %v5581
        %v5583 = vadd.f32 %v5579, %v5582
        %vm5584 = vweird.f32 %v5547
        %vm5585 = vweird.f32 %v5579
        %vm5586 = vmor %vm5584, %vm5585
        %v5587 = vsel %vm5586, %v5579, %v5583
        %v5588 = vand.u32 2147483647, %v5547
        %vm5589 = vcmp.eq.f32.partialorder %v5588, 8.507059e+37
        %v5590 = vand.u32 %v5547, 2147483648
        %v5591 = vor.u32 1.1754944e-38, %v5590
        %v5592 = vsel %vm5589, %v5591, %v5587
        %v5593 = vmul.f32 1.0, %v5592
        %v5594 = vrcp.pop %v5548
        %v5595 = vmul.f32 %v5548, %v5594
        %v5596 = vsub.f32 1.0, %v5595
        %v5597 = vmul.f32 %v5594, %v5596
        %v5598 = vadd.f32 %v5594, %v5597
        %vm5599 = vweird.f32 %v5548
        %vm5600 = vweird.f32 %v5594
        %vm5601 = vmor %vm5599, %vm5600
        %v5602 = vsel %vm5601, %v5594, %v5598
        %v5603 = vand.u32 2147483647, %v5548
        %vm5604 = vcmp.eq.f32.partialorder %v5603, 8.507059e+37
        %v5605 = vand.u32 %v5548, 2147483648
        %v5606 = vor.u32 1.1754944e-38, %v5605
        %v5607 = vsel %vm5604, %v5606, %v5602
        %v5608 = vmul.f32 1.0, %v5607
        %v5609 = vadd.f32 %v5563, 0.0
        %v5610 = vadd.f32 %v5578, 0.0
        %v5611 = vadd.f32 %v5593, 0.0
        %v5612 = vadd.f32 %v5608, 0.0
        %5613 = vset.pattern.permute.xlu0 1
        %5614 = vperm.xlu0 %5613, %v5373
        %v5615 = vpop.permute.xlu0 %5614
        %v5617 = vadd.f32 %v5369, %v5615
        %v5618 = vadd.f32 %v5370, %v5615
        %v5619 = vadd.f32 %v5371, %v5615
        %v5620 = vadd.f32 %v5372, %v5615
        %5621 = vrot.lane.b32.xlu0 %v5384, 50
        %v5622 = vpop.permute.xlu0 %5621
        %5623 = vrot.lane.b32.xlu0 %v5385, 50
        %v5624 = vpop.permute.xlu0 %5623
        %5625 = vrot.lane.b32.xlu0 %v5386, 50
        %v5626 = vpop.permute.xlu0 %5625
        %v5627 = vsel %vm2022, %v5622, %v5624
        %v5628 = vsel %vm2022, %v5624, %v5626
        %v5633 = vmul.f32 %v5617, %v5622
        %v5634 = vmul.f32 %v5618, %v5627
        %v5635 = vmul.f32 %v5619, %v5628
        %v5636 = vmul.f32 %v5620, %v5626
        %5641 = vrot.lane.b32.xlu0 %v5633, 78
        %v5642 = vpop.permute.xlu0 %5641
        %5643 = vrot.lane.b32.xlu0 %v5634, 78
        %v5644 = vpop.permute.xlu0 %5643
        %5645 = vrot.lane.b32.xlu0 %v5635, 78
        %v5646 = vpop.permute.xlu0 %5645
        %5647 = vrot.lane.b32.xlu0 %v5636, 78
        %v5648 = vpop.permute.xlu0 %5647
        %v5649 = vsel %vm1291, %v5642, %v5644
        %v5650 = vsel %vm1291, %v5644, %v5646
        %v5651 = vsel %vm1291, %v5646, %v5648
        %v5655 = vadd.f32 %v5649, %v5650
        %v5656 = vadd.f32 %v5655, %v5651
        %5657 = vadd.xlane.f32.xlu0 %v5656
        %v5658 = vpop.xlane.xlu0 %5657
        %v5659 = vmul.f32 %v5633, %v5617
        %v5660 = vmul.f32 %v5634, %v5618
        %v5661 = vmul.f32 %v5635, %v5619
        %v5662 = vmul.f32 %v5636, %v5620
        %5667 = vrot.lane.b32.xlu0 %v5659, 78
        %v5668 = vpop.permute.xlu0 %5667
        %5669 = vrot.lane.b32.xlu0 %v5660, 78
        %v5670 = vpop.permute.xlu0 %5669
        %5671 = vrot.lane.b32.xlu0 %v5661, 78
        %v5672 = vpop.permute.xlu0 %5671
        %5673 = vrot.lane.b32.xlu0 %v5662, 78
        %v5674 = vpop.permute.xlu0 %5673
        %v5675 = vsel %vm1291, %v5668, %v5670
        %v5676 = vsel %vm1291, %v5670, %v5672
        %v5677 = vsel %vm1291, %v5672, %v5674
        %v5681 = vadd.f32 %v5675, %v5676
        %v5682 = vadd.f32 %v5681, %v5677
        %5683 = vadd.xlane.f32.xlu0 %v5682
        %v5684 = vpop.xlane.xlu0 %5683
        %5685 = vmatpush.msra.mxu0 0.0
        %5686 = vmatpush.msra.mxu0 0.0
        %5687 = vmatpush.msra.mxu0 0.0
        %5688 = vmatpush.msra.mxu0 0.0
        %5689 = vmatpush.msra.mxu0 0.0
        %5690 = vmatpush.msra.mxu0 0.0
        %5691 = vmatpush.msra.mxu0 0.0
        %5692 = vmatpush.msra.mxu0 0.0
        %5693 = vmatpush.msra.mxu0 0.0
        %5694 = vmatpush.msra.mxu0 0.0
        %5695 = vmatpush.msra.mxu0 0.0
        %5696 = vmatpush.msra.mxu0 0.0
        %5697 = vmatpush.msra.mxu0 0.0
        %5698 = vmatpush.msra.mxu0 0.0
        %5699 = vmatpush.msra.mxu0 0.0
        %5700 = vmatpush.msra.mxu0 %v5658
        %5701 = vmatmul.f32.gmra.mxu0 %v5455
        %v5702 = vpop.f32.mrf.mxu0
        %v5703 = vadd.f32 0.0, %v5702
        %5704 = vdwg.mxu0
        %5705 = vmatpush.msra.mxu0 0.0
        %5706 = vmatpush.msra.mxu0 0.0
        %5707 = vmatpush.msra.mxu0 0.0
        %5708 = vmatpush.msra.mxu0 0.0
        %5709 = vmatpush.msra.mxu0 0.0
        %5710 = vmatpush.msra.mxu0 0.0
        %5711 = vmatpush.msra.mxu0 0.0
        %5712 = vmatpush.msra.mxu0 0.0
        %5713 = vmatpush.msra.mxu0 0.0
        %5714 = vmatpush.msra.mxu0 0.0
        %5715 = vmatpush.msra.mxu0 0.0
        %5716 = vmatpush.msra.mxu0 0.0
        %5717 = vmatpush.msra.mxu0 0.0
        %5718 = vmatpush.msra.mxu0 0.0
        %5719 = vmatpush.msra.mxu0 0.0
        %5720 = vmatpush.msra.mxu0 %v5684
        %5721 = vmatmul.f32.gmra.mxu0 %v5455
        %v5722 = vpop.f32.mrf.mxu0
        %v5723 = vadd.f32 0.0, %v5722
        %5724 = vdwg.mxu0
        %v5725 = vmul.f32 %v5703, %v5703
        %v5726 = vsub.f32 %v5723, %v5725
        %v5727 = vadd.f32 %v5726, 1e-05
        %v5728 = vrsqrt.pop %v5727
        %v5729 = vmul.f32 %v5728, %v5727
        %v5730 = vmul.f32 %v5729, %v5728
        %v5731 = vmul.f32 0.5, %v5730
        %v5732 = vsub.f32 1.5, %v5731
        %v5733 = vmul.f32 %v5728, %v5732
        %vm5734 = vweird.f32 %v5727
        %vm5735 = vweird.f32 %v5728
        %vm5736 = vmor %vm5734, %vm5735
        %v5737 = vsel %vm5736, %v5728, %v5733
        %5739 = vrot.lane.b32.xlu0 %v5510, 127
        %v5740 = vpop.permute.xlu0 %5739
        %v5742 = vmul.f32 %v5737, %v5740
        %v5743 = vmul.f32 %v5703, %v5742
        %5745 = vrot.lane.b32.xlu0 %v5743, 1
        %v5746 = vpop.permute.xlu0 %5745
        %v5748 = vsub.f32 %v5512, %v5746
        %5750 = vset.pattern.permute.xlu0 0
        %5751 = vperm.xlu0 %5750, %v5742
        %v5752 = vpop.permute.xlu0 %5751
        %v5754 = vmul.f32 %v5617, %v5752
        %v5755 = vmul.f32 %v5618, %v5752
        %v5756 = vmul.f32 %v5619, %v5752
        %v5757 = vmul.f32 %v5620, %v5752
        %5759 = vset.pattern.permute.xlu0 1
        %5760 = vperm.xlu0 %5759, %v5748
        %v5761 = vpop.permute.xlu0 %5760
        %v5763 = vadd.f32 %v5754, %v5761
        %v5764 = vadd.f32 %v5755, %v5761
        %v5765 = vadd.f32 %v5756, %v5761
        %v5766 = vadd.f32 %v5757, %v5761
        %v5767 = vxor.u32 %v5763, 2147483648
        %v5768 = vxor.u32 %v5764, 2147483648
        %v5769 = vxor.u32 %v5765, 2147483648
        %v5770 = vxor.u32 %v5766, 2147483648
        %v5771 = vmul.f32 %v5767, 1.442695
        %v5772 = vpow.pop %v5771
        %v5773 = vmul.f32 %v5768, 1.442695
        %v5774 = vpow.pop %v5773
        %v5775 = vmul.f32 %v5769, 1.442695
        %v5776 = vpow.pop %v5775
        %v5777 = vmul.f32 %v5770, 1.442695
        %v5778 = vpow.pop %v5777
        %v5779 = vadd.f32 %v5772, 1.0
        %v5780 = vadd.f32 %v5774, 1.0
        %v5781 = vadd.f32 %v5776, 1.0
        %v5782 = vadd.f32 %v5778, 1.0
        %v5783 = vrcp.pop %v5779
        %v5784 = vmul.f32 %v5779, %v5783
        %v5785 = vsub.f32 1.0, %v5784
        %v5786 = vmul.f32 %v5783, %v5785
        %v5787 = vadd.f32 %v5783, %v5786
        %vm5788 = vweird.f32 %v5779
        %vm5789 = vweird.f32 %v5783
        %vm5790 = vmor %vm5788, %vm5789
        %v5791 = vsel %vm5790, %v5783, %v5787
        %v5792 = vand.u32 2147483647, %v5779
        %vm5793 = vcmp.eq.f32.partialorder %v5792, 8.507059e+37
        %v5794 = vand.u32 %v5779, 2147483648
        %v5795 = vor.u32 1.1754944e-38, %v5794
        %v5796 = vsel %vm5793, %v5795, %v5791
        %v5797 = vmul.f32 1.0, %v5796
        %v5798 = vrcp.pop %v5780
        %v5799 = vmul.f32 %v5780, %v5798
        %v5800 = vsub.f32 1.0, %v5799
        %v5801 = vmul.f32 %v5798, %v5800
        %v5802 = vadd.f32 %v5798, %v5801
        %vm5803 = vweird.f32 %v5780
        %vm5804 = vweird.f32 %v5798
        %vm5805 = vmor %vm5803, %vm5804
        %v5806 = vsel %vm5805, %v5798, %v5802
        %v5807 = vand.u32 2147483647, %v5780
        %vm5808 = vcmp.eq.f32.partialorder %v5807, 8.507059e+37
        %v5809 = vand.u32 %v5780, 2147483648
        %v5810 = vor.u32 1.1754944e-38, %v5809
        %v5811 = vsel %vm5808, %v5810, %v5806
        %v5812 = vmul.f32 1.0, %v5811
        %v5813 = vrcp.pop %v5781
        %v5814 = vmul.f32 %v5781, %v5813
        %v5815 = vsub.f32 1.0, %v5814
        %v5816 = vmul.f32 %v5813, %v5815
        %v5817 = vadd.f32 %v5813, %v5816
        %vm5818 = vweird.f32 %v5781
        %vm5819 = vweird.f32 %v5813
        %vm5820 = vmor %vm5818, %vm5819
        %v5821 = vsel %vm5820, %v5813, %v5817
        %v5822 = vand.u32 2147483647, %v5781
        %vm5823 = vcmp.eq.f32.partialorder %v5822, 8.507059e+37
        %v5824 = vand.u32 %v5781, 2147483648
        %v5825 = vor.u32 1.1754944e-38, %v5824
        %v5826 = vsel %vm5823, %v5825, %v5821
        %v5827 = vmul.f32 1.0, %v5826
        %v5828 = vrcp.pop %v5782
        %v5829 = vmul.f32 %v5782, %v5828
        %v5830 = vsub.f32 1.0, %v5829
        %v5831 = vmul.f32 %v5828, %v5830
        %v5832 = vadd.f32 %v5828, %v5831
        %vm5833 = vweird.f32 %v5782
        %vm5834 = vweird.f32 %v5828
        %vm5835 = vmor %vm5833, %vm5834
        %v5836 = vsel %vm5835, %v5828, %v5832
        %v5837 = vand.u32 2147483647, %v5782
        %vm5838 = vcmp.eq.f32.partialorder %v5837, 8.507059e+37
        %v5839 = vand.u32 %v5782, 2147483648
        %v5840 = vor.u32 1.1754944e-38, %v5839
        %v5841 = vsel %vm5838, %v5840, %v5836
        %v5842 = vmul.f32 1.0, %v5841
        %5847 = vrot.lane.b32.xlu0 %v5797, 25
        %v5848 = vpop.permute.xlu0 %5847
        %5849 = vrot.lane.b32.xlu0 %v5812, 25
        %v5850 = vpop.permute.xlu0 %5849
        %5851 = vrot.lane.b32.xlu0 %v5827, 25
        %v5852 = vpop.permute.xlu0 %5851
        %5853 = vrot.lane.b32.xlu0 %v5842, 25
        %v5854 = vpop.permute.xlu0 %5853
        %v5855 = vsel %vm2570, %v5848, %v5850
        %v5856 = vsel %vm2570, %v5850, %v5852
        %v5857 = vsel %vm2570, %v5852, %v5854
        %v5862 = vadd.f32 %v5609, %v5848
        %v5863 = vadd.f32 %v5610, %v5855
        %v5864 = vadd.f32 %v5611, %v5856
        %v5865 = vadd.f32 %v5612, %v5857
        %5866 = vset.pattern.permute.xlu0 2
        %5867 = vperm.xlu0 %5866, %v5373
        %v5868 = vpop.permute.xlu0 %5867
        %v5870 = vadd.f32 %v4051, %v5868
        %v5871 = vadd.f32 %v4052, %v5868
        %v5872 = vadd.f32 %v4053, %v5868
        %v5873 = vadd.f32 %v4054, %v5868
        %5874 = vrot.lane.b32.xlu0 %v5384, 25
        %v5875 = vpop.permute.xlu0 %5874
        %5876 = vrot.lane.b32.xlu0 %v5385, 25
        %v5877 = vpop.permute.xlu0 %5876
        %5878 = vrot.lane.b32.xlu0 %v5386, 25
        %v5879 = vpop.permute.xlu0 %5878
        %v5880 = vsel %vm2570, %v5875, %v5877
        %v5881 = vsel %vm2570, %v5877, %v5879
        %v5886 = vmul.f32 %v5870, %v5875
        %v5887 = vmul.f32 %v5871, %v5880
        %v5888 = vmul.f32 %v5872, %v5881
        %v5889 = vmul.f32 %v5873, %v5879
        %5894 = vrot.lane.b32.xlu0 %v5886, 103
        %v5895 = vpop.permute.xlu0 %5894
        %5896 = vrot.lane.b32.xlu0 %v5887, 103
        %v5897 = vpop.permute.xlu0 %5896
        %5898 = vrot.lane.b32.xlu0 %v5888, 103
        %v5899 = vpop.permute.xlu0 %5898
        %5900 = vrot.lane.b32.xlu0 %v5889, 103
        %v5901 = vpop.permute.xlu0 %5900
        %v5902 = vsel %vm761, %v5895, %v5897
        %v5903 = vsel %vm761, %v5897, %v5899
        %v5904 = vsel %vm761, %v5899, %v5901
        %v5908 = vadd.f32 %v5902, %v5903
        %v5909 = vadd.f32 %v5908, %v5904
        %5910 = vadd.xlane.f32.xlu0 %v5909
        %v5911 = vpop.xlane.xlu0 %5910
        %v5912 = vmul.f32 %v5886, %v5870
        %v5913 = vmul.f32 %v5887, %v5871
        %v5914 = vmul.f32 %v5888, %v5872
        %v5915 = vmul.f32 %v5889, %v5873
        %5920 = vrot.lane.b32.xlu0 %v5912, 103
        %v5921 = vpop.permute.xlu0 %5920
        %5922 = vrot.lane.b32.xlu0 %v5913, 103
        %v5923 = vpop.permute.xlu0 %5922
        %5924 = vrot.lane.b32.xlu0 %v5914, 103
        %v5925 = vpop.permute.xlu0 %5924
        %5926 = vrot.lane.b32.xlu0 %v5915, 103
        %v5927 = vpop.permute.xlu0 %5926
        %v5928 = vsel %vm761, %v5921, %v5923
        %v5929 = vsel %vm761, %v5923, %v5925
        %v5930 = vsel %vm761, %v5925, %v5927
        %v5934 = vadd.f32 %v5928, %v5929
        %v5935 = vadd.f32 %v5934, %v5930
        %5936 = vadd.xlane.f32.xlu0 %v5935
        %v5937 = vpop.xlane.xlu0 %5936
        %5938 = vmatpush.msra.mxu0 0.0
        %5939 = vmatpush.msra.mxu0 0.0
        %5940 = vmatpush.msra.mxu0 0.0
        %5941 = vmatpush.msra.mxu0 0.0
        %5942 = vmatpush.msra.mxu0 0.0
        %5943 = vmatpush.msra.mxu0 0.0
        %5944 = vmatpush.msra.mxu0 0.0
        %5945 = vmatpush.msra.mxu0 0.0
        %5946 = vmatpush.msra.mxu0 0.0
        %5947 = vmatpush.msra.mxu0 0.0
        %5948 = vmatpush.msra.mxu0 0.0
        %5949 = vmatpush.msra.mxu0 0.0
        %5950 = vmatpush.msra.mxu0 0.0
        %5951 = vmatpush.msra.mxu0 0.0
        %5952 = vmatpush.msra.mxu0 0.0
        %5953 = vmatpush.msra.mxu0 %v5911
        %5954 = vmatmul.f32.gmra.mxu0 %v5455
        %v5955 = vpop.f32.mrf.mxu0
        %v5956 = vadd.f32 0.0, %v5955
        %5957 = vdwg.mxu0
        %5958 = vmatpush.msra.mxu0 0.0
        %5959 = vmatpush.msra.mxu0 0.0
        %5960 = vmatpush.msra.mxu0 0.0
        %5961 = vmatpush.msra.mxu0 0.0
        %5962 = vmatpush.msra.mxu0 0.0
        %5963 = vmatpush.msra.mxu0 0.0
        %5964 = vmatpush.msra.mxu0 0.0
        %5965 = vmatpush.msra.mxu0 0.0
        %5966 = vmatpush.msra.mxu0 0.0
        %5967 = vmatpush.msra.mxu0 0.0
        %5968 = vmatpush.msra.mxu0 0.0
        %5969 = vmatpush.msra.mxu0 0.0
        %5970 = vmatpush.msra.mxu0 0.0
        %5971 = vmatpush.msra.mxu0 0.0
        %5972 = vmatpush.msra.mxu0 0.0
        %5973 = vmatpush.msra.mxu0 %v5937
        %5974 = vmatmul.f32.gmra.mxu0 %v5455
        %v5975 = vpop.f32.mrf.mxu0
        %v5976 = vadd.f32 0.0, %v5975
        %5977 = vdwg.mxu0
        %v5978 = vmul.f32 %v5956, %v5956
        %v5979 = vsub.f32 %v5976, %v5978
        %v5980 = vadd.f32 %v5979, 1e-05
        %v5981 = vrsqrt.pop %v5980
        %v5982 = vmul.f32 %v5981, %v5980
        %v5983 = vmul.f32 %v5982, %v5981
        %v5984 = vmul.f32 0.5, %v5983
        %v5985 = vsub.f32 1.5, %v5984
        %v5986 = vmul.f32 %v5981, %v5985
        %vm5987 = vweird.f32 %v5980
        %vm5988 = vweird.f32 %v5981
        %vm5989 = vmor %vm5987, %vm5988
        %v5990 = vsel %vm5989, %v5981, %v5986
        %5991 = vrot.lane.b32.xlu0 %v5510, 126
        %v5992 = vpop.permute.xlu0 %5991
        %v5994 = vmul.f32 %v5990, %v5992
        %v5995 = vmul.f32 %v5956, %v5994
        %5997 = vrot.lane.b32.xlu0 %v5995, 2
        %v5998 = vpop.permute.xlu0 %5997
        %v6000 = vsub.f32 %v5512, %v5998
        %6002 = vset.pattern.permute.xlu0 0
        %6003 = vperm.xlu0 %6002, %v5994
        %v6004 = vpop.permute.xlu0 %6003
        %v6006 = vmul.f32 %v5870, %v6004
        %v6007 = vmul.f32 %v5871, %v6004
        %v6008 = vmul.f32 %v5872, %v6004
        %v6009 = vmul.f32 %v5873, %v6004
        %6011 = vset.pattern.permute.xlu0 2
        %6012 = vperm.xlu0 %6011, %v6000
        %v6013 = vpop.permute.xlu0 %6012
        %v6015 = vadd.f32 %v6006, %v6013
        %v6016 = vadd.f32 %v6007, %v6013
        %v6017 = vadd.f32 %v6008, %v6013
        %v6018 = vadd.f32 %v6009, %v6013
        %v6019 = vxor.u32 %v6015, 2147483648
        %v6020 = vxor.u32 %v6016, 2147483648
        %v6021 = vxor.u32 %v6017, 2147483648
        %v6022 = vxor.u32 %v6018, 2147483648
        %v6023 = vmul.f32 %v6019, 1.442695
        %v6024 = vpow.pop %v6023
        %v6025 = vmul.f32 %v6020, 1.442695
        %v6026 = vpow.pop %v6025
        %v6027 = vmul.f32 %v6021, 1.442695
        %v6028 = vpow.pop %v6027
        %v6029 = vmul.f32 %v6022, 1.442695
        %v6030 = vpow.pop %v6029
        %v6031 = vadd.f32 %v6024, 1.0
        %v6032 = vadd.f32 %v6026, 1.0
        %v6033 = vadd.f32 %v6028, 1.0
        %v6034 = vadd.f32 %v6030, 1.0
        %v6035 = vrcp.pop %v6031
        %v6036 = vmul.f32 %v6031, %v6035
        %v6037 = vsub.f32 1.0, %v6036
        %v6038 = vmul.f32 %v6035, %v6037
        %v6039 = vadd.f32 %v6035, %v6038
        %vm6040 = vweird.f32 %v6031
        %vm6041 = vweird.f32 %v6035
        %vm6042 = vmor %vm6040, %vm6041
        %v6043 = vsel %vm6042, %v6035, %v6039
        %v6044 = vand.u32 2147483647, %v6031
        %vm6045 = vcmp.eq.f32.partialorder %v6044, 8.507059e+37
        %v6046 = vand.u32 %v6031, 2147483648
        %v6047 = vor.u32 1.1754944e-38, %v6046
        %v6048 = vsel %vm6045, %v6047, %v6043
        %v6049 = vmul.f32 1.0, %v6048
        %v6050 = vrcp.pop %v6032
        %v6051 = vmul.f32 %v6032, %v6050
        %v6052 = vsub.f32 1.0, %v6051
        %v6053 = vmul.f32 %v6050, %v6052
        %v6054 = vadd.f32 %v6050, %v6053
        %vm6055 = vweird.f32 %v6032
        %vm6056 = vweird.f32 %v6050
        %vm6057 = vmor %vm6055, %vm6056
        %v6058 = vsel %vm6057, %v6050, %v6054
        %v6059 = vand.u32 2147483647, %v6032
        %vm6060 = vcmp.eq.f32.partialorder %v6059, 8.507059e+37
        %v6061 = vand.u32 %v6032, 2147483648
        %v6062 = vor.u32 1.1754944e-38, %v6061
        %v6063 = vsel %vm6060, %v6062, %v6058
        %v6064 = vmul.f32 1.0, %v6063
        %v6065 = vrcp.pop %v6033
        %v6066 = vmul.f32 %v6033, %v6065
        %v6067 = vsub.f32 1.0, %v6066
        %v6068 = vmul.f32 %v6065, %v6067
        %v6069 = vadd.f32 %v6065, %v6068
        %vm6070 = vweird.f32 %v6033
        %vm6071 = vweird.f32 %v6065
        %vm6072 = vmor %vm6070, %vm6071
        %v6073 = vsel %vm6072, %v6065, %v6069
        %v6074 = vand.u32 2147483647, %v6033
        %vm6075 = vcmp.eq.f32.partialorder %v6074, 8.507059e+37
        %v6076 = vand.u32 %v6033, 2147483648
        %v6077 = vor.u32 1.1754944e-38, %v6076
        %v6078 = vsel %vm6075, %v6077, %v6073
        %v6079 = vmul.f32 1.0, %v6078
        %v6080 = vrcp.pop %v6034
        %v6081 = vmul.f32 %v6034, %v6080
        %v6082 = vsub.f32 1.0, %v6081
        %v6083 = vmul.f32 %v6080, %v6082
        %v6084 = vadd.f32 %v6080, %v6083
        %vm6085 = vweird.f32 %v6034
        %vm6086 = vweird.f32 %v6080
        %vm6087 = vmor %vm6085, %vm6086
        %v6088 = vsel %vm6087, %v6080, %v6084
        %v6089 = vand.u32 2147483647, %v6034
        %vm6090 = vcmp.eq.f32.partialorder %v6089, 8.507059e+37
        %v6091 = vand.u32 %v6034, 2147483648
        %v6092 = vor.u32 1.1754944e-38, %v6091
        %v6093 = vsel %vm6090, %v6092, %v6088
        %v6094 = vmul.f32 1.0, %v6093
        %6099 = vrot.lane.b32.xlu0 %v6049, 50
        %v6100 = vpop.permute.xlu0 %6099
        %6101 = vrot.lane.b32.xlu0 %v6064, 50
        %v6102 = vpop.permute.xlu0 %6101
        %6103 = vrot.lane.b32.xlu0 %v6079, 50
        %v6104 = vpop.permute.xlu0 %6103
        %6105 = vrot.lane.b32.xlu0 %v6094, 50
        %v6106 = vpop.permute.xlu0 %6105
        %v6107 = vsel %vm2022, %v6100, %v6102
        %v6108 = vsel %vm2022, %v6102, %v6104
        %v6109 = vsel %vm2022, %v6104, %v6106
        %v6114 = vadd.f32 %v5862, %v6100
        %v6115 = vadd.f32 %v5863, %v6107
        %v6116 = vadd.f32 %v5864, %v6108
        %v6117 = vadd.f32 %v5865, %v6109
        %6118 = vset.pattern.permute.xlu0 3
        %6119 = vperm.xlu0 %6118, %v5373
        %v6120 = vpop.permute.xlu0 %6119
        %v6122 = vadd.f32 %v4350, %v6120
        %v6123 = vadd.f32 %v4351, %v6120
        %v6124 = vadd.f32 %v4352, %v6120
        %v6125 = vmul.f32 %v6122, %v5384
        %v6126 = vmul.f32 %v6123, %v5385
        %v6127 = vmul.f32 %v6124, %v5386
        %v6128 = vadd.f32 %v6125, %v6126
        %v6129 = vadd.f32 %v6128, %v6127
        %6130 = vadd.xlane.f32.xlu0 %v6129
        %v6131 = vpop.xlane.xlu0 %6130
        %v6132 = vmul.f32 %v6125, %v6122
        %v6133 = vmul.f32 %v6126, %v6123
        %v6134 = vmul.f32 %v6127, %v6124
        %v6135 = vadd.f32 %v6132, %v6133
        %v6136 = vadd.f32 %v6135, %v6134
        %6137 = vadd.xlane.f32.xlu0 %v6136
        %v6138 = vpop.xlane.xlu0 %6137
        %6139 = vmatpush.msra.mxu0 0.0
        %6140 = vmatpush.msra.mxu0 0.0
        %6141 = vmatpush.msra.mxu0 0.0
        %6142 = vmatpush.msra.mxu0 0.0
        %6143 = vmatpush.msra.mxu0 0.0
        %6144 = vmatpush.msra.mxu0 0.0
        %6145 = vmatpush.msra.mxu0 0.0
        %6146 = vmatpush.msra.mxu0 0.0
        %6147 = vmatpush.msra.mxu0 0.0
        %6148 = vmatpush.msra.mxu0 0.0
        %6149 = vmatpush.msra.mxu0 0.0
        %6150 = vmatpush.msra.mxu0 0.0
        %6151 = vmatpush.msra.mxu0 0.0
        %6152 = vmatpush.msra.mxu0 0.0
        %6153 = vmatpush.msra.mxu0 0.0
        %6154 = vmatpush.msra.mxu0 %v6131
        %6155 = vmatmul.f32.gmra.mxu0 %v5455
        %v6156 = vpop.f32.mrf.mxu0
        %v6157 = vadd.f32 0.0, %v6156
        %6158 = vdwg.mxu0
        %6159 = vmatpush.msra.mxu0 0.0
        %6160 = vmatpush.msra.mxu0 0.0
        %6161 = vmatpush.msra.mxu0 0.0
        %6162 = vmatpush.msra.mxu0 0.0
        %6163 = vmatpush.msra.mxu0 0.0
        %6164 = vmatpush.msra.mxu0 0.0
        %6165 = vmatpush.msra.mxu0 0.0
        %6166 = vmatpush.msra.mxu0 0.0
        %6167 = vmatpush.msra.mxu0 0.0
        %6168 = vmatpush.msra.mxu0 0.0
        %6169 = vmatpush.msra.mxu0 0.0
        %6170 = vmatpush.msra.mxu0 0.0
        %6171 = vmatpush.msra.mxu0 0.0
        %6172 = vmatpush.msra.mxu0 0.0
        %6173 = vmatpush.msra.mxu0 0.0
        %6174 = vmatpush.msra.mxu0 %v6138
        %6175 = vmatmul.f32.gmra.mxu0 %v5455
        %v6176 = vpop.f32.mrf.mxu0
        %v6177 = vadd.f32 0.0, %v6176
        %6178 = vdwg.mxu0
        %v6179 = vmul.f32 %v6157, %v6157
        %v6180 = vsub.f32 %v6177, %v6179
        %v6181 = vadd.f32 %v6180, 1e-05
        %v6182 = vrsqrt.pop %v6181
        %v6183 = vmul.f32 %v6182, %v6181
        %v6184 = vmul.f32 %v6183, %v6182
        %v6185 = vmul.f32 0.5, %v6184
        %v6186 = vsub.f32 1.5, %v6185
        %v6187 = vmul.f32 %v6182, %v6186
        %vm6188 = vweird.f32 %v6181
        %vm6189 = vweird.f32 %v6182
        %vm6190 = vmor %vm6188, %vm6189
        %v6191 = vsel %vm6190, %v6182, %v6187
        %6192 = vrot.lane.b32.xlu0 %v5510, 125
        %v6193 = vpop.permute.xlu0 %6192
        %v6195 = vmul.f32 %v6191, %v6193
        %v6196 = vmul.f32 %v6157, %v6195
        %6198 = vrot.lane.b32.xlu0 %v6196, 3
        %v6199 = vpop.permute.xlu0 %6198
        %v6201 = vsub.f32 %v5512, %v6199
        %6203 = vset.pattern.permute.xlu0 0
        %6204 = vperm.xlu0 %6203, %v6195
        %v6205 = vpop.permute.xlu0 %6204
        %v6207 = vmul.f32 %v6122, %v6205
        %v6208 = vmul.f32 %v6123, %v6205
        %v6209 = vmul.f32 %v6124, %v6205
        %6211 = vset.pattern.permute.xlu0 3
        %6212 = vperm.xlu0 %6211, %v6201
        %v6213 = vpop.permute.xlu0 %6212
        %v6215 = vadd.f32 %v6207, %v6213
        %v6216 = vadd.f32 %v6208, %v6213
        %v6217 = vadd.f32 %v6209, %v6213
        %v6218 = vxor.u32 %v6215, 2147483648
        %v6219 = vxor.u32 %v6216, 2147483648
        %v6220 = vxor.u32 %v6217, 2147483648
        %v6221 = vmul.f32 %v6218, 1.442695
        %v6222 = vpow.pop %v6221
        %v6223 = vmul.f32 %v6219, 1.442695
        %v6224 = vpow.pop %v6223
        %v6225 = vmul.f32 %v6220, 1.442695
        %v6226 = vpow.pop %v6225
        %v6227 = vadd.f32 %v6222, 1.0
        %v6228 = vadd.f32 %v6224, 1.0
        %v6229 = vadd.f32 %v6226, 1.0
        %v6230 = vrcp.pop %v6227
        %v6231 = vmul.f32 %v6227, %v6230
        %v6232 = vsub.f32 1.0, %v6231
        %v6233 = vmul.f32 %v6230, %v6232
        %v6234 = vadd.f32 %v6230, %v6233
        %vm6235 = vweird.f32 %v6227
        %vm6236 = vweird.f32 %v6230
        %vm6237 = vmor %vm6235, %vm6236
        %v6238 = vsel %vm6237, %v6230, %v6234
        %v6239 = vand.u32 2147483647, %v6227
        %vm6240 = vcmp.eq.f32.partialorder %v6239, 8.507059e+37
        %v6241 = vand.u32 %v6227, 2147483648
        %v6242 = vor.u32 1.1754944e-38, %v6241
        %v6243 = vsel %vm6240, %v6242, %v6238
        %v6244 = vmul.f32 1.0, %v6243
        %v6245 = vrcp.pop %v6228
        %v6246 = vmul.f32 %v6228, %v6245
        %v6247 = vsub.f32 1.0, %v6246
        %v6248 = vmul.f32 %v6245, %v6247
        %v6249 = vadd.f32 %v6245, %v6248
        %vm6250 = vweird.f32 %v6228
        %vm6251 = vweird.f32 %v6245
        %vm6252 = vmor %vm6250, %vm6251
        %v6253 = vsel %vm6252, %v6245, %v6249
        %v6254 = vand.u32 2147483647, %v6228
        %vm6255 = vcmp.eq.f32.partialorder %v6254, 8.507059e+37
        %v6256 = vand.u32 %v6228, 2147483648
        %v6257 = vor.u32 1.1754944e-38, %v6256
        %v6258 = vsel %vm6255, %v6257, %v6253
        %v6259 = vmul.f32 1.0, %v6258
        %v6260 = vrcp.pop %v6229
        %v6261 = vmul.f32 %v6229, %v6260
        %v6262 = vsub.f32 1.0, %v6261
        %v6263 = vmul.f32 %v6260, %v6262
        %v6264 = vadd.f32 %v6260, %v6263
        %vm6265 = vweird.f32 %v6229
        %vm6266 = vweird.f32 %v6260
        %vm6267 = vmor %vm6265, %vm6266
        %v6268 = vsel %vm6267, %v6260, %v6264
        %v6269 = vand.u32 2147483647, %v6229
        %vm6270 = vcmp.eq.f32.partialorder %v6269, 8.507059e+37
        %v6271 = vand.u32 %v6229, 2147483648
        %v6272 = vor.u32 1.1754944e-38, %v6271
        %v6273 = vsel %vm6270, %v6272, %v6268
        %v6274 = vmul.f32 1.0, %v6273
        %6278 = vrot.lane.b32.xlu0 %v6244, 75
        %v6279 = vpop.permute.xlu0 %6278
        %6280 = vrot.lane.b32.xlu0 %v6259, 75
        %v6281 = vpop.permute.xlu0 %6280
        %6282 = vrot.lane.b32.xlu0 %v6274, 75
        %v6283 = vpop.permute.xlu0 %6282
        %v6284 = vsel %vm1474, %v6279, %v6281
        %v6285 = vsel %vm1474, %v6281, %v6283
        %v6290 = vadd.f32 %v6114, %v6279
        %v6291 = vadd.f32 %v6115, %v6284
        %v6292 = vadd.f32 %v6116, %v6285
        %v6293 = vadd.f32 %v6117, %v6283
        %v6294 = vmul.f32 %v6290, 0.25
        %v6295 = vmul.f32 %v6291, 0.25
        %v6296 = vmul.f32 %v6292, 0.25
        %v6297 = vmul.f32 %v6293, 0.25
        %v6298 = vld [vmem:[#allocation5] sm:$0xff]
        %v6299 = vld [vmem:[#allocation5 + $0x8] sm:$0xff]
        %v6300 = vld [vmem:[#allocation5 + $0x10] sm:$0xff]
        %v6301 = vld [vmem:[#allocation5 + $0x18] sm:$0xff]
        %v6302 = vld [vmem:[#allocation5 + $0x20] sm:$0xff]
        %v6303 = vld [vmem:[#allocation5 + $0x28] sm:$0xff]
        %v6304 = vld [vmem:[#allocation5 + $0x30] sm:$0xff]
        %v6305 = vld [vmem:[#allocation5 + $0x38] sm:$0xff]
        %v6306 = vld [vmem:[#allocation5 + $0x40] sm:$0xff]
        %v6307 = vld [vmem:[#allocation5 + $0x48] sm:$0xff]
        %v6308 = vld [vmem:[#allocation5 + $0x50] sm:$0xff]
        %v6309 = vld [vmem:[#allocation5 + $0x58] sm:$0xff]
        %v6310 = vld [vmem:[#allocation5 + $0x60] sm:$0xff]
        %v6311 = vld [vmem:[#allocation5 + $0x68] sm:$0xff]
        %v6312 = vld [vmem:[#allocation5 + $0x70] sm:$0xff]
        %v6313 = vld [vmem:[#allocation5 + $0x78] sm:$0xff]
        %v6314 = vld [vmem:[#allocation5 + $0x80] sm:$0xff]
        %v6315 = vld [vmem:[#allocation5 + $0x88] sm:$0xff]
        %v6316 = vld [vmem:[#allocation5 + $0x90] sm:$0xff]
        %v6317 = vld [vmem:[#allocation5 + $0x98] sm:$0xff]
        %v6318 = vld [vmem:[#allocation5 + $0xa0] sm:$0xff]
        %v6319 = vld [vmem:[#allocation5 + $0xa8] sm:$0xff]
        %v6320 = vld [vmem:[#allocation5 + $0xb0] sm:$0xff]
        %v6321 = vld [vmem:[#allocation5 + $0xb8] sm:$0xff]
        %v6322 = vld [vmem:[#allocation5 + $0xc0] sm:$0xff]
        %v6323 = vld [vmem:[#allocation5 + $0xc8] sm:$0xff]
        %v6324 = vld [vmem:[#allocation5 + $0xd0] sm:$0xff]
        %v6325 = vld [vmem:[#allocation5 + $0xd8] sm:$0xff]
        %v6326 = vld [vmem:[#allocation5 + $0xe0] sm:$0xff]
        %v6327 = vld [vmem:[#allocation5 + $0xe8] sm:$0xff]
        %v6328 = vld [vmem:[#allocation5 + $0xf0] sm:$0xff]
        %v6329 = vld [vmem:[#allocation5 + $0xf8] sm:$0xff]
        %v6330 = vld [vmem:[#allocation5 + $0x100] sm:$0xff]
        %v6331 = vld [vmem:[#allocation5 + $0x108] sm:$0xff]
        %v6332 = vld [vmem:[#allocation5 + $0x110] sm:$0xff]
        %v6333 = vld [vmem:[#allocation5 + $0x118] sm:$0xff]
        %v6334 = vld [vmem:[#allocation5 + $0x120] sm:$0xff]
        %v6335 = vld [vmem:[#allocation5 + $0x128] sm:$0xff]
        %v6336 = vld [vmem:[#allocation5 + $0x130] sm:$0xff]
        %v6337 = vld [vmem:[#allocation5 + $0x138] sm:$0xff]
        %v6338 = vld [vmem:[#allocation5 + $0x140] sm:$0xff]
        %v6339 = vld [vmem:[#allocation5 + $0x148] sm:$0xff]
        %v6340 = vld [vmem:[#allocation5 + $0x150] sm:$0xff]
        %v6341 = vld [vmem:[#allocation5 + $0x158] sm:$0xff]
        %v6342 = vld [vmem:[#allocation5 + $0x160] sm:$0xff]
        %v6343 = vld [vmem:[#allocation5 + $0x168] sm:$0xff]
        %v6344 = vld [vmem:[#allocation5 + $0x170] sm:$0xff]
        %v6345 = vld [vmem:[#allocation5 + $0x178] sm:$0xff]
        %v6346 = vld [vmem:[#allocation5 + $0x180] sm:$0xff]
        %v6347 = vld [vmem:[#allocation5 + $0x188] sm:$0xff]
        %v6348 = vld [vmem:[#allocation5 + $0x190] sm:$0xff]
        %v6349 = vld [vmem:[#allocation5 + $0x198] sm:$0xff]
        %v6350 = vld [vmem:[#allocation5 + $0x1a0] sm:$0xff]
        %v6351 = vld [vmem:[#allocation5 + $0x1a8] sm:$0xff]
        %v6352 = vld [vmem:[#allocation5 + $0x1b0] sm:$0xff]
        %v6353 = vld [vmem:[#allocation5 + $0x1b8] sm:$0xff]
        %v6354 = vld [vmem:[#allocation5 + $0x1c0] sm:$0xff]
        %v6355 = vld [vmem:[#allocation5 + $0x1c8] sm:$0xff]
        %v6356 = vld [vmem:[#allocation5 + $0x1d0] sm:$0xff]
        %v6357 = vld [vmem:[#allocation5 + $0x1d8] sm:$0xff]
        %v6358 = vld [vmem:[#allocation5 + $0x1e0] sm:$0xff]
        %v6359 = vld [vmem:[#allocation5 + $0x1e8] sm:$0xff]
        %v6360 = vld [vmem:[#allocation5 + $0x1f0] sm:$0xff]
        %v6361 = vld [vmem:[#allocation5 + $0x1f8] sm:$0xff]
        %v6362 = vld [vmem:[#allocation5 + $0x200] sm:$0xff]
        %v6363 = vld [vmem:[#allocation5 + $0x208] sm:$0xff]
        %v6364 = vld [vmem:[#allocation5 + $0x210] sm:$0xff]
        %v6365 = vld [vmem:[#allocation5 + $0x218] sm:$0xff]
        %v6366 = vld [vmem:[#allocation5 + $0x220] sm:$0xff]
        %v6367 = vld [vmem:[#allocation5 + $0x228] sm:$0xff]
        %v6368 = vld [vmem:[#allocation5 + $0x230] sm:$0xff]
        %v6369 = vld [vmem:[#allocation5 + $0x238] sm:$0xff]
        %v6370 = vld [vmem:[#allocation5 + $0x240] sm:$0xff]
        %v6371 = vld [vmem:[#allocation5 + $0x248] sm:$0xff]
        %v6372 = vld [vmem:[#allocation5 + $0x250] sm:$0xff]
        %v6373 = vld [vmem:[#allocation5 + $0x258] sm:$0xff]
        %v6374 = vld [vmem:[#allocation5 + $0x260] sm:$0xff]
        %v6375 = vld [vmem:[#allocation5 + $0x268] sm:$0xff]
        %v6376 = vld [vmem:[#allocation5 + $0x270] sm:$0xff]
        %v6377 = vld [vmem:[#allocation5 + $0x278] sm:$0xff]
        %v6378 = vld [vmem:[#allocation5 + $0x280] sm:$0xff]
        %v6379 = vld [vmem:[#allocation5 + $0x288] sm:$0xff]
        %v6380 = vld [vmem:[#allocation5 + $0x290] sm:$0xff]
        %v6381 = vld [vmem:[#allocation5 + $0x298] sm:$0xff]
        %v6382 = vld [vmem:[#allocation5 + $0x2a0] sm:$0xff]
        %v6383 = vld [vmem:[#allocation5 + $0x2a8] sm:$0xff]
        %v6384 = vld [vmem:[#allocation5 + $0x2b0] sm:$0xff]
        %v6385 = vld [vmem:[#allocation5 + $0x2b8] sm:$0xff]
        %v6386 = vld [vmem:[#allocation5 + $0x2c0] sm:$0xff]
        %v6387 = vld [vmem:[#allocation5 + $0x2c8] sm:$0xff]
        %v6388 = vld [vmem:[#allocation5 + $0x2d0] sm:$0xff]
        %v6389 = vld [vmem:[#allocation5 + $0x2d8] sm:$0xff]
        %v6390 = vld [vmem:[#allocation5 + $0x2e0] sm:$0xff]
        %v6391 = vld [vmem:[#allocation5 + $0x2e8] sm:$0xff]
        %v6392 = vld [vmem:[#allocation5 + $0x2f0] sm:$0xff]
        %v6393 = vld [vmem:[#allocation5 + $0x2f8] sm:$0xff]
        %6398 = vrot.lane.b32.xlu0 %v6294, 53
        %v6399 = vpop.permute.xlu0 %6398
        %6400 = vrot.lane.b32.xlu0 %v6295, 53
        %v6401 = vpop.permute.xlu0 %6400
        %6402 = vrot.lane.b32.xlu0 %v6296, 53
        %v6403 = vpop.permute.xlu0 %6402
        %6404 = vrot.lane.b32.xlu0 %v6297, 53
        %v6405 = vpop.permute.xlu0 %6404
        %v6406 = vsel %vm1839, %v6399, %v6401
        %v6407 = vsel %vm1839, %v6401, %v6403
        %v6408 = vsel %vm1839, %v6403, %v6405
        %6412 = vmatpush.msra.mxu0 %v6328
        %6413 = vmatpush.msra.mxu0 %v6326
        %6414 = vmatpush.msra.mxu0 %v6324
        %6415 = vmatpush.msra.mxu0 %v6322
        %6416 = vmatpush.msra.mxu0 %v6320
        %6417 = vmatpush.msra.mxu0 %v6318
        %6418 = vmatpush.msra.mxu0 %v6316
        %6419 = vmatpush.msra.mxu0 %v6314
        %6420 = vmatpush.msra.mxu0 %v6312
        %6421 = vmatpush.msra.mxu0 %v6310
        %6422 = vmatpush.msra.mxu0 %v6308
        %6423 = vmatpush.msra.mxu0 %v6306
        %6424 = vmatpush.msra.mxu0 %v6304
        %6425 = vmatpush.msra.mxu0 %v6302
        %6426 = vmatpush.msra.mxu0 %v6300
        %6427 = vmatpush.msra.mxu0 %v6298
        %6428 = vmatmul.f32.gmra.mxu0 %v6406
        %v6429 = vpop.f32.mrf.mxu0
        %v6430 = vadd.f32 0.0, %v6429
        %6431 = vdwg.mxu0
        %6432 = vmatpush.msra.mxu0 %v6360
        %6433 = vmatpush.msra.mxu0 %v6358
        %6434 = vmatpush.msra.mxu0 %v6356
        %6435 = vmatpush.msra.mxu0 %v6354
        %6436 = vmatpush.msra.mxu0 %v6352
        %6437 = vmatpush.msra.mxu0 %v6350
        %6438 = vmatpush.msra.mxu0 %v6348
        %6439 = vmatpush.msra.mxu0 %v6346
        %6440 = vmatpush.msra.mxu0 %v6344
        %6441 = vmatpush.msra.mxu0 %v6342
        %6442 = vmatpush.msra.mxu0 %v6340
        %6443 = vmatpush.msra.mxu0 %v6338
        %6444 = vmatpush.msra.mxu0 %v6336
        %6445 = vmatpush.msra.mxu0 %v6334
        %6446 = vmatpush.msra.mxu0 %v6332
        %6447 = vmatpush.msra.mxu0 %v6330
        %6448 = vmatmul.f32.gmra.mxu0 %v6407
        %v6449 = vpop.f32.mrf.mxu0
        %v6450 = vadd.f32 %v6430, %v6449
        %6451 = vdwg.mxu0
        %6452 = vmatpush.msra.mxu0 %v6392
        %6453 = vmatpush.msra.mxu0 %v6390
        %6454 = vmatpush.msra.mxu0 %v6388
        %6455 = vmatpush.msra.mxu0 %v6386
        %6456 = vmatpush.msra.mxu0 %v6384
        %6457 = vmatpush.msra.mxu0 %v6382
        %6458 = vmatpush.msra.mxu0 %v6380
        %6459 = vmatpush.msra.mxu0 %v6378
        %6460 = vmatpush.msra.mxu0 %v6376
        %6461 = vmatpush.msra.mxu0 %v6374
        %6462 = vmatpush.msra.mxu0 %v6372
        %6463 = vmatpush.msra.mxu0 %v6370
        %6464 = vmatpush.msra.mxu0 %v6368
        %6465 = vmatpush.msra.mxu0 %v6366
        %6466 = vmatpush.msra.mxu0 %v6364
        %6467 = vmatpush.msra.mxu0 %v6362
        %6468 = vmatmul.f32.gmra.mxu0 %v6408
        %v6469 = vpop.f32.mrf.mxu0
        %v6470 = vadd.f32 %v6450, %v6469
        %6471 = vdwg.mxu0
        %6472 = vmatpush.msra.mxu0 %v6329
        %6473 = vmatpush.msra.mxu0 %v6327
        %6474 = vmatpush.msra.mxu0 %v6325
        %6475 = vmatpush.msra.mxu0 %v6323
        %6476 = vmatpush.msra.mxu0 %v6321
        %6477 = vmatpush.msra.mxu0 %v6319
        %6478 = vmatpush.msra.mxu0 %v6317
        %6479 = vmatpush.msra.mxu0 %v6315
        %6480 = vmatpush.msra.mxu0 %v6313
        %6481 = vmatpush.msra.mxu0 %v6311
        %6482 = vmatpush.msra.mxu0 %v6309
        %6483 = vmatpush.msra.mxu0 %v6307
        %6484 = vmatpush.msra.mxu0 %v6305
        %6485 = vmatpush.msra.mxu0 %v6303
        %6486 = vmatpush.msra.mxu0 %v6301
        %6487 = vmatpush.msra.mxu0 %v6299
        %6488 = vmatmul.f32.gmra.mxu0 %v6406
        %v6489 = vpop.f32.mrf.mxu0
        %v6490 = vadd.f32 0.0, %v6489
        %6491 = vdwg.mxu0
        %6492 = vmatpush.msra.mxu0 %v6361
        %6493 = vmatpush.msra.mxu0 %v6359
        %6494 = vmatpush.msra.mxu0 %v6357
        %6495 = vmatpush.msra.mxu0 %v6355
        %6496 = vmatpush.msra.mxu0 %v6353
        %6497 = vmatpush.msra.mxu0 %v6351
        %6498 = vmatpush.msra.mxu0 %v6349
        %6499 = vmatpush.msra.mxu0 %v6347
        %6500 = vmatpush.msra.mxu0 %v6345
        %6501 = vmatpush.msra.mxu0 %v6343
        %6502 = vmatpush.msra.mxu0 %v6341
        %6503 = vmatpush.msra.mxu0 %v6339
        %6504 = vmatpush.msra.mxu0 %v6337
        %6505 = vmatpush.msra.mxu0 %v6335
        %6506 = vmatpush.msra.mxu0 %v6333
        %6507 = vmatpush.msra.mxu0 %v6331
        %6508 = vmatmul.f32.gmra.mxu0 %v6407
        %v6509 = vpop.f32.mrf.mxu0
        %v6510 = vadd.f32 %v6490, %v6509
        %6511 = vdwg.mxu0
        %6512 = vmatpush.msra.mxu0 %v6393
        %6513 = vmatpush.msra.mxu0 %v6391
        %6514 = vmatpush.msra.mxu0 %v6389
        %6515 = vmatpush.msra.mxu0 %v6387
        %6516 = vmatpush.msra.mxu0 %v6385
        %6517 = vmatpush.msra.mxu0 %v6383
        %6518 = vmatpush.msra.mxu0 %v6381
        %6519 = vmatpush.msra.mxu0 %v6379
        %6520 = vmatpush.msra.mxu0 %v6377
        %6521 = vmatpush.msra.mxu0 %v6375
        %6522 = vmatpush.msra.mxu0 %v6373
        %6523 = vmatpush.msra.mxu0 %v6371
        %6524 = vmatpush.msra.mxu0 %v6369
        %6525 = vmatpush.msra.mxu0 %v6367
        %6526 = vmatpush.msra.mxu0 %v6365
        %6527 = vmatpush.msra.mxu0 %v6363
        %6528 = vmatmul.f32.gmra.mxu0 %v6408
        %v6529 = vpop.f32.mrf.mxu0
        %v6530 = vadd.f32 %v6510, %v6529
        %6531 = vdwg.mxu0
        %v6532 = vld [vmem:[%s8] sm:$0xff]
        %v6533 = vld [vmem:[%s8 + $0x8] sm:$0xff]
        %v6535 = vsel %vm2661, %v6532, 0
        %v6538 = vsel %vm2661, %v6533, 0
        %6540 = vmatpush.msra.mxu0 0.0
        %6541 = vmatpush.msra.mxu0 0.0
        %6542 = vmatpush.msra.mxu0 0.0
        %6543 = vmatpush.msra.mxu0 0.0
        %6544 = vmatpush.msra.mxu0 0.0
        %6545 = vmatpush.msra.mxu0 0.0
        %6546 = vmatpush.msra.mxu0 0.0
        %6547 = vmatpush.msra.mxu0 0.0
        %6548 = vmatpush.msra.mxu0 0.0
        %6549 = vmatpush.msra.mxu0 0.0
        %6550 = vmatpush.msra.mxu0 0.0
        %6551 = vmatpush.msra.mxu0 0.0
        %6552 = vmatpush.msra.mxu0 0.0
        %6553 = vmatpush.msra.mxu0 0.0
        %6554 = vmatpush.msra.mxu0 0.0
        %6555 = vmatpush.msra.mxu0 %v6470
        %6556 = vmatmul.f32.gmra.mxu0 %v6535
        %v6557 = vpop.f32.mrf.mxu0
        %v6558 = vadd.f32 0.0, %v6557
        %6559 = vmatmul.f32.gmra.mxu0 %v6538
        %v6560 = vpop.f32.mrf.mxu0
        %v6561 = vadd.f32 0.0, %v6560
        %6562 = vdwg.mxu0
        %6563 = vmatpush.msra.mxu0 0.0
        %6564 = vmatpush.msra.mxu0 0.0
        %6565 = vmatpush.msra.mxu0 0.0
        %6566 = vmatpush.msra.mxu0 0.0
        %6567 = vmatpush.msra.mxu0 0.0
        %6568 = vmatpush.msra.mxu0 0.0
        %6569 = vmatpush.msra.mxu0 0.0
        %6570 = vmatpush.msra.mxu0 0.0
        %6571 = vmatpush.msra.mxu0 0.0
        %6572 = vmatpush.msra.mxu0 0.0
        %6573 = vmatpush.msra.mxu0 0.0
        %6574 = vmatpush.msra.mxu0 0.0
        %6575 = vmatpush.msra.mxu0 0.0
        %6576 = vmatpush.msra.mxu0 0.0
        %6577 = vmatpush.msra.mxu0 0.0
        %6578 = vmatpush.msra.mxu0 %v6530
        %6579 = vmatmul.f32.gmra.mxu0 %v6535
        %v6580 = vpop.f32.mrf.mxu0
        %v6581 = vadd.f32 0.0, %v6580
        %6582 = vmatmul.f32.gmra.mxu0 %v6538
        %v6583 = vpop.f32.mrf.mxu0
        %v6584 = vadd.f32 0.0, %v6583
        %6585 = vdwg.mxu0
        %6587 = vrot.lane.b32.xlu0 %v6558, 112
        %v6588 = vpop.permute.xlu0 %6587
        %6590 = vrot.lane.b32.xlu0 %v6558, 96
        %v6591 = vpop.permute.xlu0 %6590
        %6593 = vrot.lane.b32.xlu0 %v6558, 80
        %v6594 = vpop.permute.xlu0 %6593
        %6596 = vrot.lane.b32.xlu0 %v6558, 64
        %v6597 = vpop.permute.xlu0 %6596
        %6599 = vrot.lane.b32.xlu0 %v6558, 48
        %v6600 = vpop.permute.xlu0 %6599
        %6602 = vrot.lane.b32.xlu0 %v6558, 32
        %v6603 = vpop.permute.xlu0 %6602
        %6605 = vrot.lane.b32.xlu0 %v6558, 16
        %v6606 = vpop.permute.xlu0 %6605
        %6609 = vrot.lane.b32.xlu0 %v6581, 112
        %v6610 = vpop.permute.xlu0 %6609
        %6612 = vrot.lane.b32.xlu0 %v6581, 96
        %v6613 = vpop.permute.xlu0 %6612
        %6615 = vrot.lane.b32.xlu0 %v6581, 80
        %v6616 = vpop.permute.xlu0 %6615
        %6618 = vrot.lane.b32.xlu0 %v6581, 64
        %v6619 = vpop.permute.xlu0 %6618
        %6621 = vrot.lane.b32.xlu0 %v6581, 48
        %v6622 = vpop.permute.xlu0 %6621
        %6624 = vrot.lane.b32.xlu0 %v6581, 32
        %v6625 = vpop.permute.xlu0 %6624
        %6627 = vrot.lane.b32.xlu0 %v6581, 16
        %v6628 = vpop.permute.xlu0 %6627
        %v6630 = vrot.slane %v6591, 4
        %vm6631 = vcmask 1047556
        %v6632 = vsel %vm6631, %v6630, %v6558
        %v6633 = vrot.slane %v6558, 4
        %v6634 = vsel %vm6631, %v6591, %v6633
        %v6636 = vunpack.c.l.s4 1983009808
        %v6637 = vunpack.c.0.s8 %v6636
        %v6638 = vperm.slane %v6632, %v6637
        %v6640 = vunpack.c.l.s4 1983009808
        %v6641 = vunpack.c.0.s8 %v6640
        %v6642 = vperm.slane %v6634, %v6641
        %v6643 = vrot.slane %v6594, 4
        %v6644 = vsel %vm6631, %v6643, %v6588
        %v6645 = vrot.slane %v6588, 4
        %v6646 = vsel %vm6631, %v6594, %v6645
        %v6648 = vunpack.c.l.s4 1983009808
        %v6649 = vunpack.c.0.s8 %v6648
        %v6650 = vperm.slane %v6644, %v6649
        %v6652 = vunpack.c.l.s4 1983009808
        %v6653 = vunpack.c.0.s8 %v6652
        %v6654 = vperm.slane %v6646, %v6653
        %v6655 = vrot.slane %v6603, 4
        %v6656 = vsel %vm6631, %v6655, %v6597
        %v6657 = vrot.slane %v6597, 4
        %v6658 = vsel %vm6631, %v6603, %v6657
        %v6660 = vunpack.c.l.s4 1983009808
        %v6661 = vunpack.c.0.s8 %v6660
        %v6662 = vperm.slane %v6656, %v6661
        %v6664 = vunpack.c.l.s4 1983009808
        %v6665 = vunpack.c.0.s8 %v6664
        %v6666 = vperm.slane %v6658, %v6665
        %v6667 = vrot.slane %v6606, 4
        %v6668 = vsel %vm6631, %v6667, %v6600
        %v6669 = vrot.slane %v6600, 4
        %v6670 = vsel %vm6631, %v6606, %v6669
        %v6672 = vunpack.c.l.s4 1983009808
        %v6673 = vunpack.c.0.s8 %v6672
        %v6674 = vperm.slane %v6668, %v6673
        %v6676 = vunpack.c.l.s4 1983009808
        %v6677 = vunpack.c.0.s8 %v6676
        %v6678 = vperm.slane %v6670, %v6677
        %v6679 = vrot.slane %v6650, 4
        %v6680 = vsel %vm6631, %v6679, %v6638
        %v6681 = vrot.slane %v6638, 4
        %v6682 = vsel %vm6631, %v6650, %v6681
        %v6684 = vunpack.c.l.s4 1934713408
        %v6685 = vunpack.c.0.s8 %v6684
        %v6686 = vperm.slane %v6680, %v6685
        %v6688 = vunpack.c.l.s4 1934713408
        %v6689 = vunpack.c.0.s8 %v6688
        %v6690 = vperm.slane %v6682, %v6689
        %v6691 = vrot.slane %v6654, 4
        %v6692 = vsel %vm6631, %v6691, %v6642
        %v6693 = vrot.slane %v6642, 4
        %v6694 = vsel %vm6631, %v6654, %v6693
        %v6696 = vunpack.c.l.s4 1934713408
        %v6697 = vunpack.c.0.s8 %v6696
        %v6698 = vperm.slane %v6692, %v6697
        %v6700 = vunpack.c.l.s4 1934713408
        %v6701 = vunpack.c.0.s8 %v6700
        %v6702 = vperm.slane %v6694, %v6701
        %v6703 = vrot.slane %v6674, 4
        %v6704 = vsel %vm6631, %v6703, %v6662
        %v6705 = vrot.slane %v6662, 4
        %v6706 = vsel %vm6631, %v6674, %v6705
        %v6708 = vunpack.c.l.s4 1934713408
        %v6709 = vunpack.c.0.s8 %v6708
        %v6710 = vperm.slane %v6704, %v6709
        %v6712 = vunpack.c.l.s4 1934713408
        %v6713 = vunpack.c.0.s8 %v6712
        %v6714 = vperm.slane %v6706, %v6713
        %v6715 = vrot.slane %v6678, 4
        %v6716 = vsel %vm6631, %v6715, %v6666
        %v6717 = vrot.slane %v6666, 4
        %v6718 = vsel %vm6631, %v6678, %v6717
        %v6720 = vunpack.c.l.s4 1934713408
        %v6721 = vunpack.c.0.s8 %v6720
        %v6722 = vperm.slane %v6716, %v6721
        %v6724 = vunpack.c.l.s4 1934713408
        %v6725 = vunpack.c.0.s8 %v6724
        %v6726 = vperm.slane %v6718, %v6725
        %v6727 = vrot.slane %v6710, 4
        %v6728 = vsel %vm6631, %v6727, %v6686
        %v6729 = vrot.slane %v6686, 4
        %v6730 = vsel %vm6631, %v6710, %v6729
        %v6731 = vrot.slane %v6714, 4
        %v6732 = vsel %vm6631, %v6731, %v6690
        %v6733 = vrot.slane %v6690, 4
        %v6734 = vsel %vm6631, %v6714, %v6733
        %v6735 = vrot.slane %v6722, 4
        %v6736 = vsel %vm6631, %v6735, %v6698
        %v6737 = vrot.slane %v6698, 4
        %v6738 = vsel %vm6631, %v6722, %v6737
        %v6739 = vrot.slane %v6726, 4
        %v6740 = vsel %vm6631, %v6739, %v6702
        %v6741 = vrot.slane %v6702, 4
        %v6742 = vsel %vm6631, %v6726, %v6741
        %v6743 = vrot.slane %v6613, 4
        %v6744 = vsel %vm6631, %v6743, %v6581
        %v6745 = vrot.slane %v6581, 4
        %v6746 = vsel %vm6631, %v6613, %v6745
        %v6748 = vunpack.c.l.s4 1983009808
        %v6749 = vunpack.c.0.s8 %v6748
        %v6750 = vperm.slane %v6744, %v6749
        %v6752 = vunpack.c.l.s4 1983009808
        %v6753 = vunpack.c.0.s8 %v6752
        %v6754 = vperm.slane %v6746, %v6753
        %v6755 = vrot.slane %v6616, 4
        %v6756 = vsel %vm6631, %v6755, %v6610
        %v6757 = vrot.slane %v6610, 4
        %v6758 = vsel %vm6631, %v6616, %v6757
        %v6760 = vunpack.c.l.s4 1983009808
        %v6761 = vunpack.c.0.s8 %v6760
        %v6762 = vperm.slane %v6756, %v6761
        %v6764 = vunpack.c.l.s4 1983009808
        %v6765 = vunpack.c.0.s8 %v6764
        %v6766 = vperm.slane %v6758, %v6765
        %v6767 = vrot.slane %v6625, 4
        %v6768 = vsel %vm6631, %v6767, %v6619
        %v6769 = vrot.slane %v6619, 4
        %v6770 = vsel %vm6631, %v6625, %v6769
        %v6772 = vunpack.c.l.s4 1983009808
        %v6773 = vunpack.c.0.s8 %v6772
        %v6774 = vperm.slane %v6768, %v6773
        %v6776 = vunpack.c.l.s4 1983009808
        %v6777 = vunpack.c.0.s8 %v6776
        %v6778 = vperm.slane %v6770, %v6777
        %v6779 = vrot.slane %v6628, 4
        %v6780 = vsel %vm6631, %v6779, %v6622
        %v6781 = vrot.slane %v6622, 4
        %v6782 = vsel %vm6631, %v6628, %v6781
        %v6784 = vunpack.c.l.s4 1983009808
        %v6785 = vunpack.c.0.s8 %v6784
        %v6786 = vperm.slane %v6780, %v6785
        %v6788 = vunpack.c.l.s4 1983009808
        %v6789 = vunpack.c.0.s8 %v6788
        %v6790 = vperm.slane %v6782, %v6789
        %v6791 = vrot.slane %v6762, 4
        %v6792 = vsel %vm6631, %v6791, %v6750
        %v6793 = vrot.slane %v6750, 4
        %v6794 = vsel %vm6631, %v6762, %v6793
        %v6796 = vunpack.c.l.s4 1934713408
        %v6797 = vunpack.c.0.s8 %v6796
        %v6798 = vperm.slane %v6792, %v6797
        %v6800 = vunpack.c.l.s4 1934713408
        %v6801 = vunpack.c.0.s8 %v6800
        %v6802 = vperm.slane %v6794, %v6801
        %v6803 = vrot.slane %v6766, 4
        %v6804 = vsel %vm6631, %v6803, %v6754
        %v6805 = vrot.slane %v6754, 4
        %v6806 = vsel %vm6631, %v6766, %v6805
        %v6808 = vunpack.c.l.s4 1934713408
        %v6809 = vunpack.c.0.s8 %v6808
        %v6810 = vperm.slane %v6804, %v6809
        %v6812 = vunpack.c.l.s4 1934713408
        %v6813 = vunpack.c.0.s8 %v6812
        %v6814 = vperm.slane %v6806, %v6813
        %v6815 = vrot.slane %v6786, 4
        %v6816 = vsel %vm6631, %v6815, %v6774
        %v6817 = vrot.slane %v6774, 4
        %v6818 = vsel %vm6631, %v6786, %v6817
        %v6820 = vunpack.c.l.s4 1934713408
        %v6821 = vunpack.c.0.s8 %v6820
        %v6822 = vperm.slane %v6816, %v6821
        %v6824 = vunpack.c.l.s4 1934713408
        %v6825 = vunpack.c.0.s8 %v6824
        %v6826 = vperm.slane %v6818, %v6825
        %v6827 = vrot.slane %v6790, 4
        %v6828 = vsel %vm6631, %v6827, %v6778
        %v6829 = vrot.slane %v6778, 4
        %v6830 = vsel %vm6631, %v6790, %v6829
        %v6832 = vunpack.c.l.s4 1934713408
        %v6833 = vunpack.c.0.s8 %v6832
        %v6834 = vperm.slane %v6828, %v6833
        %v6836 = vunpack.c.l.s4 1934713408
        %v6837 = vunpack.c.0.s8 %v6836
        %v6838 = vperm.slane %v6830, %v6837
        %v6839 = vrot.slane %v6822, 4
        %v6840 = vsel %vm6631, %v6839, %v6798
        %v6841 = vrot.slane %v6798, 4
        %v6842 = vsel %vm6631, %v6822, %v6841
        %v6843 = vrot.slane %v6826, 4
        %v6844 = vsel %vm6631, %v6843, %v6802
        %v6845 = vrot.slane %v6802, 4
        %v6846 = vsel %vm6631, %v6826, %v6845
        %v6847 = vrot.slane %v6834, 4
        %v6848 = vsel %vm6631, %v6847, %v6810
        %v6849 = vrot.slane %v6810, 4
        %v6850 = vsel %vm6631, %v6834, %v6849
        %v6851 = vrot.slane %v6838, 4
        %v6852 = vsel %vm6631, %v6851, %v6814
        %v6853 = vrot.slane %v6814, 4
        %v6854 = vsel %vm6631, %v6838, %v6853
        %6856 = vrot.lane.b32.xlu0 %v6561, 112
        %v6857 = vpop.permute.xlu0 %6856
        %6859 = vrot.lane.b32.xlu0 %v6561, 96
        %v6860 = vpop.permute.xlu0 %6859
        %6862 = vrot.lane.b32.xlu0 %v6561, 80
        %v6863 = vpop.permute.xlu0 %6862
        %6865 = vrot.lane.b32.xlu0 %v6561, 64
        %v6866 = vpop.permute.xlu0 %6865
        %6868 = vrot.lane.b32.xlu0 %v6561, 48
        %v6869 = vpop.permute.xlu0 %6868
        %6871 = vrot.lane.b32.xlu0 %v6561, 32
        %v6872 = vpop.permute.xlu0 %6871
        %6874 = vrot.lane.b32.xlu0 %v6561, 16
        %v6875 = vpop.permute.xlu0 %6874
        %6878 = vrot.lane.b32.xlu0 %v6584, 112
        %v6879 = vpop.permute.xlu0 %6878
        %6881 = vrot.lane.b32.xlu0 %v6584, 96
        %v6882 = vpop.permute.xlu0 %6881
        %6884 = vrot.lane.b32.xlu0 %v6584, 80
        %v6885 = vpop.permute.xlu0 %6884
        %6887 = vrot.lane.b32.xlu0 %v6584, 64
        %v6888 = vpop.permute.xlu0 %6887
        %6890 = vrot.lane.b32.xlu0 %v6584, 48
        %v6891 = vpop.permute.xlu0 %6890
        %6893 = vrot.lane.b32.xlu0 %v6584, 32
        %v6894 = vpop.permute.xlu0 %6893
        %6896 = vrot.lane.b32.xlu0 %v6584, 16
        %v6897 = vpop.permute.xlu0 %6896
        %v6899 = vrot.slane %v6860, 4
        %v6900 = vsel %vm6631, %v6899, %v6561
        %v6901 = vrot.slane %v6561, 4
        %v6902 = vsel %vm6631, %v6860, %v6901
        %v6904 = vunpack.c.l.s4 1983009808
        %v6905 = vunpack.c.0.s8 %v6904
        %v6906 = vperm.slane %v6900, %v6905
        %v6908 = vunpack.c.l.s4 1983009808
        %v6909 = vunpack.c.0.s8 %v6908
        %v6910 = vperm.slane %v6902, %v6909
        %v6911 = vrot.slane %v6863, 4
        %v6912 = vsel %vm6631, %v6911, %v6857
        %v6913 = vrot.slane %v6857, 4
        %v6914 = vsel %vm6631, %v6863, %v6913
        %v6916 = vunpack.c.l.s4 1983009808
        %v6917 = vunpack.c.0.s8 %v6916
        %v6918 = vperm.slane %v6912, %v6917
        %v6920 = vunpack.c.l.s4 1983009808
        %v6921 = vunpack.c.0.s8 %v6920
        %v6922 = vperm.slane %v6914, %v6921
        %v6923 = vrot.slane %v6872, 4
        %v6924 = vsel %vm6631, %v6923, %v6866
        %v6925 = vrot.slane %v6866, 4
        %v6926 = vsel %vm6631, %v6872, %v6925
        %v6928 = vunpack.c.l.s4 1983009808
        %v6929 = vunpack.c.0.s8 %v6928
        %v6930 = vperm.slane %v6924, %v6929
        %v6932 = vunpack.c.l.s4 1983009808
        %v6933 = vunpack.c.0.s8 %v6932
        %v6934 = vperm.slane %v6926, %v6933
        %v6935 = vrot.slane %v6875, 4
        %v6936 = vsel %vm6631, %v6935, %v6869
        %v6937 = vrot.slane %v6869, 4
        %v6938 = vsel %vm6631, %v6875, %v6937
        %v6940 = vunpack.c.l.s4 1983009808
        %v6941 = vunpack.c.0.s8 %v6940
        %v6942 = vperm.slane %v6936, %v6941
        %v6944 = vunpack.c.l.s4 1983009808
        %v6945 = vunpack.c.0.s8 %v6944
        %v6946 = vperm.slane %v6938, %v6945
        %v6947 = vrot.slane %v6918, 4
        %v6948 = vsel %vm6631, %v6947, %v6906
        %v6949 = vrot.slane %v6906, 4
        %v6950 = vsel %vm6631, %v6918, %v6949
        %v6952 = vunpack.c.l.s4 1934713408
        %v6953 = vunpack.c.0.s8 %v6952
        %v6954 = vperm.slane %v6948, %v6953
        %v6956 = vunpack.c.l.s4 1934713408
        %v6957 = vunpack.c.0.s8 %v6956
        %v6958 = vperm.slane %v6950, %v6957
        %v6959 = vrot.slane %v6922, 4
        %v6960 = vsel %vm6631, %v6959, %v6910
        %v6961 = vrot.slane %v6910, 4
        %v6962 = vsel %vm6631, %v6922, %v6961
        %v6964 = vunpack.c.l.s4 1934713408
        %v6965 = vunpack.c.0.s8 %v6964
        %v6966 = vperm.slane %v6960, %v6965
        %v6968 = vunpack.c.l.s4 1934713408
        %v6969 = vunpack.c.0.s8 %v6968
        %v6970 = vperm.slane %v6962, %v6969
        %v6971 = vrot.slane %v6942, 4
        %v6972 = vsel %vm6631, %v6971, %v6930
        %v6973 = vrot.slane %v6930, 4
        %v6974 = vsel %vm6631, %v6942, %v6973
        %v6976 = vunpack.c.l.s4 1934713408
        %v6977 = vunpack.c.0.s8 %v6976
        %v6978 = vperm.slane %v6972, %v6977
        %v6980 = vunpack.c.l.s4 1934713408
        %v6981 = vunpack.c.0.s8 %v6980
        %v6982 = vperm.slane %v6974, %v6981
        %v6983 = vrot.slane %v6946, 4
        %v6984 = vsel %vm6631, %v6983, %v6934
        %v6985 = vrot.slane %v6934, 4
        %v6986 = vsel %vm6631, %v6946, %v6985
        %v6988 = vunpack.c.l.s4 1934713408
        %v6989 = vunpack.c.0.s8 %v6988
        %v6990 = vperm.slane %v6984, %v6989
        %v6992 = vunpack.c.l.s4 1934713408
        %v6993 = vunpack.c.0.s8 %v6992
        %v6994 = vperm.slane %v6986, %v6993
        %v6995 = vrot.slane %v6978, 4
        %v6996 = vsel %vm6631, %v6995, %v6954
        %v6997 = vrot.slane %v6954, 4
        %v6998 = vsel %vm6631, %v6978, %v6997
        %v6999 = vrot.slane %v6982, 4
        %v7000 = vsel %vm6631, %v6999, %v6958
        %v7001 = vrot.slane %v6958, 4
        %v7002 = vsel %vm6631, %v6982, %v7001
        %v7003 = vrot.slane %v6990, 4
        %v7004 = vsel %vm6631, %v7003, %v6966
        %v7005 = vrot.slane %v6966, 4
        %v7006 = vsel %vm6631, %v6990, %v7005
        %v7007 = vrot.slane %v6994, 4
        %v7008 = vsel %vm6631, %v7007, %v6970
        %v7009 = vrot.slane %v6970, 4
        %v7010 = vsel %vm6631, %v6994, %v7009
        %v7011 = vrot.slane %v6882, 4
        %v7012 = vsel %vm6631, %v7011, %v6584
        %v7013 = vrot.slane %v6584, 4
        %v7014 = vsel %vm6631, %v6882, %v7013
        %v7016 = vunpack.c.l.s4 1983009808
        %v7017 = vunpack.c.0.s8 %v7016
        %v7018 = vperm.slane %v7012, %v7017
        %v7020 = vunpack.c.l.s4 1983009808
        %v7021 = vunpack.c.0.s8 %v7020
        %v7022 = vperm.slane %v7014, %v7021
        %v7023 = vrot.slane %v6885, 4
        %v7024 = vsel %vm6631, %v7023, %v6879
        %v7025 = vrot.slane %v6879, 4
        %v7026 = vsel %vm6631, %v6885, %v7025
        %v7028 = vunpack.c.l.s4 1983009808
        %v7029 = vunpack.c.0.s8 %v7028
        %v7030 = vperm.slane %v7024, %v7029
        %v7032 = vunpack.c.l.s4 1983009808
        %v7033 = vunpack.c.0.s8 %v7032
        %v7034 = vperm.slane %v7026, %v7033
        %v7035 = vrot.slane %v6894, 4
        %v7036 = vsel %vm6631, %v7035, %v6888
        %v7037 = vrot.slane %v6888, 4
        %v7038 = vsel %vm6631, %v6894, %v7037
        %v7040 = vunpack.c.l.s4 1983009808
        %v7041 = vunpack.c.0.s8 %v7040
        %v7042 = vperm.slane %v7036, %v7041
        %v7044 = vunpack.c.l.s4 1983009808
        %v7045 = vunpack.c.0.s8 %v7044
        %v7046 = vperm.slane %v7038, %v7045
        %v7047 = vrot.slane %v6897, 4
        %v7048 = vsel %vm6631, %v7047, %v6891
        %v7049 = vrot.slane %v6891, 4
        %v7050 = vsel %vm6631, %v6897, %v7049
        %v7052 = vunpack.c.l.s4 1983009808
        %v7053 = vunpack.c.0.s8 %v7052
        %v7054 = vperm.slane %v7048, %v7053
        %v7056 = vunpack.c.l.s4 1983009808
        %v7057 = vunpack.c.0.s8 %v7056
        %v7058 = vperm.slane %v7050, %v7057
        %v7059 = vrot.slane %v7030, 4
        %v7060 = vsel %vm6631, %v7059, %v7018
        %v7061 = vrot.slane %v7018, 4
        %v7062 = vsel %vm6631, %v7030, %v7061
        %v7064 = vunpack.c.l.s4 1934713408
        %v7065 = vunpack.c.0.s8 %v7064
        %v7066 = vperm.slane %v7060, %v7065
        %v7068 = vunpack.c.l.s4 1934713408
        %v7069 = vunpack.c.0.s8 %v7068
        %v7070 = vperm.slane %v7062, %v7069
        %v7071 = vrot.slane %v7034, 4
        %v7072 = vsel %vm6631, %v7071, %v7022
        %v7073 = vrot.slane %v7022, 4
        %v7074 = vsel %vm6631, %v7034, %v7073
        %v7076 = vunpack.c.l.s4 1934713408
        %v7077 = vunpack.c.0.s8 %v7076
        %v7078 = vperm.slane %v7072, %v7077
        %v7080 = vunpack.c.l.s4 1934713408
        %v7081 = vunpack.c.0.s8 %v7080
        %v7082 = vperm.slane %v7074, %v7081
        %v7083 = vrot.slane %v7054, 4
        %v7084 = vsel %vm6631, %v7083, %v7042
        %v7085 = vrot.slane %v7042, 4
        %v7086 = vsel %vm6631, %v7054, %v7085
        %v7088 = vunpack.c.l.s4 1934713408
        %v7089 = vunpack.c.0.s8 %v7088
        %v7090 = vperm.slane %v7084, %v7089
        %v7092 = vunpack.c.l.s4 1934713408
        %v7093 = vunpack.c.0.s8 %v7092
        %v7094 = vperm.slane %v7086, %v7093
        %v7095 = vrot.slane %v7058, 4
        %v7096 = vsel %vm6631, %v7095, %v7046
        %v7097 = vrot.slane %v7046, 4
        %v7098 = vsel %vm6631, %v7058, %v7097
        %v7100 = vunpack.c.l.s4 1934713408
        %v7101 = vunpack.c.0.s8 %v7100
        %v7102 = vperm.slane %v7096, %v7101
        %v7104 = vunpack.c.l.s4 1934713408
        %v7105 = vunpack.c.0.s8 %v7104
        %v7106 = vperm.slane %v7098, %v7105
        %v7107 = vrot.slane %v7090, 4
        %v7108 = vsel %vm6631, %v7107, %v7066
        %v7109 = vrot.slane %v7066, 4
        %v7110 = vsel %vm6631, %v7090, %v7109
        %v7111 = vrot.slane %v7094, 4
        %v7112 = vsel %vm6631, %v7111, %v7070
        %v7113 = vrot.slane %v7070, 4
        %v7114 = vsel %vm6631, %v7094, %v7113
        %v7115 = vrot.slane %v7102, 4
        %v7116 = vsel %vm6631, %v7115, %v7078
        %v7117 = vrot.slane %v7078, 4
        %v7118 = vsel %vm6631, %v7102, %v7117
        %v7119 = vrot.slane %v7106, 4
        %v7120 = vsel %vm6631, %v7119, %v7082
        %v7121 = vrot.slane %v7082, 4
        %v7122 = vsel %vm6631, %v7106, %v7121
        %vm7123 = vcmask 130048
        %v7125 = vsel %vm7123, %v6728, 0
        %v7128 = vsel %vm7123, %v6840, 0
        %v7131 = vsel %vm7123, %v6996, 0
        %v7134 = vsel %vm7123, %v7108, 0
        %7136 = vmatpush.xpose.msra.mxu0 0.0
        %7137 = vmatpush.xpose.msra.mxu0 0.0
        %7138 = vmatpush.xpose.msra.mxu0 0.0
        %7139 = vmatpush.xpose.msra.mxu0 0.0
        %7140 = vmatpush.xpose.msra.mxu0 0.0
        %7141 = vmatpush.xpose.msra.mxu0 0.0
        %7142 = vmatpush.xpose.msra.mxu0 0.0
        %7143 = vmatpush.xpose.msra.mxu0 0.0
        %7144 = vmatpush.xpose.msra.mxu0 0.0
        %7145 = vmatpush.xpose.msra.mxu0 0.0
        %7146 = vmatpush.xpose.msra.mxu0 0.0
        %7147 = vmatpush.xpose.msra.mxu0 0.0
        %7148 = vmatpush.xpose.msra.mxu0 0.0
        %7149 = vmatpush.xpose.msra.mxu0 0.0
        %7150 = vmatpush.xpose.msra.mxu0 %v7134
        %7151 = vmatpush.xpose.msra.mxu0 %v7131
        %7152 = vmatmul.f32.gmra.mxu0 %v7125
        %v7153 = vpop.f32.mrf.mxu0
        %v7154 = vadd.f32 0.0, %v7153
        %7155 = vmatmul.f32.gmra.mxu0 %v7128
        %v7156 = vpop.f32.mrf.mxu0
        %v7157 = vadd.f32 0.0, %v7156
        %7158 = vdwg.mxu0
        %v7160 = vsel %vm7123, %v6730, 0
        %v7163 = vsel %vm7123, %v6842, 0
        %v7166 = vsel %vm7123, %v6998, 0
        %v7169 = vsel %vm7123, %v7110, 0
        %7171 = vmatpush.xpose.msra.mxu0 0.0
        %7172 = vmatpush.xpose.msra.mxu0 0.0
        %7173 = vmatpush.xpose.msra.mxu0 0.0
        %7174 = vmatpush.xpose.msra.mxu0 0.0
        %7175 = vmatpush.xpose.msra.mxu0 0.0
        %7176 = vmatpush.xpose.msra.mxu0 0.0
        %7177 = vmatpush.xpose.msra.mxu0 0.0
        %7178 = vmatpush.xpose.msra.mxu0 0.0
        %7179 = vmatpush.xpose.msra.mxu0 0.0
        %7180 = vmatpush.xpose.msra.mxu0 0.0
        %7181 = vmatpush.xpose.msra.mxu0 0.0
        %7182 = vmatpush.xpose.msra.mxu0 0.0
        %7183 = vmatpush.xpose.msra.mxu0 0.0
        %7184 = vmatpush.xpose.msra.mxu0 0.0
        %7185 = vmatpush.xpose.msra.mxu0 %v7169
        %7186 = vmatpush.xpose.msra.mxu0 %v7166
        %7187 = vmatmul.f32.gmra.mxu0 %v7160
        %v7188 = vpop.f32.mrf.mxu0
        %v7189 = vadd.f32 0.0, %v7188
        %7190 = vmatmul.f32.gmra.mxu0 %v7163
        %v7191 = vpop.f32.mrf.mxu0
        %v7192 = vadd.f32 0.0, %v7191
        %7193 = vdwg.mxu0
        %v7195 = vsel %vm7123, %v6732, 0
        %v7198 = vsel %vm7123, %v6844, 0
        %v7201 = vsel %vm7123, %v7000, 0
        %v7204 = vsel %vm7123, %v7112, 0
        %7206 = vmatpush.xpose.msra.mxu0 0.0
        %7207 = vmatpush.xpose.msra.mxu0 0.0
        %7208 = vmatpush.xpose.msra.mxu0 0.0
        %7209 = vmatpush.xpose.msra.mxu0 0.0
        %7210 = vmatpush.xpose.msra.mxu0 0.0
        %7211 = vmatpush.xpose.msra.mxu0 0.0
        %7212 = vmatpush.xpose.msra.mxu0 0.0
        %7213 = vmatpush.xpose.msra.mxu0 0.0
        %7214 = vmatpush.xpose.msra.mxu0 0.0
        %7215 = vmatpush.xpose.msra.mxu0 0.0
        %7216 = vmatpush.xpose.msra.mxu0 0.0
        %7217 = vmatpush.xpose.msra.mxu0 0.0
        %7218 = vmatpush.xpose.msra.mxu0 0.0
        %7219 = vmatpush.xpose.msra.mxu0 0.0
        %7220 = vmatpush.xpose.msra.mxu0 %v7204
        %7221 = vmatpush.xpose.msra.mxu0 %v7201
        %7222 = vmatmul.f32.gmra.mxu0 %v7195
        %v7223 = vpop.f32.mrf.mxu0
        %v7224 = vadd.f32 0.0, %v7223
        %7225 = vmatmul.f32.gmra.mxu0 %v7198
        %v7226 = vpop.f32.mrf.mxu0
        %v7227 = vadd.f32 0.0, %v7226
        %7228 = vdwg.mxu0
        %v7230 = vsel %vm7123, %v6734, 0
        %v7233 = vsel %vm7123, %v6846, 0
        %v7236 = vsel %vm7123, %v7002, 0
        %v7239 = vsel %vm7123, %v7114, 0
        %7241 = vmatpush.xpose.msra.mxu0 0.0
        %7242 = vmatpush.xpose.msra.mxu0 0.0
        %7243 = vmatpush.xpose.msra.mxu0 0.0
        %7244 = vmatpush.xpose.msra.mxu0 0.0
        %7245 = vmatpush.xpose.msra.mxu0 0.0
        %7246 = vmatpush.xpose.msra.mxu0 0.0
        %7247 = vmatpush.xpose.msra.mxu0 0.0
        %7248 = vmatpush.xpose.msra.mxu0 0.0
        %7249 = vmatpush.xpose.msra.mxu0 0.0
        %7250 = vmatpush.xpose.msra.mxu0 0.0
        %7251 = vmatpush.xpose.msra.mxu0 0.0
        %7252 = vmatpush.xpose.msra.mxu0 0.0
        %7253 = vmatpush.xpose.msra.mxu0 0.0
        %7254 = vmatpush.xpose.msra.mxu0 0.0
        %7255 = vmatpush.xpose.msra.mxu0 %v7239
        %7256 = vmatpush.xpose.msra.mxu0 %v7236
        %7257 = vmatmul.f32.gmra.mxu0 %v7230
        %v7258 = vpop.f32.mrf.mxu0
        %v7259 = vadd.f32 0.0, %v7258
        %7260 = vmatmul.f32.gmra.mxu0 %v7233
        %v7261 = vpop.f32.mrf.mxu0
        %v7262 = vadd.f32 0.0, %v7261
        %7263 = vdwg.mxu0
        %v7265 = vsel %vm7123, %v6736, 0
        %v7268 = vsel %vm7123, %v6848, 0
        %v7271 = vsel %vm7123, %v7004, 0
        %v7274 = vsel %vm7123, %v7116, 0
        %7276 = vmatpush.xpose.msra.mxu0 0.0
        %7277 = vmatpush.xpose.msra.mxu0 0.0
        %7278 = vmatpush.xpose.msra.mxu0 0.0
        %7279 = vmatpush.xpose.msra.mxu0 0.0
        %7280 = vmatpush.xpose.msra.mxu0 0.0
        %7281 = vmatpush.xpose.msra.mxu0 0.0
        %7282 = vmatpush.xpose.msra.mxu0 0.0
        %7283 = vmatpush.xpose.msra.mxu0 0.0
        %7284 = vmatpush.xpose.msra.mxu0 0.0
        %7285 = vmatpush.xpose.msra.mxu0 0.0
        %7286 = vmatpush.xpose.msra.mxu0 0.0
        %7287 = vmatpush.xpose.msra.mxu0 0.0
        %7288 = vmatpush.xpose.msra.mxu0 0.0
        %7289 = vmatpush.xpose.msra.mxu0 0.0
        %7290 = vmatpush.xpose.msra.mxu0 %v7274
        %7291 = vmatpush.xpose.msra.mxu0 %v7271
        %7292 = vmatmul.f32.gmra.mxu0 %v7265
        %v7293 = vpop.f32.mrf.mxu0
        %v7294 = vadd.f32 0.0, %v7293
        %7295 = vmatmul.f32.gmra.mxu0 %v7268
        %v7296 = vpop.f32.mrf.mxu0
        %v7297 = vadd.f32 0.0, %v7296
        %7298 = vdwg.mxu0
        %v7300 = vsel %vm7123, %v6738, 0
        %v7303 = vsel %vm7123, %v6850, 0
        %v7306 = vsel %vm7123, %v7006, 0
        %v7309 = vsel %vm7123, %v7118, 0
        %7311 = vmatpush.xpose.msra.mxu0 0.0
        %7312 = vmatpush.xpose.msra.mxu0 0.0
        %7313 = vmatpush.xpose.msra.mxu0 0.0
        %7314 = vmatpush.xpose.msra.mxu0 0.0
        %7315 = vmatpush.xpose.msra.mxu0 0.0
        %7316 = vmatpush.xpose.msra.mxu0 0.0
        %7317 = vmatpush.xpose.msra.mxu0 0.0
        %7318 = vmatpush.xpose.msra.mxu0 0.0
        %7319 = vmatpush.xpose.msra.mxu0 0.0
        %7320 = vmatpush.xpose.msra.mxu0 0.0
        %7321 = vmatpush.xpose.msra.mxu0 0.0
        %7322 = vmatpush.xpose.msra.mxu0 0.0
        %7323 = vmatpush.xpose.msra.mxu0 0.0
        %7324 = vmatpush.xpose.msra.mxu0 0.0
        %7325 = vmatpush.xpose.msra.mxu0 %v7309
        %7326 = vmatpush.xpose.msra.mxu0 %v7306
        %7327 = vmatmul.f32.gmra.mxu0 %v7300
        %v7328 = vpop.f32.mrf.mxu0
        %v7329 = vadd.f32 0.0, %v7328
        %7330 = vmatmul.f32.gmra.mxu0 %v7303
        %v7331 = vpop.f32.mrf.mxu0
        %v7332 = vadd.f32 0.0, %v7331
        %7333 = vdwg.mxu0
        %v7335 = vsel %vm7123, %v6740, 0
        %v7338 = vsel %vm7123, %v6852, 0
        %v7341 = vsel %vm7123, %v7008, 0
        %v7344 = vsel %vm7123, %v7120, 0
        %7346 = vmatpush.xpose.msra.mxu0 0.0
        %7347 = vmatpush.xpose.msra.mxu0 0.0
        %7348 = vmatpush.xpose.msra.mxu0 0.0
        %7349 = vmatpush.xpose.msra.mxu0 0.0
        %7350 = vmatpush.xpose.msra.mxu0 0.0
        %7351 = vmatpush.xpose.msra.mxu0 0.0
        %7352 = vmatpush.xpose.msra.mxu0 0.0
        %7353 = vmatpush.xpose.msra.mxu0 0.0
        %7354 = vmatpush.xpose.msra.mxu0 0.0
        %7355 = vmatpush.xpose.msra.mxu0 0.0
        %7356 = vmatpush.xpose.msra.mxu0 0.0
        %7357 = vmatpush.xpose.msra.mxu0 0.0
        %7358 = vmatpush.xpose.msra.mxu0 0.0
        %7359 = vmatpush.xpose.msra.mxu0 0.0
        %7360 = vmatpush.xpose.msra.mxu0 %v7344
        %7361 = vmatpush.xpose.msra.mxu0 %v7341
        %7362 = vmatmul.f32.gmra.mxu0 %v7335
        %v7363 = vpop.f32.mrf.mxu0
        %v7364 = vadd.f32 0.0, %v7363
        %7365 = vmatmul.f32.gmra.mxu0 %v7338
        %v7366 = vpop.f32.mrf.mxu0
        %v7367 = vadd.f32 0.0, %v7366
        %7368 = vdwg.mxu0
        %v7370 = vsel %vm7123, %v6742, 0
        %v7373 = vsel %vm7123, %v6854, 0
        %v7376 = vsel %vm7123, %v7010, 0
        %v7379 = vsel %vm7123, %v7122, 0
        %7381 = vmatpush.xpose.msra.mxu0 0.0
        %7382 = vmatpush.xpose.msra.mxu0 0.0
        %7383 = vmatpush.xpose.msra.mxu0 0.0
        %7384 = vmatpush.xpose.msra.mxu0 0.0
        %7385 = vmatpush.xpose.msra.mxu0 0.0
        %7386 = vmatpush.xpose.msra.mxu0 0.0
        %7387 = vmatpush.xpose.msra.mxu0 0.0
        %7388 = vmatpush.xpose.msra.mxu0 0.0
        %7389 = vmatpush.xpose.msra.mxu0 0.0
        %7390 = vmatpush.xpose.msra.mxu0 0.0
        %7391 = vmatpush.xpose.msra.mxu0 0.0
        %7392 = vmatpush.xpose.msra.mxu0 0.0
        %7393 = vmatpush.xpose.msra.mxu0 0.0
        %7394 = vmatpush.xpose.msra.mxu0 0.0
        %7395 = vmatpush.xpose.msra.mxu0 %v7379
        %7396 = vmatpush.xpose.msra.mxu0 %v7376
        %7397 = vmatmul.f32.gmra.mxu0 %v7370
        %v7398 = vpop.f32.mrf.mxu0
        %v7399 = vadd.f32 0.0, %v7398
        %7400 = vmatmul.f32.gmra.mxu0 %v7373
        %v7401 = vpop.f32.mrf.mxu0
        %v7402 = vadd.f32 0.0, %v7401
        %7403 = vdwg.mxu0
        %v7404 = vmul.f32 %v7154, 0.35355338
        %v7405 = vmul.f32 %v7157, 0.35355338
        %v7406 = vmul.f32 %v7189, 0.35355338
        %v7407 = vmul.f32 %v7192, 0.35355338
        %v7408 = vmul.f32 %v7224, 0.35355338
        %v7409 = vmul.f32 %v7227, 0.35355338
        %v7410 = vmul.f32 %v7259, 0.35355338
        %v7411 = vmul.f32 %v7262, 0.35355338
        %v7412 = vmul.f32 %v7294, 0.35355338
        %v7413 = vmul.f32 %v7297, 0.35355338
        %v7414 = vmul.f32 %v7329, 0.35355338
        %v7415 = vmul.f32 %v7332, 0.35355338
        %v7416 = vmul.f32 %v7364, 0.35355338
        %v7417 = vmul.f32 %v7367, 0.35355338
        %v7418 = vmul.f32 %v7399, 0.35355338
        %v7419 = vmul.f32 %v7402, 0.35355338
        %v7420 = vsel %vm7123, %v7404, -inf
        %7421 = vmax.xlane.f32.xlu0 %v7420
        %v7422 = vpop.xlane.xlu0 %7421
        %v7423 = vsel %vm7123, %v7405, -inf
        %7424 = vmax.xlane.f32.xlu0 %v7423
        %v7425 = vpop.xlane.xlu0 %7424
        %v7426 = vsel %vm7123, %v7406, -inf
        %7427 = vmax.xlane.f32.xlu0 %v7426
        %v7428 = vpop.xlane.xlu0 %7427
        %v7429 = vsel %vm7123, %v7407, -inf
        %7430 = vmax.xlane.f32.xlu0 %v7429
        %v7431 = vpop.xlane.xlu0 %7430
        %v7432 = vsel %vm7123, %v7408, -inf
        %7433 = vmax.xlane.f32.xlu0 %v7432
        %v7434 = vpop.xlane.xlu0 %7433
        %v7435 = vsel %vm7123, %v7409, -inf
        %7436 = vmax.xlane.f32.xlu0 %v7435
        %v7437 = vpop.xlane.xlu0 %7436
        %v7438 = vsel %vm7123, %v7410, -inf
        %7439 = vmax.xlane.f32.xlu0 %v7438
        %v7440 = vpop.xlane.xlu0 %7439
        %v7441 = vsel %vm7123, %v7411, -inf
        %7442 = vmax.xlane.f32.xlu0 %v7441
        %v7443 = vpop.xlane.xlu0 %7442
        %v7444 = vsel %vm7123, %v7412, -inf
        %7445 = vmax.xlane.f32.xlu0 %v7444
        %v7446 = vpop.xlane.xlu0 %7445
        %v7447 = vsel %vm7123, %v7413, -inf
        %7448 = vmax.xlane.f32.xlu0 %v7447
        %v7449 = vpop.xlane.xlu0 %7448
        %v7450 = vsel %vm7123, %v7414, -inf
        %7451 = vmax.xlane.f32.xlu0 %v7450
        %v7452 = vpop.xlane.xlu0 %7451
        %v7453 = vsel %vm7123, %v7415, -inf
        %7454 = vmax.xlane.f32.xlu0 %v7453
        %v7455 = vpop.xlane.xlu0 %7454
        %v7456 = vsel %vm7123, %v7416, -inf
        %7457 = vmax.xlane.f32.xlu0 %v7456
        %v7458 = vpop.xlane.xlu0 %7457
        %v7459 = vsel %vm7123, %v7417, -inf
        %7460 = vmax.xlane.f32.xlu0 %v7459
        %v7461 = vpop.xlane.xlu0 %7460
        %v7462 = vsel %vm7123, %v7418, -inf
        %7463 = vmax.xlane.f32.xlu0 %v7462
        %v7464 = vpop.xlane.xlu0 %7463
        %v7465 = vsel %vm7123, %v7419, -inf
        %7466 = vmax.xlane.f32.xlu0 %v7465
        %v7467 = vpop.xlane.xlu0 %7466
        %v7468 = vsub.f32 %v7404, %v7422
        %v7469 = vsub.f32 %v7405, %v7425
        %v7470 = vsub.f32 %v7406, %v7428
        %v7471 = vsub.f32 %v7407, %v7431
        %v7472 = vsub.f32 %v7408, %v7434
        %v7473 = vsub.f32 %v7409, %v7437
        %v7474 = vsub.f32 %v7410, %v7440
        %v7475 = vsub.f32 %v7411, %v7443
        %v7476 = vsub.f32 %v7412, %v7446
        %v7477 = vsub.f32 %v7413, %v7449
        %v7478 = vsub.f32 %v7414, %v7452
        %v7479 = vsub.f32 %v7415, %v7455
        %v7480 = vsub.f32 %v7416, %v7458
        %v7481 = vsub.f32 %v7417, %v7461
        %v7482 = vsub.f32 %v7418, %v7464
        %v7483 = vsub.f32 %v7419, %v7467
        %v7484 = vmul.f32 %v7468, 1.442695
        %v7485 = vpow.pop %v7484
        %v7486 = vmul.f32 %v7469, 1.442695
        %v7487 = vpow.pop %v7486
        %v7488 = vmul.f32 %v7470, 1.442695
        %v7489 = vpow.pop %v7488
        %v7490 = vmul.f32 %v7471, 1.442695
        %v7491 = vpow.pop %v7490
        %v7492 = vmul.f32 %v7472, 1.442695
        %v7493 = vpow.pop %v7492
        %v7494 = vmul.f32 %v7473, 1.442695
        %v7495 = vpow.pop %v7494
        %v7496 = vmul.f32 %v7474, 1.442695
        %v7497 = vpow.pop %v7496
        %v7498 = vmul.f32 %v7475, 1.442695
        %v7499 = vpow.pop %v7498
        %v7500 = vmul.f32 %v7476, 1.442695
        %v7501 = vpow.pop %v7500
        %v7502 = vmul.f32 %v7477, 1.442695
        %v7503 = vpow.pop %v7502
        %v7504 = vmul.f32 %v7478, 1.442695
        %v7505 = vpow.pop %v7504
        %v7506 = vmul.f32 %v7479, 1.442695
        %v7507 = vpow.pop %v7506
        %v7508 = vmul.f32 %v7480, 1.442695
        %v7509 = vpow.pop %v7508
        %v7510 = vmul.f32 %v7481, 1.442695
        %v7511 = vpow.pop %v7510
        %v7512 = vmul.f32 %v7482, 1.442695
        %v7513 = vpow.pop %v7512
        %v7514 = vmul.f32 %v7483, 1.442695
        %v7515 = vpow.pop %v7514
        %v7516 = vsel %vm7123, %v7485, 0.0
        %7517 = vadd.xlane.f32.xlu0 %v7516
        %v7518 = vpop.xlane.xlu0 %7517
        %v7519 = vsel %vm7123, %v7487, 0.0
        %7520 = vadd.xlane.f32.xlu0 %v7519
        %v7521 = vpop.xlane.xlu0 %7520
        %v7522 = vsel %vm7123, %v7489, 0.0
        %7523 = vadd.xlane.f32.xlu0 %v7522
        %v7524 = vpop.xlane.xlu0 %7523
        %v7525 = vsel %vm7123, %v7491, 0.0
        %7526 = vadd.xlane.f32.xlu0 %v7525
        %v7527 = vpop.xlane.xlu0 %7526
        %v7528 = vsel %vm7123, %v7493, 0.0
        %7529 = vadd.xlane.f32.xlu0 %v7528
        %v7530 = vpop.xlane.xlu0 %7529
        %v7531 = vsel %vm7123, %v7495, 0.0
        %7532 = vadd.xlane.f32.xlu0 %v7531
        %v7533 = vpop.xlane.xlu0 %7532
        %v7534 = vsel %vm7123, %v7497, 0.0
        %7535 = vadd.xlane.f32.xlu0 %v7534
        %v7536 = vpop.xlane.xlu0 %7535
        %v7537 = vsel %vm7123, %v7499, 0.0
        %7538 = vadd.xlane.f32.xlu0 %v7537
        %v7539 = vpop.xlane.xlu0 %7538
        %v7540 = vsel %vm7123, %v7501, 0.0
        %7541 = vadd.xlane.f32.xlu0 %v7540
        %v7542 = vpop.xlane.xlu0 %7541
        %v7543 = vsel %vm7123, %v7503, 0.0
        %7544 = vadd.xlane.f32.xlu0 %v7543
        %v7545 = vpop.xlane.xlu0 %7544
        %v7546 = vsel %vm7123, %v7505, 0.0
        %7547 = vadd.xlane.f32.xlu0 %v7546
        %v7548 = vpop.xlane.xlu0 %7547
        %v7549 = vsel %vm7123, %v7507, 0.0
        %7550 = vadd.xlane.f32.xlu0 %v7549
        %v7551 = vpop.xlane.xlu0 %7550
        %v7552 = vsel %vm7123, %v7509, 0.0
        %7553 = vadd.xlane.f32.xlu0 %v7552
        %v7554 = vpop.xlane.xlu0 %7553
        %v7555 = vsel %vm7123, %v7511, 0.0
        %7556 = vadd.xlane.f32.xlu0 %v7555
        %v7557 = vpop.xlane.xlu0 %7556
        %v7558 = vsel %vm7123, %v7513, 0.0
        %7559 = vadd.xlane.f32.xlu0 %v7558
        %v7560 = vpop.xlane.xlu0 %7559
        %v7561 = vsel %vm7123, %v7515, 0.0
        %7562 = vadd.xlane.f32.xlu0 %v7561
        %v7563 = vpop.xlane.xlu0 %7562
        %v7564 = vrcp.pop %v7518
        %v7565 = vrcp.pop %v7521
        %v7566 = vrcp.pop %v7524
        %v7567 = vrcp.pop %v7527
        %v7568 = vrcp.pop %v7530
        %v7569 = vrcp.pop %v7533
        %v7570 = vrcp.pop %v7536
        %v7571 = vrcp.pop %v7539
        %v7572 = vrcp.pop %v7542
        %v7573 = vrcp.pop %v7545
        %v7574 = vrcp.pop %v7548
        %v7575 = vrcp.pop %v7551
        %v7576 = vrcp.pop %v7554
        %v7577 = vrcp.pop %v7557
        %v7578 = vrcp.pop %v7560
        %v7579 = vrcp.pop %v7563
        %v7580 = vmul.f32 %v7518, %v7564
        %v7581 = vmul.f32 %v7521, %v7565
        %v7582 = vmul.f32 %v7524, %v7566
        %v7583 = vmul.f32 %v7527, %v7567
        %v7584 = vmul.f32 %v7530, %v7568
        %v7585 = vmul.f32 %v7533, %v7569
        %v7586 = vmul.f32 %v7536, %v7570
        %v7587 = vmul.f32 %v7539, %v7571
        %v7588 = vmul.f32 %v7542, %v7572
        %v7589 = vmul.f32 %v7545, %v7573
        %v7590 = vmul.f32 %v7548, %v7574
        %v7591 = vmul.f32 %v7551, %v7575
        %v7592 = vmul.f32 %v7554, %v7576
        %v7593 = vmul.f32 %v7557, %v7577
        %v7594 = vmul.f32 %v7560, %v7578
        %v7595 = vmul.f32 %v7563, %v7579
        %v7596 = vsub.f32 2.0, %v7580
        %v7597 = vsub.f32 2.0, %v7581
        %v7598 = vsub.f32 2.0, %v7582
        %v7599 = vsub.f32 2.0, %v7583
        %v7600 = vsub.f32 2.0, %v7584
        %v7601 = vsub.f32 2.0, %v7585
        %v7602 = vsub.f32 2.0, %v7586
        %v7603 = vsub.f32 2.0, %v7587
        %v7604 = vsub.f32 2.0, %v7588
        %v7605 = vsub.f32 2.0, %v7589
        %v7606 = vsub.f32 2.0, %v7590
        %v7607 = vsub.f32 2.0, %v7591
        %v7608 = vsub.f32 2.0, %v7592
        %v7609 = vsub.f32 2.0, %v7593
        %v7610 = vsub.f32 2.0, %v7594
        %v7611 = vsub.f32 2.0, %v7595
        %v7612 = vmul.f32 %v7564, %v7596
        %v7613 = vmul.f32 %v7565, %v7597
        %v7614 = vmul.f32 %v7566, %v7598
        %v7615 = vmul.f32 %v7567, %v7599
        %v7616 = vmul.f32 %v7568, %v7600
        %v7617 = vmul.f32 %v7569, %v7601
        %v7618 = vmul.f32 %v7570, %v7602
        %v7619 = vmul.f32 %v7571, %v7603
        %v7620 = vmul.f32 %v7572, %v7604
        %v7621 = vmul.f32 %v7573, %v7605
        %v7622 = vmul.f32 %v7574, %v7606
        %v7623 = vmul.f32 %v7575, %v7607
        %v7624 = vmul.f32 %v7576, %v7608
        %v7625 = vmul.f32 %v7577, %v7609
        %v7626 = vmul.f32 %v7578, %v7610
        %v7627 = vmul.f32 %v7579, %v7611
        %v7628 = vmul.f32 %v7485, %v7612
        %v7629 = vmul.f32 %v7487, %v7613
        %v7630 = vmul.f32 %v7489, %v7614
        %v7631 = vmul.f32 %v7491, %v7615
        %v7632 = vmul.f32 %v7493, %v7616
        %v7633 = vmul.f32 %v7495, %v7617
        %v7634 = vmul.f32 %v7497, %v7618
        %v7635 = vmul.f32 %v7499, %v7619
        %v7636 = vmul.f32 %v7501, %v7620
        %v7637 = vmul.f32 %v7503, %v7621
        %v7638 = vmul.f32 %v7505, %v7622
        %v7639 = vmul.f32 %v7507, %v7623
        %v7640 = vmul.f32 %v7509, %v7624
        %v7641 = vmul.f32 %v7511, %v7625
        %v7642 = vmul.f32 %v7513, %v7626
        %v7643 = vmul.f32 %v7515, %v7627
        %v7644 = vrot.slane %v7632, 4
        %v7645 = vsel %vm6631, %v7644, %v7628
        %v7646 = vrot.slane %v7628, 4
        %v7647 = vsel %vm6631, %v7632, %v7646
        %v7649 = vunpack.c.l.s4 1983009808
        %v7650 = vunpack.c.0.s8 %v7649
        %v7651 = vperm.slane %v7645, %v7650
        %v7653 = vunpack.c.l.s4 1983009808
        %v7654 = vunpack.c.0.s8 %v7653
        %v7655 = vperm.slane %v7647, %v7654
        %v7656 = vrot.slane %v7634, 4
        %v7657 = vsel %vm6631, %v7656, %v7630
        %v7658 = vrot.slane %v7630, 4
        %v7659 = vsel %vm6631, %v7634, %v7658
        %v7661 = vunpack.c.l.s4 1983009808
        %v7662 = vunpack.c.0.s8 %v7661
        %v7663 = vperm.slane %v7657, %v7662
        %v7665 = vunpack.c.l.s4 1983009808
        %v7666 = vunpack.c.0.s8 %v7665
        %v7667 = vperm.slane %v7659, %v7666
        %v7668 = vrot.slane %v7640, 4
        %v7669 = vsel %vm6631, %v7668, %v7636
        %v7670 = vrot.slane %v7636, 4
        %v7671 = vsel %vm6631, %v7640, %v7670
        %v7673 = vunpack.c.l.s4 1983009808
        %v7674 = vunpack.c.0.s8 %v7673
        %v7675 = vperm.slane %v7669, %v7674
        %v7677 = vunpack.c.l.s4 1983009808
        %v7678 = vunpack.c.0.s8 %v7677
        %v7679 = vperm.slane %v7671, %v7678
        %v7680 = vrot.slane %v7642, 4
        %v7681 = vsel %vm6631, %v7680, %v7638
        %v7682 = vrot.slane %v7638, 4
        %v7683 = vsel %vm6631, %v7642, %v7682
        %v7685 = vunpack.c.l.s4 1983009808
        %v7686 = vunpack.c.0.s8 %v7685
        %v7687 = vperm.slane %v7681, %v7686
        %v7689 = vunpack.c.l.s4 1983009808
        %v7690 = vunpack.c.0.s8 %v7689
        %v7691 = vperm.slane %v7683, %v7690
        %v7692 = vrot.slane %v7663, 4
        %v7693 = vsel %vm6631, %v7692, %v7651
        %v7694 = vrot.slane %v7651, 4
        %v7695 = vsel %vm6631, %v7663, %v7694
        %v7697 = vunpack.c.l.s4 1934713408
        %v7698 = vunpack.c.0.s8 %v7697
        %v7699 = vperm.slane %v7693, %v7698
        %v7701 = vunpack.c.l.s4 1934713408
        %v7702 = vunpack.c.0.s8 %v7701
        %v7703 = vperm.slane %v7695, %v7702
        %v7704 = vrot.slane %v7667, 4
        %v7705 = vsel %vm6631, %v7704, %v7655
        %v7706 = vrot.slane %v7655, 4
        %v7707 = vsel %vm6631, %v7667, %v7706
        %v7709 = vunpack.c.l.s4 1934713408
        %v7710 = vunpack.c.0.s8 %v7709
        %v7711 = vperm.slane %v7705, %v7710
        %v7713 = vunpack.c.l.s4 1934713408
        %v7714 = vunpack.c.0.s8 %v7713
        %v7715 = vperm.slane %v7707, %v7714
        %v7716 = vrot.slane %v7687, 4
        %v7717 = vsel %vm6631, %v7716, %v7675
        %v7718 = vrot.slane %v7675, 4
        %v7719 = vsel %vm6631, %v7687, %v7718
        %v7721 = vunpack.c.l.s4 1934713408
        %v7722 = vunpack.c.0.s8 %v7721
        %v7723 = vperm.slane %v7717, %v7722
        %v7725 = vunpack.c.l.s4 1934713408
        %v7726 = vunpack.c.0.s8 %v7725
        %v7727 = vperm.slane %v7719, %v7726
        %v7728 = vrot.slane %v7691, 4
        %v7729 = vsel %vm6631, %v7728, %v7679
        %v7730 = vrot.slane %v7679, 4
        %v7731 = vsel %vm6631, %v7691, %v7730
        %v7733 = vunpack.c.l.s4 1934713408
        %v7734 = vunpack.c.0.s8 %v7733
        %v7735 = vperm.slane %v7729, %v7734
        %v7737 = vunpack.c.l.s4 1934713408
        %v7738 = vunpack.c.0.s8 %v7737
        %v7739 = vperm.slane %v7731, %v7738
        %v7740 = vrot.slane %v7723, 4
        %v7741 = vsel %vm6631, %v7740, %v7699
        %v7742 = vrot.slane %v7699, 4
        %v7743 = vsel %vm6631, %v7723, %v7742
        %v7744 = vrot.slane %v7727, 4
        %v7745 = vsel %vm6631, %v7744, %v7703
        %v7746 = vrot.slane %v7703, 4
        %v7747 = vsel %vm6631, %v7727, %v7746
        %v7748 = vrot.slane %v7735, 4
        %v7749 = vsel %vm6631, %v7748, %v7711
        %v7750 = vrot.slane %v7711, 4
        %v7751 = vsel %vm6631, %v7735, %v7750
        %v7752 = vrot.slane %v7739, 4
        %v7753 = vsel %vm6631, %v7752, %v7715
        %v7754 = vrot.slane %v7715, 4
        %v7755 = vsel %vm6631, %v7739, %v7754
        %v7756 = vrot.slane %v7633, 4
        %v7757 = vsel %vm6631, %v7756, %v7629
        %v7758 = vrot.slane %v7629, 4
        %v7759 = vsel %vm6631, %v7633, %v7758
        %v7761 = vunpack.c.l.s4 1983009808
        %v7762 = vunpack.c.0.s8 %v7761
        %v7763 = vperm.slane %v7757, %v7762
        %v7765 = vunpack.c.l.s4 1983009808
        %v7766 = vunpack.c.0.s8 %v7765
        %v7767 = vperm.slane %v7759, %v7766
        %v7768 = vrot.slane %v7635, 4
        %v7769 = vsel %vm6631, %v7768, %v7631
        %v7770 = vrot.slane %v7631, 4
        %v7771 = vsel %vm6631, %v7635, %v7770
        %v7773 = vunpack.c.l.s4 1983009808
        %v7774 = vunpack.c.0.s8 %v7773
        %v7775 = vperm.slane %v7769, %v7774
        %v7777 = vunpack.c.l.s4 1983009808
        %v7778 = vunpack.c.0.s8 %v7777
        %v7779 = vperm.slane %v7771, %v7778
        %v7780 = vrot.slane %v7641, 4
        %v7781 = vsel %vm6631, %v7780, %v7637
        %v7782 = vrot.slane %v7637, 4
        %v7783 = vsel %vm6631, %v7641, %v7782
        %v7785 = vunpack.c.l.s4 1983009808
        %v7786 = vunpack.c.0.s8 %v7785
        %v7787 = vperm.slane %v7781, %v7786
        %v7789 = vunpack.c.l.s4 1983009808
        %v7790 = vunpack.c.0.s8 %v7789
        %v7791 = vperm.slane %v7783, %v7790
        %v7792 = vrot.slane %v7643, 4
        %v7793 = vsel %vm6631, %v7792, %v7639
        %v7794 = vrot.slane %v7639, 4
        %v7795 = vsel %vm6631, %v7643, %v7794
        %v7797 = vunpack.c.l.s4 1983009808
        %v7798 = vunpack.c.0.s8 %v7797
        %v7799 = vperm.slane %v7793, %v7798
        %v7801 = vunpack.c.l.s4 1983009808
        %v7802 = vunpack.c.0.s8 %v7801
        %v7803 = vperm.slane %v7795, %v7802
        %v7804 = vrot.slane %v7775, 4
        %v7805 = vsel %vm6631, %v7804, %v7763
        %v7806 = vrot.slane %v7763, 4
        %v7807 = vsel %vm6631, %v7775, %v7806
        %v7809 = vunpack.c.l.s4 1934713408
        %v7810 = vunpack.c.0.s8 %v7809
        %v7811 = vperm.slane %v7805, %v7810
        %v7813 = vunpack.c.l.s4 1934713408
        %v7814 = vunpack.c.0.s8 %v7813
        %v7815 = vperm.slane %v7807, %v7814
        %v7816 = vrot.slane %v7779, 4
        %v7817 = vsel %vm6631, %v7816, %v7767
        %v7818 = vrot.slane %v7767, 4
        %v7819 = vsel %vm6631, %v7779, %v7818
        %v7821 = vunpack.c.l.s4 1934713408
        %v7822 = vunpack.c.0.s8 %v7821
        %v7823 = vperm.slane %v7817, %v7822
        %v7825 = vunpack.c.l.s4 1934713408
        %v7826 = vunpack.c.0.s8 %v7825
        %v7827 = vperm.slane %v7819, %v7826
        %v7828 = vrot.slane %v7799, 4
        %v7829 = vsel %vm6631, %v7828, %v7787
        %v7830 = vrot.slane %v7787, 4
        %v7831 = vsel %vm6631, %v7799, %v7830
        %v7833 = vunpack.c.l.s4 1934713408
        %v7834 = vunpack.c.0.s8 %v7833
        %v7835 = vperm.slane %v7829, %v7834
        %v7837 = vunpack.c.l.s4 1934713408
        %v7838 = vunpack.c.0.s8 %v7837
        %v7839 = vperm.slane %v7831, %v7838
        %v7840 = vrot.slane %v7803, 4
        %v7841 = vsel %vm6631, %v7840, %v7791
        %v7842 = vrot.slane %v7791, 4
        %v7843 = vsel %vm6631, %v7803, %v7842
        %v7845 = vunpack.c.l.s4 1934713408
        %v7846 = vunpack.c.0.s8 %v7845
        %v7847 = vperm.slane %v7841, %v7846
        %v7849 = vunpack.c.l.s4 1934713408
        %v7850 = vunpack.c.0.s8 %v7849
        %v7851 = vperm.slane %v7843, %v7850
        %v7852 = vrot.slane %v7835, 4
        %v7853 = vsel %vm6631, %v7852, %v7811
        %v7854 = vrot.slane %v7811, 4
        %v7855 = vsel %vm6631, %v7835, %v7854
        %v7856 = vrot.slane %v7839, 4
        %v7857 = vsel %vm6631, %v7856, %v7815
        %v7858 = vrot.slane %v7815, 4
        %v7859 = vsel %vm6631, %v7839, %v7858
        %v7860 = vrot.slane %v7847, 4
        %v7861 = vsel %vm6631, %v7860, %v7823
        %v7862 = vrot.slane %v7823, 4
        %v7863 = vsel %vm6631, %v7847, %v7862
        %v7864 = vrot.slane %v7851, 4
        %v7865 = vsel %vm6631, %v7864, %v7827
        %v7866 = vrot.slane %v7827, 4
        %v7867 = vsel %vm6631, %v7851, %v7866
        %7869 = vrot.lane.b32.xlu0 %v7743, 16
        %v7870 = vpop.permute.xlu0 %7869
        %7873 = vrot.lane.b32.xlu0 %v7745, 32
        %v7874 = vpop.permute.xlu0 %7873
        %7877 = vrot.lane.b32.xlu0 %v7747, 48
        %v7878 = vpop.permute.xlu0 %7877
        %7881 = vrot.lane.b32.xlu0 %v7749, 64
        %v7882 = vpop.permute.xlu0 %7881
        %7885 = vrot.lane.b32.xlu0 %v7751, 80
        %v7886 = vpop.permute.xlu0 %7885
        %7889 = vrot.lane.b32.xlu0 %v7753, 96
        %v7890 = vpop.permute.xlu0 %7889
        %7893 = vrot.lane.b32.xlu0 %v7755, 112
        %v7894 = vpop.permute.xlu0 %7893
        %7897 = vrot.lane.b32.xlu0 %v7855, 16
        %v7898 = vpop.permute.xlu0 %7897
        %7901 = vrot.lane.b32.xlu0 %v7857, 32
        %v7902 = vpop.permute.xlu0 %7901
        %7905 = vrot.lane.b32.xlu0 %v7859, 48
        %v7906 = vpop.permute.xlu0 %7905
        %7909 = vrot.lane.b32.xlu0 %v7861, 64
        %v7910 = vpop.permute.xlu0 %7909
        %7913 = vrot.lane.b32.xlu0 %v7863, 80
        %v7914 = vpop.permute.xlu0 %7913
        %7917 = vrot.lane.b32.xlu0 %v7865, 96
        %v7918 = vpop.permute.xlu0 %7917
        %7921 = vrot.lane.b32.xlu0 %v7867, 112
        %v7922 = vpop.permute.xlu0 %7921
        %v7924 = vsel %vm7123, %v7741, %v7870
        %v7925 = vsel %vm2174, %v7924, %v7874
        %v7926 = vsel %vm2144, %v7925, %v7878
        %v7927 = vsel %vm4104, %v7926, %v7882
        %v7928 = vsel %vm1200, %v7927, %v7886
        %v7929 = vsel %vm1170, %v7928, %v7890
        %v7930 = vsel %vm3132, %v7929, %v7894
        %v7931 = vsel %vm7123, %v7853, %v7898
        %v7932 = vsel %vm2174, %v7931, %v7902
        %v7933 = vsel %vm2144, %v7932, %v7906
        %v7934 = vsel %vm4104, %v7933, %v7910
        %v7935 = vsel %vm1200, %v7934, %v7914
        %v7936 = vsel %vm1170, %v7935, %v7918
        %v7937 = vsel %vm3132, %v7936, %v7922
        %v7938 = vmul.f32 %v6470, %v7930
        %v7939 = vmul.f32 %v6530, %v7937
        %7940 = vst [vmem:[%s448] sm:$0xff] %v7938
        %7941 = vst [vmem:[%s448 + $0x8] sm:$0xff] %v7939
        %s7942 = sand.u32 %s295, 1
        %s7943 = scalar_lea.sflag [#allocation4], %s7942
        %s7944 = sand.u32 %s295, 1
        %s7945 = smul.addr %s7944, 16
        %s7946 = scalar_lea.vmem [#allocation7], %s7945
        // Predicated region
        $region77: #{tpu_custom_call.1} parent=67 // pred_check
          %p7947 = pneg %p305
        $region78: #{tpu_custom_call.1} parent=67 // pred_check_branch
          %7949 = sbr.rel (%p7947) target = $region80
        $region79: #{tpu_custom_call.1} parent=67 // pred_region
          %7951 = vsyncadd %s7943, 0
          %s7952 = smul.addr %s30, 2
          %s7953 = smul.addr %s7952, 8
          %s7954 = scalar_lea.hbm %s12, %s7953
          %s7956 = sshll.u32 %s7946, 4
          %s7957 = int_to_ptr.vmem [resolvable:$true] %s7956
          %s7958 = sshll.u32 %s7954, 4
          %s7959 = int_to_ptr.hbm [resolvable:$true] %s7958
          %7961 = dma.vmem_to_hbm [thread:$0]  %s7957, 256, %s7959, %s7943
        $region80: #{tpu_custom_call.1} parent=67 // pred_fallthru
          _
      $region68: #{tpu_custom_call.1} parent=5 // pred_fallthru
        _
      %p7962 = scmp.le.s32.totalorder 2, %s25
      // Predicated region
      $region81: #{tpu_custom_call.1} parent=5 // pred_check
        %p7963 = pneg %p7962
      $region82: #{tpu_custom_call.1} parent=5 // pred_check_branch
        %7965 = sbr.rel (%p7963) target = $region84
      $region83: #{tpu_custom_call.1} parent=5 // pred_region
        %s7966 = ssub.s32 %s25, 2
        // Predicated region
        $region85: #{tpu_custom_call.1} parent=83 // pred_check
          %p7967 = pneg %p311
        $region86: #{tpu_custom_call.1} parent=83 // pred_check_branch
          %7969 = sbr.rel (%p7967) target = $region88
        $region87: #{tpu_custom_call.1} parent=83 // pred_region
          %s7970 = sand.u32 %s296, 1
          %s7971 = scalar_lea.sflag [#allocation4], %s7970
          %s7972 = sand.u32 %s296, 1
          %s7973 = smul.addr %s7972, 16
          %s7974 = scalar_lea.vmem [#allocation7], %s7973
          %7976 = dma.done %s7971, 256
        $region88: #{tpu_custom_call.1} parent=83 // pred_fallthru
          _
      $region84: #{tpu_custom_call.1} parent=5 // pred_fallthru
        _
    $region6: #{tpu_custom_call.1} parent=1 // loop_footer
      %s29 = sadd.s32 1, %s25
    $region7: #{tpu_custom_call.1} parent=1 // loop_footer_branch
      %24 = sbr.rel target = $region3
    $region8: #{tpu_custom_call.1} parent=1 // loop_exit
      _
    %7977 = vsyncpa [#allocation3], 1
    %s7978 = scalar_lea.sflag [#allocation3], 1
    %7979 = vsyncpa %s7978, 1
    %7980 = vsyncpa [#allocation6], 1
    %7981 = vsyncpa [#allocation4], 1
    %s7982 = scalar_lea.sflag [#allocation4], 1
    %7983 = vsyncpa %s7982, 1

</llo_original>
